<compile_context>
chip_gen: v6e
topology: v6e:2x2x1
jax: 0.10.0
libtpu: 0.0.40
codegen_flags: <defaults>
</compile_context>

<pallas_src>
import functools

import numpy as np

import jax
import jax.numpy as jnp
from jax.experimental import pallas as pl
from jax.experimental.pallas import tpu as pltpu

BN_EPS = 1e-5


def _vmem_spec(shape):
    # Whole-array block (everything here fits comfortably in VMEM).
    return pl.BlockSpec(shape, lambda i: (0,) * len(shape))


def _tap_masks(B, H, W):
    """(9, B*H*W) float 0/1 mask: tap k=(dy+1)*3+(dx+1) valid at pixel n."""
    n = np.arange(B * H * W)
    i = (n // W) % H
    j = n % W
    rows = []
    for dy in (-1, 0, 1):
        for dx in (-1, 0, 1):
            ok = (i + dy >= 0) & (i + dy < H) & (j + dx >= 0) & (j + dx < W)
            rows.append(ok)
    return np.stack(rows).astype(np.float32)


# ----------------------------------------------------------------------------
# Fused ResidualModule kernel (input_channels == output_channels => no layer0)
# ----------------------------------------------------------------------------
def residual_module(x_flat, p, B, H, W):
    C, N = x_flat.shape
    Ch = C // 2
    inv_n = 1.0 / N
    # Flat lane offsets of the 9 taps; pltpu.roll(h1, (-off) % N, axis=1)[., n]
    # == h1[., n + off]; every wrapped / row-crossing / batch-crossing read is
    # zeroed by the precomputed mask.
    offs = tuple(dy * W + dx for dy in (-1, 0, 1) for dx in (-1, 0, 1))
    mask = jnp.asarray(_tap_masks(B, H, W))                     # (9, N) const

    def kernel(x_ref, m_ref, w1, g1, be1, w2, g2, be2, w3, g3, be3,
               o_ref, stack_ref):
        def bn_relu(h, g, be):
            # One-pass batch statistics over all pixels (lane reduction).
            s1 = jnp.sum(h, axis=1, keepdims=True)
            s2 = jnp.sum(h * h, axis=1, keepdims=True)
            mu = s1 * inv_n
            var = s2 * inv_n - mu * mu                          # biased var
            scale = g[...] * jax.lax.rsqrt(var + BN_EPS)        # (Co, 1)
            shift = be[...] - mu * scale
            return jnp.maximum(h * scale + shift, 0.0)

        x = x_ref[...]                                          # (C, N)

        # layer1: 1x1 conv as lane-dense matmul.
        h1 = bn_relu(jnp.dot(w1[...], x,
                             preferred_element_type=jnp.float32), g1, be1)

        # layer2: build the (9*Ch, N) im2col stack with XLU rolls + border
        # masks, then a single K=72 MXU matmul.
        for k, off in enumerate(offs):
            if off == 0:
                tap = h1                                        # center: valid
            else:
                tap = pltpu.roll(h1, shift=(-off) % N, axis=1) * m_ref[k:k + 1, :]
            stack_ref[k * Ch:(k + 1) * Ch, :] = tap
        h2 = bn_relu(jnp.dot(w2[...], stack_ref[...],
                             preferred_element_type=jnp.float32), g2, be2)

        # layer3: 1x1 conv + residual add (lane-dense unmasked store).
        h3 = bn_relu(jnp.dot(w3[...], h2,
                             preferred_element_type=jnp.float32), g3, be3)
        o_ref[...] = h3 + x

    in_shapes = [
        (C, N), (9, N),
        (Ch, C), (Ch, 1), (Ch, 1),
        (Ch, 9 * Ch), (Ch, 1), (Ch, 1),
        (C, Ch), (C, 1), (C, 1),
    ]
    return pl.pallas_call(
        kernel,
        out_shape=jax.ShapeDtypeStruct((C, N), jnp.float32),
        grid=(1,),
        in_specs=[_vmem_spec(s) for s in in_shapes],
        out_specs=_vmem_spec((C, N)),
        scratch_shapes=[pltpu.VMEM((9 * Ch, N), jnp.float32)],
        compiler_params=pltpu.CompilerParams(
            dimension_semantics=("arbitrary",)),
    )(x_flat, mask,
      p["w1"], p["g1"], p["be1"],
      p["w2"], p["g2"], p["be2"],
      p["w3"], p["g3"], p["be3"])


# ----------------------------------------------------------------------------
# F.max_pool2d(x, 2, 2) and F.interpolate(x, 2)+add : tiny memory-bound ops,
# left to XLA between the residual pallas_calls (per performance review).
# ----------------------------------------------------------------------------
def maxpool2x2(x_flat, B, H, W):
    C = x_flat.shape[0]
    v = x_flat.reshape(C, B, H // 2, 2, W // 2, 2)
    return jnp.max(v, axis=(3, 5)).reshape(C, B * (H // 2) * (W // 2))


def upsample2x_add(x_flat, side_flat, B, h, w):
    C = x_flat.shape[0]
    v = x_flat.reshape(C, B, h, 1, w, 1)
    v = jnp.broadcast_to(v, (C, B, h, 2, w, 2))
    return v.reshape(C, B * 2 * h * 2 * w) + side_flat


# ----------------------------------------------------------------------------
# Parameters (deterministic synthetic init; BN gamma=1, beta=0 as in PyTorch).
# Conv biases are omitted: each conv is immediately followed by BatchNorm with
# batch statistics, which cancels a per-channel bias exactly.
# ----------------------------------------------------------------------------
def init_residual_params(key, C):
    Ch = C // 2
    k = jax.random.split(key, 3)
    return {
        "w1": jax.random.normal(k[0], (Ch, C), jnp.float32) / np.sqrt(C),
        "g1": jnp.ones((Ch, 1), jnp.float32),
        "be1": jnp.zeros((Ch, 1), jnp.float32),
        # w2[co, k*Ch + ci] == torch_weight[co, ci, dy+1, dx+1], k=(dy+1)*3+(dx+1)
        "w2": jax.random.normal(k[1], (Ch, 9 * Ch), jnp.float32) / np.sqrt(9 * Ch),
        "g2": jnp.ones((Ch, 1), jnp.float32),
        "be2": jnp.zeros((Ch, 1), jnp.float32),
        "w3": jax.random.normal(k[2], (C, Ch), jnp.float32) / np.sqrt(Ch),
        "g3": jnp.ones((C, 1), jnp.float32),
        "be3": jnp.zeros((C, 1), jnp.float32),
    }


def init_hourglass_params(key, C, depth):
    keys = jax.random.split(key, 3 * depth + 1)
    params = {"side": [], "left": [], "right": [], "middle": []}
    i = 0
    for _ in range(depth):
        params["side"].append(init_residual_params(keys[i], C)); i += 1
        params["left"].append(init_residual_params(keys[i], C)); i += 1
        params["right"].append(init_residual_params(keys[i], C)); i += 1
    params["middle"].append(init_residual_params(keys[i], C))
    return params


# ----------------------------------------------------------------------------
# HourglassModule.forward  (input/output NCHW, like the PyTorch module)
# ----------------------------------------------------------------------------
def hourglass_forward(x_nchw, params, depth):
    B, C, H, W = x_nchw.shape
    x = jnp.transpose(x_nchw, (1, 0, 2, 3)).reshape(C, B * H * W)

    sides, dims = [], []
    h, w = H, W
    for d in range(depth):
        sides.append(residual_module(x, params["side"][d], B, h, w))
        dims.append((h, w))
        x = maxpool2x2(x, B, h, w)
        h, w = h // 2, w // 2
        x = residual_module(x, params["left"][d], B, h, w)

    x = residual_module(x, params["middle"][0], B, h, w)

    for d in range(depth):
        x = residual_module(x, params["right"][d], B, h, w)
        x = upsample2x_add(x, sides[depth - d - 1], B, h, w)
        h, w = dims[depth - d - 1]

    return jnp.transpose(x.reshape(C, B, H, W), (1, 0, 2, 3))


if __name__ == "__main__":
    # Shapes chosen so every pyramid level keeps B*H*W a multiple of 128 lanes
    # (32x32 -> 16x16 -> 8x8 at depth=2).
    B, C, H, W = 2, 16, 32, 32
    depth = 2

    key = jax.random.PRNGKey(0)
    kx, kp = jax.random.split(key)

    x_nchw = jax.random.normal(kx, (B, C, H, W), jnp.float32)
    params = init_hourglass_params(kp, C, depth)

    fwd = jax.jit(functools.partial(hourglass_forward, depth=depth))
    y = jax.block_until_ready(fwd(x_nchw, params))

    assert y.shape == (B, C, H, W)
    assert bool(jnp.all(jnp.isfinite(y)))
    print("KERNEL_OK")
</pallas_src>

<mosaic_0001>
module attributes {stable_mosaic.version = 11 : i64} {
  func.func @kernel(%arg0: i32, %arg1: memref<16x512xf32, #tpu.memory_space<vmem>>, %arg2: memref<9x512xf32, #tpu.memory_space<vmem>>, %arg3: memref<8x16xf32, #tpu.memory_space<vmem>>, %arg4: memref<8x1xf32, #tpu.memory_space<vmem>>, %arg5: memref<8x1xf32, #tpu.memory_space<vmem>>, %arg6: memref<8x72xf32, #tpu.memory_space<vmem>>, %arg7: memref<8x1xf32, #tpu.memory_space<vmem>>, %arg8: memref<8x1xf32, #tpu.memory_space<vmem>>, %arg9: memref<16x8xf32, #tpu.memory_space<vmem>>, %arg10: memref<16x1xf32, #tpu.memory_space<vmem>>, %arg11: memref<16x1xf32, #tpu.memory_space<vmem>>, %arg12: memref<16x512xf32, #tpu.memory_space<vmem>>, %arg13: memref<72x512xf32, #tpu.memory_space<vmem>>) attributes {dimension_semantics = [#tpu.dimension_semantics<arbitrary>], iteration_bounds = array<i64: 1>, scalar_prefetch = 0 : i64, scratch_operands = 1 : i64, tpu.core_type = #tpu.core_type<tc>, window_params = [{pipeline_mode = #tpu.pipeline_mode<synchronous>, transform_indices = @transform_0, window_bounds = array<i64: 16, 512>}, {pipeline_mode = #tpu.pipeline_mode<synchronous>, transform_indices = @transform_1, window_bounds = array<i64: 9, 512>}, {pipeline_mode = #tpu.pipeline_mode<synchronous>, transform_indices = @transform_2, window_bounds = array<i64: 8, 16>}, {pipeline_mode = #tpu.pipeline_mode<synchronous>, transform_indices = @transform_3, window_bounds = array<i64: 8, 1>}, {pipeline_mode = #tpu.pipeline_mode<synchronous>, transform_indices = @transform_4, window_bounds = array<i64: 8, 1>}, {pipeline_mode = #tpu.pipeline_mode<synchronous>, transform_indices = @transform_5, window_bounds = array<i64: 8, 72>}, {pipeline_mode = #tpu.pipeline_mode<synchronous>, transform_indices = @transform_6, window_bounds = array<i64: 8, 1>}, {pipeline_mode = #tpu.pipeline_mode<synchronous>, transform_indices = @transform_7, window_bounds = array<i64: 8, 1>}, {pipeline_mode = #tpu.pipeline_mode<synchronous>, transform_indices = @transform_8, window_bounds = array<i64: 16, 8>}, {pipeline_mode = #tpu.pipeline_mode<synchronous>, transform_indices = @transform_9, window_bounds = array<i64: 16, 1>}, {pipeline_mode = #tpu.pipeline_mode<synchronous>, transform_indices = @transform_10, window_bounds = array<i64: 16, 1>}, {pipeline_mode = #tpu.pipeline_mode<synchronous>, transform_indices = @transform_11, window_bounds = array<i64: 16, 512>}]} {
    %c0 = arith.constant 0 : index
    %c0_0 = arith.constant 0 : index
    %0 = vector.load %arg1[%c0, %c0_0] : memref<16x512xf32, #tpu.memory_space<vmem>>, vector<16x512xf32>
    %c0_1 = arith.constant 0 : index
    %c0_2 = arith.constant 0 : index
    %1 = vector.load %arg3[%c0_1, %c0_2] : memref<8x16xf32, #tpu.memory_space<vmem>>, vector<8x16xf32>
    %cst = arith.constant dense<0.000000e+00> : vector<8x512xf32>
    %2 = tpu.matmul %1, %0, %cst {dimension_numbers = #tpu.dot_dimension_numbers<[1], [0], [0], [1], [0, 0, 1, 1], [], []>} : vector<8x16xf32>, vector<16x512xf32>, vector<8x512xf32> -> vector<8x512xf32>
    %cst_3 = arith.constant dense<0.000000e+00> : vector<8xf32>
    %3 = vector.multi_reduction <add>, %2, %cst_3 [1] : vector<8x512xf32> to vector<8xf32>
    %4 = vector.shape_cast %3 : vector<8xf32> to vector<8x1xf32>
    %5 = arith.mulf %2, %2 : vector<8x512xf32>
    %cst_4 = arith.constant dense<0.000000e+00> : vector<8xf32>
    %6 = vector.multi_reduction <add>, %5, %cst_4 [1] : vector<8x512xf32> to vector<8xf32>
    %7 = vector.shape_cast %6 : vector<8xf32> to vector<8x1xf32>
    %cst_5 = arith.constant 0.001953125 : f32
    %8 = vector.broadcast %cst_5 : f32 to vector<8x1xf32>
    %9 = arith.mulf %4, %8 : vector<8x1xf32>
    %cst_6 = arith.constant 0.001953125 : f32
    %10 = vector.broadcast %cst_6 : f32 to vector<8x1xf32>
    %11 = arith.mulf %7, %10 : vector<8x1xf32>
    %12 = arith.mulf %9, %9 : vector<8x1xf32>
    %13 = arith.subf %11, %12 : vector<8x1xf32>
    %c0_7 = arith.constant 0 : index
    %c0_8 = arith.constant 0 : index
    %14 = vector.load %arg4[%c0_7, %c0_8] : memref<8x1xf32, #tpu.memory_space<vmem>>, vector<8x1xf32>
    %cst_9 = arith.constant 9.99999974E-6 : f32
    %15 = vector.broadcast %cst_9 : f32 to vector<8x1xf32>
    %16 = arith.addf %13, %15 : vector<8x1xf32>
    %17 = math.rsqrt %16 : vector<8x1xf32>
    %18 = arith.mulf %14, %17 : vector<8x1xf32>
    %c0_10 = arith.constant 0 : index
    %c0_11 = arith.constant 0 : index
    %19 = vector.load %arg5[%c0_10, %c0_11] : memref<8x1xf32, #tpu.memory_space<vmem>>, vector<8x1xf32>
    %20 = arith.mulf %9, %18 : vector<8x1xf32>
    %21 = arith.subf %19, %20 : vector<8x1xf32>
    %22 = vector.broadcast %18 : vector<8x1xf32> to vector<8x512xf32>
    %23 = arith.mulf %2, %22 : vector<8x512xf32>
    %24 = vector.broadcast %21 : vector<8x1xf32> to vector<8x512xf32>
    %25 = arith.addf %23, %24 : vector<8x512xf32>
    %cst_12 = arith.constant 0.000000e+00 : f32
    %26 = vector.broadcast %cst_12 : f32 to vector<8x512xf32>
    %27 = arith.maximumf %25, %26 : vector<8x512xf32>
    %c17_i32 = arith.constant 17 : i32
    %28 = tpu.dynamic_rotate %27 by %c17_i32 dim 1 : vector<8x512xf32>, i32 -> vector<8x512xf32>
    %c0_13 = arith.constant 0 : index
    %c0_14 = arith.constant 0 : index
    %29 = vector.load %arg2[%c0_13, %c0_14] : memref<9x512xf32, #tpu.memory_space<vmem>>, vector<1x512xf32>
    %30 = vector.broadcast %29 : vector<1x512xf32> to vector<8x512xf32>
    %31 = arith.mulf %28, %30 : vector<8x512xf32>
    %c0_15 = arith.constant 0 : index
    %c0_16 = arith.constant 0 : index
    %32 = vector.load %arg13[%c0_15, %c0_16] : memref<72x512xf32, #tpu.memory_space<vmem>>, vector<8x512xf32>
    tpu.vector_store %arg13[%c0_15, %c0_16], %31 {strides = array<i32>} : memref<72x512xf32, #tpu.memory_space<vmem>>, vector<8x512xf32>,
    %c16_i32 = arith.constant 16 : i32
    %33 = tpu.dynamic_rotate %27 by %c16_i32 dim 1 : vector<8x512xf32>, i32 -> vector<8x512xf32>
    %c1 = arith.constant 1 : index
    %c0_17 = arith.constant 0 : index
    %34 = vector.load %arg2[%c1, %c0_17] : memref<9x512xf32, #tpu.memory_space<vmem>>, vector<1x512xf32>
    %35 = vector.broadcast %34 : vector<1x512xf32> to vector<8x512xf32>
    %36 = arith.mulf %33, %35 : vector<8x512xf32>
    %c8 = arith.constant 8 : index
    %c0_18 = arith.constant 0 : index
    %37 = vector.load %arg13[%c8, %c0_18] : memref<72x512xf32, #tpu.memory_space<vmem>>, vector<8x512xf32>
    tpu.vector_store %arg13[%c8, %c0_18], %36 {strides = array<i32>} : memref<72x512xf32, #tpu.memory_space<vmem>>, vector<8x512xf32>,
    %c15_i32 = arith.constant 15 : i32
    %38 = tpu.dynamic_rotate %27 by %c15_i32 dim 1 : vector<8x512xf32>, i32 -> vector<8x512xf32>
    %c2 = arith.constant 2 : index
    %c0_19 = arith.constant 0 : index
    %39 = vector.load %arg2[%c2, %c0_19] : memref<9x512xf32, #tpu.memory_space<vmem>>, vector<1x512xf32>
    %40 = vector.broadcast %39 : vector<1x512xf32> to vector<8x512xf32>
    %41 = arith.mulf %38, %40 : vector<8x512xf32>
    %c16 = arith.constant 16 : index
    %c0_20 = arith.constant 0 : index
    %42 = vector.load %arg13[%c16, %c0_20] : memref<72x512xf32, #tpu.memory_space<vmem>>, vector<8x512xf32>
    tpu.vector_store %arg13[%c16, %c0_20], %41 {strides = array<i32>} : memref<72x512xf32, #tpu.memory_space<vmem>>, vector<8x512xf32>,
    %c1_i32 = arith.constant 1 : i32
    %43 = tpu.dynamic_rotate %27 by %c1_i32 dim 1 : vector<8x512xf32>, i32 -> vector<8x512xf32>
    %c3 = arith.constant 3 : index
    %c0_21 = arith.constant 0 : index
    %44 = vector.load %arg2[%c3, %c0_21] : memref<9x512xf32, #tpu.memory_space<vmem>>, vector<1x512xf32>
    %45 = vector.broadcast %44 : vector<1x512xf32> to vector<8x512xf32>
    %46 = arith.mulf %43, %45 : vector<8x512xf32>
    %c24 = arith.constant 24 : index
    %c0_22 = arith.constant 0 : index
    %47 = vector.load %arg13[%c24, %c0_22] : memref<72x512xf32, #tpu.memory_space<vmem>>, vector<8x512xf32>
    tpu.vector_store %arg13[%c24, %c0_22], %46 {strides = array<i32>} : memref<72x512xf32, #tpu.memory_space<vmem>>, vector<8x512xf32>,
    %c32 = arith.constant 32 : index
    %c0_23 = arith.constant 0 : index
    %48 = vector.load %arg13[%c32, %c0_23] : memref<72x512xf32, #tpu.memory_space<vmem>>, vector<8x512xf32>
    tpu.vector_store %arg13[%c32, %c0_23], %27 {strides = array<i32>} : memref<72x512xf32, #tpu.memory_space<vmem>>, vector<8x512xf32>,
    %c511_i32 = arith.constant 511 : i32
    %49 = tpu.dynamic_rotate %27 by %c511_i32 dim 1 : vector<8x512xf32>, i32 -> vector<8x512xf32>
    %c5 = arith.constant 5 : index
    %c0_24 = arith.constant 0 : index
    %50 = vector.load %arg2[%c5, %c0_24] : memref<9x512xf32, #tpu.memory_space<vmem>>, vector<1x512xf32>
    %51 = vector.broadcast %50 : vector<1x512xf32> to vector<8x512xf32>
    %52 = arith.mulf %49, %51 : vector<8x512xf32>
    %c40 = arith.constant 40 : index
    %c0_25 = arith.constant 0 : index
    %53 = vector.load %arg13[%c40, %c0_25] : memref<72x512xf32, #tpu.memory_space<vmem>>, vector<8x512xf32>
    tpu.vector_store %arg13[%c40, %c0_25], %52 {strides = array<i32>} : memref<72x512xf32, #tpu.memory_space<vmem>>, vector<8x512xf32>,
    %c497_i32 = arith.constant 497 : i32
    %54 = tpu.dynamic_rotate %27 by %c497_i32 dim 1 : vector<8x512xf32>, i32 -> vector<8x512xf32>
    %c6 = arith.constant 6 : index
    %c0_26 = arith.constant 0 : index
    %55 = vector.load %arg2[%c6, %c0_26] : memref<9x512xf32, #tpu.memory_space<vmem>>, vector<1x512xf32>
    %56 = vector.broadcast %55 : vector<1x512xf32> to vector<8x512xf32>
    %57 = arith.mulf %54, %56 : vector<8x512xf32>
    %c48 = arith.constant 48 : index
    %c0_27 = arith.constant 0 : index
    %58 = vector.load %arg13[%c48, %c0_27] : memref<72x512xf32, #tpu.memory_space<vmem>>, vector<8x512xf32>
    tpu.vector_store %arg13[%c48, %c0_27], %57 {strides = array<i32>} : memref<72x512xf32, #tpu.memory_space<vmem>>, vector<8x512xf32>,
    %c496_i32 = arith.constant 496 : i32
    %59 = tpu.dynamic_rotate %27 by %c496_i32 dim 1 : vector<8x512xf32>, i32 -> vector<8x512xf32>
    %c7 = arith.constant 7 : index
    %c0_28 = arith.constant 0 : index
    %60 = vector.load %arg2[%c7, %c0_28] : memref<9x512xf32, #tpu.memory_space<vmem>>, vector<1x512xf32>
    %61 = vector.broadcast %60 : vector<1x512xf32> to vector<8x512xf32>
    %62 = arith.mulf %59, %61 : vector<8x512xf32>
    %c56 = arith.constant 56 : index
    %c0_29 = arith.constant 0 : index
    %63 = vector.load %arg13[%c56, %c0_29] : memref<72x512xf32, #tpu.memory_space<vmem>>, vector<8x512xf32>
    tpu.vector_store %arg13[%c56, %c0_29], %62 {strides = array<i32>} : memref<72x512xf32, #tpu.memory_space<vmem>>, vector<8x512xf32>,
    %c495_i32 = arith.constant 495 : i32
    %64 = tpu.dynamic_rotate %27 by %c495_i32 dim 1 : vector<8x512xf32>, i32 -> vector<8x512xf32>
    %c8_30 = arith.constant 8 : index
    %c0_31 = arith.constant 0 : index
    %65 = vector.load %arg2[%c8_30, %c0_31] : memref<9x512xf32, #tpu.memory_space<vmem>>, vector<1x512xf32>
    %66 = vector.broadcast %65 : vector<1x512xf32> to vector<8x512xf32>
    %67 = arith.mulf %64, %66 : vector<8x512xf32>
    %c64 = arith.constant 64 : index
    %c0_32 = arith.constant 0 : index
    %68 = vector.load %arg13[%c64, %c0_32] : memref<72x512xf32, #tpu.memory_space<vmem>>, vector<8x512xf32>
    tpu.vector_store %arg13[%c64, %c0_32], %67 {strides = array<i32>} : memref<72x512xf32, #tpu.memory_space<vmem>>, vector<8x512xf32>,
    %c0_33 = arith.constant 0 : index
    %c0_34 = arith.constant 0 : index
    %69 = vector.load %arg6[%c0_33, %c0_34] : memref<8x72xf32, #tpu.memory_space<vmem>>, vector<8x72xf32>
    %c0_35 = arith.constant 0 : index
    %c0_36 = arith.constant 0 : index
    %70 = vector.load %arg13[%c0_35, %c0_36] : memref<72x512xf32, #tpu.memory_space<vmem>>, vector<72x512xf32>
    %cst_37 = arith.constant dense<0.000000e+00> : vector<8x512xf32>
    %71 = tpu.matmul %69, %70, %cst_37 {dimension_numbers = #tpu.dot_dimension_numbers<[1], [0], [0], [1], [0, 0, 1, 1], [], []>} : vector<8x72xf32>, vector<72x512xf32>, vector<8x512xf32> -> vector<8x512xf32>
    %cst_38 = arith.constant dense<0.000000e+00> : vector<8xf32>
    %72 = vector.multi_reduction <add>, %71, %cst_38 [1] : vector<8x512xf32> to vector<8xf32>
    %73 = vector.shape_cast %72 : vector<8xf32> to vector<8x1xf32>
    %74 = arith.mulf %71, %71 : vector<8x512xf32>
    %cst_39 = arith.constant dense<0.000000e+00> : vector<8xf32>
    %75 = vector.multi_reduction <add>, %74, %cst_39 [1] : vector<8x512xf32> to vector<8xf32>
    %76 = vector.shape_cast %75 : vector<8xf32> to vector<8x1xf32>
    %cst_40 = arith.constant 0.001953125 : f32
    %77 = vector.broadcast %cst_40 : f32 to vector<8x1xf32>
    %78 = arith.mulf %73, %77 : vector<8x1xf32>
    %cst_41 = arith.constant 0.001953125 : f32
    %79 = vector.broadcast %cst_41 : f32 to vector<8x1xf32>
    %80 = arith.mulf %76, %79 : vector<8x1xf32>
    %81 = arith.mulf %78, %78 : vector<8x1xf32>
    %82 = arith.subf %80, %81 : vector<8x1xf32>
    %c0_42 = arith.constant 0 : index
    %c0_43 = arith.constant 0 : index
    %83 = vector.load %arg7[%c0_42, %c0_43] : memref<8x1xf32, #tpu.memory_space<vmem>>, vector<8x1xf32>
    %cst_44 = arith.constant 9.99999974E-6 : f32
    %84 = vector.broadcast %cst_44 : f32 to vector<8x1xf32>
    %85 = arith.addf %82, %84 : vector<8x1xf32>
    %86 = math.rsqrt %85 : vector<8x1xf32>
    %87 = arith.mulf %83, %86 : vector<8x1xf32>
    %c0_45 = arith.constant 0 : index
    %c0_46 = arith.constant 0 : index
    %88 = vector.load %arg8[%c0_45, %c0_46] : memref<8x1xf32, #tpu.memory_space<vmem>>, vector<8x1xf32>
    %89 = arith.mulf %78, %87 : vector<8x1xf32>
    %90 = arith.subf %88, %89 : vector<8x1xf32>
    %91 = vector.broadcast %87 : vector<8x1xf32> to vector<8x512xf32>
    %92 = arith.mulf %71, %91 : vector<8x512xf32>
    %93 = vector.broadcast %90 : vector<8x1xf32> to vector<8x512xf32>
    %94 = arith.addf %92, %93 : vector<8x512xf32>
    %cst_47 = arith.constant 0.000000e+00 : f32
    %95 = vector.broadcast %cst_47 : f32 to vector<8x512xf32>
    %96 = arith.maximumf %94, %95 : vector<8x512xf32>
    %c0_48 = arith.constant 0 : index
    %c0_49 = arith.constant 0 : index
    %97 = vector.load %arg9[%c0_48, %c0_49] : memref<16x8xf32, #tpu.memory_space<vmem>>, vector<16x8xf32>
    %cst_50 = arith.constant dense<0.000000e+00> : vector<16x512xf32>
    %98 = tpu.matmul %97, %96, %cst_50 {dimension_numbers = #tpu.dot_dimension_numbers<[1], [0], [0], [1], [0, 0, 1, 1], [], []>} : vector<16x8xf32>, vector<8x512xf32>, vector<16x512xf32> -> vector<16x512xf32>
    %cst_51 = arith.constant dense<0.000000e+00> : vector<16xf32>
    %99 = vector.multi_reduction <add>, %98, %cst_51 [1] : vector<16x512xf32> to vector<16xf32>
    %100 = vector.shape_cast %99 : vector<16xf32> to vector<16x1xf32>
    %101 = arith.mulf %98, %98 : vector<16x512xf32>
    %cst_52 = arith.constant dense<0.000000e+00> : vector<16xf32>
    %102 = vector.multi_reduction <add>, %101, %cst_52 [1] : vector<16x512xf32> to vector<16xf32>
    %103 = vector.shape_cast %102 : vector<16xf32> to vector<16x1xf32>
    %cst_53 = arith.constant 0.001953125 : f32
    %104 = vector.broadcast %cst_53 : f32 to vector<16x1xf32>
    %105 = arith.mulf %100, %104 : vector<16x1xf32>
    %cst_54 = arith.constant 0.001953125 : f32
    %106 = vector.broadcast %cst_54 : f32 to vector<16x1xf32>
    %107 = arith.mulf %103, %106 : vector<16x1xf32>
    %108 = arith.mulf %105, %105 : vector<16x1xf32>
    %109 = arith.subf %107, %108 : vector<16x1xf32>
    %c0_55 = arith.constant 0 : index
    %c0_56 = arith.constant 0 : index
    %110 = vector.load %arg10[%c0_55, %c0_56] : memref<16x1xf32, #tpu.memory_space<vmem>>, vector<16x1xf32>
    %cst_57 = arith.constant 9.99999974E-6 : f32
    %111 = vector.broadcast %cst_57 : f32 to vector<16x1xf32>
    %112 = arith.addf %109, %111 : vector<16x1xf32>
    %113 = math.rsqrt %112 : vector<16x1xf32>
    %114 = arith.mulf %110, %113 : vector<16x1xf32>
    %c0_58 = arith.constant 0 : index
    %c0_59 = arith.constant 0 : index
    %115 = vector.load %arg11[%c0_58, %c0_59] : memref<16x1xf32, #tpu.memory_space<vmem>>, vector<16x1xf32>
    %116 = arith.mulf %105, %114 : vector<16x1xf32>
    %117 = arith.subf %115, %116 : vector<16x1xf32>
    %118 = vector.broadcast %114 : vector<16x1xf32> to vector<16x512xf32>
    %119 = arith.mulf %98, %118 : vector<16x512xf32>
    %120 = vector.broadcast %117 : vector<16x1xf32> to vector<16x512xf32>
    %121 = arith.addf %119, %120 : vector<16x512xf32>
    %cst_60 = arith.constant 0.000000e+00 : f32
    %122 = vector.broadcast %cst_60 : f32 to vector<16x512xf32>
    %123 = arith.maximumf %121, %122 : vector<16x512xf32>
    %124 = arith.addf %123, %0 : vector<16x512xf32>
    %c0_61 = arith.constant 0 : index
    %c0_62 = arith.constant 0 : index
    %125 = vector.load %arg12[%c0_61, %c0_62] : memref<16x512xf32, #tpu.memory_space<vmem>>, vector<16x512xf32>
    tpu.vector_store %arg12[%c0_61, %c0_62], %124 {strides = array<i32>} : memref<16x512xf32, #tpu.memory_space<vmem>>, vector<16x512xf32>,
    return
  }
  func.func @transform_0(%arg0: i32) -> (i32, i32) {
    %c0_i32 = arith.constant 0 : i32
    %c0_i32_0 = arith.constant 0 : i32
    %c0_i32_1 = arith.constant 0 : i32
    return %c0_i32, %c0_i32_0 : i32, i32
  }
  func.func @transform_1(%arg0: i32) -> (i32, i32) {
    %c0_i32 = arith.constant 0 : i32
    %c0_i32_0 = arith.constant 0 : i32
    %c0_i32_1 = arith.constant 0 : i32
    return %c0_i32, %c0_i32_0 : i32, i32
  }
  func.func @transform_2(%arg0: i32) -> (i32, i32) {
    %c0_i32 = arith.constant 0 : i32
    %c0_i32_0 = arith.constant 0 : i32
    %c0_i32_1 = arith.constant 0 : i32
    return %c0_i32, %c0_i32_0 : i32, i32
  }
  func.func @transform_3(%arg0: i32) -> (i32, i32) {
    %c0_i32 = arith.constant 0 : i32
    %c0_i32_0 = arith.constant 0 : i32
    %c0_i32_1 = arith.constant 0 : i32
    return %c0_i32, %c0_i32_0 : i32, i32
  }
  func.func @transform_4(%arg0: i32) -> (i32, i32) {
    %c0_i32 = arith.constant 0 : i32
    %c0_i32_0 = arith.constant 0 : i32
    %c0_i32_1 = arith.constant 0 : i32
    return %c0_i32, %c0_i32_0 : i32, i32
  }
  func.func @transform_5(%arg0: i32) -> (i32, i32) {
    %c0_i32 = arith.constant 0 : i32
    %c0_i32_0 = arith.constant 0 : i32
    %c0_i32_1 = arith.constant 0 : i32
    return %c0_i32, %c0_i32_0 : i32, i32
  }
  func.func @transform_6(%arg0: i32) -> (i32, i32) {
    %c0_i32 = arith.constant 0 : i32
    %c0_i32_0 = arith.constant 0 : i32
    %c0_i32_1 = arith.constant 0 : i32
    return %c0_i32, %c0_i32_0 : i32, i32
  }
  func.func @transform_7(%arg0: i32) -> (i32, i32) {
    %c0_i32 = arith.constant 0 : i32
    %c0_i32_0 = arith.constant 0 : i32
    %c0_i32_1 = arith.constant 0 : i32
    return %c0_i32, %c0_i32_0 : i32, i32
  }
  func.func @transform_8(%arg0: i32) -> (i32, i32) {
    %c0_i32 = arith.constant 0 : i32
    %c0_i32_0 = arith.constant 0 : i32
    %c0_i32_1 = arith.constant 0 : i32
    return %c0_i32, %c0_i32_0 : i32, i32
  }
  func.func @transform_9(%arg0: i32) -> (i32, i32) {
    %c0_i32 = arith.constant 0 : i32
    %c0_i32_0 = arith.constant 0 : i32
    %c0_i32_1 = arith.constant 0 : i32
    return %c0_i32, %c0_i32_0 : i32, i32
  }
  func.func @transform_10(%arg0: i32) -> (i32, i32) {
    %c0_i32 = arith.constant 0 : i32
    %c0_i32_0 = arith.constant 0 : i32
    %c0_i32_1 = arith.constant 0 : i32
    return %c0_i32, %c0_i32_0 : i32, i32
  }
  func.func @transform_11(%arg0: i32) -> (i32, i32) {
    %c0_i32 = arith.constant 0 : i32
    %c0_i32_0 = arith.constant 0 : i32
    %c0_i32_1 = arith.constant 0 : i32
    return %c0_i32, %c0_i32_0 : i32, i32
  }
}

module attributes {stable_mosaic.version = 11 : i64} {
  func.func @kernel(%arg0: i32, %arg1: memref<16x128xf32, #tpu.memory_space<vmem>>, %arg2: memref<9x128xf32, #tpu.memory_space<vmem>>, %arg3: memref<8x16xf32, #tpu.memory_space<vmem>>, %arg4: memref<8x1xf32, #tpu.memory_space<vmem>>, %arg5: memref<8x1xf32, #tpu.memory_space<vmem>>, %arg6: memref<8x72xf32, #tpu.memory_space<vmem>>, %arg7: memref<8x1xf32, #tpu.memory_space<vmem>>, %arg8: memref<8x1xf32, #tpu.memory_space<vmem>>, %arg9: memref<16x8xf32, #tpu.memory_space<vmem>>, %arg10: memref<16x1xf32, #tpu.memory_space<vmem>>, %arg11: memref<16x1xf32, #tpu.memory_space<vmem>>, %arg12: memref<16x128xf32, #tpu.memory_space<vmem>>, %arg13: memref<72x128xf32, #tpu.memory_space<vmem>>) attributes {dimension_semantics = [#tpu.dimension_semantics<arbitrary>], iteration_bounds = array<i64: 1>, scalar_prefetch = 0 : i64, scratch_operands = 1 : i64, tpu.core_type = #tpu.core_type<tc>, window_params = [{pipeline_mode = #tpu.pipeline_mode<synchronous>, transform_indices = @transform_0, window_bounds = array<i64: 16, 128>}, {pipeline_mode = #tpu.pipeline_mode<synchronous>, transform_indices = @transform_1, window_bounds = array<i64: 9, 128>}, {pipeline_mode = #tpu.pipeline_mode<synchronous>, transform_indices = @transform_2, window_bounds = array<i64: 8, 16>}, {pipeline_mode = #tpu.pipeline_mode<synchronous>, transform_indices = @transform_3, window_bounds = array<i64: 8, 1>}, {pipeline_mode = #tpu.pipeline_mode<synchronous>, transform_indices = @transform_4, window_bounds = array<i64: 8, 1>}, {pipeline_mode = #tpu.pipeline_mode<synchronous>, transform_indices = @transform_5, window_bounds = array<i64: 8, 72>}, {pipeline_mode = #tpu.pipeline_mode<synchronous>, transform_indices = @transform_6, window_bounds = array<i64: 8, 1>}, {pipeline_mode = #tpu.pipeline_mode<synchronous>, transform_indices = @transform_7, window_bounds = array<i64: 8, 1>}, {pipeline_mode = #tpu.pipeline_mode<synchronous>, transform_indices = @transform_8, window_bounds = array<i64: 16, 8>}, {pipeline_mode = #tpu.pipeline_mode<synchronous>, transform_indices = @transform_9, window_bounds = array<i64: 16, 1>}, {pipeline_mode = #tpu.pipeline_mode<synchronous>, transform_indices = @transform_10, window_bounds = array<i64: 16, 1>}, {pipeline_mode = #tpu.pipeline_mode<synchronous>, transform_indices = @transform_11, window_bounds = array<i64: 16, 128>}]} {
    %c0 = arith.constant 0 : index
    %c0_0 = arith.constant 0 : index
    %0 = vector.load %arg1[%c0, %c0_0] : memref<16x128xf32, #tpu.memory_space<vmem>>, vector<16x128xf32>
    %c0_1 = arith.constant 0 : index
    %c0_2 = arith.constant 0 : index
    %1 = vector.load %arg3[%c0_1, %c0_2] : memref<8x16xf32, #tpu.memory_space<vmem>>, vector<8x16xf32>
    %cst = arith.constant dense<0.000000e+00> : vector<8x128xf32>
    %2 = tpu.matmul %1, %0, %cst {dimension_numbers = #tpu.dot_dimension_numbers<[1], [0], [0], [1], [0, 0, 1, 1], [], []>} : vector<8x16xf32>, vector<16x128xf32>, vector<8x128xf32> -> vector<8x128xf32>
    %cst_3 = arith.constant dense<0.000000e+00> : vector<8xf32>
    %3 = vector.multi_reduction <add>, %2, %cst_3 [1] : vector<8x128xf32> to vector<8xf32>
    %4 = vector.shape_cast %3 : vector<8xf32> to vector<8x1xf32>
    %5 = arith.mulf %2, %2 : vector<8x128xf32>
    %cst_4 = arith.constant dense<0.000000e+00> : vector<8xf32>
    %6 = vector.multi_reduction <add>, %5, %cst_4 [1] : vector<8x128xf32> to vector<8xf32>
    %7 = vector.shape_cast %6 : vector<8xf32> to vector<8x1xf32>
    %cst_5 = arith.constant 7.812500e-03 : f32
    %8 = vector.broadcast %cst_5 : f32 to vector<8x1xf32>
    %9 = arith.mulf %4, %8 : vector<8x1xf32>
    %cst_6 = arith.constant 7.812500e-03 : f32
    %10 = vector.broadcast %cst_6 : f32 to vector<8x1xf32>
    %11 = arith.mulf %7, %10 : vector<8x1xf32>
    %12 = arith.mulf %9, %9 : vector<8x1xf32>
    %13 = arith.subf %11, %12 : vector<8x1xf32>
    %c0_7 = arith.constant 0 : index
    %c0_8 = arith.constant 0 : index
    %14 = vector.load %arg4[%c0_7, %c0_8] : memref<8x1xf32, #tpu.memory_space<vmem>>, vector<8x1xf32>
    %cst_9 = arith.constant 9.99999974E-6 : f32
    %15 = vector.broadcast %cst_9 : f32 to vector<8x1xf32>
    %16 = arith.addf %13, %15 : vector<8x1xf32>
    %17 = math.rsqrt %16 : vector<8x1xf32>
    %18 = arith.mulf %14, %17 : vector<8x1xf32>
    %c0_10 = arith.constant 0 : index
    %c0_11 = arith.constant 0 : index
    %19 = vector.load %arg5[%c0_10, %c0_11] : memref<8x1xf32, #tpu.memory_space<vmem>>, vector<8x1xf32>
    %20 = arith.mulf %9, %18 : vector<8x1xf32>
    %21 = arith.subf %19, %20 : vector<8x1xf32>
    %22 = vector.broadcast %18 : vector<8x1xf32> to vector<8x128xf32>
    %23 = arith.mulf %2, %22 : vector<8x128xf32>
    %24 = vector.broadcast %21 : vector<8x1xf32> to vector<8x128xf32>
    %25 = arith.addf %23, %24 : vector<8x128xf32>
    %cst_12 = arith.constant 0.000000e+00 : f32
    %26 = vector.broadcast %cst_12 : f32 to vector<8x128xf32>
    %27 = arith.maximumf %25, %26 : vector<8x128xf32>
    %c9_i32 = arith.constant 9 : i32
    %28 = tpu.dynamic_rotate %27 by %c9_i32 dim 1 : vector<8x128xf32>, i32 -> vector<8x128xf32>
    %c0_13 = arith.constant 0 : index
    %c0_14 = arith.constant 0 : index
    %29 = vector.load %arg2[%c0_13, %c0_14] : memref<9x128xf32, #tpu.memory_space<vmem>>, vector<1x128xf32>
    %30 = vector.broadcast %29 : vector<1x128xf32> to vector<8x128xf32>
    %31 = arith.mulf %28, %30 : vector<8x128xf32>
    %c0_15 = arith.constant 0 : index
    %c0_16 = arith.constant 0 : index
    %32 = vector.load %arg13[%c0_15, %c0_16] : memref<72x128xf32, #tpu.memory_space<vmem>>, vector<8x128xf32>
    tpu.vector_store %arg13[%c0_15, %c0_16], %31 {strides = array<i32>} : memref<72x128xf32, #tpu.memory_space<vmem>>, vector<8x128xf32>,
    %c8_i32 = arith.constant 8 : i32
    %33 = tpu.dynamic_rotate %27 by %c8_i32 dim 1 : vector<8x128xf32>, i32 -> vector<8x128xf32>
    %c1 = arith.constant 1 : index
    %c0_17 = arith.constant 0 : index
    %34 = vector.load %arg2[%c1, %c0_17] : memref<9x128xf32, #tpu.memory_space<vmem>>, vector<1x128xf32>
    %35 = vector.broadcast %34 : vector<1x128xf32> to vector<8x128xf32>
    %36 = arith.mulf %33, %35 : vector<8x128xf32>
    %c8 = arith.constant 8 : index
    %c0_18 = arith.constant 0 : index
    %37 = vector.load %arg13[%c8, %c0_18] : memref<72x128xf32, #tpu.memory_space<vmem>>, vector<8x128xf32>
    tpu.vector_store %arg13[%c8, %c0_18], %36 {strides = array<i32>} : memref<72x128xf32, #tpu.memory_space<vmem>>, vector<8x128xf32>,
    %c7_i32 = arith.constant 7 : i32
    %38 = tpu.dynamic_rotate %27 by %c7_i32 dim 1 : vector<8x128xf32>, i32 -> vector<8x128xf32>
    %c2 = arith.constant 2 : index
    %c0_19 = arith.constant 0 : index
    %39 = vector.load %arg2[%c2, %c0_19] : memref<9x128xf32, #tpu.memory_space<vmem>>, vector<1x128xf32>
    %40 = vector.broadcast %39 : vector<1x128xf32> to vector<8x128xf32>
    %41 = arith.mulf %38, %40 : vector<8x128xf32>
    %c16 = arith.constant 16 : index
    %c0_20 = arith.constant 0 : index
    %42 = vector.load %arg13[%c16, %c0_20] : memref<72x128xf32, #tpu.memory_space<vmem>>, vector<8x128xf32>
    tpu.vector_store %arg13[%c16, %c0_20], %41 {strides = array<i32>} : memref<72x128xf32, #tpu.memory_space<vmem>>, vector<8x128xf32>,
    %c1_i32 = arith.constant 1 : i32
    %43 = tpu.dynamic_rotate %27 by %c1_i32 dim 1 : vector<8x128xf32>, i32 -> vector<8x128xf32>
    %c3 = arith.constant 3 : index
    %c0_21 = arith.constant 0 : index
    %44 = vector.load %arg2[%c3, %c0_21] : memref<9x128xf32, #tpu.memory_space<vmem>>, vector<1x128xf32>
    %45 = vector.broadcast %44 : vector<1x128xf32> to vector<8x128xf32>
    %46 = arith.mulf %43, %45 : vector<8x128xf32>
    %c24 = arith.constant 24 : index
    %c0_22 = arith.constant 0 : index
    %47 = vector.load %arg13[%c24, %c0_22] : memref<72x128xf32, #tpu.memory_space<vmem>>, vector<8x128xf32>
    tpu.vector_store %arg13[%c24, %c0_22], %46 {strides = array<i32>} : memref<72x128xf32, #tpu.memory_space<vmem>>, vector<8x128xf32>,
    %c32 = arith.constant 32 : index
    %c0_23 = arith.constant 0 : index
    %48 = vector.load %arg13[%c32, %c0_23] : memref<72x128xf32, #tpu.memory_space<vmem>>, vector<8x128xf32>
    tpu.vector_store %arg13[%c32, %c0_23], %27 {strides = array<i32>} : memref<72x128xf32, #tpu.memory_space<vmem>>, vector<8x128xf32>,
    %c127_i32 = arith.constant 127 : i32
    %49 = tpu.dynamic_rotate %27 by %c127_i32 dim 1 : vector<8x128xf32>, i32 -> vector<8x128xf32>
    %c5 = arith.constant 5 : index
    %c0_24 = arith.constant 0 : index
    %50 = vector.load %arg2[%c5, %c0_24] : memref<9x128xf32, #tpu.memory_space<vmem>>, vector<1x128xf32>
    %51 = vector.broadcast %50 : vector<1x128xf32> to vector<8x128xf32>
    %52 = arith.mulf %49, %51 : vector<8x128xf32>
    %c40 = arith.constant 40 : index
    %c0_25 = arith.constant 0 : index
    %53 = vector.load %arg13[%c40, %c0_25] : memref<72x128xf32, #tpu.memory_space<vmem>>, vector<8x128xf32>
    tpu.vector_store %arg13[%c40, %c0_25], %52 {strides = array<i32>} : memref<72x128xf32, #tpu.memory_space<vmem>>, vector<8x128xf32>,
    %c121_i32 = arith.constant 121 : i32
    %54 = tpu.dynamic_rotate %27 by %c121_i32 dim 1 : vector<8x128xf32>, i32 -> vector<8x128xf32>
    %c6 = arith.constant 6 : index
    %c0_26 = arith.constant 0 : index
    %55 = vector.load %arg2[%c6, %c0_26] : memref<9x128xf32, #tpu.memory_space<vmem>>, vector<1x128xf32>
    %56 = vector.broadcast %55 : vector<1x128xf32> to vector<8x128xf32>
    %57 = arith.mulf %54, %56 : vector<8x128xf32>
    %c48 = arith.constant 48 : index
    %c0_27 = arith.constant 0 : index
    %58 = vector.load %arg13[%c48, %c0_27] : memref<72x128xf32, #tpu.memory_space<vmem>>, vector<8x128xf32>
    tpu.vector_store %arg13[%c48, %c0_27], %57 {strides = array<i32>} : memref<72x128xf32, #tpu.memory_space<vmem>>, vector<8x128xf32>,
    %c120_i32 = arith.constant 120 : i32
    %59 = tpu.dynamic_rotate %27 by %c120_i32 dim 1 : vector<8x128xf32>, i32 -> vector<8x128xf32>
    %c7 = arith.constant 7 : index
    %c0_28 = arith.constant 0 : index
    %60 = vector.load %arg2[%c7, %c0_28] : memref<9x128xf32, #tpu.memory_space<vmem>>, vector<1x128xf32>
    %61 = vector.broadcast %60 : vector<1x128xf32> to vector<8x128xf32>
    %62 = arith.mulf %59, %61 : vector<8x128xf32>
    %c56 = arith.constant 56 : index
    %c0_29 = arith.constant 0 : index
    %63 = vector.load %arg13[%c56, %c0_29] : memref<72x128xf32, #tpu.memory_space<vmem>>, vector<8x128xf32>
    tpu.vector_store %arg13[%c56, %c0_29], %62 {strides = array<i32>} : memref<72x128xf32, #tpu.memory_space<vmem>>, vector<8x128xf32>,
    %c119_i32 = arith.constant 119 : i32
    %64 = tpu.dynamic_rotate %27 by %c119_i32 dim 1 : vector<8x128xf32>, i32 -> vector<8x128xf32>
    %c8_30 = arith.constant 8 : index
    %c0_31 = arith.constant 0 : index
    %65 = vector.load %arg2[%c8_30, %c0_31] : memref<9x128xf32, #tpu.memory_space<vmem>>, vector<1x128xf32>
    %66 = vector.broadcast %65 : vector<1x128xf32> to vector<8x128xf32>
    %67 = arith.mulf %64, %66 : vector<8x128xf32>
    %c64 = arith.constant 64 : index
    %c0_32 = arith.constant 0 : index
    %68 = vector.load %arg13[%c64, %c0_32] : memref<72x128xf32, #tpu.memory_space<vmem>>, vector<8x128xf32>
    tpu.vector_store %arg13[%c64, %c0_32], %67 {strides = array<i32>} : memref<72x128xf32, #tpu.memory_space<vmem>>, vector<8x128xf32>,
    %c0_33 = arith.constant 0 : index
    %c0_34 = arith.constant 0 : index
    %69 = vector.load %arg6[%c0_33, %c0_34] : memref<8x72xf32, #tpu.memory_space<vmem>>, vector<8x72xf32>
    %c0_35 = arith.constant 0 : index
    %c0_36 = arith.constant 0 : index
    %70 = vector.load %arg13[%c0_35, %c0_36] : memref<72x128xf32, #tpu.memory_space<vmem>>, vector<72x128xf32>
    %cst_37 = arith.constant dense<0.000000e+00> : vector<8x128xf32>
    %71 = tpu.matmul %69, %70, %cst_37 {dimension_numbers = #tpu.dot_dimension_numbers<[1], [0], [0], [1], [0, 0, 1, 1], [], []>} : vector<8x72xf32>, vector<72x128xf32>, vector<8x128xf32> -> vector<8x128xf32>
    %cst_38 = arith.constant dense<0.000000e+00> : vector<8xf32>
    %72 = vector.multi_reduction <add>, %71, %cst_38 [1] : vector<8x128xf32> to vector<8xf32>
    %73 = vector.shape_cast %72 : vector<8xf32> to vector<8x1xf32>
    %74 = arith.mulf %71, %71 : vector<8x128xf32>
    %cst_39 = arith.constant dense<0.000000e+00> : vector<8xf32>
    %75 = vector.multi_reduction <add>, %74, %cst_39 [1] : vector<8x128xf32> to vector<8xf32>
    %76 = vector.shape_cast %75 : vector<8xf32> to vector<8x1xf32>
    %cst_40 = arith.constant 7.812500e-03 : f32
    %77 = vector.broadcast %cst_40 : f32 to vector<8x1xf32>
    %78 = arith.mulf %73, %77 : vector<8x1xf32>
    %cst_41 = arith.constant 7.812500e-03 : f32
    %79 = vector.broadcast %cst_41 : f32 to vector<8x1xf32>
    %80 = arith.mulf %76, %79 : vector<8x1xf32>
    %81 = arith.mulf %78, %78 : vector<8x1xf32>
    %82 = arith.subf %80, %81 : vector<8x1xf32>
    %c0_42 = arith.constant 0 : index
    %c0_43 = arith.constant 0 : index
    %83 = vector.load %arg7[%c0_42, %c0_43] : memref<8x1xf32, #tpu.memory_space<vmem>>, vector<8x1xf32>
    %cst_44 = arith.constant 9.99999974E-6 : f32
    %84 = vector.broadcast %cst_44 : f32 to vector<8x1xf32>
    %85 = arith.addf %82, %84 : vector<8x1xf32>
    %86 = math.rsqrt %85 : vector<8x1xf32>
    %87 = arith.mulf %83, %86 : vector<8x1xf32>
    %c0_45 = arith.constant 0 : index
    %c0_46 = arith.constant 0 : index
    %88 = vector.load %arg8[%c0_45, %c0_46] : memref<8x1xf32, #tpu.memory_space<vmem>>, vector<8x1xf32>
    %89 = arith.mulf %78, %87 : vector<8x1xf32>
    %90 = arith.subf %88, %89 : vector<8x1xf32>
    %91 = vector.broadcast %87 : vector<8x1xf32> to vector<8x128xf32>
    %92 = arith.mulf %71, %91 : vector<8x128xf32>
    %93 = vector.broadcast %90 : vector<8x1xf32> to vector<8x128xf32>
    %94 = arith.addf %92, %93 : vector<8x128xf32>
    %cst_47 = arith.constant 0.000000e+00 : f32
    %95 = vector.broadcast %cst_47 : f32 to vector<8x128xf32>
    %96 = arith.maximumf %94, %95 : vector<8x128xf32>
    %c0_48 = arith.constant 0 : index
    %c0_49 = arith.constant 0 : index
    %97 = vector.load %arg9[%c0_48, %c0_49] : memref<16x8xf32, #tpu.memory_space<vmem>>, vector<16x8xf32>
    %cst_50 = arith.constant dense<0.000000e+00> : vector<16x128xf32>
    %98 = tpu.matmul %97, %96, %cst_50 {dimension_numbers = #tpu.dot_dimension_numbers<[1], [0], [0], [1], [0, 0, 1, 1], [], []>} : vector<16x8xf32>, vector<8x128xf32>, vector<16x128xf32> -> vector<16x128xf32>
    %cst_51 = arith.constant dense<0.000000e+00> : vector<16xf32>
    %99 = vector.multi_reduction <add>, %98, %cst_51 [1] : vector<16x128xf32> to vector<16xf32>
    %100 = vector.shape_cast %99 : vector<16xf32> to vector<16x1xf32>
    %101 = arith.mulf %98, %98 : vector<16x128xf32>
    %cst_52 = arith.constant dense<0.000000e+00> : vector<16xf32>
    %102 = vector.multi_reduction <add>, %101, %cst_52 [1] : vector<16x128xf32> to vector<16xf32>
    %103 = vector.shape_cast %102 : vector<16xf32> to vector<16x1xf32>
    %cst_53 = arith.constant 7.812500e-03 : f32
    %104 = vector.broadcast %cst_53 : f32 to vector<16x1xf32>
    %105 = arith.mulf %100, %104 : vector<16x1xf32>
    %cst_54 = arith.constant 7.812500e-03 : f32
    %106 = vector.broadcast %cst_54 : f32 to vector<16x1xf32>
    %107 = arith.mulf %103, %106 : vector<16x1xf32>
    %108 = arith.mulf %105, %105 : vector<16x1xf32>
    %109 = arith.subf %107, %108 : vector<16x1xf32>
    %c0_55 = arith.constant 0 : index
    %c0_56 = arith.constant 0 : index
    %110 = vector.load %arg10[%c0_55, %c0_56] : memref<16x1xf32, #tpu.memory_space<vmem>>, vector<16x1xf32>
    %cst_57 = arith.constant 9.99999974E-6 : f32
    %111 = vector.broadcast %cst_57 : f32 to vector<16x1xf32>
    %112 = arith.addf %109, %111 : vector<16x1xf32>
    %113 = math.rsqrt %112 : vector<16x1xf32>
    %114 = arith.mulf %110, %113 : vector<16x1xf32>
    %c0_58 = arith.constant 0 : index
    %c0_59 = arith.constant 0 : index
    %115 = vector.load %arg11[%c0_58, %c0_59] : memref<16x1xf32, #tpu.memory_space<vmem>>, vector<16x1xf32>
    %116 = arith.mulf %105, %114 : vector<16x1xf32>
    %117 = arith.subf %115, %116 : vector<16x1xf32>
    %118 = vector.broadcast %114 : vector<16x1xf32> to vector<16x128xf32>
    %119 = arith.mulf %98, %118 : vector<16x128xf32>
    %120 = vector.broadcast %117 : vector<16x1xf32> to vector<16x128xf32>
    %121 = arith.addf %119, %120 : vector<16x128xf32>
    %cst_60 = arith.constant 0.000000e+00 : f32
    %122 = vector.broadcast %cst_60 : f32 to vector<16x128xf32>
    %123 = arith.maximumf %121, %122 : vector<16x128xf32>
    %124 = arith.addf %123, %0 : vector<16x128xf32>
    %c0_61 = arith.constant 0 : index
    %c0_62 = arith.constant 0 : index
    %125 = vector.load %arg12[%c0_61, %c0_62] : memref<16x128xf32, #tpu.memory_space<vmem>>, vector<16x128xf32>
    tpu.vector_store %arg12[%c0_61, %c0_62], %124 {strides = array<i32>} : memref<16x128xf32, #tpu.memory_space<vmem>>, vector<16x128xf32>,
    return
  }
  func.func @transform_0(%arg0: i32) -> (i32, i32) {
    %c0_i32 = arith.constant 0 : i32
    %c0_i32_0 = arith.constant 0 : i32
    %c0_i32_1 = arith.constant 0 : i32
    return %c0_i32, %c0_i32_0 : i32, i32
  }
  func.func @transform_1(%arg0: i32) -> (i32, i32) {
    %c0_i32 = arith.constant 0 : i32
    %c0_i32_0 = arith.constant 0 : i32
    %c0_i32_1 = arith.constant 0 : i32
    return %c0_i32, %c0_i32_0 : i32, i32
  }
  func.func @transform_2(%arg0: i32) -> (i32, i32) {
    %c0_i32 = arith.constant 0 : i32
    %c0_i32_0 = arith.constant 0 : i32
    %c0_i32_1 = arith.constant 0 : i32
    return %c0_i32, %c0_i32_0 : i32, i32
  }
  func.func @transform_3(%arg0: i32) -> (i32, i32) {
    %c0_i32 = arith.constant 0 : i32
    %c0_i32_0 = arith.constant 0 : i32
    %c0_i32_1 = arith.constant 0 : i32
    return %c0_i32, %c0_i32_0 : i32, i32
  }
  func.func @transform_4(%arg0: i32) -> (i32, i32) {
    %c0_i32 = arith.constant 0 : i32
    %c0_i32_0 = arith.constant 0 : i32
    %c0_i32_1 = arith.constant 0 : i32
    return %c0_i32, %c0_i32_0 : i32, i32
  }
  func.func @transform_5(%arg0: i32) -> (i32, i32) {
    %c0_i32 = arith.constant 0 : i32
    %c0_i32_0 = arith.constant 0 : i32
    %c0_i32_1 = arith.constant 0 : i32
    return %c0_i32, %c0_i32_0 : i32, i32
  }
  func.func @transform_6(%arg0: i32) -> (i32, i32) {
    %c0_i32 = arith.constant 0 : i32
    %c0_i32_0 = arith.constant 0 : i32
    %c0_i32_1 = arith.constant 0 : i32
    return %c0_i32, %c0_i32_0 : i32, i32
  }
  func.func @transform_7(%arg0: i32) -> (i32, i32) {
    %c0_i32 = arith.constant 0 : i32
    %c0_i32_0 = arith.constant 0 : i32
    %c0_i32_1 = arith.constant 0 : i32
    return %c0_i32, %c0_i32_0 : i32, i32
  }
  func.func @transform_8(%arg0: i32) -> (i32, i32) {
    %c0_i32 = arith.constant 0 : i32
    %c0_i32_0 = arith.constant 0 : i32
    %c0_i32_1 = arith.constant 0 : i32
    return %c0_i32, %c0_i32_0 : i32, i32
  }
  func.func @transform_9(%arg0: i32) -> (i32, i32) {
    %c0_i32 = arith.constant 0 : i32
    %c0_i32_0 = arith.constant 0 : i32
    %c0_i32_1 = arith.constant 0 : i32
    return %c0_i32, %c0_i32_0 : i32, i32
  }
  func.func @transform_10(%arg0: i32) -> (i32, i32) {
    %c0_i32 = arith.constant 0 : i32
    %c0_i32_0 = arith.constant 0 : i32
    %c0_i32_1 = arith.constant 0 : i32
    return %c0_i32, %c0_i32_0 : i32, i32
  }
  func.func @transform_11(%arg0: i32) -> (i32, i32) {
    %c0_i32 = arith.constant 0 : i32
    %c0_i32_0 = arith.constant 0 : i32
    %c0_i32_1 = arith.constant 0 : i32
    return %c0_i32, %c0_i32_0 : i32, i32
  }
}

module attributes {stable_mosaic.version = 11 : i64} {
  func.func @kernel(%arg0: i32, %arg1: memref<16x2048xf32, #tpu.memory_space<vmem>>, %arg2: memref<9x2048xf32, #tpu.memory_space<vmem>>, %arg3: memref<8x16xf32, #tpu.memory_space<vmem>>, %arg4: memref<8x1xf32, #tpu.memory_space<vmem>>, %arg5: memref<8x1xf32, #tpu.memory_space<vmem>>, %arg6: memref<8x72xf32, #tpu.memory_space<vmem>>, %arg7: memref<8x1xf32, #tpu.memory_space<vmem>>, %arg8: memref<8x1xf32, #tpu.memory_space<vmem>>, %arg9: memref<16x8xf32, #tpu.memory_space<vmem>>, %arg10: memref<16x1xf32, #tpu.memory_space<vmem>>, %arg11: memref<16x1xf32, #tpu.memory_space<vmem>>, %arg12: memref<16x2048xf32, #tpu.memory_space<vmem>>, %arg13: memref<72x2048xf32, #tpu.memory_space<vmem>>) attributes {dimension_semantics = [#tpu.dimension_semantics<arbitrary>], iteration_bounds = array<i64: 1>, scalar_prefetch = 0 : i64, scratch_operands = 1 : i64, tpu.core_type = #tpu.core_type<tc>, window_params = [{pipeline_mode = #tpu.pipeline_mode<synchronous>, transform_indices = @transform_0, window_bounds = array<i64: 16, 2048>}, {pipeline_mode = #tpu.pipeline_mode<synchronous>, transform_indices = @transform_1, window_bounds = array<i64: 9, 2048>}, {pipeline_mode = #tpu.pipeline_mode<synchronous>, transform_indices = @transform_2, window_bounds = array<i64: 8, 16>}, {pipeline_mode = #tpu.pipeline_mode<synchronous>, transform_indices = @transform_3, window_bounds = array<i64: 8, 1>}, {pipeline_mode = #tpu.pipeline_mode<synchronous>, transform_indices = @transform_4, window_bounds = array<i64: 8, 1>}, {pipeline_mode = #tpu.pipeline_mode<synchronous>, transform_indices = @transform_5, window_bounds = array<i64: 8, 72>}, {pipeline_mode = #tpu.pipeline_mode<synchronous>, transform_indices = @transform_6, window_bounds = array<i64: 8, 1>}, {pipeline_mode = #tpu.pipeline_mode<synchronous>, transform_indices = @transform_7, window_bounds = array<i64: 8, 1>}, {pipeline_mode = #tpu.pipeline_mode<synchronous>, transform_indices = @transform_8, window_bounds = array<i64: 16, 8>}, {pipeline_mode = #tpu.pipeline_mode<synchronous>, transform_indices = @transform_9, window_bounds = array<i64: 16, 1>}, {pipeline_mode = #tpu.pipeline_mode<synchronous>, transform_indices = @transform_10, window_bounds = array<i64: 16, 1>}, {pipeline_mode = #tpu.pipeline_mode<synchronous>, transform_indices = @transform_11, window_bounds = array<i64: 16, 2048>}]} {
    %c0 = arith.constant 0 : index
    %c0_0 = arith.constant 0 : index
    %0 = vector.load %arg1[%c0, %c0_0] : memref<16x2048xf32, #tpu.memory_space<vmem>>, vector<16x2048xf32>
    %c0_1 = arith.constant 0 : index
    %c0_2 = arith.constant 0 : index
    %1 = vector.load %arg3[%c0_1, %c0_2] : memref<8x16xf32, #tpu.memory_space<vmem>>, vector<8x16xf32>
    %cst = arith.constant dense<0.000000e+00> : vector<8x2048xf32>
    %2 = tpu.matmul %1, %0, %cst {dimension_numbers = #tpu.dot_dimension_numbers<[1], [0], [0], [1], [0, 0, 1, 1], [], []>} : vector<8x16xf32>, vector<16x2048xf32>, vector<8x2048xf32> -> vector<8x2048xf32>
    %cst_3 = arith.constant dense<0.000000e+00> : vector<8xf32>
    %3 = vector.multi_reduction <add>, %2, %cst_3 [1] : vector<8x2048xf32> to vector<8xf32>
    %4 = vector.shape_cast %3 : vector<8xf32> to vector<8x1xf32>
    %5 = arith.mulf %2, %2 : vector<8x2048xf32>
    %cst_4 = arith.constant dense<0.000000e+00> : vector<8xf32>
    %6 = vector.multi_reduction <add>, %5, %cst_4 [1] : vector<8x2048xf32> to vector<8xf32>
    %7 = vector.shape_cast %6 : vector<8xf32> to vector<8x1xf32>
    %cst_5 = arith.constant 4.8828125E-4 : f32
    %8 = vector.broadcast %cst_5 : f32 to vector<8x1xf32>
    %9 = arith.mulf %4, %8 : vector<8x1xf32>
    %cst_6 = arith.constant 4.8828125E-4 : f32
    %10 = vector.broadcast %cst_6 : f32 to vector<8x1xf32>
    %11 = arith.mulf %7, %10 : vector<8x1xf32>
    %12 = arith.mulf %9, %9 : vector<8x1xf32>
    %13 = arith.subf %11, %12 : vector<8x1xf32>
    %c0_7 = arith.constant 0 : index
    %c0_8 = arith.constant 0 : index
    %14 = vector.load %arg4[%c0_7, %c0_8] : memref<8x1xf32, #tpu.memory_space<vmem>>, vector<8x1xf32>
    %cst_9 = arith.constant 9.99999974E-6 : f32
    %15 = vector.broadcast %cst_9 : f32 to vector<8x1xf32>
    %16 = arith.addf %13, %15 : vector<8x1xf32>
    %17 = math.rsqrt %16 : vector<8x1xf32>
    %18 = arith.mulf %14, %17 : vector<8x1xf32>
    %c0_10 = arith.constant 0 : index
    %c0_11 = arith.constant 0 : index
    %19 = vector.load %arg5[%c0_10, %c0_11] : memref<8x1xf32, #tpu.memory_space<vmem>>, vector<8x1xf32>
    %20 = arith.mulf %9, %18 : vector<8x1xf32>
    %21 = arith.subf %19, %20 : vector<8x1xf32>
    %22 = vector.broadcast %18 : vector<8x1xf32> to vector<8x2048xf32>
    %23 = arith.mulf %2, %22 : vector<8x2048xf32>
    %24 = vector.broadcast %21 : vector<8x1xf32> to vector<8x2048xf32>
    %25 = arith.addf %23, %24 : vector<8x2048xf32>
    %cst_12 = arith.constant 0.000000e+00 : f32
    %26 = vector.broadcast %cst_12 : f32 to vector<8x2048xf32>
    %27 = arith.maximumf %25, %26 : vector<8x2048xf32>
    %c33_i32 = arith.constant 33 : i32
    %28 = tpu.dynamic_rotate %27 by %c33_i32 dim 1 : vector<8x2048xf32>, i32 -> vector<8x2048xf32>
    %c0_13 = arith.constant 0 : index
    %c0_14 = arith.constant 0 : index
    %29 = vector.load %arg2[%c0_13, %c0_14] : memref<9x2048xf32, #tpu.memory_space<vmem>>, vector<1x2048xf32>
    %30 = vector.broadcast %29 : vector<1x2048xf32> to vector<8x2048xf32>
    %31 = arith.mulf %28, %30 : vector<8x2048xf32>
    %c0_15 = arith.constant 0 : index
    %c0_16 = arith.constant 0 : index
    %32 = vector.load %arg13[%c0_15, %c0_16] : memref<72x2048xf32, #tpu.memory_space<vmem>>, vector<8x2048xf32>
    tpu.vector_store %arg13[%c0_15, %c0_16], %31 {strides = array<i32>} : memref<72x2048xf32, #tpu.memory_space<vmem>>, vector<8x2048xf32>,
    %c32_i32 = arith.constant 32 : i32
    %33 = tpu.dynamic_rotate %27 by %c32_i32 dim 1 : vector<8x2048xf32>, i32 -> vector<8x2048xf32>
    %c1 = arith.constant 1 : index
    %c0_17 = arith.constant 0 : index
    %34 = vector.load %arg2[%c1, %c0_17] : memref<9x2048xf32, #tpu.memory_space<vmem>>, vector<1x2048xf32>
    %35 = vector.broadcast %34 : vector<1x2048xf32> to vector<8x2048xf32>
    %36 = arith.mulf %33, %35 : vector<8x2048xf32>
    %c8 = arith.constant 8 : index
    %c0_18 = arith.constant 0 : index
    %37 = vector.load %arg13[%c8, %c0_18] : memref<72x2048xf32, #tpu.memory_space<vmem>>, vector<8x2048xf32>
    tpu.vector_store %arg13[%c8, %c0_18], %36 {strides = array<i32>} : memref<72x2048xf32, #tpu.memory_space<vmem>>, vector<8x2048xf32>,
    %c31_i32 = arith.constant 31 : i32
    %38 = tpu.dynamic_rotate %27 by %c31_i32 dim 1 : vector<8x2048xf32>, i32 -> vector<8x2048xf32>
    %c2 = arith.constant 2 : index
    %c0_19 = arith.constant 0 : index
    %39 = vector.load %arg2[%c2, %c0_19] : memref<9x2048xf32, #tpu.memory_space<vmem>>, vector<1x2048xf32>
    %40 = vector.broadcast %39 : vector<1x2048xf32> to vector<8x2048xf32>
    %41 = arith.mulf %38, %40 : vector<8x2048xf32>
    %c16 = arith.constant 16 : index
    %c0_20 = arith.constant 0 : index
    %42 = vector.load %arg13[%c16, %c0_20] : memref<72x2048xf32, #tpu.memory_space<vmem>>, vector<8x2048xf32>
    tpu.vector_store %arg13[%c16, %c0_20], %41 {strides = array<i32>} : memref<72x2048xf32, #tpu.memory_space<vmem>>, vector<8x2048xf32>,
    %c1_i32 = arith.constant 1 : i32
    %43 = tpu.dynamic_rotate %27 by %c1_i32 dim 1 : vector<8x2048xf32>, i32 -> vector<8x2048xf32>
    %c3 = arith.constant 3 : index
    %c0_21 = arith.constant 0 : index
    %44 = vector.load %arg2[%c3, %c0_21] : memref<9x2048xf32, #tpu.memory_space<vmem>>, vector<1x2048xf32>
    %45 = vector.broadcast %44 : vector<1x2048xf32> to vector<8x2048xf32>
    %46 = arith.mulf %43, %45 : vector<8x2048xf32>
    %c24 = arith.constant 24 : index
    %c0_22 = arith.constant 0 : index
    %47 = vector.load %arg13[%c24, %c0_22] : memref<72x2048xf32, #tpu.memory_space<vmem>>, vector<8x2048xf32>
    tpu.vector_store %arg13[%c24, %c0_22], %46 {strides = array<i32>} : memref<72x2048xf32, #tpu.memory_space<vmem>>, vector<8x2048xf32>,
    %c32 = arith.constant 32 : index
    %c0_23 = arith.constant 0 : index
    %48 = vector.load %arg13[%c32, %c0_23] : memref<72x2048xf32, #tpu.memory_space<vmem>>, vector<8x2048xf32>
    tpu.vector_store %arg13[%c32, %c0_23], %27 {strides = array<i32>} : memref<72x2048xf32, #tpu.memory_space<vmem>>, vector<8x2048xf32>,
    %c2047_i32 = arith.constant 2047 : i32
    %49 = tpu.dynamic_rotate %27 by %c2047_i32 dim 1 : vector<8x2048xf32>, i32 -> vector<8x2048xf32>
    %c5 = arith.constant 5 : index
    %c0_24 = arith.constant 0 : index
    %50 = vector.load %arg2[%c5, %c0_24] : memref<9x2048xf32, #tpu.memory_space<vmem>>, vector<1x2048xf32>
    %51 = vector.broadcast %50 : vector<1x2048xf32> to vector<8x2048xf32>
    %52 = arith.mulf %49, %51 : vector<8x2048xf32>
    %c40 = arith.constant 40 : index
    %c0_25 = arith.constant 0 : index
    %53 = vector.load %arg13[%c40, %c0_25] : memref<72x2048xf32, #tpu.memory_space<vmem>>, vector<8x2048xf32>
    tpu.vector_store %arg13[%c40, %c0_25], %52 {strides = array<i32>} : memref<72x2048xf32, #tpu.memory_space<vmem>>, vector<8x2048xf32>,
    %c2017_i32 = arith.constant 2017 : i32
    %54 = tpu.dynamic_rotate %27 by %c2017_i32 dim 1 : vector<8x2048xf32>, i32 -> vector<8x2048xf32>
    %c6 = arith.constant 6 : index
    %c0_26 = arith.constant 0 : index
    %55 = vector.load %arg2[%c6, %c0_26] : memref<9x2048xf32, #tpu.memory_space<vmem>>, vector<1x2048xf32>
    %56 = vector.broadcast %55 : vector<1x2048xf32> to vector<8x2048xf32>
    %57 = arith.mulf %54, %56 : vector<8x2048xf32>
    %c48 = arith.constant 48 : index
    %c0_27 = arith.constant 0 : index
    %58 = vector.load %arg13[%c48, %c0_27] : memref<72x2048xf32, #tpu.memory_space<vmem>>, vector<8x2048xf32>
    tpu.vector_store %arg13[%c48, %c0_27], %57 {strides = array<i32>} : memref<72x2048xf32, #tpu.memory_space<vmem>>, vector<8x2048xf32>,
    %c2016_i32 = arith.constant 2016 : i32
    %59 = tpu.dynamic_rotate %27 by %c2016_i32 dim 1 : vector<8x2048xf32>, i32 -> vector<8x2048xf32>
    %c7 = arith.constant 7 : index
    %c0_28 = arith.constant 0 : index
    %60 = vector.load %arg2[%c7, %c0_28] : memref<9x2048xf32, #tpu.memory_space<vmem>>, vector<1x2048xf32>
    %61 = vector.broadcast %60 : vector<1x2048xf32> to vector<8x2048xf32>
    %62 = arith.mulf %59, %61 : vector<8x2048xf32>
    %c56 = arith.constant 56 : index
    %c0_29 = arith.constant 0 : index
    %63 = vector.load %arg13[%c56, %c0_29] : memref<72x2048xf32, #tpu.memory_space<vmem>>, vector<8x2048xf32>
    tpu.vector_store %arg13[%c56, %c0_29], %62 {strides = array<i32>} : memref<72x2048xf32, #tpu.memory_space<vmem>>, vector<8x2048xf32>,
    %c2015_i32 = arith.constant 2015 : i32
    %64 = tpu.dynamic_rotate %27 by %c2015_i32 dim 1 : vector<8x2048xf32>, i32 -> vector<8x2048xf32>
    %c8_30 = arith.constant 8 : index
    %c0_31 = arith.constant 0 : index
    %65 = vector.load %arg2[%c8_30, %c0_31] : memref<9x2048xf32, #tpu.memory_space<vmem>>, vector<1x2048xf32>
    %66 = vector.broadcast %65 : vector<1x2048xf32> to vector<8x2048xf32>
    %67 = arith.mulf %64, %66 : vector<8x2048xf32>
    %c64 = arith.constant 64 : index
    %c0_32 = arith.constant 0 : index
    %68 = vector.load %arg13[%c64, %c0_32] : memref<72x2048xf32, #tpu.memory_space<vmem>>, vector<8x2048xf32>
    tpu.vector_store %arg13[%c64, %c0_32], %67 {strides = array<i32>} : memref<72x2048xf32, #tpu.memory_space<vmem>>, vector<8x2048xf32>,
    %c0_33 = arith.constant 0 : index
    %c0_34 = arith.constant 0 : index
    %69 = vector.load %arg6[%c0_33, %c0_34] : memref<8x72xf32, #tpu.memory_space<vmem>>, vector<8x72xf32>
    %c0_35 = arith.constant 0 : index
    %c0_36 = arith.constant 0 : index
    %70 = vector.load %arg13[%c0_35, %c0_36] : memref<72x2048xf32, #tpu.memory_space<vmem>>, vector<72x2048xf32>
    %cst_37 = arith.constant dense<0.000000e+00> : vector<8x2048xf32>
    %71 = tpu.matmul %69, %70, %cst_37 {dimension_numbers = #tpu.dot_dimension_numbers<[1], [0], [0], [1], [0, 0, 1, 1], [], []>} : vector<8x72xf32>, vector<72x2048xf32>, vector<8x2048xf32> -> vector<8x2048xf32>
    %cst_38 = arith.constant dense<0.000000e+00> : vector<8xf32>
    %72 = vector.multi_reduction <add>, %71, %cst_38 [1] : vector<8x2048xf32> to vector<8xf32>
    %73 = vector.shape_cast %72 : vector<8xf32> to vector<8x1xf32>
    %74 = arith.mulf %71, %71 : vector<8x2048xf32>
    %cst_39 = arith.constant dense<0.000000e+00> : vector<8xf32>
    %75 = vector.multi_reduction <add>, %74, %cst_39 [1] : vector<8x2048xf32> to vector<8xf32>
    %76 = vector.shape_cast %75 : vector<8xf32> to vector<8x1xf32>
    %cst_40 = arith.constant 4.8828125E-4 : f32
    %77 = vector.broadcast %cst_40 : f32 to vector<8x1xf32>
    %78 = arith.mulf %73, %77 : vector<8x1xf32>
    %cst_41 = arith.constant 4.8828125E-4 : f32
    %79 = vector.broadcast %cst_41 : f32 to vector<8x1xf32>
    %80 = arith.mulf %76, %79 : vector<8x1xf32>
    %81 = arith.mulf %78, %78 : vector<8x1xf32>
    %82 = arith.subf %80, %81 : vector<8x1xf32>
    %c0_42 = arith.constant 0 : index
    %c0_43 = arith.constant 0 : index
    %83 = vector.load %arg7[%c0_42, %c0_43] : memref<8x1xf32, #tpu.memory_space<vmem>>, vector<8x1xf32>
    %cst_44 = arith.constant 9.99999974E-6 : f32
    %84 = vector.broadcast %cst_44 : f32 to vector<8x1xf32>
    %85 = arith.addf %82, %84 : vector<8x1xf32>
    %86 = math.rsqrt %85 : vector<8x1xf32>
    %87 = arith.mulf %83, %86 : vector<8x1xf32>
    %c0_45 = arith.constant 0 : index
    %c0_46 = arith.constant 0 : index
    %88 = vector.load %arg8[%c0_45, %c0_46] : memref<8x1xf32, #tpu.memory_space<vmem>>, vector<8x1xf32>
    %89 = arith.mulf %78, %87 : vector<8x1xf32>
    %90 = arith.subf %88, %89 : vector<8x1xf32>
    %91 = vector.broadcast %87 : vector<8x1xf32> to vector<8x2048xf32>
    %92 = arith.mulf %71, %91 : vector<8x2048xf32>
    %93 = vector.broadcast %90 : vector<8x1xf32> to vector<8x2048xf32>
    %94 = arith.addf %92, %93 : vector<8x2048xf32>
    %cst_47 = arith.constant 0.000000e+00 : f32
    %95 = vector.broadcast %cst_47 : f32 to vector<8x2048xf32>
    %96 = arith.maximumf %94, %95 : vector<8x2048xf32>
    %c0_48 = arith.constant 0 : index
    %c0_49 = arith.constant 0 : index
    %97 = vector.load %arg9[%c0_48, %c0_49] : memref<16x8xf32, #tpu.memory_space<vmem>>, vector<16x8xf32>
    %cst_50 = arith.constant dense<0.000000e+00> : vector<16x2048xf32>
    %98 = tpu.matmul %97, %96, %cst_50 {dimension_numbers = #tpu.dot_dimension_numbers<[1], [0], [0], [1], [0, 0, 1, 1], [], []>} : vector<16x8xf32>, vector<8x2048xf32>, vector<16x2048xf32> -> vector<16x2048xf32>
    %cst_51 = arith.constant dense<0.000000e+00> : vector<16xf32>
    %99 = vector.multi_reduction <add>, %98, %cst_51 [1] : vector<16x2048xf32> to vector<16xf32>
    %100 = vector.shape_cast %99 : vector<16xf32> to vector<16x1xf32>
    %101 = arith.mulf %98, %98 : vector<16x2048xf32>
    %cst_52 = arith.constant dense<0.000000e+00> : vector<16xf32>
    %102 = vector.multi_reduction <add>, %101, %cst_52 [1] : vector<16x2048xf32> to vector<16xf32>
    %103 = vector.shape_cast %102 : vector<16xf32> to vector<16x1xf32>
    %cst_53 = arith.constant 4.8828125E-4 : f32
    %104 = vector.broadcast %cst_53 : f32 to vector<16x1xf32>
    %105 = arith.mulf %100, %104 : vector<16x1xf32>
    %cst_54 = arith.constant 4.8828125E-4 : f32
    %106 = vector.broadcast %cst_54 : f32 to vector<16x1xf32>
    %107 = arith.mulf %103, %106 : vector<16x1xf32>
    %108 = arith.mulf %105, %105 : vector<16x1xf32>
    %109 = arith.subf %107, %108 : vector<16x1xf32>
    %c0_55 = arith.constant 0 : index
    %c0_56 = arith.constant 0 : index
    %110 = vector.load %arg10[%c0_55, %c0_56] : memref<16x1xf32, #tpu.memory_space<vmem>>, vector<16x1xf32>
    %cst_57 = arith.constant 9.99999974E-6 : f32
    %111 = vector.broadcast %cst_57 : f32 to vector<16x1xf32>
    %112 = arith.addf %109, %111 : vector<16x1xf32>
    %113 = math.rsqrt %112 : vector<16x1xf32>
    %114 = arith.mulf %110, %113 : vector<16x1xf32>
    %c0_58 = arith.constant 0 : index
    %c0_59 = arith.constant 0 : index
    %115 = vector.load %arg11[%c0_58, %c0_59] : memref<16x1xf32, #tpu.memory_space<vmem>>, vector<16x1xf32>
    %116 = arith.mulf %105, %114 : vector<16x1xf32>
    %117 = arith.subf %115, %116 : vector<16x1xf32>
    %118 = vector.broadcast %114 : vector<16x1xf32> to vector<16x2048xf32>
    %119 = arith.mulf %98, %118 : vector<16x2048xf32>
    %120 = vector.broadcast %117 : vector<16x1xf32> to vector<16x2048xf32>
    %121 = arith.addf %119, %120 : vector<16x2048xf32>
    %cst_60 = arith.constant 0.000000e+00 : f32
    %122 = vector.broadcast %cst_60 : f32 to vector<16x2048xf32>
    %123 = arith.maximumf %121, %122 : vector<16x2048xf32>
    %124 = arith.addf %123, %0 : vector<16x2048xf32>
    %c0_61 = arith.constant 0 : index
    %c0_62 = arith.constant 0 : index
    %125 = vector.load %arg12[%c0_61, %c0_62] : memref<16x2048xf32, #tpu.memory_space<vmem>>, vector<16x2048xf32>
    tpu.vector_store %arg12[%c0_61, %c0_62], %124 {strides = array<i32>} : memref<16x2048xf32, #tpu.memory_space<vmem>>, vector<16x2048xf32>,
    return
  }
  func.func @transform_0(%arg0: i32) -> (i32, i32) {
    %c0_i32 = arith.constant 0 : i32
    %c0_i32_0 = arith.constant 0 : i32
    %c0_i32_1 = arith.constant 0 : i32
    return %c0_i32, %c0_i32_0 : i32, i32
  }
  func.func @transform_1(%arg0: i32) -> (i32, i32) {
    %c0_i32 = arith.constant 0 : i32
    %c0_i32_0 = arith.constant 0 : i32
    %c0_i32_1 = arith.constant 0 : i32
    return %c0_i32, %c0_i32_0 : i32, i32
  }
  func.func @transform_2(%arg0: i32) -> (i32, i32) {
    %c0_i32 = arith.constant 0 : i32
    %c0_i32_0 = arith.constant 0 : i32
    %c0_i32_1 = arith.constant 0 : i32
    return %c0_i32, %c0_i32_0 : i32, i32
  }
  func.func @transform_3(%arg0: i32) -> (i32, i32) {
    %c0_i32 = arith.constant 0 : i32
    %c0_i32_0 = arith.constant 0 : i32
    %c0_i32_1 = arith.constant 0 : i32
    return %c0_i32, %c0_i32_0 : i32, i32
  }
  func.func @transform_4(%arg0: i32) -> (i32, i32) {
    %c0_i32 = arith.constant 0 : i32
    %c0_i32_0 = arith.constant 0 : i32
    %c0_i32_1 = arith.constant 0 : i32
    return %c0_i32, %c0_i32_0 : i32, i32
  }
  func.func @transform_5(%arg0: i32) -> (i32, i32) {
    %c0_i32 = arith.constant 0 : i32
    %c0_i32_0 = arith.constant 0 : i32
    %c0_i32_1 = arith.constant 0 : i32
    return %c0_i32, %c0_i32_0 : i32, i32
  }
  func.func @transform_6(%arg0: i32) -> (i32, i32) {
    %c0_i32 = arith.constant 0 : i32
    %c0_i32_0 = arith.constant 0 : i32
    %c0_i32_1 = arith.constant 0 : i32
    return %c0_i32, %c0_i32_0 : i32, i32
  }
  func.func @transform_7(%arg0: i32) -> (i32, i32) {
    %c0_i32 = arith.constant 0 : i32
    %c0_i32_0 = arith.constant 0 : i32
    %c0_i32_1 = arith.constant 0 : i32
    return %c0_i32, %c0_i32_0 : i32, i32
  }
  func.func @transform_8(%arg0: i32) -> (i32, i32) {
    %c0_i32 = arith.constant 0 : i32
    %c0_i32_0 = arith.constant 0 : i32
    %c0_i32_1 = arith.constant 0 : i32
    return %c0_i32, %c0_i32_0 : i32, i32
  }
  func.func @transform_9(%arg0: i32) -> (i32, i32) {
    %c0_i32 = arith.constant 0 : i32
    %c0_i32_0 = arith.constant 0 : i32
    %c0_i32_1 = arith.constant 0 : i32
    return %c0_i32, %c0_i32_0 : i32, i32
  }
  func.func @transform_10(%arg0: i32) -> (i32, i32) {
    %c0_i32 = arith.constant 0 : i32
    %c0_i32_0 = arith.constant 0 : i32
    %c0_i32_1 = arith.constant 0 : i32
    return %c0_i32, %c0_i32_0 : i32, i32
  }
  func.func @transform_11(%arg0: i32) -> (i32, i32) {
    %c0_i32 = arith.constant 0 : i32
    %c0_i32_0 = arith.constant 0 : i32
    %c0_i32_1 = arith.constant 0 : i32
    return %c0_i32, %c0_i32_0 : i32, i32
  }
}

</mosaic_0001>

<llo_original>
// kernel: hourglass_forward.8
$region0: #{hourglass_forward.8}
  #allocation0 [shape = 'u32[]', space=smem, size = 0x4, offset = 0x4, fixed_abs, tag = 'smem constant byte address 0x4 - core index']
  #allocation1 [shape = 'u32[144,128]{1,0:T(1,128)}', space=vmem, size = 0x12000, scoped, tag = 'internal scratch']
  #allocation2 [shape = 'f32[72,512]{1,0:T(8,128)}', space=vmem, size = 0x24000, scoped, tag = 'scratch operand']
  %s0 = inlined_call_operand.vmem [shape: f32[16,512], index: 0, kind: input, shape index: {}]
  %s1 = inlined_call_operand.vmem [shape: f32[9,512], index: 1, kind: input, shape index: {}]
  %s2 = inlined_call_operand.vmem [shape: f32[8,16], index: 2, kind: input, shape index: {}]
  %s3 = inlined_call_operand.vmem [shape: f32[8,1], index: 3, kind: input, shape index: {}]
  %s4 = inlined_call_operand.vmem [shape: f32[8,1], index: 4, kind: input, shape index: {}]
  %s5 = inlined_call_operand.vmem [shape: f32[8,72], index: 5, kind: input, shape index: {}]
  %s6 = inlined_call_operand.vmem [shape: f32[8,1], index: 6, kind: input, shape index: {}]
  %s7 = inlined_call_operand.vmem [shape: f32[8,1], index: 7, kind: input, shape index: {}]
  %s8 = inlined_call_operand.vmem [shape: f32[16,8], index: 8, kind: input, shape index: {}]
  %s9 = inlined_call_operand.vmem [shape: f32[16,1], index: 9, kind: input, shape index: {}]
  %s10 = inlined_call_operand.vmem [shape: f32[16,1], index: 10, kind: input, shape index: {}]
  %s11 = inlined_call_operand.vmem [shape: f32[16,512], index: 11, kind: output, shape index: {}]
  %s12 = sld [smem:[#allocation0]]
  $region54: #{hourglass_forward.8} parent=0
    _
  %s14 = ssub.s32 1, %s12
  %s15 = scalar_select 0, %s14, %s12
  // Predicated region
  $region2: #{hourglass_forward.8} parent=0 // pred_check
    _
  $region3: #{hourglass_forward.8} parent=0 // pred_check_branch
    %17 = sbr.rel (0) target = $region5
  $region4: #{hourglass_forward.8} parent=0 // pred_region
    _
  $region5: #{hourglass_forward.8} parent=0 // pred_fallthru
    _
  // Predicated region
  $region6: #{hourglass_forward.8} parent=0 // pred_check
    _
  $region7: #{hourglass_forward.8} parent=0 // pred_check_branch
    %19 = sbr.rel (0) target = $region9
  $region8: #{hourglass_forward.8} parent=0 // pred_region
    _
  $region9: #{hourglass_forward.8} parent=0 // pred_fallthru
    _
  // Predicated region
  $region10: #{hourglass_forward.8} parent=0 // pred_check
    _
  $region11: #{hourglass_forward.8} parent=0 // pred_check_branch
    %21 = sbr.rel (0) target = $region13
  $region12: #{hourglass_forward.8} parent=0 // pred_region
    _
  $region13: #{hourglass_forward.8} parent=0 // pred_fallthru
    _
  // Predicated region
  $region14: #{hourglass_forward.8} parent=0 // pred_check
    _
  $region15: #{hourglass_forward.8} parent=0 // pred_check_branch
    %23 = sbr.rel (0) target = $region17
  $region16: #{hourglass_forward.8} parent=0 // pred_region
    _
  $region17: #{hourglass_forward.8} parent=0 // pred_fallthru
    _
  // Predicated region
  $region18: #{hourglass_forward.8} parent=0 // pred_check
    _
  $region19: #{hourglass_forward.8} parent=0 // pred_check_branch
    %25 = sbr.rel (0) target = $region21
  $region20: #{hourglass_forward.8} parent=0 // pred_region
    _
  $region21: #{hourglass_forward.8} parent=0 // pred_fallthru
    _
  // Predicated region
  $region22: #{hourglass_forward.8} parent=0 // pred_check
    _
  $region23: #{hourglass_forward.8} parent=0 // pred_check_branch
    %27 = sbr.rel (0) target = $region25
  $region24: #{hourglass_forward.8} parent=0 // pred_region
    _
  $region25: #{hourglass_forward.8} parent=0 // pred_fallthru
    _
  // Predicated region
  $region26: #{hourglass_forward.8} parent=0 // pred_check
    _
  $region27: #{hourglass_forward.8} parent=0 // pred_check_branch
    %29 = sbr.rel (0) target = $region29
  $region28: #{hourglass_forward.8} parent=0 // pred_region
    _
  $region29: #{hourglass_forward.8} parent=0 // pred_fallthru
    _
  // Predicated region
  $region30: #{hourglass_forward.8} parent=0 // pred_check
    _
  $region31: #{hourglass_forward.8} parent=0 // pred_check_branch
    %31 = sbr.rel (0) target = $region33
  $region32: #{hourglass_forward.8} parent=0 // pred_region
    _
  $region33: #{hourglass_forward.8} parent=0 // pred_fallthru
    _
  // Predicated region
  $region34: #{hourglass_forward.8} parent=0 // pred_check
    _
  $region35: #{hourglass_forward.8} parent=0 // pred_check_branch
    %33 = sbr.rel (0) target = $region37
  $region36: #{hourglass_forward.8} parent=0 // pred_region
    _
  $region37: #{hourglass_forward.8} parent=0 // pred_fallthru
    _
  // Predicated region
  $region38: #{hourglass_forward.8} parent=0 // pred_check
    _
  $region39: #{hourglass_forward.8} parent=0 // pred_check_branch
    %35 = sbr.rel (0) target = $region41
  $region40: #{hourglass_forward.8} parent=0 // pred_region
    _
  $region41: #{hourglass_forward.8} parent=0 // pred_fallthru
    _
  // Predicated region
  $region42: #{hourglass_forward.8} parent=0 // pred_check
    _
  $region43: #{hourglass_forward.8} parent=0 // pred_check_branch
    %37 = sbr.rel (0) target = $region45
  $region44: #{hourglass_forward.8} parent=0 // pred_region
    _
  $region45: #{hourglass_forward.8} parent=0 // pred_fallthru
    _
  %v38 = vld [vmem:[%s0] sm:$0xff]
  %v39 = vld [vmem:[%s0 + $0x8] sm:$0xff]
  %v40 = vld [vmem:[%s0 + $0x10] sm:$0xff]
  %v41 = vld [vmem:[%s0 + $0x18] sm:$0xff]
  %v42 = vld [vmem:[%s0 + $0x20] sm:$0xff]
  %v43 = vld [vmem:[%s0 + $0x28] sm:$0xff]
  %v44 = vld [vmem:[%s0 + $0x30] sm:$0xff]
  %v45 = vld [vmem:[%s0 + $0x38] sm:$0xff]
  %v46 = vld [vmem:[%s2] sm:$0xff]
  %vm47 = vcmask 130048
  %v49 = vsel %vm47, %v46, 0
  %51 = vmatprep.subr.mxu0 0.0
  %52 = vmatpush1.msra.mxu0 0.0
  %53 = vmatprep.subr.mxu0 0.0
  %54 = vmatpush1.msra.mxu0 0.0
  %55 = vmatprep.subr.mxu0 0.0
  %56 = vmatpush1.msra.mxu0 0.0
  %57 = vmatprep.subr.mxu0 0.0
  %58 = vmatpush1.msra.mxu0 0.0
  %59 = vmatprep.subr.mxu0 0.0
  %60 = vmatpush1.msra.mxu0 0.0
  %61 = vmatprep.subr.mxu0 0.0
  %62 = vmatpush1.msra.mxu0 0.0
  %63 = vmatprep.subr.mxu0 0.0
  %64 = vmatpush1.msra.mxu0 0.0
  %65 = vmatprep.subr.mxu0 0.0
  %66 = vmatpush1.msra.mxu0 0.0
  %67 = vmatprep.subr.mxu0 0.0
  %68 = vmatpush1.msra.mxu0 0.0
  %69 = vmatprep.subr.mxu0 0.0
  %70 = vmatpush1.msra.mxu0 0.0
  %71 = vmatprep.subr.mxu0 0.0
  %72 = vmatpush1.msra.mxu0 0.0
  %73 = vmatprep.subr.mxu0 0.0
  %74 = vmatpush1.msra.mxu0 0.0
  %75 = vmatprep.subr.mxu0 0.0
  %76 = vmatpush1.msra.mxu0 0.0
  %77 = vmatprep.subr.mxu0 0.0
  %78 = vmatpush1.msra.mxu0 0.0
  %79 = vmatprep.subr.mxu0 %v43
  %80 = vmatpush1.msra.mxu0 %v42
  %81 = vmatprep.subr.mxu0 %v39
  %82 = vmatpush1.msra.mxu0 %v38
  %83 = vmatprep.subr.mxu0 0.0
  %84 = vmatpush2.msra.mxu0 0.0
  %85 = vmatprep.subr.mxu0 0.0
  %86 = vmatpush2.msra.mxu0 0.0
  %87 = vmatprep.subr.mxu0 0.0
  %88 = vmatpush2.msra.mxu0 0.0
  %89 = vmatprep.subr.mxu0 0.0
  %90 = vmatpush2.msra.mxu0 0.0
  %91 = vmatprep.subr.mxu0 0.0
  %92 = vmatpush2.msra.mxu0 0.0
  %93 = vmatprep.subr.mxu0 0.0
  %94 = vmatpush2.msra.mxu0 0.0
  %95 = vmatprep.subr.mxu0 0.0
  %96 = vmatpush2.msra.mxu0 0.0
  %97 = vmatprep.subr.mxu0 0.0
  %98 = vmatpush2.msra.mxu0 0.0
  %99 = vmatprep.subr.mxu0 0.0
  %100 = vmatpush2.msra.mxu0 0.0
  %101 = vmatprep.subr.mxu0 0.0
  %102 = vmatpush2.msra.mxu0 0.0
  %103 = vmatprep.subr.mxu0 0.0
  %104 = vmatpush2.msra.mxu0 0.0
  %105 = vmatprep.subr.mxu0 0.0
  %106 = vmatpush2.msra.mxu0 0.0
  %107 = vmatprep.subr.mxu0 0.0
  %108 = vmatpush2.msra.mxu0 0.0
  %109 = vmatprep.subr.mxu0 0.0
  %110 = vmatpush2.msra.mxu0 0.0
  %111 = vmatprep.subr.mxu0 0.0
  %112 = vmatpush2.msra.mxu0 0.0
  %113 = vmatprep.subr.mxu0 0.0
  %114 = vmatpush2.msra.mxu0 0.0
  %115 = vmatprep.mubr.f32.mxu0 0.0
  %116 = vmatmul.mubr.f32.gmra.mxu0 %v49
  %v117 = vpop.f32.mrf.mxu0
  %v118 = vadd.f32 0.0, %v117
  %v119 = vpop.f32.mrf.mxu0
  %v120 = vadd.f32 0.0, %v119
  %121 = vdwg.mxu0
  %122 = vmatprep.subr.mxu0 0.0
  %123 = vmatpush1.msra.mxu0 0.0
  %124 = vmatprep.subr.mxu0 0.0
  %125 = vmatpush1.msra.mxu0 0.0
  %126 = vmatprep.subr.mxu0 0.0
  %127 = vmatpush1.msra.mxu0 0.0
  %128 = vmatprep.subr.mxu0 0.0
  %129 = vmatpush1.msra.mxu0 0.0
  %130 = vmatprep.subr.mxu0 0.0
  %131 = vmatpush1.msra.mxu0 0.0
  %132 = vmatprep.subr.mxu0 0.0
  %133 = vmatpush1.msra.mxu0 0.0
  %134 = vmatprep.subr.mxu0 0.0
  %135 = vmatpush1.msra.mxu0 0.0
  %136 = vmatprep.subr.mxu0 0.0
  %137 = vmatpush1.msra.mxu0 0.0
  %138 = vmatprep.subr.mxu0 0.0
  %139 = vmatpush1.msra.mxu0 0.0
  %140 = vmatprep.subr.mxu0 0.0
  %141 = vmatpush1.msra.mxu0 0.0
  %142 = vmatprep.subr.mxu0 0.0
  %143 = vmatpush1.msra.mxu0 0.0
  %144 = vmatprep.subr.mxu0 0.0
  %145 = vmatpush1.msra.mxu0 0.0
  %146 = vmatprep.subr.mxu0 0.0
  %147 = vmatpush1.msra.mxu0 0.0
  %148 = vmatprep.subr.mxu0 0.0
  %149 = vmatpush1.msra.mxu0 0.0
  %150 = vmatprep.subr.mxu0 %v45
  %151 = vmatpush1.msra.mxu0 %v44
  %152 = vmatprep.subr.mxu0 %v41
  %153 = vmatpush1.msra.mxu0 %v40
  %154 = vmatprep.subr.mxu0 0.0
  %155 = vmatpush2.msra.mxu0 0.0
  %156 = vmatprep.subr.mxu0 0.0
  %157 = vmatpush2.msra.mxu0 0.0
  %158 = vmatprep.subr.mxu0 0.0
  %159 = vmatpush2.msra.mxu0 0.0
  %160 = vmatprep.subr.mxu0 0.0
  %161 = vmatpush2.msra.mxu0 0.0
  %162 = vmatprep.subr.mxu0 0.0
  %163 = vmatpush2.msra.mxu0 0.0
  %164 = vmatprep.subr.mxu0 0.0
  %165 = vmatpush2.msra.mxu0 0.0
  %166 = vmatprep.subr.mxu0 0.0
  %167 = vmatpush2.msra.mxu0 0.0
  %168 = vmatprep.subr.mxu0 0.0
  %169 = vmatpush2.msra.mxu0 0.0
  %170 = vmatprep.subr.mxu0 0.0
  %171 = vmatpush2.msra.mxu0 0.0
  %172 = vmatprep.subr.mxu0 0.0
  %173 = vmatpush2.msra.mxu0 0.0
  %174 = vmatprep.subr.mxu0 0.0
  %175 = vmatpush2.msra.mxu0 0.0
  %176 = vmatprep.subr.mxu0 0.0
  %177 = vmatpush2.msra.mxu0 0.0
  %178 = vmatprep.subr.mxu0 0.0
  %179 = vmatpush2.msra.mxu0 0.0
  %180 = vmatprep.subr.mxu0 0.0
  %181 = vmatpush2.msra.mxu0 0.0
  %182 = vmatprep.subr.mxu0 0.0
  %183 = vmatpush2.msra.mxu0 0.0
  %184 = vmatprep.subr.mxu0 0.0
  %185 = vmatpush2.msra.mxu0 0.0
  %186 = vmatprep.mubr.f32.mxu0 0.0
  %187 = vmatmul.mubr.f32.gmra.mxu0 %v49
  %v188 = vpop.f32.mrf.mxu0
  %v189 = vadd.f32 0.0, %v188
  %v190 = vpop.f32.mrf.mxu0
  %v191 = vadd.f32 0.0, %v190
  %192 = vdwg.mxu0
  %v193 = vadd.f32 %v118, %v120
  %v194 = vadd.f32 %v193, %v189
  %v195 = vadd.f32 %v194, %v191
  %196 = vadd.xlane.f32.xlu0 %v195
  %v197 = vpop.xlane.xlu0 %196
  %v198 = vmul.f32 %v118, %v118
  %v199 = vmul.f32 %v120, %v120
  %v200 = vmul.f32 %v189, %v189
  %v201 = vmul.f32 %v191, %v191
  %v202 = vadd.f32 %v198, %v199
  %v203 = vadd.f32 %v202, %v200
  %v204 = vadd.f32 %v203, %v201
  %205 = vadd.xlane.f32.xlu0 %v204
  %v206 = vpop.xlane.xlu0 %205
  %v207 = vmul.f32 %v197, 0.001953125
  %v208 = vmul.f32 %v206, 0.001953125
  %v209 = vmul.f32 %v207, %v207
  %v210 = vsub.f32 %v208, %v209
  %v211 = vld [vmem:[%s3] sm:$0xff]
  %v212 = vadd.f32 %v210, 1e-05
  %v213 = vrsqrt.pop %v212
  %v214 = vmul.f32 %v211, %v213
  %v215 = vld [vmem:[%s4] sm:$0xff]
  %v216 = vmul.f32 %v207, %v214
  %v217 = vsub.f32 %v215, %v216
  %219 = vset.pattern.permute.xlu0 0
  %220 = vperm.xlu0 %219, %v214
  %v221 = vpop.permute.xlu0 %220
  %v223 = vmul.f32 %v118, %v221
  %v224 = vmul.f32 %v120, %v221
  %v225 = vmul.f32 %v189, %v221
  %v226 = vmul.f32 %v191, %v221
  %228 = vset.pattern.permute.xlu0 0
  %229 = vperm.xlu0 %228, %v217
  %v230 = vpop.permute.xlu0 %229
  %v232 = vadd.f32 %v223, %v230
  %v233 = vadd.f32 %v224, %v230
  %v234 = vadd.f32 %v225, %v230
  %v235 = vadd.f32 %v226, %v230
  %v236 = vmax.f32 %v232, 0.0
  %v237 = vmax.f32 %v233, 0.0
  %v238 = vmax.f32 %v234, 0.0
  %v239 = vmax.f32 %v235, 0.0
  %240 = vrot.lane.b32.xlu0 %v236, 17
  %v241 = vpop.permute.xlu0 %240
  %242 = vrot.lane.b32.xlu0 %v237, 17
  %v243 = vpop.permute.xlu0 %242
  %244 = vrot.lane.b32.xlu0 %v238, 17
  %v245 = vpop.permute.xlu0 %244
  %246 = vrot.lane.b32.xlu0 %v239, 17
  %v247 = vpop.permute.xlu0 %246
  %v248 = vlaneseq
  %v249 = vand.u32 %v248, 127
  %vm250 = vcmp.lt.s32.totalorder %v249, 17
  %v251 = vsel %vm250, %v245, %v247
  %v252 = vsel %vm250, %v243, %v245
  %v253 = vsel %vm250, %v241, %v243
  %v254 = vsel %vm250, %v247, %v241
  %v255 = vld [vmem:[%s1] ss:$8 sm:$0xf]
  %v257 = vlaneseq
  %v258 = vshrl.u32 %v257, 7
  %v259 = vsub.s32 0, %v258
  %v260 = vrot.slane %v255, %v259
  %v261 = vlaneseq
  %v262 = vshrl.u32 %v261, 7
  %v263 = vsub.s32 1, %v262
  %v264 = vrot.slane %v255, %v263
  %v265 = vlaneseq
  %v266 = vshrl.u32 %v265, 7
  %v267 = vsub.s32 2, %v266
  %v268 = vrot.slane %v255, %v267
  %v269 = vlaneseq
  %v270 = vshrl.u32 %v269, 7
  %v271 = vsub.s32 3, %v270
  %v272 = vrot.slane %v255, %v271
  %v277 = vmul.f32 %v254, %v260
  %v278 = vmul.f32 %v253, %v264
  %v279 = vmul.f32 %v252, %v268
  %v280 = vmul.f32 %v251, %v272
  %281 = vst [vmem:[#allocation2] sm:$0xff] %v277
  %282 = vst [vmem:[#allocation2 + $0x8] sm:$0xff] %v278
  %283 = vst [vmem:[#allocation2 + $0x10] sm:$0xff] %v279
  %284 = vst [vmem:[#allocation2 + $0x18] sm:$0xff] %v280
  %285 = vrot.lane.b32.xlu0 %v236, 16
  %v286 = vpop.permute.xlu0 %285
  %287 = vrot.lane.b32.xlu0 %v237, 16
  %v288 = vpop.permute.xlu0 %287
  %289 = vrot.lane.b32.xlu0 %v238, 16
  %v290 = vpop.permute.xlu0 %289
  %291 = vrot.lane.b32.xlu0 %v239, 16
  %v292 = vpop.permute.xlu0 %291
  %vm293 = vcmp.lt.s32.totalorder %v249, 16
  %v294 = vsel %vm293, %v290, %v292
  %v295 = vsel %vm293, %v288, %v290
  %v296 = vsel %vm293, %v286, %v288
  %v297 = vsel %vm293, %v292, %v286
  %s298 = scalar_lea.vmem %s1, 1
  %v299 = vld [vmem:[%s298] ss:$8 sm:$0xf]
  %v301 = vlaneseq
  %v302 = vshrl.u32 %v301, 7
  %v303 = vsub.s32 0, %v302
  %v304 = vrot.slane %v299, %v303
  %v305 = vlaneseq
  %v306 = vshrl.u32 %v305, 7
  %v307 = vsub.s32 1, %v306
  %v308 = vrot.slane %v299, %v307
  %v309 = vlaneseq
  %v310 = vshrl.u32 %v309, 7
  %v311 = vsub.s32 2, %v310
  %v312 = vrot.slane %v299, %v311
  %v313 = vlaneseq
  %v314 = vshrl.u32 %v313, 7
  %v315 = vsub.s32 3, %v314
  %v316 = vrot.slane %v299, %v315
  %v321 = vmul.f32 %v297, %v304
  %v322 = vmul.f32 %v296, %v308
  %v323 = vmul.f32 %v295, %v312
  %v324 = vmul.f32 %v294, %v316
  %325 = vst [vmem:[#allocation2 + $0x20] sm:$0xff] %v321
  %326 = vst [vmem:[#allocation2 + $0x28] sm:$0xff] %v322
  %327 = vst [vmem:[#allocation2 + $0x30] sm:$0xff] %v323
  %328 = vst [vmem:[#allocation2 + $0x38] sm:$0xff] %v324
  %329 = vrot.lane.b32.xlu0 %v236, 15
  %v330 = vpop.permute.xlu0 %329
  %331 = vrot.lane.b32.xlu0 %v237, 15
  %v332 = vpop.permute.xlu0 %331
  %333 = vrot.lane.b32.xlu0 %v238, 15
  %v334 = vpop.permute.xlu0 %333
  %335 = vrot.lane.b32.xlu0 %v239, 15
  %v336 = vpop.permute.xlu0 %335
  %vm337 = vcmp.lt.s32.totalorder %v249, 15
  %v338 = vsel %vm337, %v334, %v336
  %v339 = vsel %vm337, %v332, %v334
  %v340 = vsel %vm337, %v330, %v332
  %v341 = vsel %vm337, %v336, %v330
  %s342 = scalar_lea.vmem %s1, 2
  %v343 = vld [vmem:[%s342] ss:$8 sm:$0xf]
  %v345 = vlaneseq
  %v346 = vshrl.u32 %v345, 7
  %v347 = vsub.s32 0, %v346
  %v348 = vrot.slane %v343, %v347
  %v349 = vlaneseq
  %v350 = vshrl.u32 %v349, 7
  %v351 = vsub.s32 1, %v350
  %v352 = vrot.slane %v343, %v351
  %v353 = vlaneseq
  %v354 = vshrl.u32 %v353, 7
  %v355 = vsub.s32 2, %v354
  %v356 = vrot.slane %v343, %v355
  %v357 = vlaneseq
  %v358 = vshrl.u32 %v357, 7
  %v359 = vsub.s32 3, %v358
  %v360 = vrot.slane %v343, %v359
  %v365 = vmul.f32 %v341, %v348
  %v366 = vmul.f32 %v340, %v352
  %v367 = vmul.f32 %v339, %v356
  %v368 = vmul.f32 %v338, %v360
  %369 = vst [vmem:[#allocation2 + $0x40] sm:$0xff] %v365
  %370 = vst [vmem:[#allocation2 + $0x48] sm:$0xff] %v366
  %371 = vst [vmem:[#allocation2 + $0x50] sm:$0xff] %v367
  %372 = vst [vmem:[#allocation2 + $0x58] sm:$0xff] %v368
  %373 = vrot.lane.b32.xlu0 %v236, 1
  %v374 = vpop.permute.xlu0 %373
  %375 = vrot.lane.b32.xlu0 %v237, 1
  %v376 = vpop.permute.xlu0 %375
  %377 = vrot.lane.b32.xlu0 %v238, 1
  %v378 = vpop.permute.xlu0 %377
  %379 = vrot.lane.b32.xlu0 %v239, 1
  %v380 = vpop.permute.xlu0 %379
  %vm381 = vcmp.lt.s32.totalorder %v249, 1
  %v382 = vsel %vm381, %v378, %v380
  %v383 = vsel %vm381, %v376, %v378
  %v384 = vsel %vm381, %v374, %v376
  %v385 = vsel %vm381, %v380, %v374
  %s386 = scalar_lea.vmem %s1, 3
  %v387 = vld [vmem:[%s386] ss:$8 sm:$0xf]
  %v389 = vlaneseq
  %v390 = vshrl.u32 %v389, 7
  %v391 = vsub.s32 0, %v390
  %v392 = vrot.slane %v387, %v391
  %v393 = vlaneseq
  %v394 = vshrl.u32 %v393, 7
  %v395 = vsub.s32 1, %v394
  %v396 = vrot.slane %v387, %v395
  %v397 = vlaneseq
  %v398 = vshrl.u32 %v397, 7
  %v399 = vsub.s32 2, %v398
  %v400 = vrot.slane %v387, %v399
  %v401 = vlaneseq
  %v402 = vshrl.u32 %v401, 7
  %v403 = vsub.s32 3, %v402
  %v404 = vrot.slane %v387, %v403
  %v409 = vmul.f32 %v385, %v392
  %v410 = vmul.f32 %v384, %v396
  %v411 = vmul.f32 %v383, %v400
  %v412 = vmul.f32 %v382, %v404
  %413 = vst [vmem:[#allocation2 + $0x60] sm:$0xff] %v409
  %414 = vst [vmem:[#allocation2 + $0x68] sm:$0xff] %v410
  %415 = vst [vmem:[#allocation2 + $0x70] sm:$0xff] %v411
  %416 = vst [vmem:[#allocation2 + $0x78] sm:$0xff] %v412
  %417 = vst [vmem:[#allocation2 + $0x80] sm:$0xff] %v236
  %418 = vst [vmem:[#allocation2 + $0x88] sm:$0xff] %v237
  %419 = vst [vmem:[#allocation2 + $0x90] sm:$0xff] %v238
  %420 = vst [vmem:[#allocation2 + $0x98] sm:$0xff] %v239
  %421 = vrot.lane.b32.xlu0 %v236, 127
  %v422 = vpop.permute.xlu0 %421
  %423 = vrot.lane.b32.xlu0 %v237, 127
  %v424 = vpop.permute.xlu0 %423
  %425 = vrot.lane.b32.xlu0 %v238, 127
  %v426 = vpop.permute.xlu0 %425
  %427 = vrot.lane.b32.xlu0 %v239, 127
  %v428 = vpop.permute.xlu0 %427
  %vm429 = vcmp.lt.s32.totalorder %v249, 127
  %v430 = vsel %vm429, %v426, %v428
  %v431 = vsel %vm429, %v424, %v426
  %v432 = vsel %vm429, %v422, %v424
  %v433 = vsel %vm429, %v428, %v422
  %s434 = scalar_lea.vmem %s1, 5
  %v435 = vld [vmem:[%s434] ss:$8 sm:$0xf]
  %v437 = vlaneseq
  %v438 = vshrl.u32 %v437, 7
  %v439 = vsub.s32 0, %v438
  %v440 = vrot.slane %v435, %v439
  %v441 = vlaneseq
  %v442 = vshrl.u32 %v441, 7
  %v443 = vsub.s32 1, %v442
  %v444 = vrot.slane %v435, %v443
  %v445 = vlaneseq
  %v446 = vshrl.u32 %v445, 7
  %v447 = vsub.s32 2, %v446
  %v448 = vrot.slane %v435, %v447
  %v449 = vlaneseq
  %v450 = vshrl.u32 %v449, 7
  %v451 = vsub.s32 3, %v450
  %v452 = vrot.slane %v435, %v451
  %v457 = vmul.f32 %v432, %v440
  %v458 = vmul.f32 %v431, %v444
  %v459 = vmul.f32 %v430, %v448
  %v460 = vmul.f32 %v433, %v452
  %461 = vst [vmem:[#allocation2 + $0xa0] sm:$0xff] %v457
  %462 = vst [vmem:[#allocation2 + $0xa8] sm:$0xff] %v458
  %463 = vst [vmem:[#allocation2 + $0xb0] sm:$0xff] %v459
  %464 = vst [vmem:[#allocation2 + $0xb8] sm:$0xff] %v460
  %465 = vrot.lane.b32.xlu0 %v236, 113
  %v466 = vpop.permute.xlu0 %465
  %467 = vrot.lane.b32.xlu0 %v237, 113
  %v468 = vpop.permute.xlu0 %467
  %469 = vrot.lane.b32.xlu0 %v238, 113
  %v470 = vpop.permute.xlu0 %469
  %471 = vrot.lane.b32.xlu0 %v239, 113
  %v472 = vpop.permute.xlu0 %471
  %vm473 = vcmp.lt.s32.totalorder %v249, 113
  %v474 = vsel %vm473, %v470, %v472
  %v475 = vsel %vm473, %v468, %v470
  %v476 = vsel %vm473, %v466, %v468
  %v477 = vsel %vm473, %v472, %v466
  %s478 = scalar_lea.vmem %s1, 6
  %v479 = vld [vmem:[%s478] ss:$8 sm:$0xf]
  %v481 = vlaneseq
  %v482 = vshrl.u32 %v481, 7
  %v483 = vsub.s32 0, %v482
  %v484 = vrot.slane %v479, %v483
  %v485 = vlaneseq
  %v486 = vshrl.u32 %v485, 7
  %v487 = vsub.s32 1, %v486
  %v488 = vrot.slane %v479, %v487
  %v489 = vlaneseq
  %v490 = vshrl.u32 %v489, 7
  %v491 = vsub.s32 2, %v490
  %v492 = vrot.slane %v479, %v491
  %v493 = vlaneseq
  %v494 = vshrl.u32 %v493, 7
  %v495 = vsub.s32 3, %v494
  %v496 = vrot.slane %v479, %v495
  %v501 = vmul.f32 %v476, %v484
  %v502 = vmul.f32 %v475, %v488
  %v503 = vmul.f32 %v474, %v492
  %v504 = vmul.f32 %v477, %v496
  %505 = vst [vmem:[#allocation2 + $0xc0] sm:$0xff] %v501
  %506 = vst [vmem:[#allocation2 + $0xc8] sm:$0xff] %v502
  %507 = vst [vmem:[#allocation2 + $0xd0] sm:$0xff] %v503
  %508 = vst [vmem:[#allocation2 + $0xd8] sm:$0xff] %v504
  %509 = vrot.lane.b32.xlu0 %v236, 112
  %v510 = vpop.permute.xlu0 %509
  %511 = vrot.lane.b32.xlu0 %v237, 112
  %v512 = vpop.permute.xlu0 %511
  %513 = vrot.lane.b32.xlu0 %v238, 112
  %v514 = vpop.permute.xlu0 %513
  %515 = vrot.lane.b32.xlu0 %v239, 112
  %v516 = vpop.permute.xlu0 %515
  %vm517 = vcmp.lt.s32.totalorder %v249, 112
  %v518 = vsel %vm517, %v514, %v516
  %v519 = vsel %vm517, %v512, %v514
  %v520 = vsel %vm517, %v510, %v512
  %v521 = vsel %vm517, %v516, %v510
  %s522 = scalar_lea.vmem %s1, 7
  %v523 = vld [vmem:[%s522] ss:$8 sm:$0xf]
  %v525 = vlaneseq
  %v526 = vshrl.u32 %v525, 7
  %v527 = vsub.s32 0, %v526
  %v528 = vrot.slane %v523, %v527
  %v529 = vlaneseq
  %v530 = vshrl.u32 %v529, 7
  %v531 = vsub.s32 1, %v530
  %v532 = vrot.slane %v523, %v531
  %v533 = vlaneseq
  %v534 = vshrl.u32 %v533, 7
  %v535 = vsub.s32 2, %v534
  %v536 = vrot.slane %v523, %v535
  %v537 = vlaneseq
  %v538 = vshrl.u32 %v537, 7
  %v539 = vsub.s32 3, %v538
  %v540 = vrot.slane %v523, %v539
  %v545 = vmul.f32 %v520, %v528
  %v546 = vmul.f32 %v519, %v532
  %v547 = vmul.f32 %v518, %v536
  %v548 = vmul.f32 %v521, %v540
  %549 = vst [vmem:[#allocation2 + $0xe0] sm:$0xff] %v545
  %550 = vst [vmem:[#allocation2 + $0xe8] sm:$0xff] %v546
  %551 = vst [vmem:[#allocation2 + $0xf0] sm:$0xff] %v547
  %552 = vst [vmem:[#allocation2 + $0xf8] sm:$0xff] %v548
  %553 = vrot.lane.b32.xlu0 %v236, 111
  %v554 = vpop.permute.xlu0 %553
  %555 = vrot.lane.b32.xlu0 %v237, 111
  %v556 = vpop.permute.xlu0 %555
  %557 = vrot.lane.b32.xlu0 %v238, 111
  %v558 = vpop.permute.xlu0 %557
  %559 = vrot.lane.b32.xlu0 %v239, 111
  %v560 = vpop.permute.xlu0 %559
  %vm561 = vcmp.lt.s32.totalorder %v249, 111
  %v562 = vsel %vm561, %v558, %v560
  %v563 = vsel %vm561, %v556, %v558
  %v564 = vsel %vm561, %v554, %v556
  %v565 = vsel %vm561, %v560, %v554
  %s566 = scalar_lea.vmem %s1, 32
  %v567 = vld [vmem:[%s566] ss:$8 sm:$0xf]
  %v569 = vlaneseq
  %v570 = vshrl.u32 %v569, 7
  %v571 = vsub.s32 0, %v570
  %v572 = vrot.slane %v567, %v571
  %v573 = vlaneseq
  %v574 = vshrl.u32 %v573, 7
  %v575 = vsub.s32 1, %v574
  %v576 = vrot.slane %v567, %v575
  %v577 = vlaneseq
  %v578 = vshrl.u32 %v577, 7
  %v579 = vsub.s32 2, %v578
  %v580 = vrot.slane %v567, %v579
  %v581 = vlaneseq
  %v582 = vshrl.u32 %v581, 7
  %v583 = vsub.s32 3, %v582
  %v584 = vrot.slane %v567, %v583
  %v589 = vmul.f32 %v564, %v572
  %v590 = vmul.f32 %v563, %v576
  %v591 = vmul.f32 %v562, %v580
  %v592 = vmul.f32 %v565, %v584
  %593 = vst [vmem:[#allocation2 + $0x100] sm:$0xff] %v589
  %594 = vst [vmem:[#allocation2 + $0x108] sm:$0xff] %v590
  %595 = vst [vmem:[#allocation2 + $0x110] sm:$0xff] %v591
  %596 = vst [vmem:[#allocation2 + $0x118] sm:$0xff] %v592
  %v597 = vld [vmem:[%s5] sm:$0xff]
  %v598 = vld [vmem:[#allocation2] sm:$0xff]
  %v599 = vld [vmem:[#allocation2 + $0x8] sm:$0xff]
  %v600 = vld [vmem:[#allocation2 + $0x10] sm:$0xff]
  %v601 = vld [vmem:[#allocation2 + $0x18] sm:$0xff]
  %v602 = vld [vmem:[#allocation2 + $0x20] sm:$0xff]
  %v603 = vld [vmem:[#allocation2 + $0x28] sm:$0xff]
  %v604 = vld [vmem:[#allocation2 + $0x30] sm:$0xff]
  %v605 = vld [vmem:[#allocation2 + $0x38] sm:$0xff]
  %v606 = vld [vmem:[#allocation2 + $0x40] sm:$0xff]
  %v607 = vld [vmem:[#allocation2 + $0x48] sm:$0xff]
  %v608 = vld [vmem:[#allocation2 + $0x50] sm:$0xff]
  %v609 = vld [vmem:[#allocation2 + $0x58] sm:$0xff]
  %v610 = vld [vmem:[#allocation2 + $0x60] sm:$0xff]
  %v611 = vld [vmem:[#allocation2 + $0x68] sm:$0xff]
  %v612 = vld [vmem:[#allocation2 + $0x70] sm:$0xff]
  %v613 = vld [vmem:[#allocation2 + $0x78] sm:$0xff]
  %v614 = vld [vmem:[#allocation2 + $0x80] sm:$0xff]
  %v615 = vld [vmem:[#allocation2 + $0x88] sm:$0xff]
  %v616 = vld [vmem:[#allocation2 + $0x90] sm:$0xff]
  %v617 = vld [vmem:[#allocation2 + $0x98] sm:$0xff]
  %v618 = vld [vmem:[#allocation2 + $0xa0] sm:$0xff]
  %v619 = vld [vmem:[#allocation2 + $0xa8] sm:$0xff]
  %v620 = vld [vmem:[#allocation2 + $0xb0] sm:$0xff]
  %v621 = vld [vmem:[#allocation2 + $0xb8] sm:$0xff]
  %v622 = vld [vmem:[#allocation2 + $0xc0] sm:$0xff]
  %v623 = vld [vmem:[#allocation2 + $0xc8] sm:$0xff]
  %v624 = vld [vmem:[#allocation2 + $0xd0] sm:$0xff]
  %v625 = vld [vmem:[#allocation2 + $0xd8] sm:$0xff]
  %v626 = vld [vmem:[#allocation2 + $0xe0] sm:$0xff]
  %v627 = vld [vmem:[#allocation2 + $0xe8] sm:$0xff]
  %v628 = vld [vmem:[#allocation2 + $0xf0] sm:$0xff]
  %v629 = vld [vmem:[#allocation2 + $0xf8] sm:$0xff]
  %v630 = vld [vmem:[#allocation2 + $0x100] sm:$0xff]
  %v631 = vld [vmem:[#allocation2 + $0x108] sm:$0xff]
  %v632 = vld [vmem:[#allocation2 + $0x110] sm:$0xff]
  %v633 = vld [vmem:[#allocation2 + $0x118] sm:$0xff]
  %vm634 = vcmask 588800
  %v636 = vsel %vm634, %v597, 0
  %638 = vmatprep.subr.mxu0 0.0
  %639 = vmatpush1.msra.mxu0 0.0
  %640 = vmatprep.subr.mxu0 0.0
  %641 = vmatpush1.msra.mxu0 0.0
  %642 = vmatprep.subr.mxu0 0.0
  %643 = vmatpush1.msra.mxu0 0.0
  %644 = vmatprep.subr.mxu0 0.0
  %645 = vmatpush1.msra.mxu0 0.0
  %646 = vmatprep.subr.mxu0 0.0
  %647 = vmatpush1.msra.mxu0 0.0
  %648 = vmatprep.subr.mxu0 0.0
  %649 = vmatpush1.msra.mxu0 0.0
  %650 = vmatprep.subr.mxu0 0.0
  %651 = vmatpush1.msra.mxu0 0.0
  %652 = vmatprep.subr.mxu0 %v631
  %653 = vmatpush1.msra.mxu0 %v630
  %654 = vmatprep.subr.mxu0 %v627
  %655 = vmatpush1.msra.mxu0 %v626
  %656 = vmatprep.subr.mxu0 %v623
  %657 = vmatpush1.msra.mxu0 %v622
  %658 = vmatprep.subr.mxu0 %v619
  %659 = vmatpush1.msra.mxu0 %v618
  %660 = vmatprep.subr.mxu0 %v615
  %661 = vmatpush1.msra.mxu0 %v614
  %662 = vmatprep.subr.mxu0 %v611
  %663 = vmatpush1.msra.mxu0 %v610
  %664 = vmatprep.subr.mxu0 %v607
  %665 = vmatpush1.msra.mxu0 %v606
  %666 = vmatprep.subr.mxu0 %v603
  %667 = vmatpush1.msra.mxu0 %v602
  %668 = vmatprep.subr.mxu0 %v599
  %669 = vmatpush1.msra.mxu0 %v598
  %670 = vmatprep.subr.mxu0 0.0
  %671 = vmatpush2.msra.mxu0 0.0
  %672 = vmatprep.subr.mxu0 0.0
  %673 = vmatpush2.msra.mxu0 0.0
  %674 = vmatprep.subr.mxu0 0.0
  %675 = vmatpush2.msra.mxu0 0.0
  %676 = vmatprep.subr.mxu0 0.0
  %677 = vmatpush2.msra.mxu0 0.0
  %678 = vmatprep.subr.mxu0 0.0
  %679 = vmatpush2.msra.mxu0 0.0
  %680 = vmatprep.subr.mxu0 0.0
  %681 = vmatpush2.msra.mxu0 0.0
  %682 = vmatprep.subr.mxu0 0.0
  %683 = vmatpush2.msra.mxu0 0.0
  %684 = vmatprep.subr.mxu0 0.0
  %685 = vmatpush2.msra.mxu0 0.0
  %686 = vmatprep.subr.mxu0 0.0
  %687 = vmatpush2.msra.mxu0 0.0
  %688 = vmatprep.subr.mxu0 0.0
  %689 = vmatpush2.msra.mxu0 0.0
  %690 = vmatprep.subr.mxu0 0.0
  %691 = vmatpush2.msra.mxu0 0.0
  %692 = vmatprep.subr.mxu0 0.0
  %693 = vmatpush2.msra.mxu0 0.0
  %694 = vmatprep.subr.mxu0 0.0
  %695 = vmatpush2.msra.mxu0 0.0
  %696 = vmatprep.subr.mxu0 0.0
  %697 = vmatpush2.msra.mxu0 0.0
  %698 = vmatprep.subr.mxu0 0.0
  %699 = vmatpush2.msra.mxu0 0.0
  %700 = vmatprep.subr.mxu0 0.0
  %701 = vmatpush2.msra.mxu0 0.0
  %702 = vmatprep.mubr.f32.mxu0 0.0
  %703 = vmatmul.mubr.f32.gmra.mxu0 %v636
  %v704 = vpop.f32.mrf.mxu0
  %v705 = vadd.f32 0.0, %v704
  %v706 = vpop.f32.mrf.mxu0
  %v707 = vadd.f32 0.0, %v706
  %708 = vdwg.mxu0
  %709 = vmatprep.subr.mxu0 0.0
  %710 = vmatpush1.msra.mxu0 0.0
  %711 = vmatprep.subr.mxu0 0.0
  %712 = vmatpush1.msra.mxu0 0.0
  %713 = vmatprep.subr.mxu0 0.0
  %714 = vmatpush1.msra.mxu0 0.0
  %715 = vmatprep.subr.mxu0 0.0
  %716 = vmatpush1.msra.mxu0 0.0
  %717 = vmatprep.subr.mxu0 0.0
  %718 = vmatpush1.msra.mxu0 0.0
  %719 = vmatprep.subr.mxu0 0.0
  %720 = vmatpush1.msra.mxu0 0.0
  %721 = vmatprep.subr.mxu0 0.0
  %722 = vmatpush1.msra.mxu0 0.0
  %723 = vmatprep.subr.mxu0 %v633
  %724 = vmatpush1.msra.mxu0 %v632
  %725 = vmatprep.subr.mxu0 %v629
  %726 = vmatpush1.msra.mxu0 %v628
  %727 = vmatprep.subr.mxu0 %v625
  %728 = vmatpush1.msra.mxu0 %v624
  %729 = vmatprep.subr.mxu0 %v621
  %730 = vmatpush1.msra.mxu0 %v620
  %731 = vmatprep.subr.mxu0 %v617
  %732 = vmatpush1.msra.mxu0 %v616
  %733 = vmatprep.subr.mxu0 %v613
  %734 = vmatpush1.msra.mxu0 %v612
  %735 = vmatprep.subr.mxu0 %v609
  %736 = vmatpush1.msra.mxu0 %v608
  %737 = vmatprep.subr.mxu0 %v605
  %738 = vmatpush1.msra.mxu0 %v604
  %739 = vmatprep.subr.mxu0 %v601
  %740 = vmatpush1.msra.mxu0 %v600
  %741 = vmatprep.subr.mxu0 0.0
  %742 = vmatpush2.msra.mxu0 0.0
  %743 = vmatprep.subr.mxu0 0.0
  %744 = vmatpush2.msra.mxu0 0.0
  %745 = vmatprep.subr.mxu0 0.0
  %746 = vmatpush2.msra.mxu0 0.0
  %747 = vmatprep.subr.mxu0 0.0
  %748 = vmatpush2.msra.mxu0 0.0
  %749 = vmatprep.subr.mxu0 0.0
  %750 = vmatpush2.msra.mxu0 0.0
  %751 = vmatprep.subr.mxu0 0.0
  %752 = vmatpush2.msra.mxu0 0.0
  %753 = vmatprep.subr.mxu0 0.0
  %754 = vmatpush2.msra.mxu0 0.0
  %755 = vmatprep.subr.mxu0 0.0
  %756 = vmatpush2.msra.mxu0 0.0
  %757 = vmatprep.subr.mxu0 0.0
  %758 = vmatpush2.msra.mxu0 0.0
  %759 = vmatprep.subr.mxu0 0.0
  %760 = vmatpush2.msra.mxu0 0.0
  %761 = vmatprep.subr.mxu0 0.0
  %762 = vmatpush2.msra.mxu0 0.0
  %763 = vmatprep.subr.mxu0 0.0
  %764 = vmatpush2.msra.mxu0 0.0
  %765 = vmatprep.subr.mxu0 0.0
  %766 = vmatpush2.msra.mxu0 0.0
  %767 = vmatprep.subr.mxu0 0.0
  %768 = vmatpush2.msra.mxu0 0.0
  %769 = vmatprep.subr.mxu0 0.0
  %770 = vmatpush2.msra.mxu0 0.0
  %771 = vmatprep.subr.mxu0 0.0
  %772 = vmatpush2.msra.mxu0 0.0
  %773 = vmatprep.mubr.f32.mxu0 0.0
  %774 = vmatmul.mubr.f32.gmra.mxu0 %v636
  %v775 = vpop.f32.mrf.mxu0
  %v776 = vadd.f32 0.0, %v775
  %v777 = vpop.f32.mrf.mxu0
  %v778 = vadd.f32 0.0, %v777
  %779 = vdwg.mxu0
  %v780 = vadd.f32 %v705, %v707
  %v781 = vadd.f32 %v780, %v776
  %v782 = vadd.f32 %v781, %v778
  %783 = vadd.xlane.f32.xlu0 %v782
  %v784 = vpop.xlane.xlu0 %783
  %v785 = vmul.f32 %v705, %v705
  %v786 = vmul.f32 %v707, %v707
  %v787 = vmul.f32 %v776, %v776
  %v788 = vmul.f32 %v778, %v778
  %v789 = vadd.f32 %v785, %v786
  %v790 = vadd.f32 %v789, %v787
  %v791 = vadd.f32 %v790, %v788
  %792 = vadd.xlane.f32.xlu0 %v791
  %v793 = vpop.xlane.xlu0 %792
  %v794 = vmul.f32 %v784, 0.001953125
  %v795 = vmul.f32 %v793, 0.001953125
  %v796 = vmul.f32 %v794, %v794
  %v797 = vsub.f32 %v795, %v796
  %v798 = vld [vmem:[%s6] sm:$0xff]
  %v799 = vadd.f32 %v797, 1e-05
  %v800 = vrsqrt.pop %v799
  %v801 = vmul.f32 %v798, %v800
  %v802 = vld [vmem:[%s7] sm:$0xff]
  %v803 = vmul.f32 %v794, %v801
  %v804 = vsub.f32 %v802, %v803
  %806 = vset.pattern.permute.xlu0 0
  %807 = vperm.xlu0 %806, %v801
  %v808 = vpop.permute.xlu0 %807
  %v810 = vmul.f32 %v705, %v808
  %v811 = vmul.f32 %v707, %v808
  %v812 = vmul.f32 %v776, %v808
  %v813 = vmul.f32 %v778, %v808
  %815 = vset.pattern.permute.xlu0 0
  %816 = vperm.xlu0 %815, %v804
  %v817 = vpop.permute.xlu0 %816
  %v819 = vadd.f32 %v810, %v817
  %v820 = vadd.f32 %v811, %v817
  %v821 = vadd.f32 %v812, %v817
  %v822 = vadd.f32 %v813, %v817
  %v823 = vmax.f32 %v819, 0.0
  %v824 = vmax.f32 %v820, 0.0
  %v825 = vmax.f32 %v821, 0.0
  %v826 = vmax.f32 %v822, 0.0
  %v827 = vld [vmem:[%s8] sm:$0xff]
  %v828 = vld [vmem:[%s8 + $0x8] sm:$0xff]
  %vm829 = vcmask 64512
  %v831 = vsel %vm829, %v827, 0
  %v834 = vsel %vm829, %v828, 0
  %836 = vmatprep.subr.mxu0 0.0
  %837 = vmatpush1.msra.mxu0 0.0
  %838 = vmatprep.subr.mxu0 0.0
  %839 = vmatpush1.msra.mxu0 0.0
  %840 = vmatprep.subr.mxu0 0.0
  %841 = vmatpush1.msra.mxu0 0.0
  %842 = vmatprep.subr.mxu0 0.0
  %843 = vmatpush1.msra.mxu0 0.0
  %844 = vmatprep.subr.mxu0 0.0
  %845 = vmatpush1.msra.mxu0 0.0
  %846 = vmatprep.subr.mxu0 0.0
  %847 = vmatpush1.msra.mxu0 0.0
  %848 = vmatprep.subr.mxu0 0.0
  %849 = vmatpush1.msra.mxu0 0.0
  %850 = vmatprep.subr.mxu0 0.0
  %851 = vmatpush1.msra.mxu0 0.0
  %852 = vmatprep.subr.mxu0 0.0
  %853 = vmatpush1.msra.mxu0 0.0
  %854 = vmatprep.subr.mxu0 0.0
  %855 = vmatpush1.msra.mxu0 0.0
  %856 = vmatprep.subr.mxu0 0.0
  %857 = vmatpush1.msra.mxu0 0.0
  %858 = vmatprep.subr.mxu0 0.0
  %859 = vmatpush1.msra.mxu0 0.0
  %860 = vmatprep.subr.mxu0 0.0
  %861 = vmatpush1.msra.mxu0 0.0
  %862 = vmatprep.subr.mxu0 0.0
  %863 = vmatpush1.msra.mxu0 0.0
  %864 = vmatprep.subr.mxu0 0.0
  %865 = vmatpush1.msra.mxu0 0.0
  %866 = vmatprep.subr.mxu0 %v824
  %867 = vmatpush1.msra.mxu0 %v823
  %868 = vmatprep.subr.mxu0 0.0
  %869 = vmatpush2.msra.mxu0 0.0
  %870 = vmatprep.subr.mxu0 0.0
  %871 = vmatpush2.msra.mxu0 0.0
  %872 = vmatprep.subr.mxu0 0.0
  %873 = vmatpush2.msra.mxu0 0.0
  %874 = vmatprep.subr.mxu0 0.0
  %875 = vmatpush2.msra.mxu0 0.0
  %876 = vmatprep.subr.mxu0 0.0
  %877 = vmatpush2.msra.mxu0 0.0
  %878 = vmatprep.subr.mxu0 0.0
  %879 = vmatpush2.msra.mxu0 0.0
  %880 = vmatprep.subr.mxu0 0.0
  %881 = vmatpush2.msra.mxu0 0.0
  %882 = vmatprep.subr.mxu0 0.0
  %883 = vmatpush2.msra.mxu0 0.0
  %884 = vmatprep.subr.mxu0 0.0
  %885 = vmatpush2.msra.mxu0 0.0
  %886 = vmatprep.subr.mxu0 0.0
  %887 = vmatpush2.msra.mxu0 0.0
  %888 = vmatprep.subr.mxu0 0.0
  %889 = vmatpush2.msra.mxu0 0.0
  %890 = vmatprep.subr.mxu0 0.0
  %891 = vmatpush2.msra.mxu0 0.0
  %892 = vmatprep.subr.mxu0 0.0
  %893 = vmatpush2.msra.mxu0 0.0
  %894 = vmatprep.subr.mxu0 0.0
  %895 = vmatpush2.msra.mxu0 0.0
  %896 = vmatprep.subr.mxu0 0.0
  %897 = vmatpush2.msra.mxu0 0.0
  %898 = vmatprep.subr.mxu0 0.0
  %899 = vmatpush2.msra.mxu0 0.0
  %900 = vmatprep.mubr.f32.mxu0 0.0
  %901 = vmatmul.mubr.f32.gmra.mxu0 %v831
  %v902 = vpop.f32.mrf.mxu0
  %v903 = vadd.f32 0.0, %v902
  %v904 = vpop.f32.mrf.mxu0
  %v905 = vadd.f32 0.0, %v904
  %906 = vmatprep.mubr.f32.mxu0 0.0
  %907 = vmatmul.mubr.f32.gmra.mxu0 %v834
  %v908 = vpop.f32.mrf.mxu0
  %v909 = vadd.f32 0.0, %v908
  %v910 = vpop.f32.mrf.mxu0
  %v911 = vadd.f32 0.0, %v910
  %912 = vdwg.mxu0
  %913 = vmatprep.subr.mxu0 0.0
  %914 = vmatpush1.msra.mxu0 0.0
  %915 = vmatprep.subr.mxu0 0.0
  %916 = vmatpush1.msra.mxu0 0.0
  %917 = vmatprep.subr.mxu0 0.0
  %918 = vmatpush1.msra.mxu0 0.0
  %919 = vmatprep.subr.mxu0 0.0
  %920 = vmatpush1.msra.mxu0 0.0
  %921 = vmatprep.subr.mxu0 0.0
  %922 = vmatpush1.msra.mxu0 0.0
  %923 = vmatprep.subr.mxu0 0.0
  %924 = vmatpush1.msra.mxu0 0.0
  %925 = vmatprep.subr.mxu0 0.0
  %926 = vmatpush1.msra.mxu0 0.0
  %927 = vmatprep.subr.mxu0 0.0
  %928 = vmatpush1.msra.mxu0 0.0
  %929 = vmatprep.subr.mxu0 0.0
  %930 = vmatpush1.msra.mxu0 0.0
  %931 = vmatprep.subr.mxu0 0.0
  %932 = vmatpush1.msra.mxu0 0.0
  %933 = vmatprep.subr.mxu0 0.0
  %934 = vmatpush1.msra.mxu0 0.0
  %935 = vmatprep.subr.mxu0 0.0
  %936 = vmatpush1.msra.mxu0 0.0
  %937 = vmatprep.subr.mxu0 0.0
  %938 = vmatpush1.msra.mxu0 0.0
  %939 = vmatprep.subr.mxu0 0.0
  %940 = vmatpush1.msra.mxu0 0.0
  %941 = vmatprep.subr.mxu0 0.0
  %942 = vmatpush1.msra.mxu0 0.0
  %943 = vmatprep.subr.mxu0 %v826
  %944 = vmatpush1.msra.mxu0 %v825
  %945 = vmatprep.subr.mxu0 0.0
  %946 = vmatpush2.msra.mxu0 0.0
  %947 = vmatprep.subr.mxu0 0.0
  %948 = vmatpush2.msra.mxu0 0.0
  %949 = vmatprep.subr.mxu0 0.0
  %950 = vmatpush2.msra.mxu0 0.0
  %951 = vmatprep.subr.mxu0 0.0
  %952 = vmatpush2.msra.mxu0 0.0
  %953 = vmatprep.subr.mxu0 0.0
  %954 = vmatpush2.msra.mxu0 0.0
  %955 = vmatprep.subr.mxu0 0.0
  %956 = vmatpush2.msra.mxu0 0.0
  %957 = vmatprep.subr.mxu0 0.0
  %958 = vmatpush2.msra.mxu0 0.0
  %959 = vmatprep.subr.mxu0 0.0
  %960 = vmatpush2.msra.mxu0 0.0
  %961 = vmatprep.subr.mxu0 0.0
  %962 = vmatpush2.msra.mxu0 0.0
  %963 = vmatprep.subr.mxu0 0.0
  %964 = vmatpush2.msra.mxu0 0.0
  %965 = vmatprep.subr.mxu0 0.0
  %966 = vmatpush2.msra.mxu0 0.0
  %967 = vmatprep.subr.mxu0 0.0
  %968 = vmatpush2.msra.mxu0 0.0
  %969 = vmatprep.subr.mxu0 0.0
  %970 = vmatpush2.msra.mxu0 0.0
  %971 = vmatprep.subr.mxu0 0.0
  %972 = vmatpush2.msra.mxu0 0.0
  %973 = vmatprep.subr.mxu0 0.0
  %974 = vmatpush2.msra.mxu0 0.0
  %975 = vmatprep.subr.mxu0 0.0
  %976 = vmatpush2.msra.mxu0 0.0
  %977 = vmatprep.mubr.f32.mxu0 0.0
  %978 = vmatmul.mubr.f32.gmra.mxu0 %v831
  %v979 = vpop.f32.mrf.mxu0
  %v980 = vadd.f32 0.0, %v979
  %v981 = vpop.f32.mrf.mxu0
  %v982 = vadd.f32 0.0, %v981
  %983 = vmatprep.mubr.f32.mxu0 0.0
  %984 = vmatmul.mubr.f32.gmra.mxu0 %v834
  %v985 = vpop.f32.mrf.mxu0
  %v986 = vadd.f32 0.0, %v985
  %v987 = vpop.f32.mrf.mxu0
  %v988 = vadd.f32 0.0, %v987
  %989 = vdwg.mxu0
  %v990 = vadd.f32 %v903, %v905
  %v991 = vadd.f32 %v990, %v980
  %v992 = vadd.f32 %v991, %v982
  %993 = vadd.xlane.f32.xlu0 %v992
  %v994 = vpop.xlane.xlu0 %993
  %v995 = vadd.f32 %v909, %v911
  %v996 = vadd.f32 %v995, %v986
  %v997 = vadd.f32 %v996, %v988
  %998 = vadd.xlane.f32.xlu0 %v997
  %v999 = vpop.xlane.xlu0 %998
  %v1000 = vmul.f32 %v903, %v903
  %v1001 = vmul.f32 %v905, %v905
  %v1002 = vmul.f32 %v980, %v980
  %v1003 = vmul.f32 %v982, %v982
  %v1004 = vmul.f32 %v909, %v909
  %v1005 = vmul.f32 %v911, %v911
  %v1006 = vmul.f32 %v986, %v986
  %v1007 = vmul.f32 %v988, %v988
  %v1008 = vadd.f32 %v1000, %v1001
  %v1009 = vadd.f32 %v1008, %v1002
  %v1010 = vadd.f32 %v1009, %v1003
  %1011 = vadd.xlane.f32.xlu0 %v1010
  %v1012 = vpop.xlane.xlu0 %1011
  %v1013 = vadd.f32 %v1004, %v1005
  %v1014 = vadd.f32 %v1013, %v1006
  %v1015 = vadd.f32 %v1014, %v1007
  %1016 = vadd.xlane.f32.xlu0 %v1015
  %v1017 = vpop.xlane.xlu0 %1016
  %v1018 = vmul.f32 %v994, 0.001953125
  %v1019 = vmul.f32 %v999, 0.001953125
  %v1020 = vmul.f32 %v1012, 0.001953125
  %v1021 = vmul.f32 %v1017, 0.001953125
  %v1022 = vmul.f32 %v1018, %v1018
  %v1023 = vmul.f32 %v1019, %v1019
  %v1024 = vsub.f32 %v1020, %v1022
  %v1025 = vsub.f32 %v1021, %v1023
  %v1026 = vld [vmem:[%s9] sm:$0xff]
  %v1027 = vld [vmem:[%s9 + $0x8] sm:$0xff]
  %v1028 = vadd.f32 %v1024, 1e-05
  %v1029 = vadd.f32 %v1025, 1e-05
  %v1030 = vrsqrt.pop %v1028
  %v1031 = vrsqrt.pop %v1029
  %v1032 = vmul.f32 %v1026, %v1030
  %v1033 = vmul.f32 %v1027, %v1031
  %v1034 = vld [vmem:[%s10] sm:$0xff]
  %v1035 = vld [vmem:[%s10 + $0x8] sm:$0xff]
  %v1036 = vmul.f32 %v1018, %v1032
  %v1037 = vmul.f32 %v1019, %v1033
  %v1038 = vsub.f32 %v1034, %v1036
  %v1039 = vsub.f32 %v1035, %v1037
  %1041 = vset.pattern.permute.xlu0 0
  %1042 = vperm.xlu0 %1041, %v1032
  %v1043 = vpop.permute.xlu0 %1042
  %1046 = vset.pattern.permute.xlu0 0
  %1047 = vperm.xlu0 %1046, %v1033
  %v1048 = vpop.permute.xlu0 %1047
  %v1050 = vmul.f32 %v903, %v1043
  %v1051 = vmul.f32 %v905, %v1043
  %v1052 = vmul.f32 %v980, %v1043
  %v1053 = vmul.f32 %v982, %v1043
  %v1054 = vmul.f32 %v909, %v1048
  %v1055 = vmul.f32 %v911, %v1048
  %v1056 = vmul.f32 %v986, %v1048
  %v1057 = vmul.f32 %v988, %v1048
  %1059 = vset.pattern.permute.xlu0 0
  %1060 = vperm.xlu0 %1059, %v1038
  %v1061 = vpop.permute.xlu0 %1060
  %1064 = vset.pattern.permute.xlu0 0
  %1065 = vperm.xlu0 %1064, %v1039
  %v1066 = vpop.permute.xlu0 %1065
  %v1068 = vadd.f32 %v1050, %v1061
  %v1069 = vadd.f32 %v1051, %v1061
  %v1070 = vadd.f32 %v1052, %v1061
  %v1071 = vadd.f32 %v1053, %v1061
  %v1072 = vadd.f32 %v1054, %v1066
  %v1073 = vadd.f32 %v1055, %v1066
  %v1074 = vadd.f32 %v1056, %v1066
  %v1075 = vadd.f32 %v1057, %v1066
  %v1076 = vmax.f32 %v1068, 0.0
  %v1077 = vmax.f32 %v1069, 0.0
  %v1078 = vmax.f32 %v1070, 0.0
  %v1079 = vmax.f32 %v1071, 0.0
  %v1080 = vmax.f32 %v1072, 0.0
  %v1081 = vmax.f32 %v1073, 0.0
  %v1082 = vmax.f32 %v1074, 0.0
  %v1083 = vmax.f32 %v1075, 0.0
  %v1084 = vadd.f32 %v1076, %v38
  %v1085 = vadd.f32 %v1077, %v39
  %v1086 = vadd.f32 %v1078, %v40
  %v1087 = vadd.f32 %v1079, %v41
  %v1088 = vadd.f32 %v1080, %v42
  %v1089 = vadd.f32 %v1081, %v43
  %v1090 = vadd.f32 %v1082, %v44
  %v1091 = vadd.f32 %v1083, %v45
  %1092 = vst [vmem:[%s11] sm:$0xff] %v1084
  %1093 = vst [vmem:[%s11 + $0x8] sm:$0xff] %v1085
  %1094 = vst [vmem:[%s11 + $0x10] sm:$0xff] %v1086
  %1095 = vst [vmem:[%s11 + $0x18] sm:$0xff] %v1087
  %1096 = vst [vmem:[%s11 + $0x20] sm:$0xff] %v1088
  %1097 = vst [vmem:[%s11 + $0x28] sm:$0xff] %v1089
  %1098 = vst [vmem:[%s11 + $0x30] sm:$0xff] %v1090
  %1099 = vst [vmem:[%s11 + $0x38] sm:$0xff] %v1091
  // Predicated region
  $region46: #{hourglass_forward.8} parent=0 // pred_check
    _
  $region47: #{hourglass_forward.8} parent=0 // pred_check_branch
    %1101 = sbr.rel (0) target = $region49
  $region48: #{hourglass_forward.8} parent=0 // pred_region
    _
  $region49: #{hourglass_forward.8} parent=0 // pred_fallthru
    _
  // Predicated region
  $region50: #{hourglass_forward.8} parent=0 // pred_check
    _
  $region51: #{hourglass_forward.8} parent=0 // pred_check_branch
    %1103 = sbr.rel (0) target = $region53
  $region52: #{hourglass_forward.8} parent=0 // pred_region
    _
  $region53: #{hourglass_forward.8} parent=0 // pred_fallthru
    _

// kernel: hourglass_forward.10
$region0: #{hourglass_forward.10}
  #allocation0 [shape = 'u32[]', space=smem, size = 0x4, offset = 0x4, fixed_abs, tag = 'smem constant byte address 0x4 - core index']
  #allocation1 [shape = 'u32[144,128]{1,0:T(1,128)}', space=vmem, size = 0x12000, scoped, tag = 'internal scratch']
  #allocation2 [shape = 'f32[72,128]{1,0:T(8,128)}', space=vmem, size = 0x9000, scoped, tag = 'scratch operand']
  %s0 = inlined_call_operand.vmem [shape: f32[16,128], index: 0, kind: input, shape index: {}]
  %s1 = inlined_call_operand.vmem [shape: f32[9,128], index: 1, kind: input, shape index: {}]
  %s2 = inlined_call_operand.vmem [shape: f32[8,16], index: 2, kind: input, shape index: {}]
  %s3 = inlined_call_operand.vmem [shape: f32[8,1], index: 3, kind: input, shape index: {}]
  %s4 = inlined_call_operand.vmem [shape: f32[8,1], index: 4, kind: input, shape index: {}]
  %s5 = inlined_call_operand.vmem [shape: f32[8,72], index: 5, kind: input, shape index: {}]
  %s6 = inlined_call_operand.vmem [shape: f32[8,1], index: 6, kind: input, shape index: {}]
  %s7 = inlined_call_operand.vmem [shape: f32[8,1], index: 7, kind: input, shape index: {}]
  %s8 = inlined_call_operand.vmem [shape: f32[16,8], index: 8, kind: input, shape index: {}]
  %s9 = inlined_call_operand.vmem [shape: f32[16,1], index: 9, kind: input, shape index: {}]
  %s10 = inlined_call_operand.vmem [shape: f32[16,1], index: 10, kind: input, shape index: {}]
  %s11 = inlined_call_operand.vmem [shape: f32[16,128], index: 11, kind: output, shape index: {}]
  %s12 = sld [smem:[#allocation0]]
  $region54: #{hourglass_forward.10} parent=0
    _
  %s14 = ssub.s32 1, %s12
  %s15 = scalar_select 0, %s14, %s12
  // Predicated region
  $region2: #{hourglass_forward.10} parent=0 // pred_check
    _
  $region3: #{hourglass_forward.10} parent=0 // pred_check_branch
    %17 = sbr.rel (0) target = $region5
  $region4: #{hourglass_forward.10} parent=0 // pred_region
    _
  $region5: #{hourglass_forward.10} parent=0 // pred_fallthru
    _
  // Predicated region
  $region6: #{hourglass_forward.10} parent=0 // pred_check
    _
  $region7: #{hourglass_forward.10} parent=0 // pred_check_branch
    %19 = sbr.rel (0) target = $region9
  $region8: #{hourglass_forward.10} parent=0 // pred_region
    _
  $region9: #{hourglass_forward.10} parent=0 // pred_fallthru
    _
  // Predicated region
  $region10: #{hourglass_forward.10} parent=0 // pred_check
    _
  $region11: #{hourglass_forward.10} parent=0 // pred_check_branch
    %21 = sbr.rel (0) target = $region13
  $region12: #{hourglass_forward.10} parent=0 // pred_region
    _
  $region13: #{hourglass_forward.10} parent=0 // pred_fallthru
    _
  // Predicated region
  $region14: #{hourglass_forward.10} parent=0 // pred_check
    _
  $region15: #{hourglass_forward.10} parent=0 // pred_check_branch
    %23 = sbr.rel (0) target = $region17
  $region16: #{hourglass_forward.10} parent=0 // pred_region
    _
  $region17: #{hourglass_forward.10} parent=0 // pred_fallthru
    _
  // Predicated region
  $region18: #{hourglass_forward.10} parent=0 // pred_check
    _
  $region19: #{hourglass_forward.10} parent=0 // pred_check_branch
    %25 = sbr.rel (0) target = $region21
  $region20: #{hourglass_forward.10} parent=0 // pred_region
    _
  $region21: #{hourglass_forward.10} parent=0 // pred_fallthru
    _
  // Predicated region
  $region22: #{hourglass_forward.10} parent=0 // pred_check
    _
  $region23: #{hourglass_forward.10} parent=0 // pred_check_branch
    %27 = sbr.rel (0) target = $region25
  $region24: #{hourglass_forward.10} parent=0 // pred_region
    _
  $region25: #{hourglass_forward.10} parent=0 // pred_fallthru
    _
  // Predicated region
  $region26: #{hourglass_forward.10} parent=0 // pred_check
    _
  $region27: #{hourglass_forward.10} parent=0 // pred_check_branch
    %29 = sbr.rel (0) target = $region29
  $region28: #{hourglass_forward.10} parent=0 // pred_region
    _
  $region29: #{hourglass_forward.10} parent=0 // pred_fallthru
    _
  // Predicated region
  $region30: #{hourglass_forward.10} parent=0 // pred_check
    _
  $region31: #{hourglass_forward.10} parent=0 // pred_check_branch
    %31 = sbr.rel (0) target = $region33
  $region32: #{hourglass_forward.10} parent=0 // pred_region
    _
  $region33: #{hourglass_forward.10} parent=0 // pred_fallthru
    _
  // Predicated region
  $region34: #{hourglass_forward.10} parent=0 // pred_check
    _
  $region35: #{hourglass_forward.10} parent=0 // pred_check_branch
    %33 = sbr.rel (0) target = $region37
  $region36: #{hourglass_forward.10} parent=0 // pred_region
    _
  $region37: #{hourglass_forward.10} parent=0 // pred_fallthru
    _
  // Predicated region
  $region38: #{hourglass_forward.10} parent=0 // pred_check
    _
  $region39: #{hourglass_forward.10} parent=0 // pred_check_branch
    %35 = sbr.rel (0) target = $region41
  $region40: #{hourglass_forward.10} parent=0 // pred_region
    _
  $region41: #{hourglass_forward.10} parent=0 // pred_fallthru
    _
  // Predicated region
  $region42: #{hourglass_forward.10} parent=0 // pred_check
    _
  $region43: #{hourglass_forward.10} parent=0 // pred_check_branch
    %37 = sbr.rel (0) target = $region45
  $region44: #{hourglass_forward.10} parent=0 // pred_region
    _
  $region45: #{hourglass_forward.10} parent=0 // pred_fallthru
    _
  %v38 = vld [vmem:[%s0] sm:$0xff]
  %v39 = vld [vmem:[%s0 + $0x8] sm:$0xff]
  %v40 = vld [vmem:[%s2] sm:$0xff]
  %vm41 = vcmask 130048
  %v43 = vsel %vm41, %v40, 0
  %45 = vmatprep.subr.mxu0 0.0
  %46 = vmatpush1.msra.mxu0 0.0
  %47 = vmatprep.subr.mxu0 0.0
  %48 = vmatpush1.msra.mxu0 0.0
  %49 = vmatprep.subr.mxu0 0.0
  %50 = vmatpush1.msra.mxu0 0.0
  %51 = vmatprep.subr.mxu0 0.0
  %52 = vmatpush1.msra.mxu0 0.0
  %53 = vmatprep.subr.mxu0 0.0
  %54 = vmatpush1.msra.mxu0 0.0
  %55 = vmatprep.subr.mxu0 0.0
  %56 = vmatpush1.msra.mxu0 0.0
  %57 = vmatprep.subr.mxu0 0.0
  %58 = vmatpush1.msra.mxu0 0.0
  %59 = vmatprep.subr.mxu0 0.0
  %60 = vmatpush1.msra.mxu0 0.0
  %61 = vmatprep.subr.mxu0 0.0
  %62 = vmatpush1.msra.mxu0 0.0
  %63 = vmatprep.subr.mxu0 0.0
  %64 = vmatpush1.msra.mxu0 0.0
  %65 = vmatprep.subr.mxu0 0.0
  %66 = vmatpush1.msra.mxu0 0.0
  %67 = vmatprep.subr.mxu0 0.0
  %68 = vmatpush1.msra.mxu0 0.0
  %69 = vmatprep.subr.mxu0 0.0
  %70 = vmatpush1.msra.mxu0 0.0
  %71 = vmatprep.subr.mxu0 0.0
  %72 = vmatpush1.msra.mxu0 0.0
  %73 = vmatprep.subr.mxu0 0.0
  %74 = vmatpush1.msra.mxu0 %v39
  %75 = vmatprep.subr.mxu0 0.0
  %76 = vmatpush1.msra.mxu0 %v38
  %77 = vmatprep.subr.mxu0 0.0
  %78 = vmatpush2.msra.mxu0 0.0
  %79 = vmatprep.subr.mxu0 0.0
  %80 = vmatpush2.msra.mxu0 0.0
  %81 = vmatprep.subr.mxu0 0.0
  %82 = vmatpush2.msra.mxu0 0.0
  %83 = vmatprep.subr.mxu0 0.0
  %84 = vmatpush2.msra.mxu0 0.0
  %85 = vmatprep.subr.mxu0 0.0
  %86 = vmatpush2.msra.mxu0 0.0
  %87 = vmatprep.subr.mxu0 0.0
  %88 = vmatpush2.msra.mxu0 0.0
  %89 = vmatprep.subr.mxu0 0.0
  %90 = vmatpush2.msra.mxu0 0.0
  %91 = vmatprep.subr.mxu0 0.0
  %92 = vmatpush2.msra.mxu0 0.0
  %93 = vmatprep.subr.mxu0 0.0
  %94 = vmatpush2.msra.mxu0 0.0
  %95 = vmatprep.subr.mxu0 0.0
  %96 = vmatpush2.msra.mxu0 0.0
  %97 = vmatprep.subr.mxu0 0.0
  %98 = vmatpush2.msra.mxu0 0.0
  %99 = vmatprep.subr.mxu0 0.0
  %100 = vmatpush2.msra.mxu0 0.0
  %101 = vmatprep.subr.mxu0 0.0
  %102 = vmatpush2.msra.mxu0 0.0
  %103 = vmatprep.subr.mxu0 0.0
  %104 = vmatpush2.msra.mxu0 0.0
  %105 = vmatprep.subr.mxu0 0.0
  %106 = vmatpush2.msra.mxu0 0.0
  %107 = vmatprep.subr.mxu0 0.0
  %108 = vmatpush2.msra.mxu0 0.0
  %109 = vmatprep.mubr.f32.mxu0 0.0
  %110 = vmatmul.mubr.f32.gmra.mxu0 %v43
  %v111 = vpop.f32.mrf.mxu0
  %v112 = vadd.f32 0.0, %v111
  %v113 = vpop.f32.mrf.mxu0
  %114 = vdwg.mxu0
  %115 = vadd.xlane.f32.xlu0 %v112
  %v116 = vpop.xlane.xlu0 %115
  %v117 = vmul.f32 %v112, %v112
  %118 = vadd.xlane.f32.xlu0 %v117
  %v119 = vpop.xlane.xlu0 %118
  %v120 = vmul.f32 %v116, 0.0078125
  %v121 = vmul.f32 %v119, 0.0078125
  %v122 = vmul.f32 %v120, %v120
  %v123 = vsub.f32 %v121, %v122
  %v124 = vld [vmem:[%s3] sm:$0xff]
  %v125 = vadd.f32 %v123, 1e-05
  %v126 = vrsqrt.pop %v125
  %v127 = vmul.f32 %v124, %v126
  %v128 = vld [vmem:[%s4] sm:$0xff]
  %v129 = vmul.f32 %v120, %v127
  %v130 = vsub.f32 %v128, %v129
  %132 = vset.pattern.permute.xlu0 0
  %133 = vperm.xlu0 %132, %v127
  %v134 = vpop.permute.xlu0 %133
  %v136 = vmul.f32 %v112, %v134
  %138 = vset.pattern.permute.xlu0 0
  %139 = vperm.xlu0 %138, %v130
  %v140 = vpop.permute.xlu0 %139
  %v142 = vadd.f32 %v136, %v140
  %v143 = vmax.f32 %v142, 0.0
  %144 = vrot.lane.b32.xlu0 %v143, 9
  %v145 = vpop.permute.xlu0 %144
  %v146 = vld [vmem:[%s1] sm:$0x1]
  %v147 = vlaneseq
  %v148 = vshrl.u32 %v147, 7
  %v149 = vsub.s32 0, %v148
  %v150 = vrot.slane %v146, %v149
  %v151 = vmul.f32 %v145, %v150
  %152 = vst [vmem:[#allocation2] sm:$0xff] %v151
  %153 = vrot.lane.b32.xlu0 %v143, 8
  %v154 = vpop.permute.xlu0 %153
  %v155 = vld [vmem:[%s1 + $0x1] sm:$0x1]
  %v156 = vlaneseq
  %v157 = vshrl.u32 %v156, 7
  %v158 = vsub.s32 0, %v157
  %v159 = vrot.slane %v155, %v158
  %v160 = vmul.f32 %v154, %v159
  %161 = vst [vmem:[#allocation2 + $0x8] sm:$0xff] %v160
  %162 = vrot.lane.b32.xlu0 %v143, 7
  %v163 = vpop.permute.xlu0 %162
  %v164 = vld [vmem:[%s1 + $0x2] sm:$0x1]
  %v165 = vlaneseq
  %v166 = vshrl.u32 %v165, 7
  %v167 = vsub.s32 0, %v166
  %v168 = vrot.slane %v164, %v167
  %v169 = vmul.f32 %v163, %v168
  %170 = vst [vmem:[#allocation2 + $0x10] sm:$0xff] %v169
  %171 = vrot.lane.b32.xlu0 %v143, 1
  %v172 = vpop.permute.xlu0 %171
  %v173 = vld [vmem:[%s1 + $0x3] sm:$0x1]
  %v174 = vlaneseq
  %v175 = vshrl.u32 %v174, 7
  %v176 = vsub.s32 0, %v175
  %v177 = vrot.slane %v173, %v176
  %v178 = vmul.f32 %v172, %v177
  %179 = vst [vmem:[#allocation2 + $0x18] sm:$0xff] %v178
  %180 = vst [vmem:[#allocation2 + $0x20] sm:$0xff] %v143
  %181 = vrot.lane.b32.xlu0 %v143, 127
  %v182 = vpop.permute.xlu0 %181
  %v183 = vld [vmem:[%s1 + $0x5] sm:$0x1]
  %v184 = vlaneseq
  %v185 = vshrl.u32 %v184, 7
  %v186 = vsub.s32 0, %v185
  %v187 = vrot.slane %v183, %v186
  %v188 = vmul.f32 %v182, %v187
  %189 = vst [vmem:[#allocation2 + $0x28] sm:$0xff] %v188
  %190 = vrot.lane.b32.xlu0 %v143, 121
  %v191 = vpop.permute.xlu0 %190
  %v192 = vld [vmem:[%s1 + $0x6] sm:$0x1]
  %v193 = vlaneseq
  %v194 = vshrl.u32 %v193, 7
  %v195 = vsub.s32 0, %v194
  %v196 = vrot.slane %v192, %v195
  %v197 = vmul.f32 %v191, %v196
  %198 = vst [vmem:[#allocation2 + $0x30] sm:$0xff] %v197
  %199 = vrot.lane.b32.xlu0 %v143, 120
  %v200 = vpop.permute.xlu0 %199
  %v201 = vld [vmem:[%s1 + $0x7] sm:$0x1]
  %v202 = vlaneseq
  %v203 = vshrl.u32 %v202, 7
  %v204 = vsub.s32 0, %v203
  %v205 = vrot.slane %v201, %v204
  %v206 = vmul.f32 %v200, %v205
  %207 = vst [vmem:[#allocation2 + $0x38] sm:$0xff] %v206
  %208 = vrot.lane.b32.xlu0 %v143, 119
  %v209 = vpop.permute.xlu0 %208
  %v210 = vld [vmem:[%s1 + $0x8] sm:$0x1]
  %v211 = vlaneseq
  %v212 = vshrl.u32 %v211, 7
  %v213 = vsub.s32 0, %v212
  %v214 = vrot.slane %v210, %v213
  %v215 = vmul.f32 %v209, %v214
  %216 = vst [vmem:[#allocation2 + $0x40] sm:$0xff] %v215
  %v217 = vld [vmem:[%s5] sm:$0xff]
  %v218 = vld [vmem:[#allocation2] sm:$0xff]
  %v219 = vld [vmem:[#allocation2 + $0x8] sm:$0xff]
  %v220 = vld [vmem:[#allocation2 + $0x10] sm:$0xff]
  %v221 = vld [vmem:[#allocation2 + $0x18] sm:$0xff]
  %v222 = vld [vmem:[#allocation2 + $0x20] sm:$0xff]
  %v223 = vld [vmem:[#allocation2 + $0x28] sm:$0xff]
  %v224 = vld [vmem:[#allocation2 + $0x30] sm:$0xff]
  %v225 = vld [vmem:[#allocation2 + $0x38] sm:$0xff]
  %v226 = vld [vmem:[#allocation2 + $0x40] sm:$0xff]
  %vm227 = vcmask 588800
  %v229 = vsel %vm227, %v217, 0
  %231 = vmatprep.subr.mxu0 0.0
  %232 = vmatpush1.msra.mxu0 0.0
  %233 = vmatprep.subr.mxu0 0.0
  %234 = vmatpush1.msra.mxu0 0.0
  %235 = vmatprep.subr.mxu0 0.0
  %236 = vmatpush1.msra.mxu0 0.0
  %237 = vmatprep.subr.mxu0 0.0
  %238 = vmatpush1.msra.mxu0 0.0
  %239 = vmatprep.subr.mxu0 0.0
  %240 = vmatpush1.msra.mxu0 0.0
  %241 = vmatprep.subr.mxu0 0.0
  %242 = vmatpush1.msra.mxu0 0.0
  %243 = vmatprep.subr.mxu0 0.0
  %244 = vmatpush1.msra.mxu0 0.0
  %245 = vmatprep.subr.mxu0 0.0
  %246 = vmatpush1.msra.mxu0 %v226
  %247 = vmatprep.subr.mxu0 0.0
  %248 = vmatpush1.msra.mxu0 %v225
  %249 = vmatprep.subr.mxu0 0.0
  %250 = vmatpush1.msra.mxu0 %v224
  %251 = vmatprep.subr.mxu0 0.0
  %252 = vmatpush1.msra.mxu0 %v223
  %253 = vmatprep.subr.mxu0 0.0
  %254 = vmatpush1.msra.mxu0 %v222
  %255 = vmatprep.subr.mxu0 0.0
  %256 = vmatpush1.msra.mxu0 %v221
  %257 = vmatprep.subr.mxu0 0.0
  %258 = vmatpush1.msra.mxu0 %v220
  %259 = vmatprep.subr.mxu0 0.0
  %260 = vmatpush1.msra.mxu0 %v219
  %261 = vmatprep.subr.mxu0 0.0
  %262 = vmatpush1.msra.mxu0 %v218
  %263 = vmatprep.subr.mxu0 0.0
  %264 = vmatpush2.msra.mxu0 0.0
  %265 = vmatprep.subr.mxu0 0.0
  %266 = vmatpush2.msra.mxu0 0.0
  %267 = vmatprep.subr.mxu0 0.0
  %268 = vmatpush2.msra.mxu0 0.0
  %269 = vmatprep.subr.mxu0 0.0
  %270 = vmatpush2.msra.mxu0 0.0
  %271 = vmatprep.subr.mxu0 0.0
  %272 = vmatpush2.msra.mxu0 0.0
  %273 = vmatprep.subr.mxu0 0.0
  %274 = vmatpush2.msra.mxu0 0.0
  %275 = vmatprep.subr.mxu0 0.0
  %276 = vmatpush2.msra.mxu0 0.0
  %277 = vmatprep.subr.mxu0 0.0
  %278 = vmatpush2.msra.mxu0 0.0
  %279 = vmatprep.subr.mxu0 0.0
  %280 = vmatpush2.msra.mxu0 0.0
  %281 = vmatprep.subr.mxu0 0.0
  %282 = vmatpush2.msra.mxu0 0.0
  %283 = vmatprep.subr.mxu0 0.0
  %284 = vmatpush2.msra.mxu0 0.0
  %285 = vmatprep.subr.mxu0 0.0
  %286 = vmatpush2.msra.mxu0 0.0
  %287 = vmatprep.subr.mxu0 0.0
  %288 = vmatpush2.msra.mxu0 0.0
  %289 = vmatprep.subr.mxu0 0.0
  %290 = vmatpush2.msra.mxu0 0.0
  %291 = vmatprep.subr.mxu0 0.0
  %292 = vmatpush2.msra.mxu0 0.0
  %293 = vmatprep.subr.mxu0 0.0
  %294 = vmatpush2.msra.mxu0 0.0
  %295 = vmatprep.mubr.f32.mxu0 0.0
  %296 = vmatmul.mubr.f32.gmra.mxu0 %v229
  %v297 = vpop.f32.mrf.mxu0
  %v298 = vadd.f32 0.0, %v297
  %v299 = vpop.f32.mrf.mxu0
  %300 = vdwg.mxu0
  %301 = vadd.xlane.f32.xlu0 %v298
  %v302 = vpop.xlane.xlu0 %301
  %v303 = vmul.f32 %v298, %v298
  %304 = vadd.xlane.f32.xlu0 %v303
  %v305 = vpop.xlane.xlu0 %304
  %v306 = vmul.f32 %v302, 0.0078125
  %v307 = vmul.f32 %v305, 0.0078125
  %v308 = vmul.f32 %v306, %v306
  %v309 = vsub.f32 %v307, %v308
  %v310 = vld [vmem:[%s6] sm:$0xff]
  %v311 = vadd.f32 %v309, 1e-05
  %v312 = vrsqrt.pop %v311
  %v313 = vmul.f32 %v310, %v312
  %v314 = vld [vmem:[%s7] sm:$0xff]
  %v315 = vmul.f32 %v306, %v313
  %v316 = vsub.f32 %v314, %v315
  %318 = vset.pattern.permute.xlu0 0
  %319 = vperm.xlu0 %318, %v313
  %v320 = vpop.permute.xlu0 %319
  %v322 = vmul.f32 %v298, %v320
  %324 = vset.pattern.permute.xlu0 0
  %325 = vperm.xlu0 %324, %v316
  %v326 = vpop.permute.xlu0 %325
  %v328 = vadd.f32 %v322, %v326
  %v329 = vmax.f32 %v328, 0.0
  %v330 = vld [vmem:[%s8] sm:$0xff]
  %v331 = vld [vmem:[%s8 + $0x8] sm:$0xff]
  %vm332 = vcmask 64512
  %v334 = vsel %vm332, %v330, 0
  %v337 = vsel %vm332, %v331, 0
  %339 = vmatprep.subr.mxu0 0.0
  %340 = vmatpush1.msra.mxu0 0.0
  %341 = vmatprep.subr.mxu0 0.0
  %342 = vmatpush1.msra.mxu0 0.0
  %343 = vmatprep.subr.mxu0 0.0
  %344 = vmatpush1.msra.mxu0 0.0
  %345 = vmatprep.subr.mxu0 0.0
  %346 = vmatpush1.msra.mxu0 0.0
  %347 = vmatprep.subr.mxu0 0.0
  %348 = vmatpush1.msra.mxu0 0.0
  %349 = vmatprep.subr.mxu0 0.0
  %350 = vmatpush1.msra.mxu0 0.0
  %351 = vmatprep.subr.mxu0 0.0
  %352 = vmatpush1.msra.mxu0 0.0
  %353 = vmatprep.subr.mxu0 0.0
  %354 = vmatpush1.msra.mxu0 0.0
  %355 = vmatprep.subr.mxu0 0.0
  %356 = vmatpush1.msra.mxu0 0.0
  %357 = vmatprep.subr.mxu0 0.0
  %358 = vmatpush1.msra.mxu0 0.0
  %359 = vmatprep.subr.mxu0 0.0
  %360 = vmatpush1.msra.mxu0 0.0
  %361 = vmatprep.subr.mxu0 0.0
  %362 = vmatpush1.msra.mxu0 0.0
  %363 = vmatprep.subr.mxu0 0.0
  %364 = vmatpush1.msra.mxu0 0.0
  %365 = vmatprep.subr.mxu0 0.0
  %366 = vmatpush1.msra.mxu0 0.0
  %367 = vmatprep.subr.mxu0 0.0
  %368 = vmatpush1.msra.mxu0 0.0
  %369 = vmatprep.subr.mxu0 0.0
  %370 = vmatpush1.msra.mxu0 %v329
  %371 = vmatprep.subr.mxu0 0.0
  %372 = vmatpush2.msra.mxu0 0.0
  %373 = vmatprep.subr.mxu0 0.0
  %374 = vmatpush2.msra.mxu0 0.0
  %375 = vmatprep.subr.mxu0 0.0
  %376 = vmatpush2.msra.mxu0 0.0
  %377 = vmatprep.subr.mxu0 0.0
  %378 = vmatpush2.msra.mxu0 0.0
  %379 = vmatprep.subr.mxu0 0.0
  %380 = vmatpush2.msra.mxu0 0.0
  %381 = vmatprep.subr.mxu0 0.0
  %382 = vmatpush2.msra.mxu0 0.0
  %383 = vmatprep.subr.mxu0 0.0
  %384 = vmatpush2.msra.mxu0 0.0
  %385 = vmatprep.subr.mxu0 0.0
  %386 = vmatpush2.msra.mxu0 0.0
  %387 = vmatprep.subr.mxu0 0.0
  %388 = vmatpush2.msra.mxu0 0.0
  %389 = vmatprep.subr.mxu0 0.0
  %390 = vmatpush2.msra.mxu0 0.0
  %391 = vmatprep.subr.mxu0 0.0
  %392 = vmatpush2.msra.mxu0 0.0
  %393 = vmatprep.subr.mxu0 0.0
  %394 = vmatpush2.msra.mxu0 0.0
  %395 = vmatprep.subr.mxu0 0.0
  %396 = vmatpush2.msra.mxu0 0.0
  %397 = vmatprep.subr.mxu0 0.0
  %398 = vmatpush2.msra.mxu0 0.0
  %399 = vmatprep.subr.mxu0 0.0
  %400 = vmatpush2.msra.mxu0 0.0
  %401 = vmatprep.subr.mxu0 0.0
  %402 = vmatpush2.msra.mxu0 0.0
  %403 = vmatprep.mubr.f32.mxu0 0.0
  %404 = vmatmul.mubr.f32.gmra.mxu0 %v334
  %v405 = vpop.f32.mrf.mxu0
  %v406 = vadd.f32 0.0, %v405
  %v407 = vpop.f32.mrf.mxu0
  %408 = vmatprep.mubr.f32.mxu0 0.0
  %409 = vmatmul.mubr.f32.gmra.mxu0 %v337
  %v410 = vpop.f32.mrf.mxu0
  %v411 = vadd.f32 0.0, %v410
  %v412 = vpop.f32.mrf.mxu0
  %413 = vdwg.mxu0
  %414 = vadd.xlane.f32.xlu0 %v406
  %v415 = vpop.xlane.xlu0 %414
  %416 = vadd.xlane.f32.xlu0 %v411
  %v417 = vpop.xlane.xlu0 %416
  %v418 = vmul.f32 %v406, %v406
  %v419 = vmul.f32 %v411, %v411
  %420 = vadd.xlane.f32.xlu0 %v418
  %v421 = vpop.xlane.xlu0 %420
  %422 = vadd.xlane.f32.xlu0 %v419
  %v423 = vpop.xlane.xlu0 %422
  %v424 = vmul.f32 %v415, 0.0078125
  %v425 = vmul.f32 %v417, 0.0078125
  %v426 = vmul.f32 %v421, 0.0078125
  %v427 = vmul.f32 %v423, 0.0078125
  %v428 = vmul.f32 %v424, %v424
  %v429 = vmul.f32 %v425, %v425
  %v430 = vsub.f32 %v426, %v428
  %v431 = vsub.f32 %v427, %v429
  %v432 = vld [vmem:[%s9] sm:$0xff]
  %v433 = vld [vmem:[%s9 + $0x8] sm:$0xff]
  %v434 = vadd.f32 %v430, 1e-05
  %v435 = vadd.f32 %v431, 1e-05
  %v436 = vrsqrt.pop %v434
  %v437 = vrsqrt.pop %v435
  %v438 = vmul.f32 %v432, %v436
  %v439 = vmul.f32 %v433, %v437
  %v440 = vld [vmem:[%s10] sm:$0xff]
  %v441 = vld [vmem:[%s10 + $0x8] sm:$0xff]
  %v442 = vmul.f32 %v424, %v438
  %v443 = vmul.f32 %v425, %v439
  %v444 = vsub.f32 %v440, %v442
  %v445 = vsub.f32 %v441, %v443
  %447 = vset.pattern.permute.xlu0 0
  %448 = vperm.xlu0 %447, %v438
  %v449 = vpop.permute.xlu0 %448
  %452 = vset.pattern.permute.xlu0 0
  %453 = vperm.xlu0 %452, %v439
  %v454 = vpop.permute.xlu0 %453
  %v456 = vmul.f32 %v406, %v449
  %v457 = vmul.f32 %v411, %v454
  %459 = vset.pattern.permute.xlu0 0
  %460 = vperm.xlu0 %459, %v444
  %v461 = vpop.permute.xlu0 %460
  %464 = vset.pattern.permute.xlu0 0
  %465 = vperm.xlu0 %464, %v445
  %v466 = vpop.permute.xlu0 %465
  %v468 = vadd.f32 %v456, %v461
  %v469 = vadd.f32 %v457, %v466
  %v470 = vmax.f32 %v468, 0.0
  %v471 = vmax.f32 %v469, 0.0
  %v472 = vadd.f32 %v470, %v38
  %v473 = vadd.f32 %v471, %v39
  %474 = vst [vmem:[%s11] sm:$0xff] %v472
  %475 = vst [vmem:[%s11 + $0x8] sm:$0xff] %v473
  // Predicated region
  $region46: #{hourglass_forward.10} parent=0 // pred_check
    _
  $region47: #{hourglass_forward.10} parent=0 // pred_check_branch
    %477 = sbr.rel (0) target = $region49
  $region48: #{hourglass_forward.10} parent=0 // pred_region
    _
  $region49: #{hourglass_forward.10} parent=0 // pred_fallthru
    _
  // Predicated region
  $region50: #{hourglass_forward.10} parent=0 // pred_check
    _
  $region51: #{hourglass_forward.10} parent=0 // pred_check_branch
    %479 = sbr.rel (0) target = $region53
  $region52: #{hourglass_forward.10} parent=0 // pred_region
    _
  $region53: #{hourglass_forward.10} parent=0 // pred_fallthru
    _

// kernel: hourglass_forward.7
$region0: #{hourglass_forward.7}
  #allocation0 [shape = 'u32[]', space=smem, size = 0x4, offset = 0x4, fixed_abs, tag = 'smem constant byte address 0x4 - core index']
  #allocation1 [shape = 'u32[144,128]{1,0:T(1,128)}', space=vmem, size = 0x12000, scoped, tag = 'internal scratch']
  #allocation2 [shape = 'f32[72,2048]{1,0:T(8,128)}', space=vmem, size = 0x90000, scoped, tag = 'scratch operand']
  %s0 = inlined_call_operand.vmem [shape: f32[16,2048], index: 0, kind: input, shape index: {}]
  %s1 = inlined_call_operand.vmem [shape: f32[9,2048], index: 1, kind: input, shape index: {}]
  %s2 = inlined_call_operand.vmem [shape: f32[8,16], index: 2, kind: input, shape index: {}]
  %s3 = inlined_call_operand.vmem [shape: f32[8,1], index: 3, kind: input, shape index: {}]
  %s4 = inlined_call_operand.vmem [shape: f32[8,1], index: 4, kind: input, shape index: {}]
  %s5 = inlined_call_operand.vmem [shape: f32[8,72], index: 5, kind: input, shape index: {}]
  %s6 = inlined_call_operand.vmem [shape: f32[8,1], index: 6, kind: input, shape index: {}]
  %s7 = inlined_call_operand.vmem [shape: f32[8,1], index: 7, kind: input, shape index: {}]
  %s8 = inlined_call_operand.vmem [shape: f32[16,8], index: 8, kind: input, shape index: {}]
  %s9 = inlined_call_operand.vmem [shape: f32[16,1], index: 9, kind: input, shape index: {}]
  %s10 = inlined_call_operand.vmem [shape: f32[16,1], index: 10, kind: input, shape index: {}]
  %s11 = inlined_call_operand.vmem [shape: f32[16,2048], index: 11, kind: output, shape index: {}]
  %s12 = sld [smem:[#allocation0]]
  $region54: #{hourglass_forward.7} parent=0
    _
  %s14 = ssub.s32 1, %s12
  %s15 = scalar_select 0, %s14, %s12
  // Predicated region
  $region2: #{hourglass_forward.7} parent=0 // pred_check
    _
  $region3: #{hourglass_forward.7} parent=0 // pred_check_branch
    %17 = sbr.rel (0) target = $region5
  $region4: #{hourglass_forward.7} parent=0 // pred_region
    _
  $region5: #{hourglass_forward.7} parent=0 // pred_fallthru
    _
  // Predicated region
  $region6: #{hourglass_forward.7} parent=0 // pred_check
    _
  $region7: #{hourglass_forward.7} parent=0 // pred_check_branch
    %19 = sbr.rel (0) target = $region9
  $region8: #{hourglass_forward.7} parent=0 // pred_region
    _
  $region9: #{hourglass_forward.7} parent=0 // pred_fallthru
    _
  // Predicated region
  $region10: #{hourglass_forward.7} parent=0 // pred_check
    _
  $region11: #{hourglass_forward.7} parent=0 // pred_check_branch
    %21 = sbr.rel (0) target = $region13
  $region12: #{hourglass_forward.7} parent=0 // pred_region
    _
  $region13: #{hourglass_forward.7} parent=0 // pred_fallthru
    _
  // Predicated region
  $region14: #{hourglass_forward.7} parent=0 // pred_check
    _
  $region15: #{hourglass_forward.7} parent=0 // pred_check_branch
    %23 = sbr.rel (0) target = $region17
  $region16: #{hourglass_forward.7} parent=0 // pred_region
    _
  $region17: #{hourglass_forward.7} parent=0 // pred_fallthru
    _
  // Predicated region
  $region18: #{hourglass_forward.7} parent=0 // pred_check
    _
  $region19: #{hourglass_forward.7} parent=0 // pred_check_branch
    %25 = sbr.rel (0) target = $region21
  $region20: #{hourglass_forward.7} parent=0 // pred_region
    _
  $region21: #{hourglass_forward.7} parent=0 // pred_fallthru
    _
  // Predicated region
  $region22: #{hourglass_forward.7} parent=0 // pred_check
    _
  $region23: #{hourglass_forward.7} parent=0 // pred_check_branch
    %27 = sbr.rel (0) target = $region25
  $region24: #{hourglass_forward.7} parent=0 // pred_region
    _
  $region25: #{hourglass_forward.7} parent=0 // pred_fallthru
    _
  // Predicated region
  $region26: #{hourglass_forward.7} parent=0 // pred_check
    _
  $region27: #{hourglass_forward.7} parent=0 // pred_check_branch
    %29 = sbr.rel (0) target = $region29
  $region28: #{hourglass_forward.7} parent=0 // pred_region
    _
  $region29: #{hourglass_forward.7} parent=0 // pred_fallthru
    _
  // Predicated region
  $region30: #{hourglass_forward.7} parent=0 // pred_check
    _
  $region31: #{hourglass_forward.7} parent=0 // pred_check_branch
    %31 = sbr.rel (0) target = $region33
  $region32: #{hourglass_forward.7} parent=0 // pred_region
    _
  $region33: #{hourglass_forward.7} parent=0 // pred_fallthru
    _
  // Predicated region
  $region34: #{hourglass_forward.7} parent=0 // pred_check
    _
  $region35: #{hourglass_forward.7} parent=0 // pred_check_branch
    %33 = sbr.rel (0) target = $region37
  $region36: #{hourglass_forward.7} parent=0 // pred_region
    _
  $region37: #{hourglass_forward.7} parent=0 // pred_fallthru
    _
  // Predicated region
  $region38: #{hourglass_forward.7} parent=0 // pred_check
    _
  $region39: #{hourglass_forward.7} parent=0 // pred_check_branch
    %35 = sbr.rel (0) target = $region41
  $region40: #{hourglass_forward.7} parent=0 // pred_region
    _
  $region41: #{hourglass_forward.7} parent=0 // pred_fallthru
    _
  // Predicated region
  $region42: #{hourglass_forward.7} parent=0 // pred_check
    _
  $region43: #{hourglass_forward.7} parent=0 // pred_check_branch
    %37 = sbr.rel (0) target = $region45
  $region44: #{hourglass_forward.7} parent=0 // pred_region
    _
  $region45: #{hourglass_forward.7} parent=0 // pred_fallthru
    _
  %v38 = vld [vmem:[%s0] sm:$0xff]
  %v39 = vld [vmem:[%s0 + $0x8] sm:$0xff]
  %v40 = vld [vmem:[%s0 + $0x10] sm:$0xff]
  %v41 = vld [vmem:[%s0 + $0x18] sm:$0xff]
  %v42 = vld [vmem:[%s0 + $0x20] sm:$0xff]
  %v43 = vld [vmem:[%s0 + $0x28] sm:$0xff]
  %v44 = vld [vmem:[%s0 + $0x30] sm:$0xff]
  %v45 = vld [vmem:[%s0 + $0x38] sm:$0xff]
  %v46 = vld [vmem:[%s0 + $0x40] sm:$0xff]
  %v47 = vld [vmem:[%s0 + $0x48] sm:$0xff]
  %v48 = vld [vmem:[%s0 + $0x50] sm:$0xff]
  %v49 = vld [vmem:[%s0 + $0x58] sm:$0xff]
  %v50 = vld [vmem:[%s0 + $0x60] sm:$0xff]
  %v51 = vld [vmem:[%s0 + $0x68] sm:$0xff]
  %v52 = vld [vmem:[%s0 + $0x70] sm:$0xff]
  %v53 = vld [vmem:[%s0 + $0x78] sm:$0xff]
  %v54 = vld [vmem:[%s0 + $0x80] sm:$0xff]
  %v55 = vld [vmem:[%s0 + $0x88] sm:$0xff]
  %v56 = vld [vmem:[%s0 + $0x90] sm:$0xff]
  %v57 = vld [vmem:[%s0 + $0x98] sm:$0xff]
  %v58 = vld [vmem:[%s0 + $0xa0] sm:$0xff]
  %v59 = vld [vmem:[%s0 + $0xa8] sm:$0xff]
  %v60 = vld [vmem:[%s0 + $0xb0] sm:$0xff]
  %v61 = vld [vmem:[%s0 + $0xb8] sm:$0xff]
  %v62 = vld [vmem:[%s0 + $0xc0] sm:$0xff]
  %v63 = vld [vmem:[%s0 + $0xc8] sm:$0xff]
  %v64 = vld [vmem:[%s0 + $0xd0] sm:$0xff]
  %v65 = vld [vmem:[%s0 + $0xd8] sm:$0xff]
  %v66 = vld [vmem:[%s0 + $0xe0] sm:$0xff]
  %v67 = vld [vmem:[%s0 + $0xe8] sm:$0xff]
  %v68 = vld [vmem:[%s0 + $0xf0] sm:$0xff]
  %v69 = vld [vmem:[%s0 + $0xf8] sm:$0xff]
  %v70 = vld [vmem:[%s2] sm:$0xff]
  %vm71 = vcmask 130048
  %v73 = vsel %vm71, %v70, 0
  %75 = vmatprep.subr.mxu0 0.0
  %76 = vmatpush1.msra.mxu0 0.0
  %77 = vmatprep.subr.mxu0 0.0
  %78 = vmatpush1.msra.mxu0 0.0
  %79 = vmatprep.subr.mxu0 0.0
  %80 = vmatpush1.msra.mxu0 0.0
  %81 = vmatprep.subr.mxu0 0.0
  %82 = vmatpush1.msra.mxu0 0.0
  %83 = vmatprep.subr.mxu0 0.0
  %84 = vmatpush1.msra.mxu0 0.0
  %85 = vmatprep.subr.mxu0 0.0
  %86 = vmatpush1.msra.mxu0 0.0
  %87 = vmatprep.subr.mxu0 0.0
  %88 = vmatpush1.msra.mxu0 0.0
  %89 = vmatprep.subr.mxu0 0.0
  %90 = vmatpush1.msra.mxu0 0.0
  %91 = vmatprep.subr.mxu0 0.0
  %92 = vmatpush1.msra.mxu0 0.0
  %93 = vmatprep.subr.mxu0 0.0
  %94 = vmatpush1.msra.mxu0 0.0
  %95 = vmatprep.subr.mxu0 0.0
  %96 = vmatpush1.msra.mxu0 0.0
  %97 = vmatprep.subr.mxu0 0.0
  %98 = vmatpush1.msra.mxu0 0.0
  %99 = vmatprep.subr.mxu0 0.0
  %100 = vmatpush1.msra.mxu0 0.0
  %101 = vmatprep.subr.mxu0 0.0
  %102 = vmatpush1.msra.mxu0 0.0
  %103 = vmatprep.subr.mxu0 %v55
  %104 = vmatpush1.msra.mxu0 %v54
  %105 = vmatprep.subr.mxu0 %v39
  %106 = vmatpush1.msra.mxu0 %v38
  %107 = vmatprep.subr.mxu0 0.0
  %108 = vmatpush2.msra.mxu0 0.0
  %109 = vmatprep.subr.mxu0 0.0
  %110 = vmatpush2.msra.mxu0 0.0
  %111 = vmatprep.subr.mxu0 0.0
  %112 = vmatpush2.msra.mxu0 0.0
  %113 = vmatprep.subr.mxu0 0.0
  %114 = vmatpush2.msra.mxu0 0.0
  %115 = vmatprep.subr.mxu0 0.0
  %116 = vmatpush2.msra.mxu0 0.0
  %117 = vmatprep.subr.mxu0 0.0
  %118 = vmatpush2.msra.mxu0 0.0
  %119 = vmatprep.subr.mxu0 0.0
  %120 = vmatpush2.msra.mxu0 0.0
  %121 = vmatprep.subr.mxu0 0.0
  %122 = vmatpush2.msra.mxu0 0.0
  %123 = vmatprep.subr.mxu0 0.0
  %124 = vmatpush2.msra.mxu0 0.0
  %125 = vmatprep.subr.mxu0 0.0
  %126 = vmatpush2.msra.mxu0 0.0
  %127 = vmatprep.subr.mxu0 0.0
  %128 = vmatpush2.msra.mxu0 0.0
  %129 = vmatprep.subr.mxu0 0.0
  %130 = vmatpush2.msra.mxu0 0.0
  %131 = vmatprep.subr.mxu0 0.0
  %132 = vmatpush2.msra.mxu0 0.0
  %133 = vmatprep.subr.mxu0 0.0
  %134 = vmatpush2.msra.mxu0 0.0
  %135 = vmatprep.subr.mxu0 0.0
  %136 = vmatpush2.msra.mxu0 0.0
  %137 = vmatprep.subr.mxu0 0.0
  %138 = vmatpush2.msra.mxu0 0.0
  %139 = vmatprep.mubr.f32.mxu0 0.0
  %140 = vmatmul.mubr.f32.gmra.mxu0 %v73
  %v141 = vpop.f32.mrf.mxu0
  %v142 = vadd.f32 0.0, %v141
  %v143 = vpop.f32.mrf.mxu0
  %v144 = vadd.f32 0.0, %v143
  %145 = vdwg.mxu0
  %146 = vmatprep.subr.mxu0 0.0
  %147 = vmatpush1.msra.mxu0 0.0
  %148 = vmatprep.subr.mxu0 0.0
  %149 = vmatpush1.msra.mxu0 0.0
  %150 = vmatprep.subr.mxu0 0.0
  %151 = vmatpush1.msra.mxu0 0.0
  %152 = vmatprep.subr.mxu0 0.0
  %153 = vmatpush1.msra.mxu0 0.0
  %154 = vmatprep.subr.mxu0 0.0
  %155 = vmatpush1.msra.mxu0 0.0
  %156 = vmatprep.subr.mxu0 0.0
  %157 = vmatpush1.msra.mxu0 0.0
  %158 = vmatprep.subr.mxu0 0.0
  %159 = vmatpush1.msra.mxu0 0.0
  %160 = vmatprep.subr.mxu0 0.0
  %161 = vmatpush1.msra.mxu0 0.0
  %162 = vmatprep.subr.mxu0 0.0
  %163 = vmatpush1.msra.mxu0 0.0
  %164 = vmatprep.subr.mxu0 0.0
  %165 = vmatpush1.msra.mxu0 0.0
  %166 = vmatprep.subr.mxu0 0.0
  %167 = vmatpush1.msra.mxu0 0.0
  %168 = vmatprep.subr.mxu0 0.0
  %169 = vmatpush1.msra.mxu0 0.0
  %170 = vmatprep.subr.mxu0 0.0
  %171 = vmatpush1.msra.mxu0 0.0
  %172 = vmatprep.subr.mxu0 0.0
  %173 = vmatpush1.msra.mxu0 0.0
  %174 = vmatprep.subr.mxu0 %v57
  %175 = vmatpush1.msra.mxu0 %v56
  %176 = vmatprep.subr.mxu0 %v41
  %177 = vmatpush1.msra.mxu0 %v40
  %178 = vmatprep.subr.mxu0 0.0
  %179 = vmatpush2.msra.mxu0 0.0
  %180 = vmatprep.subr.mxu0 0.0
  %181 = vmatpush2.msra.mxu0 0.0
  %182 = vmatprep.subr.mxu0 0.0
  %183 = vmatpush2.msra.mxu0 0.0
  %184 = vmatprep.subr.mxu0 0.0
  %185 = vmatpush2.msra.mxu0 0.0
  %186 = vmatprep.subr.mxu0 0.0
  %187 = vmatpush2.msra.mxu0 0.0
  %188 = vmatprep.subr.mxu0 0.0
  %189 = vmatpush2.msra.mxu0 0.0
  %190 = vmatprep.subr.mxu0 0.0
  %191 = vmatpush2.msra.mxu0 0.0
  %192 = vmatprep.subr.mxu0 0.0
  %193 = vmatpush2.msra.mxu0 0.0
  %194 = vmatprep.subr.mxu0 0.0
  %195 = vmatpush2.msra.mxu0 0.0
  %196 = vmatprep.subr.mxu0 0.0
  %197 = vmatpush2.msra.mxu0 0.0
  %198 = vmatprep.subr.mxu0 0.0
  %199 = vmatpush2.msra.mxu0 0.0
  %200 = vmatprep.subr.mxu0 0.0
  %201 = vmatpush2.msra.mxu0 0.0
  %202 = vmatprep.subr.mxu0 0.0
  %203 = vmatpush2.msra.mxu0 0.0
  %204 = vmatprep.subr.mxu0 0.0
  %205 = vmatpush2.msra.mxu0 0.0
  %206 = vmatprep.subr.mxu0 0.0
  %207 = vmatpush2.msra.mxu0 0.0
  %208 = vmatprep.subr.mxu0 0.0
  %209 = vmatpush2.msra.mxu0 0.0
  %210 = vmatprep.mubr.f32.mxu0 0.0
  %211 = vmatmul.mubr.f32.gmra.mxu0 %v73
  %v212 = vpop.f32.mrf.mxu0
  %v213 = vadd.f32 0.0, %v212
  %v214 = vpop.f32.mrf.mxu0
  %v215 = vadd.f32 0.0, %v214
  %216 = vdwg.mxu0
  %217 = vmatprep.subr.mxu0 0.0
  %218 = vmatpush1.msra.mxu0 0.0
  %219 = vmatprep.subr.mxu0 0.0
  %220 = vmatpush1.msra.mxu0 0.0
  %221 = vmatprep.subr.mxu0 0.0
  %222 = vmatpush1.msra.mxu0 0.0
  %223 = vmatprep.subr.mxu0 0.0
  %224 = vmatpush1.msra.mxu0 0.0
  %225 = vmatprep.subr.mxu0 0.0
  %226 = vmatpush1.msra.mxu0 0.0
  %227 = vmatprep.subr.mxu0 0.0
  %228 = vmatpush1.msra.mxu0 0.0
  %229 = vmatprep.subr.mxu0 0.0
  %230 = vmatpush1.msra.mxu0 0.0
  %231 = vmatprep.subr.mxu0 0.0
  %232 = vmatpush1.msra.mxu0 0.0
  %233 = vmatprep.subr.mxu0 0.0
  %234 = vmatpush1.msra.mxu0 0.0
  %235 = vmatprep.subr.mxu0 0.0
  %236 = vmatpush1.msra.mxu0 0.0
  %237 = vmatprep.subr.mxu0 0.0
  %238 = vmatpush1.msra.mxu0 0.0
  %239 = vmatprep.subr.mxu0 0.0
  %240 = vmatpush1.msra.mxu0 0.0
  %241 = vmatprep.subr.mxu0 0.0
  %242 = vmatpush1.msra.mxu0 0.0
  %243 = vmatprep.subr.mxu0 0.0
  %244 = vmatpush1.msra.mxu0 0.0
  %245 = vmatprep.subr.mxu0 %v59
  %246 = vmatpush1.msra.mxu0 %v58
  %247 = vmatprep.subr.mxu0 %v43
  %248 = vmatpush1.msra.mxu0 %v42
  %249 = vmatprep.subr.mxu0 0.0
  %250 = vmatpush2.msra.mxu0 0.0
  %251 = vmatprep.subr.mxu0 0.0
  %252 = vmatpush2.msra.mxu0 0.0
  %253 = vmatprep.subr.mxu0 0.0
  %254 = vmatpush2.msra.mxu0 0.0
  %255 = vmatprep.subr.mxu0 0.0
  %256 = vmatpush2.msra.mxu0 0.0
  %257 = vmatprep.subr.mxu0 0.0
  %258 = vmatpush2.msra.mxu0 0.0
  %259 = vmatprep.subr.mxu0 0.0
  %260 = vmatpush2.msra.mxu0 0.0
  %261 = vmatprep.subr.mxu0 0.0
  %262 = vmatpush2.msra.mxu0 0.0
  %263 = vmatprep.subr.mxu0 0.0
  %264 = vmatpush2.msra.mxu0 0.0
  %265 = vmatprep.subr.mxu0 0.0
  %266 = vmatpush2.msra.mxu0 0.0
  %267 = vmatprep.subr.mxu0 0.0
  %268 = vmatpush2.msra.mxu0 0.0
  %269 = vmatprep.subr.mxu0 0.0
  %270 = vmatpush2.msra.mxu0 0.0
  %271 = vmatprep.subr.mxu0 0.0
  %272 = vmatpush2.msra.mxu0 0.0
  %273 = vmatprep.subr.mxu0 0.0
  %274 = vmatpush2.msra.mxu0 0.0
  %275 = vmatprep.subr.mxu0 0.0
  %276 = vmatpush2.msra.mxu0 0.0
  %277 = vmatprep.subr.mxu0 0.0
  %278 = vmatpush2.msra.mxu0 0.0
  %279 = vmatprep.subr.mxu0 0.0
  %280 = vmatpush2.msra.mxu0 0.0
  %281 = vmatprep.mubr.f32.mxu0 0.0
  %282 = vmatmul.mubr.f32.gmra.mxu0 %v73
  %v283 = vpop.f32.mrf.mxu0
  %v284 = vadd.f32 0.0, %v283
  %v285 = vpop.f32.mrf.mxu0
  %v286 = vadd.f32 0.0, %v285
  %287 = vdwg.mxu0
  %288 = vmatprep.subr.mxu0 0.0
  %289 = vmatpush1.msra.mxu0 0.0
  %290 = vmatprep.subr.mxu0 0.0
  %291 = vmatpush1.msra.mxu0 0.0
  %292 = vmatprep.subr.mxu0 0.0
  %293 = vmatpush1.msra.mxu0 0.0
  %294 = vmatprep.subr.mxu0 0.0
  %295 = vmatpush1.msra.mxu0 0.0
  %296 = vmatprep.subr.mxu0 0.0
  %297 = vmatpush1.msra.mxu0 0.0
  %298 = vmatprep.subr.mxu0 0.0
  %299 = vmatpush1.msra.mxu0 0.0
  %300 = vmatprep.subr.mxu0 0.0
  %301 = vmatpush1.msra.mxu0 0.0
  %302 = vmatprep.subr.mxu0 0.0
  %303 = vmatpush1.msra.mxu0 0.0
  %304 = vmatprep.subr.mxu0 0.0
  %305 = vmatpush1.msra.mxu0 0.0
  %306 = vmatprep.subr.mxu0 0.0
  %307 = vmatpush1.msra.mxu0 0.0
  %308 = vmatprep.subr.mxu0 0.0
  %309 = vmatpush1.msra.mxu0 0.0
  %310 = vmatprep.subr.mxu0 0.0
  %311 = vmatpush1.msra.mxu0 0.0
  %312 = vmatprep.subr.mxu0 0.0
  %313 = vmatpush1.msra.mxu0 0.0
  %314 = vmatprep.subr.mxu0 0.0
  %315 = vmatpush1.msra.mxu0 0.0
  %316 = vmatprep.subr.mxu0 %v61
  %317 = vmatpush1.msra.mxu0 %v60
  %318 = vmatprep.subr.mxu0 %v45
  %319 = vmatpush1.msra.mxu0 %v44
  %320 = vmatprep.subr.mxu0 0.0
  %321 = vmatpush2.msra.mxu0 0.0
  %322 = vmatprep.subr.mxu0 0.0
  %323 = vmatpush2.msra.mxu0 0.0
  %324 = vmatprep.subr.mxu0 0.0
  %325 = vmatpush2.msra.mxu0 0.0
  %326 = vmatprep.subr.mxu0 0.0
  %327 = vmatpush2.msra.mxu0 0.0
  %328 = vmatprep.subr.mxu0 0.0
  %329 = vmatpush2.msra.mxu0 0.0
  %330 = vmatprep.subr.mxu0 0.0
  %331 = vmatpush2.msra.mxu0 0.0
  %332 = vmatprep.subr.mxu0 0.0
  %333 = vmatpush2.msra.mxu0 0.0
  %334 = vmatprep.subr.mxu0 0.0
  %335 = vmatpush2.msra.mxu0 0.0
  %336 = vmatprep.subr.mxu0 0.0
  %337 = vmatpush2.msra.mxu0 0.0
  %338 = vmatprep.subr.mxu0 0.0
  %339 = vmatpush2.msra.mxu0 0.0
  %340 = vmatprep.subr.mxu0 0.0
  %341 = vmatpush2.msra.mxu0 0.0
  %342 = vmatprep.subr.mxu0 0.0
  %343 = vmatpush2.msra.mxu0 0.0
  %344 = vmatprep.subr.mxu0 0.0
  %345 = vmatpush2.msra.mxu0 0.0
  %346 = vmatprep.subr.mxu0 0.0
  %347 = vmatpush2.msra.mxu0 0.0
  %348 = vmatprep.subr.mxu0 0.0
  %349 = vmatpush2.msra.mxu0 0.0
  %350 = vmatprep.subr.mxu0 0.0
  %351 = vmatpush2.msra.mxu0 0.0
  %352 = vmatprep.mubr.f32.mxu0 0.0
  %353 = vmatmul.mubr.f32.gmra.mxu0 %v73
  %v354 = vpop.f32.mrf.mxu0
  %v355 = vadd.f32 0.0, %v354
  %v356 = vpop.f32.mrf.mxu0
  %v357 = vadd.f32 0.0, %v356
  %358 = vdwg.mxu0
  %359 = vmatprep.subr.mxu0 0.0
  %360 = vmatpush1.msra.mxu0 0.0
  %361 = vmatprep.subr.mxu0 0.0
  %362 = vmatpush1.msra.mxu0 0.0
  %363 = vmatprep.subr.mxu0 0.0
  %364 = vmatpush1.msra.mxu0 0.0
  %365 = vmatprep.subr.mxu0 0.0
  %366 = vmatpush1.msra.mxu0 0.0
  %367 = vmatprep.subr.mxu0 0.0
  %368 = vmatpush1.msra.mxu0 0.0
  %369 = vmatprep.subr.mxu0 0.0
  %370 = vmatpush1.msra.mxu0 0.0
  %371 = vmatprep.subr.mxu0 0.0
  %372 = vmatpush1.msra.mxu0 0.0
  %373 = vmatprep.subr.mxu0 0.0
  %374 = vmatpush1.msra.mxu0 0.0
  %375 = vmatprep.subr.mxu0 0.0
  %376 = vmatpush1.msra.mxu0 0.0
  %377 = vmatprep.subr.mxu0 0.0
  %378 = vmatpush1.msra.mxu0 0.0
  %379 = vmatprep.subr.mxu0 0.0
  %380 = vmatpush1.msra.mxu0 0.0
  %381 = vmatprep.subr.mxu0 0.0
  %382 = vmatpush1.msra.mxu0 0.0
  %383 = vmatprep.subr.mxu0 0.0
  %384 = vmatpush1.msra.mxu0 0.0
  %385 = vmatprep.subr.mxu0 0.0
  %386 = vmatpush1.msra.mxu0 0.0
  %387 = vmatprep.subr.mxu0 %v63
  %388 = vmatpush1.msra.mxu0 %v62
  %389 = vmatprep.subr.mxu0 %v47
  %390 = vmatpush1.msra.mxu0 %v46
  %391 = vmatprep.subr.mxu0 0.0
  %392 = vmatpush2.msra.mxu0 0.0
  %393 = vmatprep.subr.mxu0 0.0
  %394 = vmatpush2.msra.mxu0 0.0
  %395 = vmatprep.subr.mxu0 0.0
  %396 = vmatpush2.msra.mxu0 0.0
  %397 = vmatprep.subr.mxu0 0.0
  %398 = vmatpush2.msra.mxu0 0.0
  %399 = vmatprep.subr.mxu0 0.0
  %400 = vmatpush2.msra.mxu0 0.0
  %401 = vmatprep.subr.mxu0 0.0
  %402 = vmatpush2.msra.mxu0 0.0
  %403 = vmatprep.subr.mxu0 0.0
  %404 = vmatpush2.msra.mxu0 0.0
  %405 = vmatprep.subr.mxu0 0.0
  %406 = vmatpush2.msra.mxu0 0.0
  %407 = vmatprep.subr.mxu0 0.0
  %408 = vmatpush2.msra.mxu0 0.0
  %409 = vmatprep.subr.mxu0 0.0
  %410 = vmatpush2.msra.mxu0 0.0
  %411 = vmatprep.subr.mxu0 0.0
  %412 = vmatpush2.msra.mxu0 0.0
  %413 = vmatprep.subr.mxu0 0.0
  %414 = vmatpush2.msra.mxu0 0.0
  %415 = vmatprep.subr.mxu0 0.0
  %416 = vmatpush2.msra.mxu0 0.0
  %417 = vmatprep.subr.mxu0 0.0
  %418 = vmatpush2.msra.mxu0 0.0
  %419 = vmatprep.subr.mxu0 0.0
  %420 = vmatpush2.msra.mxu0 0.0
  %421 = vmatprep.subr.mxu0 0.0
  %422 = vmatpush2.msra.mxu0 0.0
  %423 = vmatprep.mubr.f32.mxu0 0.0
  %424 = vmatmul.mubr.f32.gmra.mxu0 %v73
  %v425 = vpop.f32.mrf.mxu0
  %v426 = vadd.f32 0.0, %v425
  %v427 = vpop.f32.mrf.mxu0
  %v428 = vadd.f32 0.0, %v427
  %429 = vdwg.mxu0
  %430 = vmatprep.subr.mxu0 0.0
  %431 = vmatpush1.msra.mxu0 0.0
  %432 = vmatprep.subr.mxu0 0.0
  %433 = vmatpush1.msra.mxu0 0.0
  %434 = vmatprep.subr.mxu0 0.0
  %435 = vmatpush1.msra.mxu0 0.0
  %436 = vmatprep.subr.mxu0 0.0
  %437 = vmatpush1.msra.mxu0 0.0
  %438 = vmatprep.subr.mxu0 0.0
  %439 = vmatpush1.msra.mxu0 0.0
  %440 = vmatprep.subr.mxu0 0.0
  %441 = vmatpush1.msra.mxu0 0.0
  %442 = vmatprep.subr.mxu0 0.0
  %443 = vmatpush1.msra.mxu0 0.0
  %444 = vmatprep.subr.mxu0 0.0
  %445 = vmatpush1.msra.mxu0 0.0
  %446 = vmatprep.subr.mxu0 0.0
  %447 = vmatpush1.msra.mxu0 0.0
  %448 = vmatprep.subr.mxu0 0.0
  %449 = vmatpush1.msra.mxu0 0.0
  %450 = vmatprep.subr.mxu0 0.0
  %451 = vmatpush1.msra.mxu0 0.0
  %452 = vmatprep.subr.mxu0 0.0
  %453 = vmatpush1.msra.mxu0 0.0
  %454 = vmatprep.subr.mxu0 0.0
  %455 = vmatpush1.msra.mxu0 0.0
  %456 = vmatprep.subr.mxu0 0.0
  %457 = vmatpush1.msra.mxu0 0.0
  %458 = vmatprep.subr.mxu0 %v65
  %459 = vmatpush1.msra.mxu0 %v64
  %460 = vmatprep.subr.mxu0 %v49
  %461 = vmatpush1.msra.mxu0 %v48
  %462 = vmatprep.subr.mxu0 0.0
  %463 = vmatpush2.msra.mxu0 0.0
  %464 = vmatprep.subr.mxu0 0.0
  %465 = vmatpush2.msra.mxu0 0.0
  %466 = vmatprep.subr.mxu0 0.0
  %467 = vmatpush2.msra.mxu0 0.0
  %468 = vmatprep.subr.mxu0 0.0
  %469 = vmatpush2.msra.mxu0 0.0
  %470 = vmatprep.subr.mxu0 0.0
  %471 = vmatpush2.msra.mxu0 0.0
  %472 = vmatprep.subr.mxu0 0.0
  %473 = vmatpush2.msra.mxu0 0.0
  %474 = vmatprep.subr.mxu0 0.0
  %475 = vmatpush2.msra.mxu0 0.0
  %476 = vmatprep.subr.mxu0 0.0
  %477 = vmatpush2.msra.mxu0 0.0
  %478 = vmatprep.subr.mxu0 0.0
  %479 = vmatpush2.msra.mxu0 0.0
  %480 = vmatprep.subr.mxu0 0.0
  %481 = vmatpush2.msra.mxu0 0.0
  %482 = vmatprep.subr.mxu0 0.0
  %483 = vmatpush2.msra.mxu0 0.0
  %484 = vmatprep.subr.mxu0 0.0
  %485 = vmatpush2.msra.mxu0 0.0
  %486 = vmatprep.subr.mxu0 0.0
  %487 = vmatpush2.msra.mxu0 0.0
  %488 = vmatprep.subr.mxu0 0.0
  %489 = vmatpush2.msra.mxu0 0.0
  %490 = vmatprep.subr.mxu0 0.0
  %491 = vmatpush2.msra.mxu0 0.0
  %492 = vmatprep.subr.mxu0 0.0
  %493 = vmatpush2.msra.mxu0 0.0
  %494 = vmatprep.mubr.f32.mxu0 0.0
  %495 = vmatmul.mubr.f32.gmra.mxu0 %v73
  %v496 = vpop.f32.mrf.mxu0
  %v497 = vadd.f32 0.0, %v496
  %v498 = vpop.f32.mrf.mxu0
  %v499 = vadd.f32 0.0, %v498
  %500 = vdwg.mxu0
  %501 = vmatprep.subr.mxu0 0.0
  %502 = vmatpush1.msra.mxu0 0.0
  %503 = vmatprep.subr.mxu0 0.0
  %504 = vmatpush1.msra.mxu0 0.0
  %505 = vmatprep.subr.mxu0 0.0
  %506 = vmatpush1.msra.mxu0 0.0
  %507 = vmatprep.subr.mxu0 0.0
  %508 = vmatpush1.msra.mxu0 0.0
  %509 = vmatprep.subr.mxu0 0.0
  %510 = vmatpush1.msra.mxu0 0.0
  %511 = vmatprep.subr.mxu0 0.0
  %512 = vmatpush1.msra.mxu0 0.0
  %513 = vmatprep.subr.mxu0 0.0
  %514 = vmatpush1.msra.mxu0 0.0
  %515 = vmatprep.subr.mxu0 0.0
  %516 = vmatpush1.msra.mxu0 0.0
  %517 = vmatprep.subr.mxu0 0.0
  %518 = vmatpush1.msra.mxu0 0.0
  %519 = vmatprep.subr.mxu0 0.0
  %520 = vmatpush1.msra.mxu0 0.0
  %521 = vmatprep.subr.mxu0 0.0
  %522 = vmatpush1.msra.mxu0 0.0
  %523 = vmatprep.subr.mxu0 0.0
  %524 = vmatpush1.msra.mxu0 0.0
  %525 = vmatprep.subr.mxu0 0.0
  %526 = vmatpush1.msra.mxu0 0.0
  %527 = vmatprep.subr.mxu0 0.0
  %528 = vmatpush1.msra.mxu0 0.0
  %529 = vmatprep.subr.mxu0 %v67
  %530 = vmatpush1.msra.mxu0 %v66
  %531 = vmatprep.subr.mxu0 %v51
  %532 = vmatpush1.msra.mxu0 %v50
  %533 = vmatprep.subr.mxu0 0.0
  %534 = vmatpush2.msra.mxu0 0.0
  %535 = vmatprep.subr.mxu0 0.0
  %536 = vmatpush2.msra.mxu0 0.0
  %537 = vmatprep.subr.mxu0 0.0
  %538 = vmatpush2.msra.mxu0 0.0
  %539 = vmatprep.subr.mxu0 0.0
  %540 = vmatpush2.msra.mxu0 0.0
  %541 = vmatprep.subr.mxu0 0.0
  %542 = vmatpush2.msra.mxu0 0.0
  %543 = vmatprep.subr.mxu0 0.0
  %544 = vmatpush2.msra.mxu0 0.0
  %545 = vmatprep.subr.mxu0 0.0
  %546 = vmatpush2.msra.mxu0 0.0
  %547 = vmatprep.subr.mxu0 0.0
  %548 = vmatpush2.msra.mxu0 0.0
  %549 = vmatprep.subr.mxu0 0.0
  %550 = vmatpush2.msra.mxu0 0.0
  %551 = vmatprep.subr.mxu0 0.0
  %552 = vmatpush2.msra.mxu0 0.0
  %553 = vmatprep.subr.mxu0 0.0
  %554 = vmatpush2.msra.mxu0 0.0
  %555 = vmatprep.subr.mxu0 0.0
  %556 = vmatpush2.msra.mxu0 0.0
  %557 = vmatprep.subr.mxu0 0.0
  %558 = vmatpush2.msra.mxu0 0.0
  %559 = vmatprep.subr.mxu0 0.0
  %560 = vmatpush2.msra.mxu0 0.0
  %561 = vmatprep.subr.mxu0 0.0
  %562 = vmatpush2.msra.mxu0 0.0
  %563 = vmatprep.subr.mxu0 0.0
  %564 = vmatpush2.msra.mxu0 0.0
  %565 = vmatprep.mubr.f32.mxu0 0.0
  %566 = vmatmul.mubr.f32.gmra.mxu0 %v73
  %v567 = vpop.f32.mrf.mxu0
  %v568 = vadd.f32 0.0, %v567
  %v569 = vpop.f32.mrf.mxu0
  %v570 = vadd.f32 0.0, %v569
  %571 = vdwg.mxu0
  %572 = vmatprep.subr.mxu0 0.0
  %573 = vmatpush1.msra.mxu0 0.0
  %574 = vmatprep.subr.mxu0 0.0
  %575 = vmatpush1.msra.mxu0 0.0
  %576 = vmatprep.subr.mxu0 0.0
  %577 = vmatpush1.msra.mxu0 0.0
  %578 = vmatprep.subr.mxu0 0.0
  %579 = vmatpush1.msra.mxu0 0.0
  %580 = vmatprep.subr.mxu0 0.0
  %581 = vmatpush1.msra.mxu0 0.0
  %582 = vmatprep.subr.mxu0 0.0
  %583 = vmatpush1.msra.mxu0 0.0
  %584 = vmatprep.subr.mxu0 0.0
  %585 = vmatpush1.msra.mxu0 0.0
  %586 = vmatprep.subr.mxu0 0.0
  %587 = vmatpush1.msra.mxu0 0.0
  %588 = vmatprep.subr.mxu0 0.0
  %589 = vmatpush1.msra.mxu0 0.0
  %590 = vmatprep.subr.mxu0 0.0
  %591 = vmatpush1.msra.mxu0 0.0
  %592 = vmatprep.subr.mxu0 0.0
  %593 = vmatpush1.msra.mxu0 0.0
  %594 = vmatprep.subr.mxu0 0.0
  %595 = vmatpush1.msra.mxu0 0.0
  %596 = vmatprep.subr.mxu0 0.0
  %597 = vmatpush1.msra.mxu0 0.0
  %598 = vmatprep.subr.mxu0 0.0
  %599 = vmatpush1.msra.mxu0 0.0
  %600 = vmatprep.subr.mxu0 %v69
  %601 = vmatpush1.msra.mxu0 %v68
  %602 = vmatprep.subr.mxu0 %v53
  %603 = vmatpush1.msra.mxu0 %v52
  %604 = vmatprep.subr.mxu0 0.0
  %605 = vmatpush2.msra.mxu0 0.0
  %606 = vmatprep.subr.mxu0 0.0
  %607 = vmatpush2.msra.mxu0 0.0
  %608 = vmatprep.subr.mxu0 0.0
  %609 = vmatpush2.msra.mxu0 0.0
  %610 = vmatprep.subr.mxu0 0.0
  %611 = vmatpush2.msra.mxu0 0.0
  %612 = vmatprep.subr.mxu0 0.0
  %613 = vmatpush2.msra.mxu0 0.0
  %614 = vmatprep.subr.mxu0 0.0
  %615 = vmatpush2.msra.mxu0 0.0
  %616 = vmatprep.subr.mxu0 0.0
  %617 = vmatpush2.msra.mxu0 0.0
  %618 = vmatprep.subr.mxu0 0.0
  %619 = vmatpush2.msra.mxu0 0.0
  %620 = vmatprep.subr.mxu0 0.0
  %621 = vmatpush2.msra.mxu0 0.0
  %622 = vmatprep.subr.mxu0 0.0
  %623 = vmatpush2.msra.mxu0 0.0
  %624 = vmatprep.subr.mxu0 0.0
  %625 = vmatpush2.msra.mxu0 0.0
  %626 = vmatprep.subr.mxu0 0.0
  %627 = vmatpush2.msra.mxu0 0.0
  %628 = vmatprep.subr.mxu0 0.0
  %629 = vmatpush2.msra.mxu0 0.0
  %630 = vmatprep.subr.mxu0 0.0
  %631 = vmatpush2.msra.mxu0 0.0
  %632 = vmatprep.subr.mxu0 0.0
  %633 = vmatpush2.msra.mxu0 0.0
  %634 = vmatprep.subr.mxu0 0.0
  %635 = vmatpush2.msra.mxu0 0.0
  %636 = vmatprep.mubr.f32.mxu0 0.0
  %637 = vmatmul.mubr.f32.gmra.mxu0 %v73
  %v638 = vpop.f32.mrf.mxu0
  %v639 = vadd.f32 0.0, %v638
  %v640 = vpop.f32.mrf.mxu0
  %v641 = vadd.f32 0.0, %v640
  %642 = vdwg.mxu0
  %v643 = vadd.f32 %v142, %v144
  %v644 = vadd.f32 %v643, %v213
  %v645 = vadd.f32 %v644, %v215
  %v646 = vadd.f32 %v645, %v284
  %v647 = vadd.f32 %v646, %v286
  %v648 = vadd.f32 %v647, %v355
  %v649 = vadd.f32 %v648, %v357
  %v650 = vadd.f32 %v649, %v426
  %v651 = vadd.f32 %v650, %v428
  %v652 = vadd.f32 %v651, %v497
  %v653 = vadd.f32 %v652, %v499
  %v654 = vadd.f32 %v653, %v568
  %v655 = vadd.f32 %v654, %v570
  %v656 = vadd.f32 %v655, %v639
  %v657 = vadd.f32 %v656, %v641
  %658 = vadd.xlane.f32.xlu0 %v657
  %v659 = vpop.xlane.xlu0 %658
  %v660 = vmul.f32 %v142, %v142
  %v661 = vmul.f32 %v144, %v144
  %v662 = vmul.f32 %v213, %v213
  %v663 = vmul.f32 %v215, %v215
  %v664 = vmul.f32 %v284, %v284
  %v665 = vmul.f32 %v286, %v286
  %v666 = vmul.f32 %v355, %v355
  %v667 = vmul.f32 %v357, %v357
  %v668 = vmul.f32 %v426, %v426
  %v669 = vmul.f32 %v428, %v428
  %v670 = vmul.f32 %v497, %v497
  %v671 = vmul.f32 %v499, %v499
  %v672 = vmul.f32 %v568, %v568
  %v673 = vmul.f32 %v570, %v570
  %v674 = vmul.f32 %v639, %v639
  %v675 = vmul.f32 %v641, %v641
  %v676 = vadd.f32 %v660, %v661
  %v677 = vadd.f32 %v676, %v662
  %v678 = vadd.f32 %v677, %v663
  %v679 = vadd.f32 %v678, %v664
  %v680 = vadd.f32 %v679, %v665
  %v681 = vadd.f32 %v680, %v666
  %v682 = vadd.f32 %v681, %v667
  %v683 = vadd.f32 %v682, %v668
  %v684 = vadd.f32 %v683, %v669
  %v685 = vadd.f32 %v684, %v670
  %v686 = vadd.f32 %v685, %v671
  %v687 = vadd.f32 %v686, %v672
  %v688 = vadd.f32 %v687, %v673
  %v689 = vadd.f32 %v688, %v674
  %v690 = vadd.f32 %v689, %v675
  %691 = vadd.xlane.f32.xlu0 %v690
  %v692 = vpop.xlane.xlu0 %691
  %v693 = vmul.f32 %v659, 0.00048828125
  %v694 = vmul.f32 %v692, 0.00048828125
  %v695 = vmul.f32 %v693, %v693
  %v696 = vsub.f32 %v694, %v695
  %v697 = vld [vmem:[%s3] sm:$0xff]
  %v698 = vadd.f32 %v696, 1e-05
  %v699 = vrsqrt.pop %v698
  %v700 = vmul.f32 %v697, %v699
  %v701 = vld [vmem:[%s4] sm:$0xff]
  %v702 = vmul.f32 %v693, %v700
  %v703 = vsub.f32 %v701, %v702
  %705 = vset.pattern.permute.xlu0 0
  %706 = vperm.xlu0 %705, %v700
  %v707 = vpop.permute.xlu0 %706
  %v709 = vmul.f32 %v142, %v707
  %v710 = vmul.f32 %v144, %v707
  %v711 = vmul.f32 %v213, %v707
  %v712 = vmul.f32 %v215, %v707
  %v713 = vmul.f32 %v284, %v707
  %v714 = vmul.f32 %v286, %v707
  %v715 = vmul.f32 %v355, %v707
  %v716 = vmul.f32 %v357, %v707
  %v717 = vmul.f32 %v426, %v707
  %v718 = vmul.f32 %v428, %v707
  %v719 = vmul.f32 %v497, %v707
  %v720 = vmul.f32 %v499, %v707
  %v721 = vmul.f32 %v568, %v707
  %v722 = vmul.f32 %v570, %v707
  %v723 = vmul.f32 %v639, %v707
  %v724 = vmul.f32 %v641, %v707
  %726 = vset.pattern.permute.xlu0 0
  %727 = vperm.xlu0 %726, %v703
  %v728 = vpop.permute.xlu0 %727
  %v730 = vadd.f32 %v709, %v728
  %v731 = vadd.f32 %v710, %v728
  %v732 = vadd.f32 %v711, %v728
  %v733 = vadd.f32 %v712, %v728
  %v734 = vadd.f32 %v713, %v728
  %v735 = vadd.f32 %v714, %v728
  %v736 = vadd.f32 %v715, %v728
  %v737 = vadd.f32 %v716, %v728
  %v738 = vadd.f32 %v717, %v728
  %v739 = vadd.f32 %v718, %v728
  %v740 = vadd.f32 %v719, %v728
  %v741 = vadd.f32 %v720, %v728
  %v742 = vadd.f32 %v721, %v728
  %v743 = vadd.f32 %v722, %v728
  %v744 = vadd.f32 %v723, %v728
  %v745 = vadd.f32 %v724, %v728
  %v746 = vmax.f32 %v730, 0.0
  %v747 = vmax.f32 %v731, 0.0
  %v748 = vmax.f32 %v732, 0.0
  %v749 = vmax.f32 %v733, 0.0
  %v750 = vmax.f32 %v734, 0.0
  %v751 = vmax.f32 %v735, 0.0
  %v752 = vmax.f32 %v736, 0.0
  %v753 = vmax.f32 %v737, 0.0
  %v754 = vmax.f32 %v738, 0.0
  %v755 = vmax.f32 %v739, 0.0
  %v756 = vmax.f32 %v740, 0.0
  %v757 = vmax.f32 %v741, 0.0
  %v758 = vmax.f32 %v742, 0.0
  %v759 = vmax.f32 %v743, 0.0
  %v760 = vmax.f32 %v744, 0.0
  %v761 = vmax.f32 %v745, 0.0
  %762 = vrot.lane.b32.xlu0 %v746, 33
  %v763 = vpop.permute.xlu0 %762
  %764 = vrot.lane.b32.xlu0 %v747, 33
  %v765 = vpop.permute.xlu0 %764
  %766 = vrot.lane.b32.xlu0 %v748, 33
  %v767 = vpop.permute.xlu0 %766
  %768 = vrot.lane.b32.xlu0 %v749, 33
  %v769 = vpop.permute.xlu0 %768
  %770 = vrot.lane.b32.xlu0 %v750, 33
  %v771 = vpop.permute.xlu0 %770
  %772 = vrot.lane.b32.xlu0 %v751, 33
  %v773 = vpop.permute.xlu0 %772
  %774 = vrot.lane.b32.xlu0 %v752, 33
  %v775 = vpop.permute.xlu0 %774
  %776 = vrot.lane.b32.xlu0 %v753, 33
  %v777 = vpop.permute.xlu0 %776
  %778 = vrot.lane.b32.xlu0 %v754, 33
  %v779 = vpop.permute.xlu0 %778
  %780 = vrot.lane.b32.xlu0 %v755, 33
  %v781 = vpop.permute.xlu0 %780
  %782 = vrot.lane.b32.xlu0 %v756, 33
  %v783 = vpop.permute.xlu0 %782
  %784 = vrot.lane.b32.xlu0 %v757, 33
  %v785 = vpop.permute.xlu0 %784
  %786 = vrot.lane.b32.xlu0 %v758, 33
  %v787 = vpop.permute.xlu0 %786
  %788 = vrot.lane.b32.xlu0 %v759, 33
  %v789 = vpop.permute.xlu0 %788
  %790 = vrot.lane.b32.xlu0 %v760, 33
  %v791 = vpop.permute.xlu0 %790
  %792 = vrot.lane.b32.xlu0 %v761, 33
  %v793 = vpop.permute.xlu0 %792
  %v794 = vlaneseq
  %v795 = vand.u32 %v794, 127
  %vm796 = vcmp.lt.s32.totalorder %v795, 33
  %v797 = vsel %vm796, %v791, %v793
  %v798 = vsel %vm796, %v789, %v791
  %v799 = vsel %vm796, %v787, %v789
  %v800 = vsel %vm796, %v785, %v787
  %v801 = vsel %vm796, %v783, %v785
  %v802 = vsel %vm796, %v781, %v783
  %v803 = vsel %vm796, %v779, %v781
  %v804 = vsel %vm796, %v777, %v779
  %v805 = vsel %vm796, %v775, %v777
  %v806 = vsel %vm796, %v773, %v775
  %v807 = vsel %vm796, %v771, %v773
  %v808 = vsel %vm796, %v769, %v771
  %v809 = vsel %vm796, %v767, %v769
  %v810 = vsel %vm796, %v765, %v767
  %v811 = vsel %vm796, %v763, %v765
  %v812 = vsel %vm796, %v793, %v763
  %v813 = vld [vmem:[%s1] ss:$8 sm:$0xf]
  %v814 = vld [vmem:[%s1] ss:$8 sm:$0xf0]
  %v815 = vor.u32 %v813, %v814
  %s816 = scalar_lea.vmem %s1, 64
  %v817 = vld [vmem:[%s816] ss:$8 sm:$0xf]
  %v818 = vld [vmem:[%s816] ss:$8 sm:$0xf0]
  %v819 = vor.u32 %v817, %v818
  %v822 = vlaneseq
  %v823 = vshrl.u32 %v822, 7
  %v824 = vsub.s32 0, %v823
  %v825 = vrot.slane %v815, %v824
  %v826 = vlaneseq
  %v827 = vshrl.u32 %v826, 7
  %v828 = vsub.s32 1, %v827
  %v829 = vrot.slane %v815, %v828
  %v830 = vlaneseq
  %v831 = vshrl.u32 %v830, 7
  %v832 = vsub.s32 2, %v831
  %v833 = vrot.slane %v815, %v832
  %v834 = vlaneseq
  %v835 = vshrl.u32 %v834, 7
  %v836 = vsub.s32 3, %v835
  %v837 = vrot.slane %v815, %v836
  %v838 = vlaneseq
  %v839 = vshrl.u32 %v838, 7
  %v840 = vsub.s32 4, %v839
  %v841 = vrot.slane %v815, %v840
  %v842 = vlaneseq
  %v843 = vshrl.u32 %v842, 7
  %v844 = vsub.s32 5, %v843
  %v845 = vrot.slane %v815, %v844
  %v846 = vlaneseq
  %v847 = vshrl.u32 %v846, 7
  %v848 = vsub.s32 6, %v847
  %v849 = vrot.slane %v815, %v848
  %v850 = vlaneseq
  %v851 = vshrl.u32 %v850, 7
  %v852 = vsub.s32 7, %v851
  %v853 = vrot.slane %v815, %v852
  %v854 = vlaneseq
  %v855 = vshrl.u32 %v854, 7
  %v856 = vsub.s32 0, %v855
  %v857 = vrot.slane %v819, %v856
  %v858 = vlaneseq
  %v859 = vshrl.u32 %v858, 7
  %v860 = vsub.s32 1, %v859
  %v861 = vrot.slane %v819, %v860
  %v862 = vlaneseq
  %v863 = vshrl.u32 %v862, 7
  %v864 = vsub.s32 2, %v863
  %v865 = vrot.slane %v819, %v864
  %v866 = vlaneseq
  %v867 = vshrl.u32 %v866, 7
  %v868 = vsub.s32 3, %v867
  %v869 = vrot.slane %v819, %v868
  %v870 = vlaneseq
  %v871 = vshrl.u32 %v870, 7
  %v872 = vsub.s32 4, %v871
  %v873 = vrot.slane %v819, %v872
  %v874 = vlaneseq
  %v875 = vshrl.u32 %v874, 7
  %v876 = vsub.s32 5, %v875
  %v877 = vrot.slane %v819, %v876
  %v878 = vlaneseq
  %v879 = vshrl.u32 %v878, 7
  %v880 = vsub.s32 6, %v879
  %v881 = vrot.slane %v819, %v880
  %v882 = vlaneseq
  %v883 = vshrl.u32 %v882, 7
  %v884 = vsub.s32 7, %v883
  %v885 = vrot.slane %v819, %v884
  %v902 = vmul.f32 %v812, %v825
  %v903 = vmul.f32 %v811, %v829
  %v904 = vmul.f32 %v810, %v833
  %v905 = vmul.f32 %v809, %v837
  %v906 = vmul.f32 %v808, %v841
  %v907 = vmul.f32 %v807, %v845
  %v908 = vmul.f32 %v806, %v849
  %v909 = vmul.f32 %v805, %v853
  %v910 = vmul.f32 %v804, %v857
  %v911 = vmul.f32 %v803, %v861
  %v912 = vmul.f32 %v802, %v865
  %v913 = vmul.f32 %v801, %v869
  %v914 = vmul.f32 %v800, %v873
  %v915 = vmul.f32 %v799, %v877
  %v916 = vmul.f32 %v798, %v881
  %v917 = vmul.f32 %v797, %v885
  %918 = vst [vmem:[#allocation2] sm:$0xff] %v902
  %919 = vst [vmem:[#allocation2 + $0x8] sm:$0xff] %v903
  %920 = vst [vmem:[#allocation2 + $0x10] sm:$0xff] %v904
  %921 = vst [vmem:[#allocation2 + $0x18] sm:$0xff] %v905
  %922 = vst [vmem:[#allocation2 + $0x20] sm:$0xff] %v906
  %923 = vst [vmem:[#allocation2 + $0x28] sm:$0xff] %v907
  %924 = vst [vmem:[#allocation2 + $0x30] sm:$0xff] %v908
  %925 = vst [vmem:[#allocation2 + $0x38] sm:$0xff] %v909
  %926 = vst [vmem:[#allocation2 + $0x40] sm:$0xff] %v910
  %927 = vst [vmem:[#allocation2 + $0x48] sm:$0xff] %v911
  %928 = vst [vmem:[#allocation2 + $0x50] sm:$0xff] %v912
  %929 = vst [vmem:[#allocation2 + $0x58] sm:$0xff] %v913
  %930 = vst [vmem:[#allocation2 + $0x60] sm:$0xff] %v914
  %931 = vst [vmem:[#allocation2 + $0x68] sm:$0xff] %v915
  %932 = vst [vmem:[#allocation2 + $0x70] sm:$0xff] %v916
  %933 = vst [vmem:[#allocation2 + $0x78] sm:$0xff] %v917
  %934 = vrot.lane.b32.xlu0 %v746, 32
  %v935 = vpop.permute.xlu0 %934
  %936 = vrot.lane.b32.xlu0 %v747, 32
  %v937 = vpop.permute.xlu0 %936
  %938 = vrot.lane.b32.xlu0 %v748, 32
  %v939 = vpop.permute.xlu0 %938
  %940 = vrot.lane.b32.xlu0 %v749, 32
  %v941 = vpop.permute.xlu0 %940
  %942 = vrot.lane.b32.xlu0 %v750, 32
  %v943 = vpop.permute.xlu0 %942
  %944 = vrot.lane.b32.xlu0 %v751, 32
  %v945 = vpop.permute.xlu0 %944
  %946 = vrot.lane.b32.xlu0 %v752, 32
  %v947 = vpop.permute.xlu0 %946
  %948 = vrot.lane.b32.xlu0 %v753, 32
  %v949 = vpop.permute.xlu0 %948
  %950 = vrot.lane.b32.xlu0 %v754, 32
  %v951 = vpop.permute.xlu0 %950
  %952 = vrot.lane.b32.xlu0 %v755, 32
  %v953 = vpop.permute.xlu0 %952
  %954 = vrot.lane.b32.xlu0 %v756, 32
  %v955 = vpop.permute.xlu0 %954
  %956 = vrot.lane.b32.xlu0 %v757, 32
  %v957 = vpop.permute.xlu0 %956
  %958 = vrot.lane.b32.xlu0 %v758, 32
  %v959 = vpop.permute.xlu0 %958
  %960 = vrot.lane.b32.xlu0 %v759, 32
  %v961 = vpop.permute.xlu0 %960
  %962 = vrot.lane.b32.xlu0 %v760, 32
  %v963 = vpop.permute.xlu0 %962
  %964 = vrot.lane.b32.xlu0 %v761, 32
  %v965 = vpop.permute.xlu0 %964
  %vm966 = vcmp.lt.s32.totalorder %v795, 32
  %v967 = vsel %vm966, %v963, %v965
  %v968 = vsel %vm966, %v961, %v963
  %v969 = vsel %vm966, %v959, %v961
  %v970 = vsel %vm966, %v957, %v959
  %v971 = vsel %vm966, %v955, %v957
  %v972 = vsel %vm966, %v953, %v955
  %v973 = vsel %vm966, %v951, %v953
  %v974 = vsel %vm966, %v949, %v951
  %v975 = vsel %vm966, %v947, %v949
  %v976 = vsel %vm966, %v945, %v947
  %v977 = vsel %vm966, %v943, %v945
  %v978 = vsel %vm966, %v941, %v943
  %v979 = vsel %vm966, %v939, %v941
  %v980 = vsel %vm966, %v937, %v939
  %v981 = vsel %vm966, %v935, %v937
  %v982 = vsel %vm966, %v965, %v935
  %s983 = scalar_lea.vmem %s1, 1
  %v984 = vld [vmem:[%s983] ss:$8 sm:$0xf]
  %v985 = vld [vmem:[%s983] ss:$8 sm:$0xf0]
  %v986 = vor.u32 %v984, %v985
  %s987 = scalar_lea.vmem %s1, 65
  %v988 = vld [vmem:[%s987] ss:$8 sm:$0xf]
  %v989 = vld [vmem:[%s987] ss:$8 sm:$0xf0]
  %v990 = vor.u32 %v988, %v989
  %v993 = vlaneseq
  %v994 = vshrl.u32 %v993, 7
  %v995 = vsub.s32 0, %v994
  %v996 = vrot.slane %v986, %v995
  %v997 = vlaneseq
  %v998 = vshrl.u32 %v997, 7
  %v999 = vsub.s32 1, %v998
  %v1000 = vrot.slane %v986, %v999
  %v1001 = vlaneseq
  %v1002 = vshrl.u32 %v1001, 7
  %v1003 = vsub.s32 2, %v1002
  %v1004 = vrot.slane %v986, %v1003
  %v1005 = vlaneseq
  %v1006 = vshrl.u32 %v1005, 7
  %v1007 = vsub.s32 3, %v1006
  %v1008 = vrot.slane %v986, %v1007
  %v1009 = vlaneseq
  %v1010 = vshrl.u32 %v1009, 7
  %v1011 = vsub.s32 4, %v1010
  %v1012 = vrot.slane %v986, %v1011
  %v1013 = vlaneseq
  %v1014 = vshrl.u32 %v1013, 7
  %v1015 = vsub.s32 5, %v1014
  %v1016 = vrot.slane %v986, %v1015
  %v1017 = vlaneseq
  %v1018 = vshrl.u32 %v1017, 7
  %v1019 = vsub.s32 6, %v1018
  %v1020 = vrot.slane %v986, %v1019
  %v1021 = vlaneseq
  %v1022 = vshrl.u32 %v1021, 7
  %v1023 = vsub.s32 7, %v1022
  %v1024 = vrot.slane %v986, %v1023
  %v1025 = vlaneseq
  %v1026 = vshrl.u32 %v1025, 7
  %v1027 = vsub.s32 0, %v1026
  %v1028 = vrot.slane %v990, %v1027
  %v1029 = vlaneseq
  %v1030 = vshrl.u32 %v1029, 7
  %v1031 = vsub.s32 1, %v1030
  %v1032 = vrot.slane %v990, %v1031
  %v1033 = vlaneseq
  %v1034 = vshrl.u32 %v1033, 7
  %v1035 = vsub.s32 2, %v1034
  %v1036 = vrot.slane %v990, %v1035
  %v1037 = vlaneseq
  %v1038 = vshrl.u32 %v1037, 7
  %v1039 = vsub.s32 3, %v1038
  %v1040 = vrot.slane %v990, %v1039
  %v1041 = vlaneseq
  %v1042 = vshrl.u32 %v1041, 7
  %v1043 = vsub.s32 4, %v1042
  %v1044 = vrot.slane %v990, %v1043
  %v1045 = vlaneseq
  %v1046 = vshrl.u32 %v1045, 7
  %v1047 = vsub.s32 5, %v1046
  %v1048 = vrot.slane %v990, %v1047
  %v1049 = vlaneseq
  %v1050 = vshrl.u32 %v1049, 7
  %v1051 = vsub.s32 6, %v1050
  %v1052 = vrot.slane %v990, %v1051
  %v1053 = vlaneseq
  %v1054 = vshrl.u32 %v1053, 7
  %v1055 = vsub.s32 7, %v1054
  %v1056 = vrot.slane %v990, %v1055
  %v1073 = vmul.f32 %v982, %v996
  %v1074 = vmul.f32 %v981, %v1000
  %v1075 = vmul.f32 %v980, %v1004
  %v1076 = vmul.f32 %v979, %v1008
  %v1077 = vmul.f32 %v978, %v1012
  %v1078 = vmul.f32 %v977, %v1016
  %v1079 = vmul.f32 %v976, %v1020
  %v1080 = vmul.f32 %v975, %v1024
  %v1081 = vmul.f32 %v974, %v1028
  %v1082 = vmul.f32 %v973, %v1032
  %v1083 = vmul.f32 %v972, %v1036
  %v1084 = vmul.f32 %v971, %v1040
  %v1085 = vmul.f32 %v970, %v1044
  %v1086 = vmul.f32 %v969, %v1048
  %v1087 = vmul.f32 %v968, %v1052
  %v1088 = vmul.f32 %v967, %v1056
  %1089 = vst [vmem:[#allocation2 + $0x80] sm:$0xff] %v1073
  %1090 = vst [vmem:[#allocation2 + $0x88] sm:$0xff] %v1074
  %1091 = vst [vmem:[#allocation2 + $0x90] sm:$0xff] %v1075
  %1092 = vst [vmem:[#allocation2 + $0x98] sm:$0xff] %v1076
  %1093 = vst [vmem:[#allocation2 + $0xa0] sm:$0xff] %v1077
  %1094 = vst [vmem:[#allocation2 + $0xa8] sm:$0xff] %v1078
  %1095 = vst [vmem:[#allocation2 + $0xb0] sm:$0xff] %v1079
  %1096 = vst [vmem:[#allocation2 + $0xb8] sm:$0xff] %v1080
  %1097 = vst [vmem:[#allocation2 + $0xc0] sm:$0xff] %v1081
  %1098 = vst [vmem:[#allocation2 + $0xc8] sm:$0xff] %v1082
  %1099 = vst [vmem:[#allocation2 + $0xd0] sm:$0xff] %v1083
  %1100 = vst [vmem:[#allocation2 + $0xd8] sm:$0xff] %v1084
  %1101 = vst [vmem:[#allocation2 + $0xe0] sm:$0xff] %v1085
  %1102 = vst [vmem:[#allocation2 + $0xe8] sm:$0xff] %v1086
  %1103 = vst [vmem:[#allocation2 + $0xf0] sm:$0xff] %v1087
  %1104 = vst [vmem:[#allocation2 + $0xf8] sm:$0xff] %v1088
  %1105 = vrot.lane.b32.xlu0 %v746, 31
  %v1106 = vpop.permute.xlu0 %1105
  %1107 = vrot.lane.b32.xlu0 %v747, 31
  %v1108 = vpop.permute.xlu0 %1107
  %1109 = vrot.lane.b32.xlu0 %v748, 31
  %v1110 = vpop.permute.xlu0 %1109
  %1111 = vrot.lane.b32.xlu0 %v749, 31
  %v1112 = vpop.permute.xlu0 %1111
  %1113 = vrot.lane.b32.xlu0 %v750, 31
  %v1114 = vpop.permute.xlu0 %1113
  %1115 = vrot.lane.b32.xlu0 %v751, 31
  %v1116 = vpop.permute.xlu0 %1115
  %1117 = vrot.lane.b32.xlu0 %v752, 31
  %v1118 = vpop.permute.xlu0 %1117
  %1119 = vrot.lane.b32.xlu0 %v753, 31
  %v1120 = vpop.permute.xlu0 %1119
  %1121 = vrot.lane.b32.xlu0 %v754, 31
  %v1122 = vpop.permute.xlu0 %1121
  %1123 = vrot.lane.b32.xlu0 %v755, 31
  %v1124 = vpop.permute.xlu0 %1123
  %1125 = vrot.lane.b32.xlu0 %v756, 31
  %v1126 = vpop.permute.xlu0 %1125
  %1127 = vrot.lane.b32.xlu0 %v757, 31
  %v1128 = vpop.permute.xlu0 %1127
  %1129 = vrot.lane.b32.xlu0 %v758, 31
  %v1130 = vpop.permute.xlu0 %1129
  %1131 = vrot.lane.b32.xlu0 %v759, 31
  %v1132 = vpop.permute.xlu0 %1131
  %1133 = vrot.lane.b32.xlu0 %v760, 31
  %v1134 = vpop.permute.xlu0 %1133
  %1135 = vrot.lane.b32.xlu0 %v761, 31
  %v1136 = vpop.permute.xlu0 %1135
  %vm1137 = vcmp.lt.s32.totalorder %v795, 31
  %v1138 = vsel %vm1137, %v1134, %v1136
  %v1139 = vsel %vm1137, %v1132, %v1134
  %v1140 = vsel %vm1137, %v1130, %v1132
  %v1141 = vsel %vm1137, %v1128, %v1130
  %v1142 = vsel %vm1137, %v1126, %v1128
  %v1143 = vsel %vm1137, %v1124, %v1126
  %v1144 = vsel %vm1137, %v1122, %v1124
  %v1145 = vsel %vm1137, %v1120, %v1122
  %v1146 = vsel %vm1137, %v1118, %v1120
  %v1147 = vsel %vm1137, %v1116, %v1118
  %v1148 = vsel %vm1137, %v1114, %v1116
  %v1149 = vsel %vm1137, %v1112, %v1114
  %v1150 = vsel %vm1137, %v1110, %v1112
  %v1151 = vsel %vm1137, %v1108, %v1110
  %v1152 = vsel %vm1137, %v1106, %v1108
  %v1153 = vsel %vm1137, %v1136, %v1106
  %s1154 = scalar_lea.vmem %s1, 2
  %v1155 = vld [vmem:[%s1154] ss:$8 sm:$0xf]
  %v1156 = vld [vmem:[%s1154] ss:$8 sm:$0xf0]
  %v1157 = vor.u32 %v1155, %v1156
  %s1158 = scalar_lea.vmem %s1, 66
  %v1159 = vld [vmem:[%s1158] ss:$8 sm:$0xf]
  %v1160 = vld [vmem:[%s1158] ss:$8 sm:$0xf0]
  %v1161 = vor.u32 %v1159, %v1160
  %v1164 = vlaneseq
  %v1165 = vshrl.u32 %v1164, 7
  %v1166 = vsub.s32 0, %v1165
  %v1167 = vrot.slane %v1157, %v1166
  %v1168 = vlaneseq
  %v1169 = vshrl.u32 %v1168, 7
  %v1170 = vsub.s32 1, %v1169
  %v1171 = vrot.slane %v1157, %v1170
  %v1172 = vlaneseq
  %v1173 = vshrl.u32 %v1172, 7
  %v1174 = vsub.s32 2, %v1173
  %v1175 = vrot.slane %v1157, %v1174
  %v1176 = vlaneseq
  %v1177 = vshrl.u32 %v1176, 7
  %v1178 = vsub.s32 3, %v1177
  %v1179 = vrot.slane %v1157, %v1178
  %v1180 = vlaneseq
  %v1181 = vshrl.u32 %v1180, 7
  %v1182 = vsub.s32 4, %v1181
  %v1183 = vrot.slane %v1157, %v1182
  %v1184 = vlaneseq
  %v1185 = vshrl.u32 %v1184, 7
  %v1186 = vsub.s32 5, %v1185
  %v1187 = vrot.slane %v1157, %v1186
  %v1188 = vlaneseq
  %v1189 = vshrl.u32 %v1188, 7
  %v1190 = vsub.s32 6, %v1189
  %v1191 = vrot.slane %v1157, %v1190
  %v1192 = vlaneseq
  %v1193 = vshrl.u32 %v1192, 7
  %v1194 = vsub.s32 7, %v1193
  %v1195 = vrot.slane %v1157, %v1194
  %v1196 = vlaneseq
  %v1197 = vshrl.u32 %v1196, 7
  %v1198 = vsub.s32 0, %v1197
  %v1199 = vrot.slane %v1161, %v1198
  %v1200 = vlaneseq
  %v1201 = vshrl.u32 %v1200, 7
  %v1202 = vsub.s32 1, %v1201
  %v1203 = vrot.slane %v1161, %v1202
  %v1204 = vlaneseq
  %v1205 = vshrl.u32 %v1204, 7
  %v1206 = vsub.s32 2, %v1205
  %v1207 = vrot.slane %v1161, %v1206
  %v1208 = vlaneseq
  %v1209 = vshrl.u32 %v1208, 7
  %v1210 = vsub.s32 3, %v1209
  %v1211 = vrot.slane %v1161, %v1210
  %v1212 = vlaneseq
  %v1213 = vshrl.u32 %v1212, 7
  %v1214 = vsub.s32 4, %v1213
  %v1215 = vrot.slane %v1161, %v1214
  %v1216 = vlaneseq
  %v1217 = vshrl.u32 %v1216, 7
  %v1218 = vsub.s32 5, %v1217
  %v1219 = vrot.slane %v1161, %v1218
  %v1220 = vlaneseq
  %v1221 = vshrl.u32 %v1220, 7
  %v1222 = vsub.s32 6, %v1221
  %v1223 = vrot.slane %v1161, %v1222
  %v1224 = vlaneseq
  %v1225 = vshrl.u32 %v1224, 7
  %v1226 = vsub.s32 7, %v1225
  %v1227 = vrot.slane %v1161, %v1226
  %v1244 = vmul.f32 %v1153, %v1167
  %v1245 = vmul.f32 %v1152, %v1171
  %v1246 = vmul.f32 %v1151, %v1175
  %v1247 = vmul.f32 %v1150, %v1179
  %v1248 = vmul.f32 %v1149, %v1183
  %v1249 = vmul.f32 %v1148, %v1187
  %v1250 = vmul.f32 %v1147, %v1191
  %v1251 = vmul.f32 %v1146, %v1195
  %v1252 = vmul.f32 %v1145, %v1199
  %v1253 = vmul.f32 %v1144, %v1203
  %v1254 = vmul.f32 %v1143, %v1207
  %v1255 = vmul.f32 %v1142, %v1211
  %v1256 = vmul.f32 %v1141, %v1215
  %v1257 = vmul.f32 %v1140, %v1219
  %v1258 = vmul.f32 %v1139, %v1223
  %v1259 = vmul.f32 %v1138, %v1227
  %1260 = vst [vmem:[#allocation2 + $0x100] sm:$0xff] %v1244
  %1261 = vst [vmem:[#allocation2 + $0x108] sm:$0xff] %v1245
  %1262 = vst [vmem:[#allocation2 + $0x110] sm:$0xff] %v1246
  %1263 = vst [vmem:[#allocation2 + $0x118] sm:$0xff] %v1247
  %1264 = vst [vmem:[#allocation2 + $0x120] sm:$0xff] %v1248
  %1265 = vst [vmem:[#allocation2 + $0x128] sm:$0xff] %v1249
  %1266 = vst [vmem:[#allocation2 + $0x130] sm:$0xff] %v1250
  %1267 = vst [vmem:[#allocation2 + $0x138] sm:$0xff] %v1251
  %1268 = vst [vmem:[#allocation2 + $0x140] sm:$0xff] %v1252
  %1269 = vst [vmem:[#allocation2 + $0x148] sm:$0xff] %v1253
  %1270 = vst [vmem:[#allocation2 + $0x150] sm:$0xff] %v1254
  %1271 = vst [vmem:[#allocation2 + $0x158] sm:$0xff] %v1255
  %1272 = vst [vmem:[#allocation2 + $0x160] sm:$0xff] %v1256
  %1273 = vst [vmem:[#allocation2 + $0x168] sm:$0xff] %v1257
  %1274 = vst [vmem:[#allocation2 + $0x170] sm:$0xff] %v1258
  %1275 = vst [vmem:[#allocation2 + $0x178] sm:$0xff] %v1259
  %1276 = vrot.lane.b32.xlu0 %v746, 1
  %v1277 = vpop.permute.xlu0 %1276
  %1278 = vrot.lane.b32.xlu0 %v747, 1
  %v1279 = vpop.permute.xlu0 %1278
  %1280 = vrot.lane.b32.xlu0 %v748, 1
  %v1281 = vpop.permute.xlu0 %1280
  %1282 = vrot.lane.b32.xlu0 %v749, 1
  %v1283 = vpop.permute.xlu0 %1282
  %1284 = vrot.lane.b32.xlu0 %v750, 1
  %v1285 = vpop.permute.xlu0 %1284
  %1286 = vrot.lane.b32.xlu0 %v751, 1
  %v1287 = vpop.permute.xlu0 %1286
  %1288 = vrot.lane.b32.xlu0 %v752, 1
  %v1289 = vpop.permute.xlu0 %1288
  %1290 = vrot.lane.b32.xlu0 %v753, 1
  %v1291 = vpop.permute.xlu0 %1290
  %1292 = vrot.lane.b32.xlu0 %v754, 1
  %v1293 = vpop.permute.xlu0 %1292
  %1294 = vrot.lane.b32.xlu0 %v755, 1
  %v1295 = vpop.permute.xlu0 %1294
  %1296 = vrot.lane.b32.xlu0 %v756, 1
  %v1297 = vpop.permute.xlu0 %1296
  %1298 = vrot.lane.b32.xlu0 %v757, 1
  %v1299 = vpop.permute.xlu0 %1298
  %1300 = vrot.lane.b32.xlu0 %v758, 1
  %v1301 = vpop.permute.xlu0 %1300
  %1302 = vrot.lane.b32.xlu0 %v759, 1
  %v1303 = vpop.permute.xlu0 %1302
  %1304 = vrot.lane.b32.xlu0 %v760, 1
  %v1305 = vpop.permute.xlu0 %1304
  %1306 = vrot.lane.b32.xlu0 %v761, 1
  %v1307 = vpop.permute.xlu0 %1306
  %vm1308 = vcmp.lt.s32.totalorder %v795, 1
  %v1309 = vsel %vm1308, %v1305, %v1307
  %v1310 = vsel %vm1308, %v1303, %v1305
  %v1311 = vsel %vm1308, %v1301, %v1303
  %v1312 = vsel %vm1308, %v1299, %v1301
  %v1313 = vsel %vm1308, %v1297, %v1299
  %v1314 = vsel %vm1308, %v1295, %v1297
  %v1315 = vsel %vm1308, %v1293, %v1295
  %v1316 = vsel %vm1308, %v1291, %v1293
  %v1317 = vsel %vm1308, %v1289, %v1291
  %v1318 = vsel %vm1308, %v1287, %v1289
  %v1319 = vsel %vm1308, %v1285, %v1287
  %v1320 = vsel %vm1308, %v1283, %v1285
  %v1321 = vsel %vm1308, %v1281, %v1283
  %v1322 = vsel %vm1308, %v1279, %v1281
  %v1323 = vsel %vm1308, %v1277, %v1279
  %v1324 = vsel %vm1308, %v1307, %v1277
  %s1325 = scalar_lea.vmem %s1, 3
  %v1326 = vld [vmem:[%s1325] ss:$8 sm:$0xf]
  %v1327 = vld [vmem:[%s1325] ss:$8 sm:$0xf0]
  %v1328 = vor.u32 %v1326, %v1327
  %s1329 = scalar_lea.vmem %s1, 67
  %v1330 = vld [vmem:[%s1329] ss:$8 sm:$0xf]
  %v1331 = vld [vmem:[%s1329] ss:$8 sm:$0xf0]
  %v1332 = vor.u32 %v1330, %v1331
  %v1335 = vlaneseq
  %v1336 = vshrl.u32 %v1335, 7
  %v1337 = vsub.s32 0, %v1336
  %v1338 = vrot.slane %v1328, %v1337
  %v1339 = vlaneseq
  %v1340 = vshrl.u32 %v1339, 7
  %v1341 = vsub.s32 1, %v1340
  %v1342 = vrot.slane %v1328, %v1341
  %v1343 = vlaneseq
  %v1344 = vshrl.u32 %v1343, 7
  %v1345 = vsub.s32 2, %v1344
  %v1346 = vrot.slane %v1328, %v1345
  %v1347 = vlaneseq
  %v1348 = vshrl.u32 %v1347, 7
  %v1349 = vsub.s32 3, %v1348
  %v1350 = vrot.slane %v1328, %v1349
  %v1351 = vlaneseq
  %v1352 = vshrl.u32 %v1351, 7
  %v1353 = vsub.s32 4, %v1352
  %v1354 = vrot.slane %v1328, %v1353
  %v1355 = vlaneseq
  %v1356 = vshrl.u32 %v1355, 7
  %v1357 = vsub.s32 5, %v1356
  %v1358 = vrot.slane %v1328, %v1357
  %v1359 = vlaneseq
  %v1360 = vshrl.u32 %v1359, 7
  %v1361 = vsub.s32 6, %v1360
  %v1362 = vrot.slane %v1328, %v1361
  %v1363 = vlaneseq
  %v1364 = vshrl.u32 %v1363, 7
  %v1365 = vsub.s32 7, %v1364
  %v1366 = vrot.slane %v1328, %v1365
  %v1367 = vlaneseq
  %v1368 = vshrl.u32 %v1367, 7
  %v1369 = vsub.s32 0, %v1368
  %v1370 = vrot.slane %v1332, %v1369
  %v1371 = vlaneseq
  %v1372 = vshrl.u32 %v1371, 7
  %v1373 = vsub.s32 1, %v1372
  %v1374 = vrot.slane %v1332, %v1373
  %v1375 = vlaneseq
  %v1376 = vshrl.u32 %v1375, 7
  %v1377 = vsub.s32 2, %v1376
  %v1378 = vrot.slane %v1332, %v1377
  %v1379 = vlaneseq
  %v1380 = vshrl.u32 %v1379, 7
  %v1381 = vsub.s32 3, %v1380
  %v1382 = vrot.slane %v1332, %v1381
  %v1383 = vlaneseq
  %v1384 = vshrl.u32 %v1383, 7
  %v1385 = vsub.s32 4, %v1384
  %v1386 = vrot.slane %v1332, %v1385
  %v1387 = vlaneseq
  %v1388 = vshrl.u32 %v1387, 7
  %v1389 = vsub.s32 5, %v1388
  %v1390 = vrot.slane %v1332, %v1389
  %v1391 = vlaneseq
  %v1392 = vshrl.u32 %v1391, 7
  %v1393 = vsub.s32 6, %v1392
  %v1394 = vrot.slane %v1332, %v1393
  %v1395 = vlaneseq
  %v1396 = vshrl.u32 %v1395, 7
  %v1397 = vsub.s32 7, %v1396
  %v1398 = vrot.slane %v1332, %v1397
  %v1415 = vmul.f32 %v1324, %v1338
  %v1416 = vmul.f32 %v1323, %v1342
  %v1417 = vmul.f32 %v1322, %v1346
  %v1418 = vmul.f32 %v1321, %v1350
  %v1419 = vmul.f32 %v1320, %v1354
  %v1420 = vmul.f32 %v1319, %v1358
  %v1421 = vmul.f32 %v1318, %v1362
  %v1422 = vmul.f32 %v1317, %v1366
  %v1423 = vmul.f32 %v1316, %v1370
  %v1424 = vmul.f32 %v1315, %v1374
  %v1425 = vmul.f32 %v1314, %v1378
  %v1426 = vmul.f32 %v1313, %v1382
  %v1427 = vmul.f32 %v1312, %v1386
  %v1428 = vmul.f32 %v1311, %v1390
  %v1429 = vmul.f32 %v1310, %v1394
  %v1430 = vmul.f32 %v1309, %v1398
  %1431 = vst [vmem:[#allocation2 + $0x180] sm:$0xff] %v1415
  %1432 = vst [vmem:[#allocation2 + $0x188] sm:$0xff] %v1416
  %1433 = vst [vmem:[#allocation2 + $0x190] sm:$0xff] %v1417
  %1434 = vst [vmem:[#allocation2 + $0x198] sm:$0xff] %v1418
  %1435 = vst [vmem:[#allocation2 + $0x1a0] sm:$0xff] %v1419
  %1436 = vst [vmem:[#allocation2 + $0x1a8] sm:$0xff] %v1420
  %1437 = vst [vmem:[#allocation2 + $0x1b0] sm:$0xff] %v1421
  %1438 = vst [vmem:[#allocation2 + $0x1b8] sm:$0xff] %v1422
  %1439 = vst [vmem:[#allocation2 + $0x1c0] sm:$0xff] %v1423
  %1440 = vst [vmem:[#allocation2 + $0x1c8] sm:$0xff] %v1424
  %1441 = vst [vmem:[#allocation2 + $0x1d0] sm:$0xff] %v1425
  %1442 = vst [vmem:[#allocation2 + $0x1d8] sm:$0xff] %v1426
  %1443 = vst [vmem:[#allocation2 + $0x1e0] sm:$0xff] %v1427
  %1444 = vst [vmem:[#allocation2 + $0x1e8] sm:$0xff] %v1428
  %1445 = vst [vmem:[#allocation2 + $0x1f0] sm:$0xff] %v1429
  %1446 = vst [vmem:[#allocation2 + $0x1f8] sm:$0xff] %v1430
  %1447 = vst [vmem:[#allocation2 + $0x200] sm:$0xff] %v746
  %1448 = vst [vmem:[#allocation2 + $0x208] sm:$0xff] %v747
  %1449 = vst [vmem:[#allocation2 + $0x210] sm:$0xff] %v748
  %1450 = vst [vmem:[#allocation2 + $0x218] sm:$0xff] %v749
  %1451 = vst [vmem:[#allocation2 + $0x220] sm:$0xff] %v750
  %1452 = vst [vmem:[#allocation2 + $0x228] sm:$0xff] %v751
  %1453 = vst [vmem:[#allocation2 + $0x230] sm:$0xff] %v752
  %1454 = vst [vmem:[#allocation2 + $0x238] sm:$0xff] %v753
  %1455 = vst [vmem:[#allocation2 + $0x240] sm:$0xff] %v754
  %1456 = vst [vmem:[#allocation2 + $0x248] sm:$0xff] %v755
  %1457 = vst [vmem:[#allocation2 + $0x250] sm:$0xff] %v756
  %1458 = vst [vmem:[#allocation2 + $0x258] sm:$0xff] %v757
  %1459 = vst [vmem:[#allocation2 + $0x260] sm:$0xff] %v758
  %1460 = vst [vmem:[#allocation2 + $0x268] sm:$0xff] %v759
  %1461 = vst [vmem:[#allocation2 + $0x270] sm:$0xff] %v760
  %1462 = vst [vmem:[#allocation2 + $0x278] sm:$0xff] %v761
  %1463 = vrot.lane.b32.xlu0 %v746, 127
  %v1464 = vpop.permute.xlu0 %1463
  %1465 = vrot.lane.b32.xlu0 %v747, 127
  %v1466 = vpop.permute.xlu0 %1465
  %1467 = vrot.lane.b32.xlu0 %v748, 127
  %v1468 = vpop.permute.xlu0 %1467
  %1469 = vrot.lane.b32.xlu0 %v749, 127
  %v1470 = vpop.permute.xlu0 %1469
  %1471 = vrot.lane.b32.xlu0 %v750, 127
  %v1472 = vpop.permute.xlu0 %1471
  %1473 = vrot.lane.b32.xlu0 %v751, 127
  %v1474 = vpop.permute.xlu0 %1473
  %1475 = vrot.lane.b32.xlu0 %v752, 127
  %v1476 = vpop.permute.xlu0 %1475
  %1477 = vrot.lane.b32.xlu0 %v753, 127
  %v1478 = vpop.permute.xlu0 %1477
  %1479 = vrot.lane.b32.xlu0 %v754, 127
  %v1480 = vpop.permute.xlu0 %1479
  %1481 = vrot.lane.b32.xlu0 %v755, 127
  %v1482 = vpop.permute.xlu0 %1481
  %1483 = vrot.lane.b32.xlu0 %v756, 127
  %v1484 = vpop.permute.xlu0 %1483
  %1485 = vrot.lane.b32.xlu0 %v757, 127
  %v1486 = vpop.permute.xlu0 %1485
  %1487 = vrot.lane.b32.xlu0 %v758, 127
  %v1488 = vpop.permute.xlu0 %1487
  %1489 = vrot.lane.b32.xlu0 %v759, 127
  %v1490 = vpop.permute.xlu0 %1489
  %1491 = vrot.lane.b32.xlu0 %v760, 127
  %v1492 = vpop.permute.xlu0 %1491
  %1493 = vrot.lane.b32.xlu0 %v761, 127
  %v1494 = vpop.permute.xlu0 %1493
  %vm1495 = vcmp.lt.s32.totalorder %v795, 127
  %v1496 = vsel %vm1495, %v1492, %v1494
  %v1497 = vsel %vm1495, %v1490, %v1492
  %v1498 = vsel %vm1495, %v1488, %v1490
  %v1499 = vsel %vm1495, %v1486, %v1488
  %v1500 = vsel %vm1495, %v1484, %v1486
  %v1501 = vsel %vm1495, %v1482, %v1484
  %v1502 = vsel %vm1495, %v1480, %v1482
  %v1503 = vsel %vm1495, %v1478, %v1480
  %v1504 = vsel %vm1495, %v1476, %v1478
  %v1505 = vsel %vm1495, %v1474, %v1476
  %v1506 = vsel %vm1495, %v1472, %v1474
  %v1507 = vsel %vm1495, %v1470, %v1472
  %v1508 = vsel %vm1495, %v1468, %v1470
  %v1509 = vsel %vm1495, %v1466, %v1468
  %v1510 = vsel %vm1495, %v1464, %v1466
  %v1511 = vsel %vm1495, %v1494, %v1464
  %s1512 = scalar_lea.vmem %s1, 5
  %v1513 = vld [vmem:[%s1512] ss:$8 sm:$0xf]
  %v1514 = vld [vmem:[%s1512] ss:$8 sm:$0xf0]
  %v1515 = vor.u32 %v1513, %v1514
  %s1516 = scalar_lea.vmem %s1, 69
  %v1517 = vld [vmem:[%s1516] ss:$8 sm:$0xf]
  %v1518 = vld [vmem:[%s1516] ss:$8 sm:$0xf0]
  %v1519 = vor.u32 %v1517, %v1518
  %v1522 = vlaneseq
  %v1523 = vshrl.u32 %v1522, 7
  %v1524 = vsub.s32 0, %v1523
  %v1525 = vrot.slane %v1515, %v1524
  %v1526 = vlaneseq
  %v1527 = vshrl.u32 %v1526, 7
  %v1528 = vsub.s32 1, %v1527
  %v1529 = vrot.slane %v1515, %v1528
  %v1530 = vlaneseq
  %v1531 = vshrl.u32 %v1530, 7
  %v1532 = vsub.s32 2, %v1531
  %v1533 = vrot.slane %v1515, %v1532
  %v1534 = vlaneseq
  %v1535 = vshrl.u32 %v1534, 7
  %v1536 = vsub.s32 3, %v1535
  %v1537 = vrot.slane %v1515, %v1536
  %v1538 = vlaneseq
  %v1539 = vshrl.u32 %v1538, 7
  %v1540 = vsub.s32 4, %v1539
  %v1541 = vrot.slane %v1515, %v1540
  %v1542 = vlaneseq
  %v1543 = vshrl.u32 %v1542, 7
  %v1544 = vsub.s32 5, %v1543
  %v1545 = vrot.slane %v1515, %v1544
  %v1546 = vlaneseq
  %v1547 = vshrl.u32 %v1546, 7
  %v1548 = vsub.s32 6, %v1547
  %v1549 = vrot.slane %v1515, %v1548
  %v1550 = vlaneseq
  %v1551 = vshrl.u32 %v1550, 7
  %v1552 = vsub.s32 7, %v1551
  %v1553 = vrot.slane %v1515, %v1552
  %v1554 = vlaneseq
  %v1555 = vshrl.u32 %v1554, 7
  %v1556 = vsub.s32 0, %v1555
  %v1557 = vrot.slane %v1519, %v1556
  %v1558 = vlaneseq
  %v1559 = vshrl.u32 %v1558, 7
  %v1560 = vsub.s32 1, %v1559
  %v1561 = vrot.slane %v1519, %v1560
  %v1562 = vlaneseq
  %v1563 = vshrl.u32 %v1562, 7
  %v1564 = vsub.s32 2, %v1563
  %v1565 = vrot.slane %v1519, %v1564
  %v1566 = vlaneseq
  %v1567 = vshrl.u32 %v1566, 7
  %v1568 = vsub.s32 3, %v1567
  %v1569 = vrot.slane %v1519, %v1568
  %v1570 = vlaneseq
  %v1571 = vshrl.u32 %v1570, 7
  %v1572 = vsub.s32 4, %v1571
  %v1573 = vrot.slane %v1519, %v1572
  %v1574 = vlaneseq
  %v1575 = vshrl.u32 %v1574, 7
  %v1576 = vsub.s32 5, %v1575
  %v1577 = vrot.slane %v1519, %v1576
  %v1578 = vlaneseq
  %v1579 = vshrl.u32 %v1578, 7
  %v1580 = vsub.s32 6, %v1579
  %v1581 = vrot.slane %v1519, %v1580
  %v1582 = vlaneseq
  %v1583 = vshrl.u32 %v1582, 7
  %v1584 = vsub.s32 7, %v1583
  %v1585 = vrot.slane %v1519, %v1584
  %v1602 = vmul.f32 %v1510, %v1525
  %v1603 = vmul.f32 %v1509, %v1529
  %v1604 = vmul.f32 %v1508, %v1533
  %v1605 = vmul.f32 %v1507, %v1537
  %v1606 = vmul.f32 %v1506, %v1541
  %v1607 = vmul.f32 %v1505, %v1545
  %v1608 = vmul.f32 %v1504, %v1549
  %v1609 = vmul.f32 %v1503, %v1553
  %v1610 = vmul.f32 %v1502, %v1557
  %v1611 = vmul.f32 %v1501, %v1561
  %v1612 = vmul.f32 %v1500, %v1565
  %v1613 = vmul.f32 %v1499, %v1569
  %v1614 = vmul.f32 %v1498, %v1573
  %v1615 = vmul.f32 %v1497, %v1577
  %v1616 = vmul.f32 %v1496, %v1581
  %v1617 = vmul.f32 %v1511, %v1585
  %1618 = vst [vmem:[#allocation2 + $0x280] sm:$0xff] %v1602
  %1619 = vst [vmem:[#allocation2 + $0x288] sm:$0xff] %v1603
  %1620 = vst [vmem:[#allocation2 + $0x290] sm:$0xff] %v1604
  %1621 = vst [vmem:[#allocation2 + $0x298] sm:$0xff] %v1605
  %1622 = vst [vmem:[#allocation2 + $0x2a0] sm:$0xff] %v1606
  %1623 = vst [vmem:[#allocation2 + $0x2a8] sm:$0xff] %v1607
  %1624 = vst [vmem:[#allocation2 + $0x2b0] sm:$0xff] %v1608
  %1625 = vst [vmem:[#allocation2 + $0x2b8] sm:$0xff] %v1609
  %1626 = vst [vmem:[#allocation2 + $0x2c0] sm:$0xff] %v1610
  %1627 = vst [vmem:[#allocation2 + $0x2c8] sm:$0xff] %v1611
  %1628 = vst [vmem:[#allocation2 + $0x2d0] sm:$0xff] %v1612
  %1629 = vst [vmem:[#allocation2 + $0x2d8] sm:$0xff] %v1613
  %1630 = vst [vmem:[#allocation2 + $0x2e0] sm:$0xff] %v1614
  %1631 = vst [vmem:[#allocation2 + $0x2e8] sm:$0xff] %v1615
  %1632 = vst [vmem:[#allocation2 + $0x2f0] sm:$0xff] %v1616
  %1633 = vst [vmem:[#allocation2 + $0x2f8] sm:$0xff] %v1617
  %1634 = vrot.lane.b32.xlu0 %v746, 97
  %v1635 = vpop.permute.xlu0 %1634
  %1636 = vrot.lane.b32.xlu0 %v747, 97
  %v1637 = vpop.permute.xlu0 %1636
  %1638 = vrot.lane.b32.xlu0 %v748, 97
  %v1639 = vpop.permute.xlu0 %1638
  %1640 = vrot.lane.b32.xlu0 %v749, 97
  %v1641 = vpop.permute.xlu0 %1640
  %1642 = vrot.lane.b32.xlu0 %v750, 97
  %v1643 = vpop.permute.xlu0 %1642
  %1644 = vrot.lane.b32.xlu0 %v751, 97
  %v1645 = vpop.permute.xlu0 %1644
  %1646 = vrot.lane.b32.xlu0 %v752, 97
  %v1647 = vpop.permute.xlu0 %1646
  %1648 = vrot.lane.b32.xlu0 %v753, 97
  %v1649 = vpop.permute.xlu0 %1648
  %1650 = vrot.lane.b32.xlu0 %v754, 97
  %v1651 = vpop.permute.xlu0 %1650
  %1652 = vrot.lane.b32.xlu0 %v755, 97
  %v1653 = vpop.permute.xlu0 %1652
  %1654 = vrot.lane.b32.xlu0 %v756, 97
  %v1655 = vpop.permute.xlu0 %1654
  %1656 = vrot.lane.b32.xlu0 %v757, 97
  %v1657 = vpop.permute.xlu0 %1656
  %1658 = vrot.lane.b32.xlu0 %v758, 97
  %v1659 = vpop.permute.xlu0 %1658
  %1660 = vrot.lane.b32.xlu0 %v759, 97
  %v1661 = vpop.permute.xlu0 %1660
  %1662 = vrot.lane.b32.xlu0 %v760, 97
  %v1663 = vpop.permute.xlu0 %1662
  %1664 = vrot.lane.b32.xlu0 %v761, 97
  %v1665 = vpop.permute.xlu0 %1664
  %vm1666 = vcmp.lt.s32.totalorder %v795, 97
  %v1667 = vsel %vm1666, %v1663, %v1665
  %v1668 = vsel %vm1666, %v1661, %v1663
  %v1669 = vsel %vm1666, %v1659, %v1661
  %v1670 = vsel %vm1666, %v1657, %v1659
  %v1671 = vsel %vm1666, %v1655, %v1657
  %v1672 = vsel %vm1666, %v1653, %v1655
  %v1673 = vsel %vm1666, %v1651, %v1653
  %v1674 = vsel %vm1666, %v1649, %v1651
  %v1675 = vsel %vm1666, %v1647, %v1649
  %v1676 = vsel %vm1666, %v1645, %v1647
  %v1677 = vsel %vm1666, %v1643, %v1645
  %v1678 = vsel %vm1666, %v1641, %v1643
  %v1679 = vsel %vm1666, %v1639, %v1641
  %v1680 = vsel %vm1666, %v1637, %v1639
  %v1681 = vsel %vm1666, %v1635, %v1637
  %v1682 = vsel %vm1666, %v1665, %v1635
  %s1683 = scalar_lea.vmem %s1, 6
  %v1684 = vld [vmem:[%s1683] ss:$8 sm:$0xf]
  %v1685 = vld [vmem:[%s1683] ss:$8 sm:$0xf0]
  %v1686 = vor.u32 %v1684, %v1685
  %s1687 = scalar_lea.vmem %s1, 70
  %v1688 = vld [vmem:[%s1687] ss:$8 sm:$0xf]
  %v1689 = vld [vmem:[%s1687] ss:$8 sm:$0xf0]
  %v1690 = vor.u32 %v1688, %v1689
  %v1693 = vlaneseq
  %v1694 = vshrl.u32 %v1693, 7
  %v1695 = vsub.s32 0, %v1694
  %v1696 = vrot.slane %v1686, %v1695
  %v1697 = vlaneseq
  %v1698 = vshrl.u32 %v1697, 7
  %v1699 = vsub.s32 1, %v1698
  %v1700 = vrot.slane %v1686, %v1699
  %v1701 = vlaneseq
  %v1702 = vshrl.u32 %v1701, 7
  %v1703 = vsub.s32 2, %v1702
  %v1704 = vrot.slane %v1686, %v1703
  %v1705 = vlaneseq
  %v1706 = vshrl.u32 %v1705, 7
  %v1707 = vsub.s32 3, %v1706
  %v1708 = vrot.slane %v1686, %v1707
  %v1709 = vlaneseq
  %v1710 = vshrl.u32 %v1709, 7
  %v1711 = vsub.s32 4, %v1710
  %v1712 = vrot.slane %v1686, %v1711
  %v1713 = vlaneseq
  %v1714 = vshrl.u32 %v1713, 7
  %v1715 = vsub.s32 5, %v1714
  %v1716 = vrot.slane %v1686, %v1715
  %v1717 = vlaneseq
  %v1718 = vshrl.u32 %v1717, 7
  %v1719 = vsub.s32 6, %v1718
  %v1720 = vrot.slane %v1686, %v1719
  %v1721 = vlaneseq
  %v1722 = vshrl.u32 %v1721, 7
  %v1723 = vsub.s32 7, %v1722
  %v1724 = vrot.slane %v1686, %v1723
  %v1725 = vlaneseq
  %v1726 = vshrl.u32 %v1725, 7
  %v1727 = vsub.s32 0, %v1726
  %v1728 = vrot.slane %v1690, %v1727
  %v1729 = vlaneseq
  %v1730 = vshrl.u32 %v1729, 7
  %v1731 = vsub.s32 1, %v1730
  %v1732 = vrot.slane %v1690, %v1731
  %v1733 = vlaneseq
  %v1734 = vshrl.u32 %v1733, 7
  %v1735 = vsub.s32 2, %v1734
  %v1736 = vrot.slane %v1690, %v1735
  %v1737 = vlaneseq
  %v1738 = vshrl.u32 %v1737, 7
  %v1739 = vsub.s32 3, %v1738
  %v1740 = vrot.slane %v1690, %v1739
  %v1741 = vlaneseq
  %v1742 = vshrl.u32 %v1741, 7
  %v1743 = vsub.s32 4, %v1742
  %v1744 = vrot.slane %v1690, %v1743
  %v1745 = vlaneseq
  %v1746 = vshrl.u32 %v1745, 7
  %v1747 = vsub.s32 5, %v1746
  %v1748 = vrot.slane %v1690, %v1747
  %v1749 = vlaneseq
  %v1750 = vshrl.u32 %v1749, 7
  %v1751 = vsub.s32 6, %v1750
  %v1752 = vrot.slane %v1690, %v1751
  %v1753 = vlaneseq
  %v1754 = vshrl.u32 %v1753, 7
  %v1755 = vsub.s32 7, %v1754
  %v1756 = vrot.slane %v1690, %v1755
  %v1773 = vmul.f32 %v1681, %v1696
  %v1774 = vmul.f32 %v1680, %v1700
  %v1775 = vmul.f32 %v1679, %v1704
  %v1776 = vmul.f32 %v1678, %v1708
  %v1777 = vmul.f32 %v1677, %v1712
  %v1778 = vmul.f32 %v1676, %v1716
  %v1779 = vmul.f32 %v1675, %v1720
  %v1780 = vmul.f32 %v1674, %v1724
  %v1781 = vmul.f32 %v1673, %v1728
  %v1782 = vmul.f32 %v1672, %v1732
  %v1783 = vmul.f32 %v1671, %v1736
  %v1784 = vmul.f32 %v1670, %v1740
  %v1785 = vmul.f32 %v1669, %v1744
  %v1786 = vmul.f32 %v1668, %v1748
  %v1787 = vmul.f32 %v1667, %v1752
  %v1788 = vmul.f32 %v1682, %v1756
  %1789 = vst [vmem:[#allocation2 + $0x300] sm:$0xff] %v1773
  %1790 = vst [vmem:[#allocation2 + $0x308] sm:$0xff] %v1774
  %1791 = vst [vmem:[#allocation2 + $0x310] sm:$0xff] %v1775
  %1792 = vst [vmem:[#allocation2 + $0x318] sm:$0xff] %v1776
  %1793 = vst [vmem:[#allocation2 + $0x320] sm:$0xff] %v1777
  %1794 = vst [vmem:[#allocation2 + $0x328] sm:$0xff] %v1778
  %1795 = vst [vmem:[#allocation2 + $0x330] sm:$0xff] %v1779
  %1796 = vst [vmem:[#allocation2 + $0x338] sm:$0xff] %v1780
  %1797 = vst [vmem:[#allocation2 + $0x340] sm:$0xff] %v1781
  %1798 = vst [vmem:[#allocation2 + $0x348] sm:$0xff] %v1782
  %1799 = vst [vmem:[#allocation2 + $0x350] sm:$0xff] %v1783
  %1800 = vst [vmem:[#allocation2 + $0x358] sm:$0xff] %v1784
  %1801 = vst [vmem:[#allocation2 + $0x360] sm:$0xff] %v1785
  %1802 = vst [vmem:[#allocation2 + $0x368] sm:$0xff] %v1786
  %1803 = vst [vmem:[#allocation2 + $0x370] sm:$0xff] %v1787
  %1804 = vst [vmem:[#allocation2 + $0x378] sm:$0xff] %v1788
  %1805 = vrot.lane.b32.xlu0 %v746, 96
  %v1806 = vpop.permute.xlu0 %1805
  %1807 = vrot.lane.b32.xlu0 %v747, 96
  %v1808 = vpop.permute.xlu0 %1807
  %1809 = vrot.lane.b32.xlu0 %v748, 96
  %v1810 = vpop.permute.xlu0 %1809
  %1811 = vrot.lane.b32.xlu0 %v749, 96
  %v1812 = vpop.permute.xlu0 %1811
  %1813 = vrot.lane.b32.xlu0 %v750, 96
  %v1814 = vpop.permute.xlu0 %1813
  %1815 = vrot.lane.b32.xlu0 %v751, 96
  %v1816 = vpop.permute.xlu0 %1815
  %1817 = vrot.lane.b32.xlu0 %v752, 96
  %v1818 = vpop.permute.xlu0 %1817
  %1819 = vrot.lane.b32.xlu0 %v753, 96
  %v1820 = vpop.permute.xlu0 %1819
  %1821 = vrot.lane.b32.xlu0 %v754, 96
  %v1822 = vpop.permute.xlu0 %1821
  %1823 = vrot.lane.b32.xlu0 %v755, 96
  %v1824 = vpop.permute.xlu0 %1823
  %1825 = vrot.lane.b32.xlu0 %v756, 96
  %v1826 = vpop.permute.xlu0 %1825
  %1827 = vrot.lane.b32.xlu0 %v757, 96
  %v1828 = vpop.permute.xlu0 %1827
  %1829 = vrot.lane.b32.xlu0 %v758, 96
  %v1830 = vpop.permute.xlu0 %1829
  %1831 = vrot.lane.b32.xlu0 %v759, 96
  %v1832 = vpop.permute.xlu0 %1831
  %1833 = vrot.lane.b32.xlu0 %v760, 96
  %v1834 = vpop.permute.xlu0 %1833
  %1835 = vrot.lane.b32.xlu0 %v761, 96
  %v1836 = vpop.permute.xlu0 %1835
  %vm1837 = vcmp.lt.s32.totalorder %v795, 96
  %v1838 = vsel %vm1837, %v1834, %v1836
  %v1839 = vsel %vm1837, %v1832, %v1834
  %v1840 = vsel %vm1837, %v1830, %v1832
  %v1841 = vsel %vm1837, %v1828, %v1830
  %v1842 = vsel %vm1837, %v1826, %v1828
  %v1843 = vsel %vm1837, %v1824, %v1826
  %v1844 = vsel %vm1837, %v1822, %v1824
  %v1845 = vsel %vm1837, %v1820, %v1822
  %v1846 = vsel %vm1837, %v1818, %v1820
  %v1847 = vsel %vm1837, %v1816, %v1818
  %v1848 = vsel %vm1837, %v1814, %v1816
  %v1849 = vsel %vm1837, %v1812, %v1814
  %v1850 = vsel %vm1837, %v1810, %v1812
  %v1851 = vsel %vm1837, %v1808, %v1810
  %v1852 = vsel %vm1837, %v1806, %v1808
  %v1853 = vsel %vm1837, %v1836, %v1806
  %s1854 = scalar_lea.vmem %s1, 7
  %v1855 = vld [vmem:[%s1854] ss:$8 sm:$0xf]
  %v1856 = vld [vmem:[%s1854] ss:$8 sm:$0xf0]
  %v1857 = vor.u32 %v1855, %v1856
  %s1858 = scalar_lea.vmem %s1, 71
  %v1859 = vld [vmem:[%s1858] ss:$8 sm:$0xf]
  %v1860 = vld [vmem:[%s1858] ss:$8 sm:$0xf0]
  %v1861 = vor.u32 %v1859, %v1860
  %v1864 = vlaneseq
  %v1865 = vshrl.u32 %v1864, 7
  %v1866 = vsub.s32 0, %v1865
  %v1867 = vrot.slane %v1857, %v1866
  %v1868 = vlaneseq
  %v1869 = vshrl.u32 %v1868, 7
  %v1870 = vsub.s32 1, %v1869
  %v1871 = vrot.slane %v1857, %v1870
  %v1872 = vlaneseq
  %v1873 = vshrl.u32 %v1872, 7
  %v1874 = vsub.s32 2, %v1873
  %v1875 = vrot.slane %v1857, %v1874
  %v1876 = vlaneseq
  %v1877 = vshrl.u32 %v1876, 7
  %v1878 = vsub.s32 3, %v1877
  %v1879 = vrot.slane %v1857, %v1878
  %v1880 = vlaneseq
  %v1881 = vshrl.u32 %v1880, 7
  %v1882 = vsub.s32 4, %v1881
  %v1883 = vrot.slane %v1857, %v1882
  %v1884 = vlaneseq
  %v1885 = vshrl.u32 %v1884, 7
  %v1886 = vsub.s32 5, %v1885
  %v1887 = vrot.slane %v1857, %v1886
  %v1888 = vlaneseq
  %v1889 = vshrl.u32 %v1888, 7
  %v1890 = vsub.s32 6, %v1889
  %v1891 = vrot.slane %v1857, %v1890
  %v1892 = vlaneseq
  %v1893 = vshrl.u32 %v1892, 7
  %v1894 = vsub.s32 7, %v1893
  %v1895 = vrot.slane %v1857, %v1894
  %v1896 = vlaneseq
  %v1897 = vshrl.u32 %v1896, 7
  %v1898 = vsub.s32 0, %v1897
  %v1899 = vrot.slane %v1861, %v1898
  %v1900 = vlaneseq
  %v1901 = vshrl.u32 %v1900, 7
  %v1902 = vsub.s32 1, %v1901
  %v1903 = vrot.slane %v1861, %v1902
  %v1904 = vlaneseq
  %v1905 = vshrl.u32 %v1904, 7
  %v1906 = vsub.s32 2, %v1905
  %v1907 = vrot.slane %v1861, %v1906
  %v1908 = vlaneseq
  %v1909 = vshrl.u32 %v1908, 7
  %v1910 = vsub.s32 3, %v1909
  %v1911 = vrot.slane %v1861, %v1910
  %v1912 = vlaneseq
  %v1913 = vshrl.u32 %v1912, 7
  %v1914 = vsub.s32 4, %v1913
  %v1915 = vrot.slane %v1861, %v1914
  %v1916 = vlaneseq
  %v1917 = vshrl.u32 %v1916, 7
  %v1918 = vsub.s32 5, %v1917
  %v1919 = vrot.slane %v1861, %v1918
  %v1920 = vlaneseq
  %v1921 = vshrl.u32 %v1920, 7
  %v1922 = vsub.s32 6, %v1921
  %v1923 = vrot.slane %v1861, %v1922
  %v1924 = vlaneseq
  %v1925 = vshrl.u32 %v1924, 7
  %v1926 = vsub.s32 7, %v1925
  %v1927 = vrot.slane %v1861, %v1926
  %v1944 = vmul.f32 %v1852, %v1867
  %v1945 = vmul.f32 %v1851, %v1871
  %v1946 = vmul.f32 %v1850, %v1875
  %v1947 = vmul.f32 %v1849, %v1879
  %v1948 = vmul.f32 %v1848, %v1883
  %v1949 = vmul.f32 %v1847, %v1887
  %v1950 = vmul.f32 %v1846, %v1891
  %v1951 = vmul.f32 %v1845, %v1895
  %v1952 = vmul.f32 %v1844, %v1899
  %v1953 = vmul.f32 %v1843, %v1903
  %v1954 = vmul.f32 %v1842, %v1907
  %v1955 = vmul.f32 %v1841, %v1911
  %v1956 = vmul.f32 %v1840, %v1915
  %v1957 = vmul.f32 %v1839, %v1919
  %v1958 = vmul.f32 %v1838, %v1923
  %v1959 = vmul.f32 %v1853, %v1927
  %1960 = vst [vmem:[#allocation2 + $0x380] sm:$0xff] %v1944
  %1961 = vst [vmem:[#allocation2 + $0x388] sm:$0xff] %v1945
  %1962 = vst [vmem:[#allocation2 + $0x390] sm:$0xff] %v1946
  %1963 = vst [vmem:[#allocation2 + $0x398] sm:$0xff] %v1947
  %1964 = vst [vmem:[#allocation2 + $0x3a0] sm:$0xff] %v1948
  %1965 = vst [vmem:[#allocation2 + $0x3a8] sm:$0xff] %v1949
  %1966 = vst [vmem:[#allocation2 + $0x3b0] sm:$0xff] %v1950
  %1967 = vst [vmem:[#allocation2 + $0x3b8] sm:$0xff] %v1951
  %1968 = vst [vmem:[#allocation2 + $0x3c0] sm:$0xff] %v1952
  %1969 = vst [vmem:[#allocation2 + $0x3c8] sm:$0xff] %v1953
  %1970 = vst [vmem:[#allocation2 + $0x3d0] sm:$0xff] %v1954
  %1971 = vst [vmem:[#allocation2 + $0x3d8] sm:$0xff] %v1955
  %1972 = vst [vmem:[#allocation2 + $0x3e0] sm:$0xff] %v1956
  %1973 = vst [vmem:[#allocation2 + $0x3e8] sm:$0xff] %v1957
  %1974 = vst [vmem:[#allocation2 + $0x3f0] sm:$0xff] %v1958
  %1975 = vst [vmem:[#allocation2 + $0x3f8] sm:$0xff] %v1959
  %1976 = vrot.lane.b32.xlu0 %v746, 95
  %v1977 = vpop.permute.xlu0 %1976
  %1978 = vrot.lane.b32.xlu0 %v747, 95
  %v1979 = vpop.permute.xlu0 %1978
  %1980 = vrot.lane.b32.xlu0 %v748, 95
  %v1981 = vpop.permute.xlu0 %1980
  %1982 = vrot.lane.b32.xlu0 %v749, 95
  %v1983 = vpop.permute.xlu0 %1982
  %1984 = vrot.lane.b32.xlu0 %v750, 95
  %v1985 = vpop.permute.xlu0 %1984
  %1986 = vrot.lane.b32.xlu0 %v751, 95
  %v1987 = vpop.permute.xlu0 %1986
  %1988 = vrot.lane.b32.xlu0 %v752, 95
  %v1989 = vpop.permute.xlu0 %1988
  %1990 = vrot.lane.b32.xlu0 %v753, 95
  %v1991 = vpop.permute.xlu0 %1990
  %1992 = vrot.lane.b32.xlu0 %v754, 95
  %v1993 = vpop.permute.xlu0 %1992
  %1994 = vrot.lane.b32.xlu0 %v755, 95
  %v1995 = vpop.permute.xlu0 %1994
  %1996 = vrot.lane.b32.xlu0 %v756, 95
  %v1997 = vpop.permute.xlu0 %1996
  %1998 = vrot.lane.b32.xlu0 %v757, 95
  %v1999 = vpop.permute.xlu0 %1998
  %2000 = vrot.lane.b32.xlu0 %v758, 95
  %v2001 = vpop.permute.xlu0 %2000
  %2002 = vrot.lane.b32.xlu0 %v759, 95
  %v2003 = vpop.permute.xlu0 %2002
  %2004 = vrot.lane.b32.xlu0 %v760, 95
  %v2005 = vpop.permute.xlu0 %2004
  %2006 = vrot.lane.b32.xlu0 %v761, 95
  %v2007 = vpop.permute.xlu0 %2006
  %vm2008 = vcmp.lt.s32.totalorder %v795, 95
  %v2009 = vsel %vm2008, %v2005, %v2007
  %v2010 = vsel %vm2008, %v2003, %v2005
  %v2011 = vsel %vm2008, %v2001, %v2003
  %v2012 = vsel %vm2008, %v1999, %v2001
  %v2013 = vsel %vm2008, %v1997, %v1999
  %v2014 = vsel %vm2008, %v1995, %v1997
  %v2015 = vsel %vm2008, %v1993, %v1995
  %v2016 = vsel %vm2008, %v1991, %v1993
  %v2017 = vsel %vm2008, %v1989, %v1991
  %v2018 = vsel %vm2008, %v1987, %v1989
  %v2019 = vsel %vm2008, %v1985, %v1987
  %v2020 = vsel %vm2008, %v1983, %v1985
  %v2021 = vsel %vm2008, %v1981, %v1983
  %v2022 = vsel %vm2008, %v1979, %v1981
  %v2023 = vsel %vm2008, %v1977, %v1979
  %v2024 = vsel %vm2008, %v2007, %v1977
  %s2025 = scalar_lea.vmem %s1, 128
  %v2026 = vld [vmem:[%s2025] ss:$8 sm:$0xf]
  %v2027 = vld [vmem:[%s2025] ss:$8 sm:$0xf0]
  %v2028 = vor.u32 %v2026, %v2027
  %s2029 = scalar_lea.vmem %s1, 192
  %v2030 = vld [vmem:[%s2029] ss:$8 sm:$0xf]
  %v2031 = vld [vmem:[%s2029] ss:$8 sm:$0xf0]
  %v2032 = vor.u32 %v2030, %v2031
  %v2035 = vlaneseq
  %v2036 = vshrl.u32 %v2035, 7
  %v2037 = vsub.s32 0, %v2036
  %v2038 = vrot.slane %v2028, %v2037
  %v2039 = vlaneseq
  %v2040 = vshrl.u32 %v2039, 7
  %v2041 = vsub.s32 1, %v2040
  %v2042 = vrot.slane %v2028, %v2041
  %v2043 = vlaneseq
  %v2044 = vshrl.u32 %v2043, 7
  %v2045 = vsub.s32 2, %v2044
  %v2046 = vrot.slane %v2028, %v2045
  %v2047 = vlaneseq
  %v2048 = vshrl.u32 %v2047, 7
  %v2049 = vsub.s32 3, %v2048
  %v2050 = vrot.slane %v2028, %v2049
  %v2051 = vlaneseq
  %v2052 = vshrl.u32 %v2051, 7
  %v2053 = vsub.s32 4, %v2052
  %v2054 = vrot.slane %v2028, %v2053
  %v2055 = vlaneseq
  %v2056 = vshrl.u32 %v2055, 7
  %v2057 = vsub.s32 5, %v2056
  %v2058 = vrot.slane %v2028, %v2057
  %v2059 = vlaneseq
  %v2060 = vshrl.u32 %v2059, 7
  %v2061 = vsub.s32 6, %v2060
  %v2062 = vrot.slane %v2028, %v2061
  %v2063 = vlaneseq
  %v2064 = vshrl.u32 %v2063, 7
  %v2065 = vsub.s32 7, %v2064
  %v2066 = vrot.slane %v2028, %v2065
  %v2067 = vlaneseq
  %v2068 = vshrl.u32 %v2067, 7
  %v2069 = vsub.s32 0, %v2068
  %v2070 = vrot.slane %v2032, %v2069
  %v2071 = vlaneseq
  %v2072 = vshrl.u32 %v2071, 7
  %v2073 = vsub.s32 1, %v2072
  %v2074 = vrot.slane %v2032, %v2073
  %v2075 = vlaneseq
  %v2076 = vshrl.u32 %v2075, 7
  %v2077 = vsub.s32 2, %v2076
  %v2078 = vrot.slane %v2032, %v2077
  %v2079 = vlaneseq
  %v2080 = vshrl.u32 %v2079, 7
  %v2081 = vsub.s32 3, %v2080
  %v2082 = vrot.slane %v2032, %v2081
  %v2083 = vlaneseq
  %v2084 = vshrl.u32 %v2083, 7
  %v2085 = vsub.s32 4, %v2084
  %v2086 = vrot.slane %v2032, %v2085
  %v2087 = vlaneseq
  %v2088 = vshrl.u32 %v2087, 7
  %v2089 = vsub.s32 5, %v2088
  %v2090 = vrot.slane %v2032, %v2089
  %v2091 = vlaneseq
  %v2092 = vshrl.u32 %v2091, 7
  %v2093 = vsub.s32 6, %v2092
  %v2094 = vrot.slane %v2032, %v2093
  %v2095 = vlaneseq
  %v2096 = vshrl.u32 %v2095, 7
  %v2097 = vsub.s32 7, %v2096
  %v2098 = vrot.slane %v2032, %v2097
  %v2115 = vmul.f32 %v2023, %v2038
  %v2116 = vmul.f32 %v2022, %v2042
  %v2117 = vmul.f32 %v2021, %v2046
  %v2118 = vmul.f32 %v2020, %v2050
  %v2119 = vmul.f32 %v2019, %v2054
  %v2120 = vmul.f32 %v2018, %v2058
  %v2121 = vmul.f32 %v2017, %v2062
  %v2122 = vmul.f32 %v2016, %v2066
  %v2123 = vmul.f32 %v2015, %v2070
  %v2124 = vmul.f32 %v2014, %v2074
  %v2125 = vmul.f32 %v2013, %v2078
  %v2126 = vmul.f32 %v2012, %v2082
  %v2127 = vmul.f32 %v2011, %v2086
  %v2128 = vmul.f32 %v2010, %v2090
  %v2129 = vmul.f32 %v2009, %v2094
  %v2130 = vmul.f32 %v2024, %v2098
  %2131 = vst [vmem:[#allocation2 + $0x400] sm:$0xff] %v2115
  %2132 = vst [vmem:[#allocation2 + $0x408] sm:$0xff] %v2116
  %2133 = vst [vmem:[#allocation2 + $0x410] sm:$0xff] %v2117
  %2134 = vst [vmem:[#allocation2 + $0x418] sm:$0xff] %v2118
  %2135 = vst [vmem:[#allocation2 + $0x420] sm:$0xff] %v2119
  %2136 = vst [vmem:[#allocation2 + $0x428] sm:$0xff] %v2120
  %2137 = vst [vmem:[#allocation2 + $0x430] sm:$0xff] %v2121
  %2138 = vst [vmem:[#allocation2 + $0x438] sm:$0xff] %v2122
  %2139 = vst [vmem:[#allocation2 + $0x440] sm:$0xff] %v2123
  %2140 = vst [vmem:[#allocation2 + $0x448] sm:$0xff] %v2124
  %2141 = vst [vmem:[#allocation2 + $0x450] sm:$0xff] %v2125
  %2142 = vst [vmem:[#allocation2 + $0x458] sm:$0xff] %v2126
  %2143 = vst [vmem:[#allocation2 + $0x460] sm:$0xff] %v2127
  %2144 = vst [vmem:[#allocation2 + $0x468] sm:$0xff] %v2128
  %2145 = vst [vmem:[#allocation2 + $0x470] sm:$0xff] %v2129
  %2146 = vst [vmem:[#allocation2 + $0x478] sm:$0xff] %v2130
  %v2147 = vld [vmem:[%s5] sm:$0xff]
  %v2148 = vld [vmem:[#allocation2] sm:$0xff]
  %v2149 = vld [vmem:[#allocation2 + $0x8] sm:$0xff]
  %v2150 = vld [vmem:[#allocation2 + $0x10] sm:$0xff]
  %v2151 = vld [vmem:[#allocation2 + $0x18] sm:$0xff]
  %v2152 = vld [vmem:[#allocation2 + $0x20] sm:$0xff]
  %v2153 = vld [vmem:[#allocation2 + $0x28] sm:$0xff]
  %v2154 = vld [vmem:[#allocation2 + $0x30] sm:$0xff]
  %v2155 = vld [vmem:[#allocation2 + $0x38] sm:$0xff]
  %v2156 = vld [vmem:[#allocation2 + $0x40] sm:$0xff]
  %v2157 = vld [vmem:[#allocation2 + $0x48] sm:$0xff]
  %v2158 = vld [vmem:[#allocation2 + $0x50] sm:$0xff]
  %v2159 = vld [vmem:[#allocation2 + $0x58] sm:$0xff]
  %v2160 = vld [vmem:[#allocation2 + $0x60] sm:$0xff]
  %v2161 = vld [vmem:[#allocation2 + $0x68] sm:$0xff]
  %v2162 = vld [vmem:[#allocation2 + $0x70] sm:$0xff]
  %v2163 = vld [vmem:[#allocation2 + $0x78] sm:$0xff]
  %v2164 = vld [vmem:[#allocation2 + $0x80] sm:$0xff]
  %v2165 = vld [vmem:[#allocation2 + $0x88] sm:$0xff]
  %v2166 = vld [vmem:[#allocation2 + $0x90] sm:$0xff]
  %v2167 = vld [vmem:[#allocation2 + $0x98] sm:$0xff]
  %v2168 = vld [vmem:[#allocation2 + $0xa0] sm:$0xff]
  %v2169 = vld [vmem:[#allocation2 + $0xa8] sm:$0xff]
  %v2170 = vld [vmem:[#allocation2 + $0xb0] sm:$0xff]
  %v2171 = vld [vmem:[#allocation2 + $0xb8] sm:$0xff]
  %v2172 = vld [vmem:[#allocation2 + $0xc0] sm:$0xff]
  %v2173 = vld [vmem:[#allocation2 + $0xc8] sm:$0xff]
  %v2174 = vld [vmem:[#allocation2 + $0xd0] sm:$0xff]
  %v2175 = vld [vmem:[#allocation2 + $0xd8] sm:$0xff]
  %v2176 = vld [vmem:[#allocation2 + $0xe0] sm:$0xff]
  %v2177 = vld [vmem:[#allocation2 + $0xe8] sm:$0xff]
  %v2178 = vld [vmem:[#allocation2 + $0xf0] sm:$0xff]
  %v2179 = vld [vmem:[#allocation2 + $0xf8] sm:$0xff]
  %v2180 = vld [vmem:[#allocation2 + $0x100] sm:$0xff]
  %v2181 = vld [vmem:[#allocation2 + $0x108] sm:$0xff]
  %v2182 = vld [vmem:[#allocation2 + $0x110] sm:$0xff]
  %v2183 = vld [vmem:[#allocation2 + $0x118] sm:$0xff]
  %v2184 = vld [vmem:[#allocation2 + $0x120] sm:$0xff]
  %v2185 = vld [vmem:[#allocation2 + $0x128] sm:$0xff]
  %v2186 = vld [vmem:[#allocation2 + $0x130] sm:$0xff]
  %v2187 = vld [vmem:[#allocation2 + $0x138] sm:$0xff]
  %v2188 = vld [vmem:[#allocation2 + $0x140] sm:$0xff]
  %v2189 = vld [vmem:[#allocation2 + $0x148] sm:$0xff]
  %v2190 = vld [vmem:[#allocation2 + $0x150] sm:$0xff]
  %v2191 = vld [vmem:[#allocation2 + $0x158] sm:$0xff]
  %v2192 = vld [vmem:[#allocation2 + $0x160] sm:$0xff]
  %v2193 = vld [vmem:[#allocation2 + $0x168] sm:$0xff]
  %v2194 = vld [vmem:[#allocation2 + $0x170] sm:$0xff]
  %v2195 = vld [vmem:[#allocation2 + $0x178] sm:$0xff]
  %v2196 = vld [vmem:[#allocation2 + $0x180] sm:$0xff]
  %v2197 = vld [vmem:[#allocation2 + $0x188] sm:$0xff]
  %v2198 = vld [vmem:[#allocation2 + $0x190] sm:$0xff]
  %v2199 = vld [vmem:[#allocation2 + $0x198] sm:$0xff]
  %v2200 = vld [vmem:[#allocation2 + $0x1a0] sm:$0xff]
  %v2201 = vld [vmem:[#allocation2 + $0x1a8] sm:$0xff]
  %v2202 = vld [vmem:[#allocation2 + $0x1b0] sm:$0xff]
  %v2203 = vld [vmem:[#allocation2 + $0x1b8] sm:$0xff]
  %v2204 = vld [vmem:[#allocation2 + $0x1c0] sm:$0xff]
  %v2205 = vld [vmem:[#allocation2 + $0x1c8] sm:$0xff]
  %v2206 = vld [vmem:[#allocation2 + $0x1d0] sm:$0xff]
  %v2207 = vld [vmem:[#allocation2 + $0x1d8] sm:$0xff]
  %v2208 = vld [vmem:[#allocation2 + $0x1e0] sm:$0xff]
  %v2209 = vld [vmem:[#allocation2 + $0x1e8] sm:$0xff]
  %v2210 = vld [vmem:[#allocation2 + $0x1f0] sm:$0xff]
  %v2211 = vld [vmem:[#allocation2 + $0x1f8] sm:$0xff]
  %v2212 = vld [vmem:[#allocation2 + $0x200] sm:$0xff]
  %v2213 = vld [vmem:[#allocation2 + $0x208] sm:$0xff]
  %v2214 = vld [vmem:[#allocation2 + $0x210] sm:$0xff]
  %v2215 = vld [vmem:[#allocation2 + $0x218] sm:$0xff]
  %v2216 = vld [vmem:[#allocation2 + $0x220] sm:$0xff]
  %v2217 = vld [vmem:[#allocation2 + $0x228] sm:$0xff]
  %v2218 = vld [vmem:[#allocation2 + $0x230] sm:$0xff]
  %v2219 = vld [vmem:[#allocation2 + $0x238] sm:$0xff]
  %v2220 = vld [vmem:[#allocation2 + $0x240] sm:$0xff]
  %v2221 = vld [vmem:[#allocation2 + $0x248] sm:$0xff]
  %v2222 = vld [vmem:[#allocation2 + $0x250] sm:$0xff]
  %v2223 = vld [vmem:[#allocation2 + $0x258] sm:$0xff]
  %v2224 = vld [vmem:[#allocation2 + $0x260] sm:$0xff]
  %v2225 = vld [vmem:[#allocation2 + $0x268] sm:$0xff]
  %v2226 = vld [vmem:[#allocation2 + $0x270] sm:$0xff]
  %v2227 = vld [vmem:[#allocation2 + $0x278] sm:$0xff]
  %v2228 = vld [vmem:[#allocation2 + $0x280] sm:$0xff]
  %v2229 = vld [vmem:[#allocation2 + $0x288] sm:$0xff]
  %v2230 = vld [vmem:[#allocation2 + $0x290] sm:$0xff]
  %v2231 = vld [vmem:[#allocation2 + $0x298] sm:$0xff]
  %v2232 = vld [vmem:[#allocation2 + $0x2a0] sm:$0xff]
  %v2233 = vld [vmem:[#allocation2 + $0x2a8] sm:$0xff]
  %v2234 = vld [vmem:[#allocation2 + $0x2b0] sm:$0xff]
  %v2235 = vld [vmem:[#allocation2 + $0x2b8] sm:$0xff]
  %v2236 = vld [vmem:[#allocation2 + $0x2c0] sm:$0xff]
  %v2237 = vld [vmem:[#allocation2 + $0x2c8] sm:$0xff]
  %v2238 = vld [vmem:[#allocation2 + $0x2d0] sm:$0xff]
  %v2239 = vld [vmem:[#allocation2 + $0x2d8] sm:$0xff]
  %v2240 = vld [vmem:[#allocation2 + $0x2e0] sm:$0xff]
  %v2241 = vld [vmem:[#allocation2 + $0x2e8] sm:$0xff]
  %v2242 = vld [vmem:[#allocation2 + $0x2f0] sm:$0xff]
  %v2243 = vld [vmem:[#allocation2 + $0x2f8] sm:$0xff]
  %v2244 = vld [vmem:[#allocation2 + $0x300] sm:$0xff]
  %v2245 = vld [vmem:[#allocation2 + $0x308] sm:$0xff]
  %v2246 = vld [vmem:[#allocation2 + $0x310] sm:$0xff]
  %v2247 = vld [vmem:[#allocation2 + $0x318] sm:$0xff]
  %v2248 = vld [vmem:[#allocation2 + $0x320] sm:$0xff]
  %v2249 = vld [vmem:[#allocation2 + $0x328] sm:$0xff]
  %v2250 = vld [vmem:[#allocation2 + $0x330] sm:$0xff]
  %v2251 = vld [vmem:[#allocation2 + $0x338] sm:$0xff]
  %v2252 = vld [vmem:[#allocation2 + $0x340] sm:$0xff]
  %v2253 = vld [vmem:[#allocation2 + $0x348] sm:$0xff]
  %v2254 = vld [vmem:[#allocation2 + $0x350] sm:$0xff]
  %v2255 = vld [vmem:[#allocation2 + $0x358] sm:$0xff]
  %v2256 = vld [vmem:[#allocation2 + $0x360] sm:$0xff]
  %v2257 = vld [vmem:[#allocation2 + $0x368] sm:$0xff]
  %v2258 = vld [vmem:[#allocation2 + $0x370] sm:$0xff]
  %v2259 = vld [vmem:[#allocation2 + $0x378] sm:$0xff]
  %v2260 = vld [vmem:[#allocation2 + $0x380] sm:$0xff]
  %v2261 = vld [vmem:[#allocation2 + $0x388] sm:$0xff]
  %v2262 = vld [vmem:[#allocation2 + $0x390] sm:$0xff]
  %v2263 = vld [vmem:[#allocation2 + $0x398] sm:$0xff]
  %v2264 = vld [vmem:[#allocation2 + $0x3a0] sm:$0xff]
  %v2265 = vld [vmem:[#allocation2 + $0x3a8] sm:$0xff]
  %v2266 = vld [vmem:[#allocation2 + $0x3b0] sm:$0xff]
  %v2267 = vld [vmem:[#allocation2 + $0x3b8] sm:$0xff]
  %v2268 = vld [vmem:[#allocation2 + $0x3c0] sm:$0xff]
  %v2269 = vld [vmem:[#allocation2 + $0x3c8] sm:$0xff]
  %v2270 = vld [vmem:[#allocation2 + $0x3d0] sm:$0xff]
  %v2271 = vld [vmem:[#allocation2 + $0x3d8] sm:$0xff]
  %v2272 = vld [vmem:[#allocation2 + $0x3e0] sm:$0xff]
  %v2273 = vld [vmem:[#allocation2 + $0x3e8] sm:$0xff]
  %v2274 = vld [vmem:[#allocation2 + $0x3f0] sm:$0xff]
  %v2275 = vld [vmem:[#allocation2 + $0x3f8] sm:$0xff]
  %v2276 = vld [vmem:[#allocation2 + $0x400] sm:$0xff]
  %v2277 = vld [vmem:[#allocation2 + $0x408] sm:$0xff]
  %v2278 = vld [vmem:[#allocation2 + $0x410] sm:$0xff]
  %v2279 = vld [vmem:[#allocation2 + $0x418] sm:$0xff]
  %v2280 = vld [vmem:[#allocation2 + $0x420] sm:$0xff]
  %v2281 = vld [vmem:[#allocation2 + $0x428] sm:$0xff]
  %v2282 = vld [vmem:[#allocation2 + $0x430] sm:$0xff]
  %v2283 = vld [vmem:[#allocation2 + $0x438] sm:$0xff]
  %v2284 = vld [vmem:[#allocation2 + $0x440] sm:$0xff]
  %v2285 = vld [vmem:[#allocation2 + $0x448] sm:$0xff]
  %v2286 = vld [vmem:[#allocation2 + $0x450] sm:$0xff]
  %v2287 = vld [vmem:[#allocation2 + $0x458] sm:$0xff]
  %v2288 = vld [vmem:[#allocation2 + $0x460] sm:$0xff]
  %v2289 = vld [vmem:[#allocation2 + $0x468] sm:$0xff]
  %v2290 = vld [vmem:[#allocation2 + $0x470] sm:$0xff]
  %v2291 = vld [vmem:[#allocation2 + $0x478] sm:$0xff]
  %vm2292 = vcmask 588800
  %v2294 = vsel %vm2292, %v2147, 0
  %2296 = vmatprep.subr.mxu0 0.0
  %2297 = vmatpush1.msra.mxu0 0.0
  %2298 = vmatprep.subr.mxu0 0.0
  %2299 = vmatpush1.msra.mxu0 0.0
  %2300 = vmatprep.subr.mxu0 0.0
  %2301 = vmatpush1.msra.mxu0 0.0
  %2302 = vmatprep.subr.mxu0 0.0
  %2303 = vmatpush1.msra.mxu0 0.0
  %2304 = vmatprep.subr.mxu0 0.0
  %2305 = vmatpush1.msra.mxu0 0.0
  %2306 = vmatprep.subr.mxu0 0.0
  %2307 = vmatpush1.msra.mxu0 0.0
  %2308 = vmatprep.subr.mxu0 0.0
  %2309 = vmatpush1.msra.mxu0 0.0
  %2310 = vmatprep.subr.mxu0 %v2277
  %2311 = vmatpush1.msra.mxu0 %v2276
  %2312 = vmatprep.subr.mxu0 %v2261
  %2313 = vmatpush1.msra.mxu0 %v2260
  %2314 = vmatprep.subr.mxu0 %v2245
  %2315 = vmatpush1.msra.mxu0 %v2244
  %2316 = vmatprep.subr.mxu0 %v2229
  %2317 = vmatpush1.msra.mxu0 %v2228
  %2318 = vmatprep.subr.mxu0 %v2213
  %2319 = vmatpush1.msra.mxu0 %v2212
  %2320 = vmatprep.subr.mxu0 %v2197
  %2321 = vmatpush1.msra.mxu0 %v2196
  %2322 = vmatprep.subr.mxu0 %v2181
  %2323 = vmatpush1.msra.mxu0 %v2180
  %2324 = vmatprep.subr.mxu0 %v2165
  %2325 = vmatpush1.msra.mxu0 %v2164
  %2326 = vmatprep.subr.mxu0 %v2149
  %2327 = vmatpush1.msra.mxu0 %v2148
  %2328 = vmatprep.subr.mxu0 0.0
  %2329 = vmatpush2.msra.mxu0 0.0
  %2330 = vmatprep.subr.mxu0 0.0
  %2331 = vmatpush2.msra.mxu0 0.0
  %2332 = vmatprep.subr.mxu0 0.0
  %2333 = vmatpush2.msra.mxu0 0.0
  %2334 = vmatprep.subr.mxu0 0.0
  %2335 = vmatpush2.msra.mxu0 0.0
  %2336 = vmatprep.subr.mxu0 0.0
  %2337 = vmatpush2.msra.mxu0 0.0
  %2338 = vmatprep.subr.mxu0 0.0
  %2339 = vmatpush2.msra.mxu0 0.0
  %2340 = vmatprep.subr.mxu0 0.0
  %2341 = vmatpush2.msra.mxu0 0.0
  %2342 = vmatprep.subr.mxu0 0.0
  %2343 = vmatpush2.msra.mxu0 0.0
  %2344 = vmatprep.subr.mxu0 0.0
  %2345 = vmatpush2.msra.mxu0 0.0
  %2346 = vmatprep.subr.mxu0 0.0
  %2347 = vmatpush2.msra.mxu0 0.0
  %2348 = vmatprep.subr.mxu0 0.0
  %2349 = vmatpush2.msra.mxu0 0.0
  %2350 = vmatprep.subr.mxu0 0.0
  %2351 = vmatpush2.msra.mxu0 0.0
  %2352 = vmatprep.subr.mxu0 0.0
  %2353 = vmatpush2.msra.mxu0 0.0
  %2354 = vmatprep.subr.mxu0 0.0
  %2355 = vmatpush2.msra.mxu0 0.0
  %2356 = vmatprep.subr.mxu0 0.0
  %2357 = vmatpush2.msra.mxu0 0.0
  %2358 = vmatprep.subr.mxu0 0.0
  %2359 = vmatpush2.msra.mxu0 0.0
  %2360 = vmatprep.mubr.f32.mxu0 0.0
  %2361 = vmatmul.mubr.f32.gmra.mxu0 %v2294
  %v2362 = vpop.f32.mrf.mxu0
  %v2363 = vadd.f32 0.0, %v2362
  %v2364 = vpop.f32.mrf.mxu0
  %v2365 = vadd.f32 0.0, %v2364
  %2366 = vdwg.mxu0
  %2367 = vmatprep.subr.mxu0 0.0
  %2368 = vmatpush1.msra.mxu0 0.0
  %2369 = vmatprep.subr.mxu0 0.0
  %2370 = vmatpush1.msra.mxu0 0.0
  %2371 = vmatprep.subr.mxu0 0.0
  %2372 = vmatpush1.msra.mxu0 0.0
  %2373 = vmatprep.subr.mxu0 0.0
  %2374 = vmatpush1.msra.mxu0 0.0
  %2375 = vmatprep.subr.mxu0 0.0
  %2376 = vmatpush1.msra.mxu0 0.0
  %2377 = vmatprep.subr.mxu0 0.0
  %2378 = vmatpush1.msra.mxu0 0.0
  %2379 = vmatprep.subr.mxu0 0.0
  %2380 = vmatpush1.msra.mxu0 0.0
  %2381 = vmatprep.subr.mxu0 %v2279
  %2382 = vmatpush1.msra.mxu0 %v2278
  %2383 = vmatprep.subr.mxu0 %v2263
  %2384 = vmatpush1.msra.mxu0 %v2262
  %2385 = vmatprep.subr.mxu0 %v2247
  %2386 = vmatpush1.msra.mxu0 %v2246
  %2387 = vmatprep.subr.mxu0 %v2231
  %2388 = vmatpush1.msra.mxu0 %v2230
  %2389 = vmatprep.subr.mxu0 %v2215
  %2390 = vmatpush1.msra.mxu0 %v2214
  %2391 = vmatprep.subr.mxu0 %v2199
  %2392 = vmatpush1.msra.mxu0 %v2198
  %2393 = vmatprep.subr.mxu0 %v2183
  %2394 = vmatpush1.msra.mxu0 %v2182
  %2395 = vmatprep.subr.mxu0 %v2167
  %2396 = vmatpush1.msra.mxu0 %v2166
  %2397 = vmatprep.subr.mxu0 %v2151
  %2398 = vmatpush1.msra.mxu0 %v2150
  %2399 = vmatprep.subr.mxu0 0.0
  %2400 = vmatpush2.msra.mxu0 0.0
  %2401 = vmatprep.subr.mxu0 0.0
  %2402 = vmatpush2.msra.mxu0 0.0
  %2403 = vmatprep.subr.mxu0 0.0
  %2404 = vmatpush2.msra.mxu0 0.0
  %2405 = vmatprep.subr.mxu0 0.0
  %2406 = vmatpush2.msra.mxu0 0.0
  %2407 = vmatprep.subr.mxu0 0.0
  %2408 = vmatpush2.msra.mxu0 0.0
  %2409 = vmatprep.subr.mxu0 0.0
  %2410 = vmatpush2.msra.mxu0 0.0
  %2411 = vmatprep.subr.mxu0 0.0
  %2412 = vmatpush2.msra.mxu0 0.0
  %2413 = vmatprep.subr.mxu0 0.0
  %2414 = vmatpush2.msra.mxu0 0.0
  %2415 = vmatprep.subr.mxu0 0.0
  %2416 = vmatpush2.msra.mxu0 0.0
  %2417 = vmatprep.subr.mxu0 0.0
  %2418 = vmatpush2.msra.mxu0 0.0
  %2419 = vmatprep.subr.mxu0 0.0
  %2420 = vmatpush2.msra.mxu0 0.0
  %2421 = vmatprep.subr.mxu0 0.0
  %2422 = vmatpush2.msra.mxu0 0.0
  %2423 = vmatprep.subr.mxu0 0.0
  %2424 = vmatpush2.msra.mxu0 0.0
  %2425 = vmatprep.subr.mxu0 0.0
  %2426 = vmatpush2.msra.mxu0 0.0
  %2427 = vmatprep.subr.mxu0 0.0
  %2428 = vmatpush2.msra.mxu0 0.0
  %2429 = vmatprep.subr.mxu0 0.0
  %2430 = vmatpush2.msra.mxu0 0.0
  %2431 = vmatprep.mubr.f32.mxu0 0.0
  %2432 = vmatmul.mubr.f32.gmra.mxu0 %v2294
  %v2433 = vpop.f32.mrf.mxu0
  %v2434 = vadd.f32 0.0, %v2433
  %v2435 = vpop.f32.mrf.mxu0
  %v2436 = vadd.f32 0.0, %v2435
  %2437 = vdwg.mxu0
  %2438 = vmatprep.subr.mxu0 0.0
  %2439 = vmatpush1.msra.mxu0 0.0
  %2440 = vmatprep.subr.mxu0 0.0
  %2441 = vmatpush1.msra.mxu0 0.0
  %2442 = vmatprep.subr.mxu0 0.0
  %2443 = vmatpush1.msra.mxu0 0.0
  %2444 = vmatprep.subr.mxu0 0.0
  %2445 = vmatpush1.msra.mxu0 0.0
  %2446 = vmatprep.subr.mxu0 0.0
  %2447 = vmatpush1.msra.mxu0 0.0
  %2448 = vmatprep.subr.mxu0 0.0
  %2449 = vmatpush1.msra.mxu0 0.0
  %2450 = vmatprep.subr.mxu0 0.0
  %2451 = vmatpush1.msra.mxu0 0.0
  %2452 = vmatprep.subr.mxu0 %v2281
  %2453 = vmatpush1.msra.mxu0 %v2280
  %2454 = vmatprep.subr.mxu0 %v2265
  %2455 = vmatpush1.msra.mxu0 %v2264
  %2456 = vmatprep.subr.mxu0 %v2249
  %2457 = vmatpush1.msra.mxu0 %v2248
  %2458 = vmatprep.subr.mxu0 %v2233
  %2459 = vmatpush1.msra.mxu0 %v2232
  %2460 = vmatprep.subr.mxu0 %v2217
  %2461 = vmatpush1.msra.mxu0 %v2216
  %2462 = vmatprep.subr.mxu0 %v2201
  %2463 = vmatpush1.msra.mxu0 %v2200
  %2464 = vmatprep.subr.mxu0 %v2185
  %2465 = vmatpush1.msra.mxu0 %v2184
  %2466 = vmatprep.subr.mxu0 %v2169
  %2467 = vmatpush1.msra.mxu0 %v2168
  %2468 = vmatprep.subr.mxu0 %v2153
  %2469 = vmatpush1.msra.mxu0 %v2152
  %2470 = vmatprep.subr.mxu0 0.0
  %2471 = vmatpush2.msra.mxu0 0.0
  %2472 = vmatprep.subr.mxu0 0.0
  %2473 = vmatpush2.msra.mxu0 0.0
  %2474 = vmatprep.subr.mxu0 0.0
  %2475 = vmatpush2.msra.mxu0 0.0
  %2476 = vmatprep.subr.mxu0 0.0
  %2477 = vmatpush2.msra.mxu0 0.0
  %2478 = vmatprep.subr.mxu0 0.0
  %2479 = vmatpush2.msra.mxu0 0.0
  %2480 = vmatprep.subr.mxu0 0.0
  %2481 = vmatpush2.msra.mxu0 0.0
  %2482 = vmatprep.subr.mxu0 0.0
  %2483 = vmatpush2.msra.mxu0 0.0
  %2484 = vmatprep.subr.mxu0 0.0
  %2485 = vmatpush2.msra.mxu0 0.0
  %2486 = vmatprep.subr.mxu0 0.0
  %2487 = vmatpush2.msra.mxu0 0.0
  %2488 = vmatprep.subr.mxu0 0.0
  %2489 = vmatpush2.msra.mxu0 0.0
  %2490 = vmatprep.subr.mxu0 0.0
  %2491 = vmatpush2.msra.mxu0 0.0
  %2492 = vmatprep.subr.mxu0 0.0
  %2493 = vmatpush2.msra.mxu0 0.0
  %2494 = vmatprep.subr.mxu0 0.0
  %2495 = vmatpush2.msra.mxu0 0.0
  %2496 = vmatprep.subr.mxu0 0.0
  %2497 = vmatpush2.msra.mxu0 0.0
  %2498 = vmatprep.subr.mxu0 0.0
  %2499 = vmatpush2.msra.mxu0 0.0
  %2500 = vmatprep.subr.mxu0 0.0
  %2501 = vmatpush2.msra.mxu0 0.0
  %2502 = vmatprep.mubr.f32.mxu0 0.0
  %2503 = vmatmul.mubr.f32.gmra.mxu0 %v2294
  %v2504 = vpop.f32.mrf.mxu0
  %v2505 = vadd.f32 0.0, %v2504
  %v2506 = vpop.f32.mrf.mxu0
  %v2507 = vadd.f32 0.0, %v2506
  %2508 = vdwg.mxu0
  %2509 = vmatprep.subr.mxu0 0.0
  %2510 = vmatpush1.msra.mxu0 0.0
  %2511 = vmatprep.subr.mxu0 0.0
  %2512 = vmatpush1.msra.mxu0 0.0
  %2513 = vmatprep.subr.mxu0 0.0
  %2514 = vmatpush1.msra.mxu0 0.0
  %2515 = vmatprep.subr.mxu0 0.0
  %2516 = vmatpush1.msra.mxu0 0.0
  %2517 = vmatprep.subr.mxu0 0.0
  %2518 = vmatpush1.msra.mxu0 0.0
  %2519 = vmatprep.subr.mxu0 0.0
  %2520 = vmatpush1.msra.mxu0 0.0
  %2521 = vmatprep.subr.mxu0 0.0
  %2522 = vmatpush1.msra.mxu0 0.0
  %2523 = vmatprep.subr.mxu0 %v2283
  %2524 = vmatpush1.msra.mxu0 %v2282
  %2525 = vmatprep.subr.mxu0 %v2267
  %2526 = vmatpush1.msra.mxu0 %v2266
  %2527 = vmatprep.subr.mxu0 %v2251
  %2528 = vmatpush1.msra.mxu0 %v2250
  %2529 = vmatprep.subr.mxu0 %v2235
  %2530 = vmatpush1.msra.mxu0 %v2234
  %2531 = vmatprep.subr.mxu0 %v2219
  %2532 = vmatpush1.msra.mxu0 %v2218
  %2533 = vmatprep.subr.mxu0 %v2203
  %2534 = vmatpush1.msra.mxu0 %v2202
  %2535 = vmatprep.subr.mxu0 %v2187
  %2536 = vmatpush1.msra.mxu0 %v2186
  %2537 = vmatprep.subr.mxu0 %v2171
  %2538 = vmatpush1.msra.mxu0 %v2170
  %2539 = vmatprep.subr.mxu0 %v2155
  %2540 = vmatpush1.msra.mxu0 %v2154
  %2541 = vmatprep.subr.mxu0 0.0
  %2542 = vmatpush2.msra.mxu0 0.0
  %2543 = vmatprep.subr.mxu0 0.0
  %2544 = vmatpush2.msra.mxu0 0.0
  %2545 = vmatprep.subr.mxu0 0.0
  %2546 = vmatpush2.msra.mxu0 0.0
  %2547 = vmatprep.subr.mxu0 0.0
  %2548 = vmatpush2.msra.mxu0 0.0
  %2549 = vmatprep.subr.mxu0 0.0
  %2550 = vmatpush2.msra.mxu0 0.0
  %2551 = vmatprep.subr.mxu0 0.0
  %2552 = vmatpush2.msra.mxu0 0.0
  %2553 = vmatprep.subr.mxu0 0.0
  %2554 = vmatpush2.msra.mxu0 0.0
  %2555 = vmatprep.subr.mxu0 0.0
  %2556 = vmatpush2.msra.mxu0 0.0
  %2557 = vmatprep.subr.mxu0 0.0
  %2558 = vmatpush2.msra.mxu0 0.0
  %2559 = vmatprep.subr.mxu0 0.0
  %2560 = vmatpush2.msra.mxu0 0.0
  %2561 = vmatprep.subr.mxu0 0.0
  %2562 = vmatpush2.msra.mxu0 0.0
  %2563 = vmatprep.subr.mxu0 0.0
  %2564 = vmatpush2.msra.mxu0 0.0
  %2565 = vmatprep.subr.mxu0 0.0
  %2566 = vmatpush2.msra.mxu0 0.0
  %2567 = vmatprep.subr.mxu0 0.0
  %2568 = vmatpush2.msra.mxu0 0.0
  %2569 = vmatprep.subr.mxu0 0.0
  %2570 = vmatpush2.msra.mxu0 0.0
  %2571 = vmatprep.subr.mxu0 0.0
  %2572 = vmatpush2.msra.mxu0 0.0
  %2573 = vmatprep.mubr.f32.mxu0 0.0
  %2574 = vmatmul.mubr.f32.gmra.mxu0 %v2294
  %v2575 = vpop.f32.mrf.mxu0
  %v2576 = vadd.f32 0.0, %v2575
  %v2577 = vpop.f32.mrf.mxu0
  %v2578 = vadd.f32 0.0, %v2577
  %2579 = vdwg.mxu0
  %2580 = vmatprep.subr.mxu0 0.0
  %2581 = vmatpush1.msra.mxu0 0.0
  %2582 = vmatprep.subr.mxu0 0.0
  %2583 = vmatpush1.msra.mxu0 0.0
  %2584 = vmatprep.subr.mxu0 0.0
  %2585 = vmatpush1.msra.mxu0 0.0
  %2586 = vmatprep.subr.mxu0 0.0
  %2587 = vmatpush1.msra.mxu0 0.0
  %2588 = vmatprep.subr.mxu0 0.0
  %2589 = vmatpush1.msra.mxu0 0.0
  %2590 = vmatprep.subr.mxu0 0.0
  %2591 = vmatpush1.msra.mxu0 0.0
  %2592 = vmatprep.subr.mxu0 0.0
  %2593 = vmatpush1.msra.mxu0 0.0
  %2594 = vmatprep.subr.mxu0 %v2285
  %2595 = vmatpush1.msra.mxu0 %v2284
  %2596 = vmatprep.subr.mxu0 %v2269
  %2597 = vmatpush1.msra.mxu0 %v2268
  %2598 = vmatprep.subr.mxu0 %v2253
  %2599 = vmatpush1.msra.mxu0 %v2252
  %2600 = vmatprep.subr.mxu0 %v2237
  %2601 = vmatpush1.msra.mxu0 %v2236
  %2602 = vmatprep.subr.mxu0 %v2221
  %2603 = vmatpush1.msra.mxu0 %v2220
  %2604 = vmatprep.subr.mxu0 %v2205
  %2605 = vmatpush1.msra.mxu0 %v2204
  %2606 = vmatprep.subr.mxu0 %v2189
  %2607 = vmatpush1.msra.mxu0 %v2188
  %2608 = vmatprep.subr.mxu0 %v2173
  %2609 = vmatpush1.msra.mxu0 %v2172
  %2610 = vmatprep.subr.mxu0 %v2157
  %2611 = vmatpush1.msra.mxu0 %v2156
  %2612 = vmatprep.subr.mxu0 0.0
  %2613 = vmatpush2.msra.mxu0 0.0
  %2614 = vmatprep.subr.mxu0 0.0
  %2615 = vmatpush2.msra.mxu0 0.0
  %2616 = vmatprep.subr.mxu0 0.0
  %2617 = vmatpush2.msra.mxu0 0.0
  %2618 = vmatprep.subr.mxu0 0.0
  %2619 = vmatpush2.msra.mxu0 0.0
  %2620 = vmatprep.subr.mxu0 0.0
  %2621 = vmatpush2.msra.mxu0 0.0
  %2622 = vmatprep.subr.mxu0 0.0
  %2623 = vmatpush2.msra.mxu0 0.0
  %2624 = vmatprep.subr.mxu0 0.0
  %2625 = vmatpush2.msra.mxu0 0.0
  %2626 = vmatprep.subr.mxu0 0.0
  %2627 = vmatpush2.msra.mxu0 0.0
  %2628 = vmatprep.subr.mxu0 0.0
  %2629 = vmatpush2.msra.mxu0 0.0
  %2630 = vmatprep.subr.mxu0 0.0
  %2631 = vmatpush2.msra.mxu0 0.0
  %2632 = vmatprep.subr.mxu0 0.0
  %2633 = vmatpush2.msra.mxu0 0.0
  %2634 = vmatprep.subr.mxu0 0.0
  %2635 = vmatpush2.msra.mxu0 0.0
  %2636 = vmatprep.subr.mxu0 0.0
  %2637 = vmatpush2.msra.mxu0 0.0
  %2638 = vmatprep.subr.mxu0 0.0
  %2639 = vmatpush2.msra.mxu0 0.0
  %2640 = vmatprep.subr.mxu0 0.0
  %2641 = vmatpush2.msra.mxu0 0.0
  %2642 = vmatprep.subr.mxu0 0.0
  %2643 = vmatpush2.msra.mxu0 0.0
  %2644 = vmatprep.mubr.f32.mxu0 0.0
  %2645 = vmatmul.mubr.f32.gmra.mxu0 %v2294
  %v2646 = vpop.f32.mrf.mxu0
  %v2647 = vadd.f32 0.0, %v2646
  %v2648 = vpop.f32.mrf.mxu0
  %v2649 = vadd.f32 0.0, %v2648
  %2650 = vdwg.mxu0
  %2651 = vmatprep.subr.mxu0 0.0
  %2652 = vmatpush1.msra.mxu0 0.0
  %2653 = vmatprep.subr.mxu0 0.0
  %2654 = vmatpush1.msra.mxu0 0.0
  %2655 = vmatprep.subr.mxu0 0.0
  %2656 = vmatpush1.msra.mxu0 0.0
  %2657 = vmatprep.subr.mxu0 0.0
  %2658 = vmatpush1.msra.mxu0 0.0
  %2659 = vmatprep.subr.mxu0 0.0
  %2660 = vmatpush1.msra.mxu0 0.0
  %2661 = vmatprep.subr.mxu0 0.0
  %2662 = vmatpush1.msra.mxu0 0.0
  %2663 = vmatprep.subr.mxu0 0.0
  %2664 = vmatpush1.msra.mxu0 0.0
  %2665 = vmatprep.subr.mxu0 %v2287
  %2666 = vmatpush1.msra.mxu0 %v2286
  %2667 = vmatprep.subr.mxu0 %v2271
  %2668 = vmatpush1.msra.mxu0 %v2270
  %2669 = vmatprep.subr.mxu0 %v2255
  %2670 = vmatpush1.msra.mxu0 %v2254
  %2671 = vmatprep.subr.mxu0 %v2239
  %2672 = vmatpush1.msra.mxu0 %v2238
  %2673 = vmatprep.subr.mxu0 %v2223
  %2674 = vmatpush1.msra.mxu0 %v2222
  %2675 = vmatprep.subr.mxu0 %v2207
  %2676 = vmatpush1.msra.mxu0 %v2206
  %2677 = vmatprep.subr.mxu0 %v2191
  %2678 = vmatpush1.msra.mxu0 %v2190
  %2679 = vmatprep.subr.mxu0 %v2175
  %2680 = vmatpush1.msra.mxu0 %v2174
  %2681 = vmatprep.subr.mxu0 %v2159
  %2682 = vmatpush1.msra.mxu0 %v2158
  %2683 = vmatprep.subr.mxu0 0.0
  %2684 = vmatpush2.msra.mxu0 0.0
  %2685 = vmatprep.subr.mxu0 0.0
  %2686 = vmatpush2.msra.mxu0 0.0
  %2687 = vmatprep.subr.mxu0 0.0
  %2688 = vmatpush2.msra.mxu0 0.0
  %2689 = vmatprep.subr.mxu0 0.0
  %2690 = vmatpush2.msra.mxu0 0.0
  %2691 = vmatprep.subr.mxu0 0.0
  %2692 = vmatpush2.msra.mxu0 0.0
  %2693 = vmatprep.subr.mxu0 0.0
  %2694 = vmatpush2.msra.mxu0 0.0
  %2695 = vmatprep.subr.mxu0 0.0
  %2696 = vmatpush2.msra.mxu0 0.0
  %2697 = vmatprep.subr.mxu0 0.0
  %2698 = vmatpush2.msra.mxu0 0.0
  %2699 = vmatprep.subr.mxu0 0.0
  %2700 = vmatpush2.msra.mxu0 0.0
  %2701 = vmatprep.subr.mxu0 0.0
  %2702 = vmatpush2.msra.mxu0 0.0
  %2703 = vmatprep.subr.mxu0 0.0
  %2704 = vmatpush2.msra.mxu0 0.0
  %2705 = vmatprep.subr.mxu0 0.0
  %2706 = vmatpush2.msra.mxu0 0.0
  %2707 = vmatprep.subr.mxu0 0.0
  %2708 = vmatpush2.msra.mxu0 0.0
  %2709 = vmatprep.subr.mxu0 0.0
  %2710 = vmatpush2.msra.mxu0 0.0
  %2711 = vmatprep.subr.mxu0 0.0
  %2712 = vmatpush2.msra.mxu0 0.0
  %2713 = vmatprep.subr.mxu0 0.0
  %2714 = vmatpush2.msra.mxu0 0.0
  %2715 = vmatprep.mubr.f32.mxu0 0.0
  %2716 = vmatmul.mubr.f32.gmra.mxu0 %v2294
  %v2717 = vpop.f32.mrf.mxu0
  %v2718 = vadd.f32 0.0, %v2717
  %v2719 = vpop.f32.mrf.mxu0
  %v2720 = vadd.f32 0.0, %v2719
  %2721 = vdwg.mxu0
  %2722 = vmatprep.subr.mxu0 0.0
  %2723 = vmatpush1.msra.mxu0 0.0
  %2724 = vmatprep.subr.mxu0 0.0
  %2725 = vmatpush1.msra.mxu0 0.0
  %2726 = vmatprep.subr.mxu0 0.0
  %2727 = vmatpush1.msra.mxu0 0.0
  %2728 = vmatprep.subr.mxu0 0.0
  %2729 = vmatpush1.msra.mxu0 0.0
  %2730 = vmatprep.subr.mxu0 0.0
  %2731 = vmatpush1.msra.mxu0 0.0
  %2732 = vmatprep.subr.mxu0 0.0
  %2733 = vmatpush1.msra.mxu0 0.0
  %2734 = vmatprep.subr.mxu0 0.0
  %2735 = vmatpush1.msra.mxu0 0.0
  %2736 = vmatprep.subr.mxu0 %v2289
  %2737 = vmatpush1.msra.mxu0 %v2288
  %2738 = vmatprep.subr.mxu0 %v2273
  %2739 = vmatpush1.msra.mxu0 %v2272
  %2740 = vmatprep.subr.mxu0 %v2257
  %2741 = vmatpush1.msra.mxu0 %v2256
  %2742 = vmatprep.subr.mxu0 %v2241
  %2743 = vmatpush1.msra.mxu0 %v2240
  %2744 = vmatprep.subr.mxu0 %v2225
  %2745 = vmatpush1.msra.mxu0 %v2224
  %2746 = vmatprep.subr.mxu0 %v2209
  %2747 = vmatpush1.msra.mxu0 %v2208
  %2748 = vmatprep.subr.mxu0 %v2193
  %2749 = vmatpush1.msra.mxu0 %v2192
  %2750 = vmatprep.subr.mxu0 %v2177
  %2751 = vmatpush1.msra.mxu0 %v2176
  %2752 = vmatprep.subr.mxu0 %v2161
  %2753 = vmatpush1.msra.mxu0 %v2160
  %2754 = vmatprep.subr.mxu0 0.0
  %2755 = vmatpush2.msra.mxu0 0.0
  %2756 = vmatprep.subr.mxu0 0.0
  %2757 = vmatpush2.msra.mxu0 0.0
  %2758 = vmatprep.subr.mxu0 0.0
  %2759 = vmatpush2.msra.mxu0 0.0
  %2760 = vmatprep.subr.mxu0 0.0
  %2761 = vmatpush2.msra.mxu0 0.0
  %2762 = vmatprep.subr.mxu0 0.0
  %2763 = vmatpush2.msra.mxu0 0.0
  %2764 = vmatprep.subr.mxu0 0.0
  %2765 = vmatpush2.msra.mxu0 0.0
  %2766 = vmatprep.subr.mxu0 0.0
  %2767 = vmatpush2.msra.mxu0 0.0
  %2768 = vmatprep.subr.mxu0 0.0
  %2769 = vmatpush2.msra.mxu0 0.0
  %2770 = vmatprep.subr.mxu0 0.0
  %2771 = vmatpush2.msra.mxu0 0.0
  %2772 = vmatprep.subr.mxu0 0.0
  %2773 = vmatpush2.msra.mxu0 0.0
  %2774 = vmatprep.subr.mxu0 0.0
  %2775 = vmatpush2.msra.mxu0 0.0
  %2776 = vmatprep.subr.mxu0 0.0
  %2777 = vmatpush2.msra.mxu0 0.0
  %2778 = vmatprep.subr.mxu0 0.0
  %2779 = vmatpush2.msra.mxu0 0.0
  %2780 = vmatprep.subr.mxu0 0.0
  %2781 = vmatpush2.msra.mxu0 0.0
  %2782 = vmatprep.subr.mxu0 0.0
  %2783 = vmatpush2.msra.mxu0 0.0
  %2784 = vmatprep.subr.mxu0 0.0
  %2785 = vmatpush2.msra.mxu0 0.0
  %2786 = vmatprep.mubr.f32.mxu0 0.0
  %2787 = vmatmul.mubr.f32.gmra.mxu0 %v2294
  %v2788 = vpop.f32.mrf.mxu0
  %v2789 = vadd.f32 0.0, %v2788
  %v2790 = vpop.f32.mrf.mxu0
  %v2791 = vadd.f32 0.0, %v2790
  %2792 = vdwg.mxu0
  %2793 = vmatprep.subr.mxu0 0.0
  %2794 = vmatpush1.msra.mxu0 0.0
  %2795 = vmatprep.subr.mxu0 0.0
  %2796 = vmatpush1.msra.mxu0 0.0
  %2797 = vmatprep.subr.mxu0 0.0
  %2798 = vmatpush1.msra.mxu0 0.0
  %2799 = vmatprep.subr.mxu0 0.0
  %2800 = vmatpush1.msra.mxu0 0.0
  %2801 = vmatprep.subr.mxu0 0.0
  %2802 = vmatpush1.msra.mxu0 0.0
  %2803 = vmatprep.subr.mxu0 0.0
  %2804 = vmatpush1.msra.mxu0 0.0
  %2805 = vmatprep.subr.mxu0 0.0
  %2806 = vmatpush1.msra.mxu0 0.0
  %2807 = vmatprep.subr.mxu0 %v2291
  %2808 = vmatpush1.msra.mxu0 %v2290
  %2809 = vmatprep.subr.mxu0 %v2275
  %2810 = vmatpush1.msra.mxu0 %v2274
  %2811 = vmatprep.subr.mxu0 %v2259
  %2812 = vmatpush1.msra.mxu0 %v2258
  %2813 = vmatprep.subr.mxu0 %v2243
  %2814 = vmatpush1.msra.mxu0 %v2242
  %2815 = vmatprep.subr.mxu0 %v2227
  %2816 = vmatpush1.msra.mxu0 %v2226
  %2817 = vmatprep.subr.mxu0 %v2211
  %2818 = vmatpush1.msra.mxu0 %v2210
  %2819 = vmatprep.subr.mxu0 %v2195
  %2820 = vmatpush1.msra.mxu0 %v2194
  %2821 = vmatprep.subr.mxu0 %v2179
  %2822 = vmatpush1.msra.mxu0 %v2178
  %2823 = vmatprep.subr.mxu0 %v2163
  %2824 = vmatpush1.msra.mxu0 %v2162
  %2825 = vmatprep.subr.mxu0 0.0
  %2826 = vmatpush2.msra.mxu0 0.0
  %2827 = vmatprep.subr.mxu0 0.0
  %2828 = vmatpush2.msra.mxu0 0.0
  %2829 = vmatprep.subr.mxu0 0.0
  %2830 = vmatpush2.msra.mxu0 0.0
  %2831 = vmatprep.subr.mxu0 0.0
  %2832 = vmatpush2.msra.mxu0 0.0
  %2833 = vmatprep.subr.mxu0 0.0
  %2834 = vmatpush2.msra.mxu0 0.0
  %2835 = vmatprep.subr.mxu0 0.0
  %2836 = vmatpush2.msra.mxu0 0.0
  %2837 = vmatprep.subr.mxu0 0.0
  %2838 = vmatpush2.msra.mxu0 0.0
  %2839 = vmatprep.subr.mxu0 0.0
  %2840 = vmatpush2.msra.mxu0 0.0
  %2841 = vmatprep.subr.mxu0 0.0
  %2842 = vmatpush2.msra.mxu0 0.0
  %2843 = vmatprep.subr.mxu0 0.0
  %2844 = vmatpush2.msra.mxu0 0.0
  %2845 = vmatprep.subr.mxu0 0.0
  %2846 = vmatpush2.msra.mxu0 0.0
  %2847 = vmatprep.subr.mxu0 0.0
  %2848 = vmatpush2.msra.mxu0 0.0
  %2849 = vmatprep.subr.mxu0 0.0
  %2850 = vmatpush2.msra.mxu0 0.0
  %2851 = vmatprep.subr.mxu0 0.0
  %2852 = vmatpush2.msra.mxu0 0.0
  %2853 = vmatprep.subr.mxu0 0.0
  %2854 = vmatpush2.msra.mxu0 0.0
  %2855 = vmatprep.subr.mxu0 0.0
  %2856 = vmatpush2.msra.mxu0 0.0
  %2857 = vmatprep.mubr.f32.mxu0 0.0
  %2858 = vmatmul.mubr.f32.gmra.mxu0 %v2294
  %v2859 = vpop.f32.mrf.mxu0
  %v2860 = vadd.f32 0.0, %v2859
  %v2861 = vpop.f32.mrf.mxu0
  %v2862 = vadd.f32 0.0, %v2861
  %2863 = vdwg.mxu0
  %v2864 = vadd.f32 %v2363, %v2365
  %v2865 = vadd.f32 %v2864, %v2434
  %v2866 = vadd.f32 %v2865, %v2436
  %v2867 = vadd.f32 %v2866, %v2505
  %v2868 = vadd.f32 %v2867, %v2507
  %v2869 = vadd.f32 %v2868, %v2576
  %v2870 = vadd.f32 %v2869, %v2578
  %v2871 = vadd.f32 %v2870, %v2647
  %v2872 = vadd.f32 %v2871, %v2649
  %v2873 = vadd.f32 %v2872, %v2718
  %v2874 = vadd.f32 %v2873, %v2720
  %v2875 = vadd.f32 %v2874, %v2789
  %v2876 = vadd.f32 %v2875, %v2791
  %v2877 = vadd.f32 %v2876, %v2860
  %v2878 = vadd.f32 %v2877, %v2862
  %2879 = vadd.xlane.f32.xlu0 %v2878
  %v2880 = vpop.xlane.xlu0 %2879
  %v2881 = vmul.f32 %v2363, %v2363
  %v2882 = vmul.f32 %v2365, %v2365
  %v2883 = vmul.f32 %v2434, %v2434
  %v2884 = vmul.f32 %v2436, %v2436
  %v2885 = vmul.f32 %v2505, %v2505
  %v2886 = vmul.f32 %v2507, %v2507
  %v2887 = vmul.f32 %v2576, %v2576
  %v2888 = vmul.f32 %v2578, %v2578
  %v2889 = vmul.f32 %v2647, %v2647
  %v2890 = vmul.f32 %v2649, %v2649
  %v2891 = vmul.f32 %v2718, %v2718
  %v2892 = vmul.f32 %v2720, %v2720
  %v2893 = vmul.f32 %v2789, %v2789
  %v2894 = vmul.f32 %v2791, %v2791
  %v2895 = vmul.f32 %v2860, %v2860
  %v2896 = vmul.f32 %v2862, %v2862
  %v2897 = vadd.f32 %v2881, %v2882
  %v2898 = vadd.f32 %v2897, %v2883
  %v2899 = vadd.f32 %v2898, %v2884
  %v2900 = vadd.f32 %v2899, %v2885
  %v2901 = vadd.f32 %v2900, %v2886
  %v2902 = vadd.f32 %v2901, %v2887
  %v2903 = vadd.f32 %v2902, %v2888
  %v2904 = vadd.f32 %v2903, %v2889
  %v2905 = vadd.f32 %v2904, %v2890
  %v2906 = vadd.f32 %v2905, %v2891
  %v2907 = vadd.f32 %v2906, %v2892
  %v2908 = vadd.f32 %v2907, %v2893
  %v2909 = vadd.f32 %v2908, %v2894
  %v2910 = vadd.f32 %v2909, %v2895
  %v2911 = vadd.f32 %v2910, %v2896
  %2912 = vadd.xlane.f32.xlu0 %v2911
  %v2913 = vpop.xlane.xlu0 %2912
  %v2914 = vmul.f32 %v2880, 0.00048828125
  %v2915 = vmul.f32 %v2913, 0.00048828125
  %v2916 = vmul.f32 %v2914, %v2914
  %v2917 = vsub.f32 %v2915, %v2916
  %v2918 = vld [vmem:[%s6] sm:$0xff]
  %v2919 = vadd.f32 %v2917, 1e-05
  %v2920 = vrsqrt.pop %v2919
  %v2921 = vmul.f32 %v2918, %v2920
  %v2922 = vld [vmem:[%s7] sm:$0xff]
  %v2923 = vmul.f32 %v2914, %v2921
  %v2924 = vsub.f32 %v2922, %v2923
  %2926 = vset.pattern.permute.xlu0 0
  %2927 = vperm.xlu0 %2926, %v2921
  %v2928 = vpop.permute.xlu0 %2927
  %v2930 = vmul.f32 %v2363, %v2928
  %v2931 = vmul.f32 %v2365, %v2928
  %v2932 = vmul.f32 %v2434, %v2928
  %v2933 = vmul.f32 %v2436, %v2928
  %v2934 = vmul.f32 %v2505, %v2928
  %v2935 = vmul.f32 %v2507, %v2928
  %v2936 = vmul.f32 %v2576, %v2928
  %v2937 = vmul.f32 %v2578, %v2928
  %v2938 = vmul.f32 %v2647, %v2928
  %v2939 = vmul.f32 %v2649, %v2928
  %v2940 = vmul.f32 %v2718, %v2928
  %v2941 = vmul.f32 %v2720, %v2928
  %v2942 = vmul.f32 %v2789, %v2928
  %v2943 = vmul.f32 %v2791, %v2928
  %v2944 = vmul.f32 %v2860, %v2928
  %v2945 = vmul.f32 %v2862, %v2928
  %2947 = vset.pattern.permute.xlu0 0
  %2948 = vperm.xlu0 %2947, %v2924
  %v2949 = vpop.permute.xlu0 %2948
  %v2951 = vadd.f32 %v2930, %v2949
  %v2952 = vadd.f32 %v2931, %v2949
  %v2953 = vadd.f32 %v2932, %v2949
  %v2954 = vadd.f32 %v2933, %v2949
  %v2955 = vadd.f32 %v2934, %v2949
  %v2956 = vadd.f32 %v2935, %v2949
  %v2957 = vadd.f32 %v2936, %v2949
  %v2958 = vadd.f32 %v2937, %v2949
  %v2959 = vadd.f32 %v2938, %v2949
  %v2960 = vadd.f32 %v2939, %v2949
  %v2961 = vadd.f32 %v2940, %v2949
  %v2962 = vadd.f32 %v2941, %v2949
  %v2963 = vadd.f32 %v2942, %v2949
  %v2964 = vadd.f32 %v2943, %v2949
  %v2965 = vadd.f32 %v2944, %v2949
  %v2966 = vadd.f32 %v2945, %v2949
  %v2967 = vmax.f32 %v2951, 0.0
  %v2968 = vmax.f32 %v2952, 0.0
  %v2969 = vmax.f32 %v2953, 0.0
  %v2970 = vmax.f32 %v2954, 0.0
  %v2971 = vmax.f32 %v2955, 0.0
  %v2972 = vmax.f32 %v2956, 0.0
  %v2973 = vmax.f32 %v2957, 0.0
  %v2974 = vmax.f32 %v2958, 0.0
  %v2975 = vmax.f32 %v2959, 0.0
  %v2976 = vmax.f32 %v2960, 0.0
  %v2977 = vmax.f32 %v2961, 0.0
  %v2978 = vmax.f32 %v2962, 0.0
  %v2979 = vmax.f32 %v2963, 0.0
  %v2980 = vmax.f32 %v2964, 0.0
  %v2981 = vmax.f32 %v2965, 0.0
  %v2982 = vmax.f32 %v2966, 0.0
  %v2983 = vld [vmem:[%s8] sm:$0xff]
  %v2984 = vld [vmem:[%s8 + $0x8] sm:$0xff]
  %vm2985 = vcmask 64512
  %v2987 = vsel %vm2985, %v2983, 0
  %v2990 = vsel %vm2985, %v2984, 0
  %2992 = vmatprep.subr.mxu0 0.0
  %2993 = vmatpush1.msra.mxu0 0.0
  %2994 = vmatprep.subr.mxu0 0.0
  %2995 = vmatpush1.msra.mxu0 0.0
  %2996 = vmatprep.subr.mxu0 0.0
  %2997 = vmatpush1.msra.mxu0 0.0
  %2998 = vmatprep.subr.mxu0 0.0
  %2999 = vmatpush1.msra.mxu0 0.0
  %3000 = vmatprep.subr.mxu0 0.0
  %3001 = vmatpush1.msra.mxu0 0.0
  %3002 = vmatprep.subr.mxu0 0.0
  %3003 = vmatpush1.msra.mxu0 0.0
  %3004 = vmatprep.subr.mxu0 0.0
  %3005 = vmatpush1.msra.mxu0 0.0
  %3006 = vmatprep.subr.mxu0 0.0
  %3007 = vmatpush1.msra.mxu0 0.0
  %3008 = vmatprep.subr.mxu0 0.0
  %3009 = vmatpush1.msra.mxu0 0.0
  %3010 = vmatprep.subr.mxu0 0.0
  %3011 = vmatpush1.msra.mxu0 0.0
  %3012 = vmatprep.subr.mxu0 0.0
  %3013 = vmatpush1.msra.mxu0 0.0
  %3014 = vmatprep.subr.mxu0 0.0
  %3015 = vmatpush1.msra.mxu0 0.0
  %3016 = vmatprep.subr.mxu0 0.0
  %3017 = vmatpush1.msra.mxu0 0.0
  %3018 = vmatprep.subr.mxu0 0.0
  %3019 = vmatpush1.msra.mxu0 0.0
  %3020 = vmatprep.subr.mxu0 0.0
  %3021 = vmatpush1.msra.mxu0 0.0
  %3022 = vmatprep.subr.mxu0 %v2968
  %3023 = vmatpush1.msra.mxu0 %v2967
  %3024 = vmatprep.subr.mxu0 0.0
  %3025 = vmatpush2.msra.mxu0 0.0
  %3026 = vmatprep.subr.mxu0 0.0
  %3027 = vmatpush2.msra.mxu0 0.0
  %3028 = vmatprep.subr.mxu0 0.0
  %3029 = vmatpush2.msra.mxu0 0.0
  %3030 = vmatprep.subr.mxu0 0.0
  %3031 = vmatpush2.msra.mxu0 0.0
  %3032 = vmatprep.subr.mxu0 0.0
  %3033 = vmatpush2.msra.mxu0 0.0
  %3034 = vmatprep.subr.mxu0 0.0
  %3035 = vmatpush2.msra.mxu0 0.0
  %3036 = vmatprep.subr.mxu0 0.0
  %3037 = vmatpush2.msra.mxu0 0.0
  %3038 = vmatprep.subr.mxu0 0.0
  %3039 = vmatpush2.msra.mxu0 0.0
  %3040 = vmatprep.subr.mxu0 0.0
  %3041 = vmatpush2.msra.mxu0 0.0
  %3042 = vmatprep.subr.mxu0 0.0
  %3043 = vmatpush2.msra.mxu0 0.0
  %3044 = vmatprep.subr.mxu0 0.0
  %3045 = vmatpush2.msra.mxu0 0.0
  %3046 = vmatprep.subr.mxu0 0.0
  %3047 = vmatpush2.msra.mxu0 0.0
  %3048 = vmatprep.subr.mxu0 0.0
  %3049 = vmatpush2.msra.mxu0 0.0
  %3050 = vmatprep.subr.mxu0 0.0
  %3051 = vmatpush2.msra.mxu0 0.0
  %3052 = vmatprep.subr.mxu0 0.0
  %3053 = vmatpush2.msra.mxu0 0.0
  %3054 = vmatprep.subr.mxu0 0.0
  %3055 = vmatpush2.msra.mxu0 0.0
  %3056 = vmatprep.mubr.f32.mxu0 0.0
  %3057 = vmatmul.mubr.f32.gmra.mxu0 %v2987
  %v3058 = vpop.f32.mrf.mxu0
  %v3059 = vadd.f32 0.0, %v3058
  %v3060 = vpop.f32.mrf.mxu0
  %v3061 = vadd.f32 0.0, %v3060
  %3062 = vmatprep.mubr.f32.mxu0 0.0
  %3063 = vmatmul.mubr.f32.gmra.mxu0 %v2990
  %v3064 = vpop.f32.mrf.mxu0
  %v3065 = vadd.f32 0.0, %v3064
  %v3066 = vpop.f32.mrf.mxu0
  %v3067 = vadd.f32 0.0, %v3066
  %3068 = vdwg.mxu0
  %3069 = vmatprep.subr.mxu0 0.0
  %3070 = vmatpush1.msra.mxu0 0.0
  %3071 = vmatprep.subr.mxu0 0.0
  %3072 = vmatpush1.msra.mxu0 0.0
  %3073 = vmatprep.subr.mxu0 0.0
  %3074 = vmatpush1.msra.mxu0 0.0
  %3075 = vmatprep.subr.mxu0 0.0
  %3076 = vmatpush1.msra.mxu0 0.0
  %3077 = vmatprep.subr.mxu0 0.0
  %3078 = vmatpush1.msra.mxu0 0.0
  %3079 = vmatprep.subr.mxu0 0.0
  %3080 = vmatpush1.msra.mxu0 0.0
  %3081 = vmatprep.subr.mxu0 0.0
  %3082 = vmatpush1.msra.mxu0 0.0
  %3083 = vmatprep.subr.mxu0 0.0
  %3084 = vmatpush1.msra.mxu0 0.0
  %3085 = vmatprep.subr.mxu0 0.0
  %3086 = vmatpush1.msra.mxu0 0.0
  %3087 = vmatprep.subr.mxu0 0.0
  %3088 = vmatpush1.msra.mxu0 0.0
  %3089 = vmatprep.subr.mxu0 0.0
  %3090 = vmatpush1.msra.mxu0 0.0
  %3091 = vmatprep.subr.mxu0 0.0
  %3092 = vmatpush1.msra.mxu0 0.0
  %3093 = vmatprep.subr.mxu0 0.0
  %3094 = vmatpush1.msra.mxu0 0.0
  %3095 = vmatprep.subr.mxu0 0.0
  %3096 = vmatpush1.msra.mxu0 0.0
  %3097 = vmatprep.subr.mxu0 0.0
  %3098 = vmatpush1.msra.mxu0 0.0
  %3099 = vmatprep.subr.mxu0 %v2970
  %3100 = vmatpush1.msra.mxu0 %v2969
  %3101 = vmatprep.subr.mxu0 0.0
  %3102 = vmatpush2.msra.mxu0 0.0
  %3103 = vmatprep.subr.mxu0 0.0
  %3104 = vmatpush2.msra.mxu0 0.0
  %3105 = vmatprep.subr.mxu0 0.0
  %3106 = vmatpush2.msra.mxu0 0.0
  %3107 = vmatprep.subr.mxu0 0.0
  %3108 = vmatpush2.msra.mxu0 0.0
  %3109 = vmatprep.subr.mxu0 0.0
  %3110 = vmatpush2.msra.mxu0 0.0
  %3111 = vmatprep.subr.mxu0 0.0
  %3112 = vmatpush2.msra.mxu0 0.0
  %3113 = vmatprep.subr.mxu0 0.0
  %3114 = vmatpush2.msra.mxu0 0.0
  %3115 = vmatprep.subr.mxu0 0.0
  %3116 = vmatpush2.msra.mxu0 0.0
  %3117 = vmatprep.subr.mxu0 0.0
  %3118 = vmatpush2.msra.mxu0 0.0
  %3119 = vmatprep.subr.mxu0 0.0
  %3120 = vmatpush2.msra.mxu0 0.0
  %3121 = vmatprep.subr.mxu0 0.0
  %3122 = vmatpush2.msra.mxu0 0.0
  %3123 = vmatprep.subr.mxu0 0.0
  %3124 = vmatpush2.msra.mxu0 0.0
  %3125 = vmatprep.subr.mxu0 0.0
  %3126 = vmatpush2.msra.mxu0 0.0
  %3127 = vmatprep.subr.mxu0 0.0
  %3128 = vmatpush2.msra.mxu0 0.0
  %3129 = vmatprep.subr.mxu0 0.0
  %3130 = vmatpush2.msra.mxu0 0.0
  %3131 = vmatprep.subr.mxu0 0.0
  %3132 = vmatpush2.msra.mxu0 0.0
  %3133 = vmatprep.mubr.f32.mxu0 0.0
  %3134 = vmatmul.mubr.f32.gmra.mxu0 %v2987
  %v3135 = vpop.f32.mrf.mxu0
  %v3136 = vadd.f32 0.0, %v3135
  %v3137 = vpop.f32.mrf.mxu0
  %v3138 = vadd.f32 0.0, %v3137
  %3139 = vmatprep.mubr.f32.mxu0 0.0
  %3140 = vmatmul.mubr.f32.gmra.mxu0 %v2990
  %v3141 = vpop.f32.mrf.mxu0
  %v3142 = vadd.f32 0.0, %v3141
  %v3143 = vpop.f32.mrf.mxu0
  %v3144 = vadd.f32 0.0, %v3143
  %3145 = vdwg.mxu0
  %3146 = vmatprep.subr.mxu0 0.0
  %3147 = vmatpush1.msra.mxu0 0.0
  %3148 = vmatprep.subr.mxu0 0.0
  %3149 = vmatpush1.msra.mxu0 0.0
  %3150 = vmatprep.subr.mxu0 0.0
  %3151 = vmatpush1.msra.mxu0 0.0
  %3152 = vmatprep.subr.mxu0 0.0
  %3153 = vmatpush1.msra.mxu0 0.0
  %3154 = vmatprep.subr.mxu0 0.0
  %3155 = vmatpush1.msra.mxu0 0.0
  %3156 = vmatprep.subr.mxu0 0.0
  %3157 = vmatpush1.msra.mxu0 0.0
  %3158 = vmatprep.subr.mxu0 0.0
  %3159 = vmatpush1.msra.mxu0 0.0
  %3160 = vmatprep.subr.mxu0 0.0
  %3161 = vmatpush1.msra.mxu0 0.0
  %3162 = vmatprep.subr.mxu0 0.0
  %3163 = vmatpush1.msra.mxu0 0.0
  %3164 = vmatprep.subr.mxu0 0.0
  %3165 = vmatpush1.msra.mxu0 0.0
  %3166 = vmatprep.subr.mxu0 0.0
  %3167 = vmatpush1.msra.mxu0 0.0
  %3168 = vmatprep.subr.mxu0 0.0
  %3169 = vmatpush1.msra.mxu0 0.0
  %3170 = vmatprep.subr.mxu0 0.0
  %3171 = vmatpush1.msra.mxu0 0.0
  %3172 = vmatprep.subr.mxu0 0.0
  %3173 = vmatpush1.msra.mxu0 0.0
  %3174 = vmatprep.subr.mxu0 0.0
  %3175 = vmatpush1.msra.mxu0 0.0
  %3176 = vmatprep.subr.mxu0 %v2972
  %3177 = vmatpush1.msra.mxu0 %v2971
  %3178 = vmatprep.subr.mxu0 0.0
  %3179 = vmatpush2.msra.mxu0 0.0
  %3180 = vmatprep.subr.mxu0 0.0
  %3181 = vmatpush2.msra.mxu0 0.0
  %3182 = vmatprep.subr.mxu0 0.0
  %3183 = vmatpush2.msra.mxu0 0.0
  %3184 = vmatprep.subr.mxu0 0.0
  %3185 = vmatpush2.msra.mxu0 0.0
  %3186 = vmatprep.subr.mxu0 0.0
  %3187 = vmatpush2.msra.mxu0 0.0
  %3188 = vmatprep.subr.mxu0 0.0
  %3189 = vmatpush2.msra.mxu0 0.0
  %3190 = vmatprep.subr.mxu0 0.0
  %3191 = vmatpush2.msra.mxu0 0.0
  %3192 = vmatprep.subr.mxu0 0.0
  %3193 = vmatpush2.msra.mxu0 0.0
  %3194 = vmatprep.subr.mxu0 0.0
  %3195 = vmatpush2.msra.mxu0 0.0
  %3196 = vmatprep.subr.mxu0 0.0
  %3197 = vmatpush2.msra.mxu0 0.0
  %3198 = vmatprep.subr.mxu0 0.0
  %3199 = vmatpush2.msra.mxu0 0.0
  %3200 = vmatprep.subr.mxu0 0.0
  %3201 = vmatpush2.msra.mxu0 0.0
  %3202 = vmatprep.subr.mxu0 0.0
  %3203 = vmatpush2.msra.mxu0 0.0
  %3204 = vmatprep.subr.mxu0 0.0
  %3205 = vmatpush2.msra.mxu0 0.0
  %3206 = vmatprep.subr.mxu0 0.0
  %3207 = vmatpush2.msra.mxu0 0.0
  %3208 = vmatprep.subr.mxu0 0.0
  %3209 = vmatpush2.msra.mxu0 0.0
  %3210 = vmatprep.mubr.f32.mxu0 0.0
  %3211 = vmatmul.mubr.f32.gmra.mxu0 %v2987
  %v3212 = vpop.f32.mrf.mxu0
  %v3213 = vadd.f32 0.0, %v3212
  %v3214 = vpop.f32.mrf.mxu0
  %v3215 = vadd.f32 0.0, %v3214
  %3216 = vmatprep.mubr.f32.mxu0 0.0
  %3217 = vmatmul.mubr.f32.gmra.mxu0 %v2990
  %v3218 = vpop.f32.mrf.mxu0
  %v3219 = vadd.f32 0.0, %v3218
  %v3220 = vpop.f32.mrf.mxu0
  %v3221 = vadd.f32 0.0, %v3220
  %3222 = vdwg.mxu0
  %3223 = vmatprep.subr.mxu0 0.0
  %3224 = vmatpush1.msra.mxu0 0.0
  %3225 = vmatprep.subr.mxu0 0.0
  %3226 = vmatpush1.msra.mxu0 0.0
  %3227 = vmatprep.subr.mxu0 0.0
  %3228 = vmatpush1.msra.mxu0 0.0
  %3229 = vmatprep.subr.mxu0 0.0
  %3230 = vmatpush1.msra.mxu0 0.0
  %3231 = vmatprep.subr.mxu0 0.0
  %3232 = vmatpush1.msra.mxu0 0.0
  %3233 = vmatprep.subr.mxu0 0.0
  %3234 = vmatpush1.msra.mxu0 0.0
  %3235 = vmatprep.subr.mxu0 0.0
  %3236 = vmatpush1.msra.mxu0 0.0
  %3237 = vmatprep.subr.mxu0 0.0
  %3238 = vmatpush1.msra.mxu0 0.0
  %3239 = vmatprep.subr.mxu0 0.0
  %3240 = vmatpush1.msra.mxu0 0.0
  %3241 = vmatprep.subr.mxu0 0.0
  %3242 = vmatpush1.msra.mxu0 0.0
  %3243 = vmatprep.subr.mxu0 0.0
  %3244 = vmatpush1.msra.mxu0 0.0
  %3245 = vmatprep.subr.mxu0 0.0
  %3246 = vmatpush1.msra.mxu0 0.0
  %3247 = vmatprep.subr.mxu0 0.0
  %3248 = vmatpush1.msra.mxu0 0.0
  %3249 = vmatprep.subr.mxu0 0.0
  %3250 = vmatpush1.msra.mxu0 0.0
  %3251 = vmatprep.subr.mxu0 0.0
  %3252 = vmatpush1.msra.mxu0 0.0
  %3253 = vmatprep.subr.mxu0 %v2974
  %3254 = vmatpush1.msra.mxu0 %v2973
  %3255 = vmatprep.subr.mxu0 0.0
  %3256 = vmatpush2.msra.mxu0 0.0
  %3257 = vmatprep.subr.mxu0 0.0
  %3258 = vmatpush2.msra.mxu0 0.0
  %3259 = vmatprep.subr.mxu0 0.0
  %3260 = vmatpush2.msra.mxu0 0.0
  %3261 = vmatprep.subr.mxu0 0.0
  %3262 = vmatpush2.msra.mxu0 0.0
  %3263 = vmatprep.subr.mxu0 0.0
  %3264 = vmatpush2.msra.mxu0 0.0
  %3265 = vmatprep.subr.mxu0 0.0
  %3266 = vmatpush2.msra.mxu0 0.0
  %3267 = vmatprep.subr.mxu0 0.0
  %3268 = vmatpush2.msra.mxu0 0.0
  %3269 = vmatprep.subr.mxu0 0.0
  %3270 = vmatpush2.msra.mxu0 0.0
  %3271 = vmatprep.subr.mxu0 0.0
  %3272 = vmatpush2.msra.mxu0 0.0
  %3273 = vmatprep.subr.mxu0 0.0
  %3274 = vmatpush2.msra.mxu0 0.0
  %3275 = vmatprep.subr.mxu0 0.0
  %3276 = vmatpush2.msra.mxu0 0.0
  %3277 = vmatprep.subr.mxu0 0.0
  %3278 = vmatpush2.msra.mxu0 0.0
  %3279 = vmatprep.subr.mxu0 0.0
  %3280 = vmatpush2.msra.mxu0 0.0
  %3281 = vmatprep.subr.mxu0 0.0
  %3282 = vmatpush2.msra.mxu0 0.0
  %3283 = vmatprep.subr.mxu0 0.0
  %3284 = vmatpush2.msra.mxu0 0.0
  %3285 = vmatprep.subr.mxu0 0.0
  %3286 = vmatpush2.msra.mxu0 0.0
  %3287 = vmatprep.mubr.f32.mxu0 0.0
  %3288 = vmatmul.mubr.f32.gmra.mxu0 %v2987
  %v3289 = vpop.f32.mrf.mxu0
  %v3290 = vadd.f32 0.0, %v3289
  %v3291 = vpop.f32.mrf.mxu0
  %v3292 = vadd.f32 0.0, %v3291
  %3293 = vmatprep.mubr.f32.mxu0 0.0
  %3294 = vmatmul.mubr.f32.gmra.mxu0 %v2990
  %v3295 = vpop.f32.mrf.mxu0
  %v3296 = vadd.f32 0.0, %v3295
  %v3297 = vpop.f32.mrf.mxu0
  %v3298 = vadd.f32 0.0, %v3297
  %3299 = vdwg.mxu0
  %3300 = vmatprep.subr.mxu0 0.0
  %3301 = vmatpush1.msra.mxu0 0.0
  %3302 = vmatprep.subr.mxu0 0.0
  %3303 = vmatpush1.msra.mxu0 0.0
  %3304 = vmatprep.subr.mxu0 0.0
  %3305 = vmatpush1.msra.mxu0 0.0
  %3306 = vmatprep.subr.mxu0 0.0
  %3307 = vmatpush1.msra.mxu0 0.0
  %3308 = vmatprep.subr.mxu0 0.0
  %3309 = vmatpush1.msra.mxu0 0.0
  %3310 = vmatprep.subr.mxu0 0.0
  %3311 = vmatpush1.msra.mxu0 0.0
  %3312 = vmatprep.subr.mxu0 0.0
  %3313 = vmatpush1.msra.mxu0 0.0
  %3314 = vmatprep.subr.mxu0 0.0
  %3315 = vmatpush1.msra.mxu0 0.0
  %3316 = vmatprep.subr.mxu0 0.0
  %3317 = vmatpush1.msra.mxu0 0.0
  %3318 = vmatprep.subr.mxu0 0.0
  %3319 = vmatpush1.msra.mxu0 0.0
  %3320 = vmatprep.subr.mxu0 0.0
  %3321 = vmatpush1.msra.mxu0 0.0
  %3322 = vmatprep.subr.mxu0 0.0
  %3323 = vmatpush1.msra.mxu0 0.0
  %3324 = vmatprep.subr.mxu0 0.0
  %3325 = vmatpush1.msra.mxu0 0.0
  %3326 = vmatprep.subr.mxu0 0.0
  %3327 = vmatpush1.msra.mxu0 0.0
  %3328 = vmatprep.subr.mxu0 0.0
  %3329 = vmatpush1.msra.mxu0 0.0
  %3330 = vmatprep.subr.mxu0 %v2976
  %3331 = vmatpush1.msra.mxu0 %v2975
  %3332 = vmatprep.subr.mxu0 0.0
  %3333 = vmatpush2.msra.mxu0 0.0
  %3334 = vmatprep.subr.mxu0 0.0
  %3335 = vmatpush2.msra.mxu0 0.0
  %3336 = vmatprep.subr.mxu0 0.0
  %3337 = vmatpush2.msra.mxu0 0.0
  %3338 = vmatprep.subr.mxu0 0.0
  %3339 = vmatpush2.msra.mxu0 0.0
  %3340 = vmatprep.subr.mxu0 0.0
  %3341 = vmatpush2.msra.mxu0 0.0
  %3342 = vmatprep.subr.mxu0 0.0
  %3343 = vmatpush2.msra.mxu0 0.0
  %3344 = vmatprep.subr.mxu0 0.0
  %3345 = vmatpush2.msra.mxu0 0.0
  %3346 = vmatprep.subr.mxu0 0.0
  %3347 = vmatpush2.msra.mxu0 0.0
  %3348 = vmatprep.subr.mxu0 0.0
  %3349 = vmatpush2.msra.mxu0 0.0
  %3350 = vmatprep.subr.mxu0 0.0
  %3351 = vmatpush2.msra.mxu0 0.0
  %3352 = vmatprep.subr.mxu0 0.0
  %3353 = vmatpush2.msra.mxu0 0.0
  %3354 = vmatprep.subr.mxu0 0.0
  %3355 = vmatpush2.msra.mxu0 0.0
  %3356 = vmatprep.subr.mxu0 0.0
  %3357 = vmatpush2.msra.mxu0 0.0
  %3358 = vmatprep.subr.mxu0 0.0
  %3359 = vmatpush2.msra.mxu0 0.0
  %3360 = vmatprep.subr.mxu0 0.0
  %3361 = vmatpush2.msra.mxu0 0.0
  %3362 = vmatprep.subr.mxu0 0.0
  %3363 = vmatpush2.msra.mxu0 0.0
  %3364 = vmatprep.mubr.f32.mxu0 0.0
  %3365 = vmatmul.mubr.f32.gmra.mxu0 %v2987
  %v3366 = vpop.f32.mrf.mxu0
  %v3367 = vadd.f32 0.0, %v3366
  %v3368 = vpop.f32.mrf.mxu0
  %v3369 = vadd.f32 0.0, %v3368
  %3370 = vmatprep.mubr.f32.mxu0 0.0
  %3371 = vmatmul.mubr.f32.gmra.mxu0 %v2990
  %v3372 = vpop.f32.mrf.mxu0
  %v3373 = vadd.f32 0.0, %v3372
  %v3374 = vpop.f32.mrf.mxu0
  %v3375 = vadd.f32 0.0, %v3374
  %3376 = vdwg.mxu0
  %3377 = vmatprep.subr.mxu0 0.0
  %3378 = vmatpush1.msra.mxu0 0.0
  %3379 = vmatprep.subr.mxu0 0.0
  %3380 = vmatpush1.msra.mxu0 0.0
  %3381 = vmatprep.subr.mxu0 0.0
  %3382 = vmatpush1.msra.mxu0 0.0
  %3383 = vmatprep.subr.mxu0 0.0
  %3384 = vmatpush1.msra.mxu0 0.0
  %3385 = vmatprep.subr.mxu0 0.0
  %3386 = vmatpush1.msra.mxu0 0.0
  %3387 = vmatprep.subr.mxu0 0.0
  %3388 = vmatpush1.msra.mxu0 0.0
  %3389 = vmatprep.subr.mxu0 0.0
  %3390 = vmatpush1.msra.mxu0 0.0
  %3391 = vmatprep.subr.mxu0 0.0
  %3392 = vmatpush1.msra.mxu0 0.0
  %3393 = vmatprep.subr.mxu0 0.0
  %3394 = vmatpush1.msra.mxu0 0.0
  %3395 = vmatprep.subr.mxu0 0.0
  %3396 = vmatpush1.msra.mxu0 0.0
  %3397 = vmatprep.subr.mxu0 0.0
  %3398 = vmatpush1.msra.mxu0 0.0
  %3399 = vmatprep.subr.mxu0 0.0
  %3400 = vmatpush1.msra.mxu0 0.0
  %3401 = vmatprep.subr.mxu0 0.0
  %3402 = vmatpush1.msra.mxu0 0.0
  %3403 = vmatprep.subr.mxu0 0.0
  %3404 = vmatpush1.msra.mxu0 0.0
  %3405 = vmatprep.subr.mxu0 0.0
  %3406 = vmatpush1.msra.mxu0 0.0
  %3407 = vmatprep.subr.mxu0 %v2978
  %3408 = vmatpush1.msra.mxu0 %v2977
  %3409 = vmatprep.subr.mxu0 0.0
  %3410 = vmatpush2.msra.mxu0 0.0
  %3411 = vmatprep.subr.mxu0 0.0
  %3412 = vmatpush2.msra.mxu0 0.0
  %3413 = vmatprep.subr.mxu0 0.0
  %3414 = vmatpush2.msra.mxu0 0.0
  %3415 = vmatprep.subr.mxu0 0.0
  %3416 = vmatpush2.msra.mxu0 0.0
  %3417 = vmatprep.subr.mxu0 0.0
  %3418 = vmatpush2.msra.mxu0 0.0
  %3419 = vmatprep.subr.mxu0 0.0
  %3420 = vmatpush2.msra.mxu0 0.0
  %3421 = vmatprep.subr.mxu0 0.0
  %3422 = vmatpush2.msra.mxu0 0.0
  %3423 = vmatprep.subr.mxu0 0.0
  %3424 = vmatpush2.msra.mxu0 0.0
  %3425 = vmatprep.subr.mxu0 0.0
  %3426 = vmatpush2.msra.mxu0 0.0
  %3427 = vmatprep.subr.mxu0 0.0
  %3428 = vmatpush2.msra.mxu0 0.0
  %3429 = vmatprep.subr.mxu0 0.0
  %3430 = vmatpush2.msra.mxu0 0.0
  %3431 = vmatprep.subr.mxu0 0.0
  %3432 = vmatpush2.msra.mxu0 0.0
  %3433 = vmatprep.subr.mxu0 0.0
  %3434 = vmatpush2.msra.mxu0 0.0
  %3435 = vmatprep.subr.mxu0 0.0
  %3436 = vmatpush2.msra.mxu0 0.0
  %3437 = vmatprep.subr.mxu0 0.0
  %3438 = vmatpush2.msra.mxu0 0.0
  %3439 = vmatprep.subr.mxu0 0.0
  %3440 = vmatpush2.msra.mxu0 0.0
  %3441 = vmatprep.mubr.f32.mxu0 0.0
  %3442 = vmatmul.mubr.f32.gmra.mxu0 %v2987
  %v3443 = vpop.f32.mrf.mxu0
  %v3444 = vadd.f32 0.0, %v3443
  %v3445 = vpop.f32.mrf.mxu0
  %v3446 = vadd.f32 0.0, %v3445
  %3447 = vmatprep.mubr.f32.mxu0 0.0
  %3448 = vmatmul.mubr.f32.gmra.mxu0 %v2990
  %v3449 = vpop.f32.mrf.mxu0
  %v3450 = vadd.f32 0.0, %v3449
  %v3451 = vpop.f32.mrf.mxu0
  %v3452 = vadd.f32 0.0, %v3451
  %3453 = vdwg.mxu0
  %3454 = vmatprep.subr.mxu0 0.0
  %3455 = vmatpush1.msra.mxu0 0.0
  %3456 = vmatprep.subr.mxu0 0.0
  %3457 = vmatpush1.msra.mxu0 0.0
  %3458 = vmatprep.subr.mxu0 0.0
  %3459 = vmatpush1.msra.mxu0 0.0
  %3460 = vmatprep.subr.mxu0 0.0
  %3461 = vmatpush1.msra.mxu0 0.0
  %3462 = vmatprep.subr.mxu0 0.0
  %3463 = vmatpush1.msra.mxu0 0.0
  %3464 = vmatprep.subr.mxu0 0.0
  %3465 = vmatpush1.msra.mxu0 0.0
  %3466 = vmatprep.subr.mxu0 0.0
  %3467 = vmatpush1.msra.mxu0 0.0
  %3468 = vmatprep.subr.mxu0 0.0
  %3469 = vmatpush1.msra.mxu0 0.0
  %3470 = vmatprep.subr.mxu0 0.0
  %3471 = vmatpush1.msra.mxu0 0.0
  %3472 = vmatprep.subr.mxu0 0.0
  %3473 = vmatpush1.msra.mxu0 0.0
  %3474 = vmatprep.subr.mxu0 0.0
  %3475 = vmatpush1.msra.mxu0 0.0
  %3476 = vmatprep.subr.mxu0 0.0
  %3477 = vmatpush1.msra.mxu0 0.0
  %3478 = vmatprep.subr.mxu0 0.0
  %3479 = vmatpush1.msra.mxu0 0.0
  %3480 = vmatprep.subr.mxu0 0.0
  %3481 = vmatpush1.msra.mxu0 0.0
  %3482 = vmatprep.subr.mxu0 0.0
  %3483 = vmatpush1.msra.mxu0 0.0
  %3484 = vmatprep.subr.mxu0 %v2980
  %3485 = vmatpush1.msra.mxu0 %v2979
  %3486 = vmatprep.subr.mxu0 0.0
  %3487 = vmatpush2.msra.mxu0 0.0
  %3488 = vmatprep.subr.mxu0 0.0
  %3489 = vmatpush2.msra.mxu0 0.0
  %3490 = vmatprep.subr.mxu0 0.0
  %3491 = vmatpush2.msra.mxu0 0.0
  %3492 = vmatprep.subr.mxu0 0.0
  %3493 = vmatpush2.msra.mxu0 0.0
  %3494 = vmatprep.subr.mxu0 0.0
  %3495 = vmatpush2.msra.mxu0 0.0
  %3496 = vmatprep.subr.mxu0 0.0
  %3497 = vmatpush2.msra.mxu0 0.0
  %3498 = vmatprep.subr.mxu0 0.0
  %3499 = vmatpush2.msra.mxu0 0.0
  %3500 = vmatprep.subr.mxu0 0.0
  %3501 = vmatpush2.msra.mxu0 0.0
  %3502 = vmatprep.subr.mxu0 0.0
  %3503 = vmatpush2.msra.mxu0 0.0
  %3504 = vmatprep.subr.mxu0 0.0
  %3505 = vmatpush2.msra.mxu0 0.0
  %3506 = vmatprep.subr.mxu0 0.0
  %3507 = vmatpush2.msra.mxu0 0.0
  %3508 = vmatprep.subr.mxu0 0.0
  %3509 = vmatpush2.msra.mxu0 0.0
  %3510 = vmatprep.subr.mxu0 0.0
  %3511 = vmatpush2.msra.mxu0 0.0
  %3512 = vmatprep.subr.mxu0 0.0
  %3513 = vmatpush2.msra.mxu0 0.0
  %3514 = vmatprep.subr.mxu0 0.0
  %3515 = vmatpush2.msra.mxu0 0.0
  %3516 = vmatprep.subr.mxu0 0.0
  %3517 = vmatpush2.msra.mxu0 0.0
  %3518 = vmatprep.mubr.f32.mxu0 0.0
  %3519 = vmatmul.mubr.f32.gmra.mxu0 %v2987
  %v3520 = vpop.f32.mrf.mxu0
  %v3521 = vadd.f32 0.0, %v3520
  %v3522 = vpop.f32.mrf.mxu0
  %v3523 = vadd.f32 0.0, %v3522
  %3524 = vmatprep.mubr.f32.mxu0 0.0
  %3525 = vmatmul.mubr.f32.gmra.mxu0 %v2990
  %v3526 = vpop.f32.mrf.mxu0
  %v3527 = vadd.f32 0.0, %v3526
  %v3528 = vpop.f32.mrf.mxu0
  %v3529 = vadd.f32 0.0, %v3528
  %3530 = vdwg.mxu0
  %3531 = vmatprep.subr.mxu0 0.0
  %3532 = vmatpush1.msra.mxu0 0.0
  %3533 = vmatprep.subr.mxu0 0.0
  %3534 = vmatpush1.msra.mxu0 0.0
  %3535 = vmatprep.subr.mxu0 0.0
  %3536 = vmatpush1.msra.mxu0 0.0
  %3537 = vmatprep.subr.mxu0 0.0
  %3538 = vmatpush1.msra.mxu0 0.0
  %3539 = vmatprep.subr.mxu0 0.0
  %3540 = vmatpush1.msra.mxu0 0.0
  %3541 = vmatprep.subr.mxu0 0.0
  %3542 = vmatpush1.msra.mxu0 0.0
  %3543 = vmatprep.subr.mxu0 0.0
  %3544 = vmatpush1.msra.mxu0 0.0
  %3545 = vmatprep.subr.mxu0 0.0
  %3546 = vmatpush1.msra.mxu0 0.0
  %3547 = vmatprep.subr.mxu0 0.0
  %3548 = vmatpush1.msra.mxu0 0.0
  %3549 = vmatprep.subr.mxu0 0.0
  %3550 = vmatpush1.msra.mxu0 0.0
  %3551 = vmatprep.subr.mxu0 0.0
  %3552 = vmatpush1.msra.mxu0 0.0
  %3553 = vmatprep.subr.mxu0 0.0
  %3554 = vmatpush1.msra.mxu0 0.0
  %3555 = vmatprep.subr.mxu0 0.0
  %3556 = vmatpush1.msra.mxu0 0.0
  %3557 = vmatprep.subr.mxu0 0.0
  %3558 = vmatpush1.msra.mxu0 0.0
  %3559 = vmatprep.subr.mxu0 0.0
  %3560 = vmatpush1.msra.mxu0 0.0
  %3561 = vmatprep.subr.mxu0 %v2982
  %3562 = vmatpush1.msra.mxu0 %v2981
  %3563 = vmatprep.subr.mxu0 0.0
  %3564 = vmatpush2.msra.mxu0 0.0
  %3565 = vmatprep.subr.mxu0 0.0
  %3566 = vmatpush2.msra.mxu0 0.0
  %3567 = vmatprep.subr.mxu0 0.0
  %3568 = vmatpush2.msra.mxu0 0.0
  %3569 = vmatprep.subr.mxu0 0.0
  %3570 = vmatpush2.msra.mxu0 0.0
  %3571 = vmatprep.subr.mxu0 0.0
  %3572 = vmatpush2.msra.mxu0 0.0
  %3573 = vmatprep.subr.mxu0 0.0
  %3574 = vmatpush2.msra.mxu0 0.0
  %3575 = vmatprep.subr.mxu0 0.0
  %3576 = vmatpush2.msra.mxu0 0.0
  %3577 = vmatprep.subr.mxu0 0.0
  %3578 = vmatpush2.msra.mxu0 0.0
  %3579 = vmatprep.subr.mxu0 0.0
  %3580 = vmatpush2.msra.mxu0 0.0
  %3581 = vmatprep.subr.mxu0 0.0
  %3582 = vmatpush2.msra.mxu0 0.0
  %3583 = vmatprep.subr.mxu0 0.0
  %3584 = vmatpush2.msra.mxu0 0.0
  %3585 = vmatprep.subr.mxu0 0.0
  %3586 = vmatpush2.msra.mxu0 0.0
  %3587 = vmatprep.subr.mxu0 0.0
  %3588 = vmatpush2.msra.mxu0 0.0
  %3589 = vmatprep.subr.mxu0 0.0
  %3590 = vmatpush2.msra.mxu0 0.0
  %3591 = vmatprep.subr.mxu0 0.0
  %3592 = vmatpush2.msra.mxu0 0.0
  %3593 = vmatprep.subr.mxu0 0.0
  %3594 = vmatpush2.msra.mxu0 0.0
  %3595 = vmatprep.mubr.f32.mxu0 0.0
  %3596 = vmatmul.mubr.f32.gmra.mxu0 %v2987
  %v3597 = vpop.f32.mrf.mxu0
  %v3598 = vadd.f32 0.0, %v3597
  %v3599 = vpop.f32.mrf.mxu0
  %v3600 = vadd.f32 0.0, %v3599
  %3601 = vmatprep.mubr.f32.mxu0 0.0
  %3602 = vmatmul.mubr.f32.gmra.mxu0 %v2990
  %v3603 = vpop.f32.mrf.mxu0
  %v3604 = vadd.f32 0.0, %v3603
  %v3605 = vpop.f32.mrf.mxu0
  %v3606 = vadd.f32 0.0, %v3605
  %3607 = vdwg.mxu0
  %v3608 = vadd.f32 %v3059, %v3061
  %v3609 = vadd.f32 %v3608, %v3136
  %v3610 = vadd.f32 %v3609, %v3138
  %v3611 = vadd.f32 %v3610, %v3213
  %v3612 = vadd.f32 %v3611, %v3215
  %v3613 = vadd.f32 %v3612, %v3290
  %v3614 = vadd.f32 %v3613, %v3292
  %v3615 = vadd.f32 %v3614, %v3367
  %v3616 = vadd.f32 %v3615, %v3369
  %v3617 = vadd.f32 %v3616, %v3444
  %v3618 = vadd.f32 %v3617, %v3446
  %v3619 = vadd.f32 %v3618, %v3521
  %v3620 = vadd.f32 %v3619, %v3523
  %v3621 = vadd.f32 %v3620, %v3598
  %v3622 = vadd.f32 %v3621, %v3600
  %3623 = vadd.xlane.f32.xlu0 %v3622
  %v3624 = vpop.xlane.xlu0 %3623
  %v3625 = vadd.f32 %v3065, %v3067
  %v3626 = vadd.f32 %v3625, %v3142
  %v3627 = vadd.f32 %v3626, %v3144
  %v3628 = vadd.f32 %v3627, %v3219
  %v3629 = vadd.f32 %v3628, %v3221
  %v3630 = vadd.f32 %v3629, %v3296
  %v3631 = vadd.f32 %v3630, %v3298
  %v3632 = vadd.f32 %v3631, %v3373
  %v3633 = vadd.f32 %v3632, %v3375
  %v3634 = vadd.f32 %v3633, %v3450
  %v3635 = vadd.f32 %v3634, %v3452
  %v3636 = vadd.f32 %v3635, %v3527
  %v3637 = vadd.f32 %v3636, %v3529
  %v3638 = vadd.f32 %v3637, %v3604
  %v3639 = vadd.f32 %v3638, %v3606
  %3640 = vadd.xlane.f32.xlu0 %v3639
  %v3641 = vpop.xlane.xlu0 %3640
  %v3642 = vmul.f32 %v3059, %v3059
  %v3643 = vmul.f32 %v3061, %v3061
  %v3644 = vmul.f32 %v3136, %v3136
  %v3645 = vmul.f32 %v3138, %v3138
  %v3646 = vmul.f32 %v3213, %v3213
  %v3647 = vmul.f32 %v3215, %v3215
  %v3648 = vmul.f32 %v3290, %v3290
  %v3649 = vmul.f32 %v3292, %v3292
  %v3650 = vmul.f32 %v3367, %v3367
  %v3651 = vmul.f32 %v3369, %v3369
  %v3652 = vmul.f32 %v3444, %v3444
  %v3653 = vmul.f32 %v3446, %v3446
  %v3654 = vmul.f32 %v3521, %v3521
  %v3655 = vmul.f32 %v3523, %v3523
  %v3656 = vmul.f32 %v3598, %v3598
  %v3657 = vmul.f32 %v3600, %v3600
  %v3658 = vmul.f32 %v3065, %v3065
  %v3659 = vmul.f32 %v3067, %v3067
  %v3660 = vmul.f32 %v3142, %v3142
  %v3661 = vmul.f32 %v3144, %v3144
  %v3662 = vmul.f32 %v3219, %v3219
  %v3663 = vmul.f32 %v3221, %v3221
  %v3664 = vmul.f32 %v3296, %v3296
  %v3665 = vmul.f32 %v3298, %v3298
  %v3666 = vmul.f32 %v3373, %v3373
  %v3667 = vmul.f32 %v3375, %v3375
  %v3668 = vmul.f32 %v3450, %v3450
  %v3669 = vmul.f32 %v3452, %v3452
  %v3670 = vmul.f32 %v3527, %v3527
  %v3671 = vmul.f32 %v3529, %v3529
  %v3672 = vmul.f32 %v3604, %v3604
  %v3673 = vmul.f32 %v3606, %v3606
  %v3674 = vadd.f32 %v3642, %v3643
  %v3675 = vadd.f32 %v3674, %v3644
  %v3676 = vadd.f32 %v3675, %v3645
  %v3677 = vadd.f32 %v3676, %v3646
  %v3678 = vadd.f32 %v3677, %v3647
  %v3679 = vadd.f32 %v3678, %v3648
  %v3680 = vadd.f32 %v3679, %v3649
  %v3681 = vadd.f32 %v3680, %v3650
  %v3682 = vadd.f32 %v3681, %v3651
  %v3683 = vadd.f32 %v3682, %v3652
  %v3684 = vadd.f32 %v3683, %v3653
  %v3685 = vadd.f32 %v3684, %v3654
  %v3686 = vadd.f32 %v3685, %v3655
  %v3687 = vadd.f32 %v3686, %v3656
  %v3688 = vadd.f32 %v3687, %v3657
  %3689 = vadd.xlane.f32.xlu0 %v3688
  %v3690 = vpop.xlane.xlu0 %3689
  %v3691 = vadd.f32 %v3658, %v3659
  %v3692 = vadd.f32 %v3691, %v3660
  %v3693 = vadd.f32 %v3692, %v3661
  %v3694 = vadd.f32 %v3693, %v3662
  %v3695 = vadd.f32 %v3694, %v3663
  %v3696 = vadd.f32 %v3695, %v3664
  %v3697 = vadd.f32 %v3696, %v3665
  %v3698 = vadd.f32 %v3697, %v3666
  %v3699 = vadd.f32 %v3698, %v3667
  %v3700 = vadd.f32 %v3699, %v3668
  %v3701 = vadd.f32 %v3700, %v3669
  %v3702 = vadd.f32 %v3701, %v3670
  %v3703 = vadd.f32 %v3702, %v3671
  %v3704 = vadd.f32 %v3703, %v3672
  %v3705 = vadd.f32 %v3704, %v3673
  %3706 = vadd.xlane.f32.xlu0 %v3705
  %v3707 = vpop.xlane.xlu0 %3706
  %v3708 = vmul.f32 %v3624, 0.00048828125
  %v3709 = vmul.f32 %v3641, 0.00048828125
  %v3710 = vmul.f32 %v3690, 0.00048828125
  %v3711 = vmul.f32 %v3707, 0.00048828125
  %v3712 = vmul.f32 %v3708, %v3708
  %v3713 = vmul.f32 %v3709, %v3709
  %v3714 = vsub.f32 %v3710, %v3712
  %v3715 = vsub.f32 %v3711, %v3713
  %v3716 = vld [vmem:[%s9] sm:$0xff]
  %v3717 = vld [vmem:[%s9 + $0x8] sm:$0xff]
  %v3718 = vadd.f32 %v3714, 1e-05
  %v3719 = vadd.f32 %v3715, 1e-05
  %v3720 = vrsqrt.pop %v3718
  %v3721 = vrsqrt.pop %v3719
  %v3722 = vmul.f32 %v3716, %v3720
  %v3723 = vmul.f32 %v3717, %v3721
  %v3724 = vld [vmem:[%s10] sm:$0xff]
  %v3725 = vld [vmem:[%s10 + $0x8] sm:$0xff]
  %v3726 = vmul.f32 %v3708, %v3722
  %v3727 = vmul.f32 %v3709, %v3723
  %v3728 = vsub.f32 %v3724, %v3726
  %v3729 = vsub.f32 %v3725, %v3727
  %3731 = vset.pattern.permute.xlu0 0
  %3732 = vperm.xlu0 %3731, %v3722
  %v3733 = vpop.permute.xlu0 %3732
  %3736 = vset.pattern.permute.xlu0 0
  %3737 = vperm.xlu0 %3736, %v3723
  %v3738 = vpop.permute.xlu0 %3737
  %v3740 = vmul.f32 %v3059, %v3733
  %v3741 = vmul.f32 %v3061, %v3733
  %v3742 = vmul.f32 %v3136, %v3733
  %v3743 = vmul.f32 %v3138, %v3733
  %v3744 = vmul.f32 %v3213, %v3733
  %v3745 = vmul.f32 %v3215, %v3733
  %v3746 = vmul.f32 %v3290, %v3733
  %v3747 = vmul.f32 %v3292, %v3733
  %v3748 = vmul.f32 %v3367, %v3733
  %v3749 = vmul.f32 %v3369, %v3733
  %v3750 = vmul.f32 %v3444, %v3733
  %v3751 = vmul.f32 %v3446, %v3733
  %v3752 = vmul.f32 %v3521, %v3733
  %v3753 = vmul.f32 %v3523, %v3733
  %v3754 = vmul.f32 %v3598, %v3733
  %v3755 = vmul.f32 %v3600, %v3733
  %v3756 = vmul.f32 %v3065, %v3738
  %v3757 = vmul.f32 %v3067, %v3738
  %v3758 = vmul.f32 %v3142, %v3738
  %v3759 = vmul.f32 %v3144, %v3738
  %v3760 = vmul.f32 %v3219, %v3738
  %v3761 = vmul.f32 %v3221, %v3738
  %v3762 = vmul.f32 %v3296, %v3738
  %v3763 = vmul.f32 %v3298, %v3738
  %v3764 = vmul.f32 %v3373, %v3738
  %v3765 = vmul.f32 %v3375, %v3738
  %v3766 = vmul.f32 %v3450, %v3738
  %v3767 = vmul.f32 %v3452, %v3738
  %v3768 = vmul.f32 %v3527, %v3738
  %v3769 = vmul.f32 %v3529, %v3738
  %v3770 = vmul.f32 %v3604, %v3738
  %v3771 = vmul.f32 %v3606, %v3738
  %3773 = vset.pattern.permute.xlu0 0
  %3774 = vperm.xlu0 %3773, %v3728
  %v3775 = vpop.permute.xlu0 %3774
  %3778 = vset.pattern.permute.xlu0 0
  %3779 = vperm.xlu0 %3778, %v3729
  %v3780 = vpop.permute.xlu0 %3779
  %v3782 = vadd.f32 %v3740, %v3775
  %v3783 = vadd.f32 %v3741, %v3775
  %v3784 = vadd.f32 %v3742, %v3775
  %v3785 = vadd.f32 %v3743, %v3775
  %v3786 = vadd.f32 %v3744, %v3775
  %v3787 = vadd.f32 %v3745, %v3775
  %v3788 = vadd.f32 %v3746, %v3775
  %v3789 = vadd.f32 %v3747, %v3775
  %v3790 = vadd.f32 %v3748, %v3775
  %v3791 = vadd.f32 %v3749, %v3775
  %v3792 = vadd.f32 %v3750, %v3775
  %v3793 = vadd.f32 %v3751, %v3775
  %v3794 = vadd.f32 %v3752, %v3775
  %v3795 = vadd.f32 %v3753, %v3775
  %v3796 = vadd.f32 %v3754, %v3775
  %v3797 = vadd.f32 %v3755, %v3775
  %v3798 = vadd.f32 %v3756, %v3780
  %v3799 = vadd.f32 %v3757, %v3780
  %v3800 = vadd.f32 %v3758, %v3780
  %v3801 = vadd.f32 %v3759, %v3780
  %v3802 = vadd.f32 %v3760, %v3780
  %v3803 = vadd.f32 %v3761, %v3780
  %v3804 = vadd.f32 %v3762, %v3780
  %v3805 = vadd.f32 %v3763, %v3780
  %v3806 = vadd.f32 %v3764, %v3780
  %v3807 = vadd.f32 %v3765, %v3780
  %v3808 = vadd.f32 %v3766, %v3780
  %v3809 = vadd.f32 %v3767, %v3780
  %v3810 = vadd.f32 %v3768, %v3780
  %v3811 = vadd.f32 %v3769, %v3780
  %v3812 = vadd.f32 %v3770, %v3780
  %v3813 = vadd.f32 %v3771, %v3780
  %v3814 = vmax.f32 %v3782, 0.0
  %v3815 = vmax.f32 %v3783, 0.0
  %v3816 = vmax.f32 %v3784, 0.0
  %v3817 = vmax.f32 %v3785, 0.0
  %v3818 = vmax.f32 %v3786, 0.0
  %v3819 = vmax.f32 %v3787, 0.0
  %v3820 = vmax.f32 %v3788, 0.0
  %v3821 = vmax.f32 %v3789, 0.0
  %v3822 = vmax.f32 %v3790, 0.0
  %v3823 = vmax.f32 %v3791, 0.0
  %v3824 = vmax.f32 %v3792, 0.0
  %v3825 = vmax.f32 %v3793, 0.0
  %v3826 = vmax.f32 %v3794, 0.0
  %v3827 = vmax.f32 %v3795, 0.0
  %v3828 = vmax.f32 %v3796, 0.0
  %v3829 = vmax.f32 %v3797, 0.0
  %v3830 = vmax.f32 %v3798, 0.0
  %v3831 = vmax.f32 %v3799, 0.0
  %v3832 = vmax.f32 %v3800, 0.0
  %v3833 = vmax.f32 %v3801, 0.0
  %v3834 = vmax.f32 %v3802, 0.0
  %v3835 = vmax.f32 %v3803, 0.0
  %v3836 = vmax.f32 %v3804, 0.0
  %v3837 = vmax.f32 %v3805, 0.0
  %v3838 = vmax.f32 %v3806, 0.0
  %v3839 = vmax.f32 %v3807, 0.0
  %v3840 = vmax.f32 %v3808, 0.0
  %v3841 = vmax.f32 %v3809, 0.0
  %v3842 = vmax.f32 %v3810, 0.0
  %v3843 = vmax.f32 %v3811, 0.0
  %v3844 = vmax.f32 %v3812, 0.0
  %v3845 = vmax.f32 %v3813, 0.0
  %v3846 = vadd.f32 %v3814, %v38
  %v3847 = vadd.f32 %v3815, %v39
  %v3848 = vadd.f32 %v3816, %v40
  %v3849 = vadd.f32 %v3817, %v41
  %v3850 = vadd.f32 %v3818, %v42
  %v3851 = vadd.f32 %v3819, %v43
  %v3852 = vadd.f32 %v3820, %v44
  %v3853 = vadd.f32 %v3821, %v45
  %v3854 = vadd.f32 %v3822, %v46
  %v3855 = vadd.f32 %v3823, %v47
  %v3856 = vadd.f32 %v3824, %v48
  %v3857 = vadd.f32 %v3825, %v49
  %v3858 = vadd.f32 %v3826, %v50
  %v3859 = vadd.f32 %v3827, %v51
  %v3860 = vadd.f32 %v3828, %v52
  %v3861 = vadd.f32 %v3829, %v53
  %v3862 = vadd.f32 %v3830, %v54
  %v3863 = vadd.f32 %v3831, %v55
  %v3864 = vadd.f32 %v3832, %v56
  %v3865 = vadd.f32 %v3833, %v57
  %v3866 = vadd.f32 %v3834, %v58
  %v3867 = vadd.f32 %v3835, %v59
  %v3868 = vadd.f32 %v3836, %v60
  %v3869 = vadd.f32 %v3837, %v61
  %v3870 = vadd.f32 %v3838, %v62
  %v3871 = vadd.f32 %v3839, %v63
  %v3872 = vadd.f32 %v3840, %v64
  %v3873 = vadd.f32 %v3841, %v65
  %v3874 = vadd.f32 %v3842, %v66
  %v3875 = vadd.f32 %v3843, %v67
  %v3876 = vadd.f32 %v3844, %v68
  %v3877 = vadd.f32 %v3845, %v69
  %3878 = vst [vmem:[%s11] sm:$0xff] %v3846
  %3879 = vst [vmem:[%s11 + $0x8] sm:$0xff] %v3847
  %3880 = vst [vmem:[%s11 + $0x10] sm:$0xff] %v3848
  %3881 = vst [vmem:[%s11 + $0x18] sm:$0xff] %v3849
  %3882 = vst [vmem:[%s11 + $0x20] sm:$0xff] %v3850
  %3883 = vst [vmem:[%s11 + $0x28] sm:$0xff] %v3851
  %3884 = vst [vmem:[%s11 + $0x30] sm:$0xff] %v3852
  %3885 = vst [vmem:[%s11 + $0x38] sm:$0xff] %v3853
  %3886 = vst [vmem:[%s11 + $0x40] sm:$0xff] %v3854
  %3887 = vst [vmem:[%s11 + $0x48] sm:$0xff] %v3855
  %3888 = vst [vmem:[%s11 + $0x50] sm:$0xff] %v3856
  %3889 = vst [vmem:[%s11 + $0x58] sm:$0xff] %v3857
  %3890 = vst [vmem:[%s11 + $0x60] sm:$0xff] %v3858
  %3891 = vst [vmem:[%s11 + $0x68] sm:$0xff] %v3859
  %3892 = vst [vmem:[%s11 + $0x70] sm:$0xff] %v3860
  %3893 = vst [vmem:[%s11 + $0x78] sm:$0xff] %v3861
  %3894 = vst [vmem:[%s11 + $0x80] sm:$0xff] %v3862
  %3895 = vst [vmem:[%s11 + $0x88] sm:$0xff] %v3863
  %3896 = vst [vmem:[%s11 + $0x90] sm:$0xff] %v3864
  %3897 = vst [vmem:[%s11 + $0x98] sm:$0xff] %v3865
  %3898 = vst [vmem:[%s11 + $0xa0] sm:$0xff] %v3866
  %3899 = vst [vmem:[%s11 + $0xa8] sm:$0xff] %v3867
  %3900 = vst [vmem:[%s11 + $0xb0] sm:$0xff] %v3868
  %3901 = vst [vmem:[%s11 + $0xb8] sm:$0xff] %v3869
  %3902 = vst [vmem:[%s11 + $0xc0] sm:$0xff] %v3870
  %3903 = vst [vmem:[%s11 + $0xc8] sm:$0xff] %v3871
  %3904 = vst [vmem:[%s11 + $0xd0] sm:$0xff] %v3872
  %3905 = vst [vmem:[%s11 + $0xd8] sm:$0xff] %v3873
  %3906 = vst [vmem:[%s11 + $0xe0] sm:$0xff] %v3874
  %3907 = vst [vmem:[%s11 + $0xe8] sm:$0xff] %v3875
  %3908 = vst [vmem:[%s11 + $0xf0] sm:$0xff] %v3876
  %3909 = vst [vmem:[%s11 + $0xf8] sm:$0xff] %v3877
  // Predicated region
  $region46: #{hourglass_forward.7} parent=0 // pred_check
    _
  $region47: #{hourglass_forward.7} parent=0 // pred_check_branch
    %3911 = sbr.rel (0) target = $region49
  $region48: #{hourglass_forward.7} parent=0 // pred_region
    _
  $region49: #{hourglass_forward.7} parent=0 // pred_fallthru
    _
  // Predicated region
  $region50: #{hourglass_forward.7} parent=0 // pred_check
    _
  $region51: #{hourglass_forward.7} parent=0 // pred_check_branch
    %3913 = sbr.rel (0) target = $region53
  $region52: #{hourglass_forward.7} parent=0 // pred_region
    _
  $region53: #{hourglass_forward.7} parent=0 // pred_fallthru
    _

</llo_original>
